<compile_context>
chip_gen: v6e
topology: v6e:2x2x1
jax: 0.10.0
libtpu: 0.0.40
codegen_flags: <defaults>
</compile_context>

<pallas_src>
import jax
import jax.numpy as jnp
import numpy as np
from jax.experimental import pallas as pl
from jax.experimental.pallas import tpu as pltpu

# Small shapes consistent with the module structure (2 stories x 5 sentences).
S, T, L, D, H = 2, 5, 8, 64, 32     # stories, sentences, tokens, LM dim, LSTM hidden
G4 = 4 * H                          # fused gate width == 128 (lane-dense)
NCONF = 10                          # conflictClassify2 output size
NPLAU = 2                           # plauClassify output size

# Row offsets inside the packed (WB_ROWS, 128) weight buffer (all 8-aligned).
R_WIH = 0                           # (D, 4H)   = (64, 128)   (1/L folded in)
R_WHH = 64                          # (H, 4H)   = (32, 128)
R_BL = 96                           # (1, 4H)   combined LSTM gate bias
R_W1 = 104                          # (T*H, H)  = (160, 32), time-major blocks
R_B1 = 264                          # (1, H)
R_W2 = 272                          # (H, NCONF) = (32, 10)
R_B2 = 304                          # (1, NCONF)
R_WP0 = 312                         # (NCONF, NPLAU) rows 0:10 of Wp^T
R_WP1 = 328                         # (NCONF, NPLAU) rows 10:20 of Wp^T
R_BP = 344                          # (1, NPLAU)
WB_ROWS = 352


def _make_kernel(block_b):
    rows = S * block_b              # LSTM batch rows per grid step (128 for BT=64)

    def tiered_kernel(x_ref, wb_ref, out_ref):
        # 1) pool the RoBERTa hidden states over tokens (1/L folded into Wih):
        #    (T*S*BT, L, D) -> (T*S*BT, D); row = t*(S*BT) + s*BT + b.
        pooled = jnp.sum(x_ref[...], axis=1)
        # (drop_out p=0.2 is identity at inference)

        # 2) hoisted, fused input projection for all (t, s, b) at once; gate
        #    bias (b_ih + b_hh) folded in here.
        wih = wb_ref[R_WIH:R_WIH + D, :]                       # (D, 4H)
        bias = wb_ref[R_BL:R_BL + 1, :]                        # (1, 4H)
        gates_in = jnp.dot(pooled, wih,
                           preferred_element_type=jnp.float32) + bias

        whh = wb_ref[R_WHH:R_WHH + H, :]                       # (H, 4H)

        # 3) unidirectional LSTM over the 5 sentences, batched over
        #    (stories x examples) = `rows`.  Only h @ Whh stays on the serial
        #    chain; W1 contraction is deferred to after the loop.
        h = jnp.zeros((rows, H), jnp.float32)
        c = jnp.zeros((rows, H), jnp.float32)
        hs = []
        for t in range(T):                                     # static unroll, T == 5
            gates = gates_in[t * rows:(t + 1) * rows, :] + jnp.dot(
                h, whh, preferred_element_type=jnp.float32)    # (rows, 4H)
            sig = jax.nn.sigmoid(gates)                        # whole-vreg sigmoid
            g_g = jnp.tanh(gates[:, 2 * H:3 * H])
            i_g = sig[:, 0:H]
            f_g = sig[:, H:2 * H]
            o_g = sig[:, 3 * H:4 * H]
            c = f_g * c + i_g * g_g
            h = o_g * jnp.tanh(c)
            hs.append(h)

        # 4) conflict classifier: ReLU(Linear(T*H -> H)) -> Linear(H -> 10).
        #    Single (rows, T*H) @ (T*H, H) contraction, off the serial chain;
        #    concat order matches lstm_out.view(1, -1) (time-major).
        h_all = jnp.concatenate(hs, axis=1)                    # (rows, T*H)
        w1 = wb_ref[R_W1:R_W1 + T * H, 0:H]                    # (T*H, H)
        b1 = wb_ref[R_B1:R_B1 + 1, 0:H]
        hid = jnp.maximum(
            jnp.dot(h_all, w1, preferred_element_type=jnp.float32) + b1, 0.0)

        w2 = wb_ref[R_W2:R_W2 + H, 0:NCONF]
        b2 = wb_ref[R_B2:R_B2 + 1, 0:NCONF]
        conflict = jnp.dot(hid, w2,
                           preferred_element_type=jnp.float32) + b2  # (rows, 10)

        # rows [0:BT] are story 0 of every example in the tile, [BT:2BT] story 1.
        c0 = conflict[0:block_b, :]
        c1 = conflict[block_b:2 * block_b, :]

        # 5) plausibility head over ReLU(cat(conflicts)) -- two small dots
        #    (one per story block) so no lane concat is needed.
        wp0 = wb_ref[R_WP0:R_WP0 + NCONF, 0:NPLAU]             # (10, 2)
        wp1 = wb_ref[R_WP1:R_WP1 + NCONF, 0:NPLAU]             # (10, 2)
        bp = wb_ref[R_BP:R_BP + 1, 0:NPLAU]                    # (1, 2)
        plaus = (jnp.dot(jnp.maximum(c0, 0.0), wp0, preferred_element_type=jnp.float32)
                 + jnp.dot(jnp.maximum(c1, 0.0), wp1, preferred_element_type=jnp.float32)
                 + bp)                                         # (BT, 2)

        # 6) per-example selection of which story's conflict logits to return
        #    (vectorized lane-mask select, no scalar extraction).
        mask = plaus[:, 0:1] > plaus[:, 1:2]                   # (BT, 1)
        sel = jnp.where(mask, c0, c1)                          # (BT, 10)

        # 7) lane-dense (BT, 128) output rows: plaus in lanes [0:2], selected
        #    conflict logits in lanes [2:12], zero pad elsewhere.
        pad = jnp.zeros((block_b, 128 - NPLAU - NCONF), jnp.float32)
        out_ref[...] = jnp.concatenate([plaus, sel, pad], axis=1)

    return tiered_kernel


def tiered_forward(x, wb, *, block_b=64):
    """x: (B, S, T, L, D) hidden states; wb: packed (WB_ROWS, 128) weights."""
    B = x.shape[0]
    assert B % block_b == 0, "batch must be a multiple of the example tile"
    nb = B // block_b

    # Host-side layout plumbing: block/t/s/example-major rows so each grid
    # step's timestep slices are contiguous (S*BT)-row sublane blocks.
    x_k = (x.reshape(nb, block_b, S, T, L, D)
             .transpose(0, 3, 2, 1, 4, 5)          # (nb, T, S, BT, L, D)
             .reshape(nb * T * S * block_b, L, D))

    # Advisory cost so XLA can overlap this micro-kernel with the encoder.
    flops_per_ex = (2 * T * S * D * G4 + 2 * T * S * H * G4
                    + 2 * S * (T * H) * H + 2 * S * H * NCONF
                    + 2 * 2 * NCONF * NPLAU + T * S * L * D)
    transc_per_ex = T * S * (G4 + 2 * H)
    bytes_acc = x_k.size * 4 + wb.size * 4 + B * 128 * 4
    cost = pl.CostEstimate(flops=B * flops_per_ex,
                           transcendentals=B * transc_per_ex,
                           bytes_accessed=int(bytes_acc))

    out = pl.pallas_call(
        _make_kernel(block_b),
        out_shape=jax.ShapeDtypeStruct((B, 128), jnp.float32),
        grid_spec=pltpu.PrefetchScalarGridSpec(
            num_scalar_prefetch=0,
            grid=(nb,),
            in_specs=[
                # per-step x tile, pipelined across grid steps
                pl.BlockSpec((T * S * block_b, L, D), lambda i: (i, 0, 0)),
                # packed weights: constant block index -> DMA'd once, resident
                pl.BlockSpec((WB_ROWS, 128), lambda i: (0, 0)),
            ],
            out_specs=pl.BlockSpec((block_b, 128), lambda i: (i, 0)),
        ),
        compiler_params=pltpu.CompilerParams(
            dimension_semantics=("parallel",),       # megacore sharding on v7x
            vmem_limit_bytes=32 * 1024 * 1024,       # fits v5e/v6e/v7x scoped VMEM
        ),
        cost_estimate=cost,
    )(x_k, wb)

    plaus = out[:, 0:NPLAU]
    conf = out[:, NPLAU:NPLAU + NCONF]
    return plaus, conf


def make_params(key):
    """Deterministic synthetic parameters matching the module's shapes."""
    ks = jax.random.split(key, 10)
    kk = 1.0 / np.sqrt(H)
    return dict(
        w_ih=jax.random.uniform(ks[0], (4 * H, D), jnp.float32, -kk, kk),
        w_hh=jax.random.uniform(ks[1], (4 * H, H), jnp.float32, -kk, kk),
        b_ih=jax.random.uniform(ks[2], (4 * H,), jnp.float32, -kk, kk),
        b_hh=jax.random.uniform(ks[3], (4 * H,), jnp.float32, -kk, kk),
        w1=0.02 * jax.random.normal(ks[4], (H, T * H), jnp.float32),
        b1=jax.random.uniform(ks[5], (H,), jnp.float32, -0.05, 0.05),
        w2=0.02 * jax.random.normal(ks[6], (NCONF, H), jnp.float32),
        b2=jax.random.uniform(ks[7], (NCONF,), jnp.float32, -0.05, 0.05),
        wp=0.02 * jax.random.normal(ks[8], (NPLAU, 2 * NCONF), jnp.float32),
        bp=jax.random.uniform(ks[9], (NPLAU,), jnp.float32, -0.05, 0.05),
    )


def pack_for_kernel(p):
    """Pack all weights/biases into one (WB_ROWS, 128) f32 buffer.

    LSTM weights are pre-transposed and gate-fused; the 1/L mean-pool scale is
    folded into W_ih; W1 keeps time-major row blocks so the post-loop
    contraction matches lstm_out.view(1, -1) ordering.
    """
    wb = jnp.zeros((WB_ROWS, 128), jnp.float32)
    wb = wb.at[R_WIH:R_WIH + D, :G4].set(p["w_ih"].T * (1.0 / L))   # (64, 128)
    wb = wb.at[R_WHH:R_WHH + H, :G4].set(p["w_hh"].T)               # (32, 128)
    wb = wb.at[R_BL, :G4].set(p["b_ih"] + p["b_hh"])
    wb = wb.at[R_W1:R_W1 + T * H, :H].set(p["w1"].T)                # (160, 32)
    wb = wb.at[R_B1, :H].set(p["b1"])
    wb = wb.at[R_W2:R_W2 + H, :NCONF].set(p["w2"].T)                # (32, 10)
    wb = wb.at[R_B2, :NCONF].set(p["b2"])
    wpT = p["wp"].T                                                 # (20, 2)
    wb = wb.at[R_WP0:R_WP0 + NCONF, :NPLAU].set(wpT[:NCONF])
    wb = wb.at[R_WP1:R_WP1 + NCONF, :NPLAU].set(wpT[NCONF:])
    wb = wb.at[R_BP, :NPLAU].set(p["bp"])
    return wb


def reference_forward(x, p):
    """Batched plain-JAX reference mirroring the PyTorch forward (eval mode).

    x: (B, S, T, L, D).  Returns (plaus (B,2), selected conflict (B,10),
    both stories' conflict logits (B,2,10))."""
    B = x.shape[0]
    pooled = jnp.mean(x, axis=3)                         # (B, S, T, D)
    h = jnp.zeros((B, S, H), jnp.float32)
    c = jnp.zeros((B, S, H), jnp.float32)
    hs = []
    for t in range(T):
        gates = (pooled[:, :, t, :] @ p["w_ih"].T + p["b_ih"]
                 + h @ p["w_hh"].T + p["b_hh"])
        i_g = jax.nn.sigmoid(gates[..., 0:H])
        f_g = jax.nn.sigmoid(gates[..., H:2 * H])
        g_g = jnp.tanh(gates[..., 2 * H:3 * H])
        o_g = jax.nn.sigmoid(gates[..., 3 * H:4 * H])
        c = f_g * c + i_g * g_g
        h = o_g * jnp.tanh(c)
        hs.append(h)
    lstm_flat = jnp.concatenate(hs, axis=-1)             # (B, S, T*H)
    hid = jax.nn.relu(lstm_flat @ p["w1"].T + p["b1"])   # (B, S, H)
    conflict = hid @ p["w2"].T + p["b2"]                 # (B, S, 10)
    plaus_in = jax.nn.relu(conflict.reshape(B, S * NCONF))
    plaus = plaus_in @ p["wp"].T + p["bp"]               # (B, 2)
    sel = jnp.where(plaus[:, 0:1] > plaus[:, 1:2],
                    conflict[:, 0, :], conflict[:, 1, :])
    return plaus, sel, conflict


if __name__ == "__main__":
    key = jax.random.PRNGKey(0)
    kx, kp = jax.random.split(key)

    B, BT = 128, 64   # batch of examples, examples per grid step

    # Synthetic stand-in for the frozen RoBERTa last hidden states.
    x = jax.random.normal(kx, (B, S, T, L, D), jnp.float32)
    params = make_params(kp)
    wb = pack_for_kernel(params)

    plaus, conf = tiered_forward(x, wb, block_b=BT)
    jax.block_until_ready((plaus, conf))

    # Sanity check against the plain-JAX reference.
    plaus_ref, conf_ref, conf_all_ref = reference_forward(x, params)
    assert plaus.shape == (B, NPLAU) and conf.shape == (B, NCONF)
    np.testing.assert_allclose(np.asarray(plaus), np.asarray(plaus_ref),
                               rtol=2e-3, atol=2e-3)

    # Conflict logits: compare against the reference's selected story; if the
    # plausibility margin is a near-tie, accept either story's logits.
    p_ref = np.asarray(plaus_ref)
    conf_np = np.asarray(conf)
    conf_all = np.asarray(conf_all_ref)
    primary = np.where(p_ref[:, 0] > p_ref[:, 1], 0, 1)
    prim = conf_all[np.arange(B), primary]
    alt = conf_all[np.arange(B), 1 - primary]
    margin = np.abs(p_ref[:, 0] - p_ref[:, 1])

    def row_close(a, b):
        return np.all(np.abs(a - b) <= 2e-3 + 2e-3 * np.abs(b), axis=1)

    ok = row_close(conf_np, prim) | ((margin < 1e-3) & row_close(conf_np, alt))
    assert np.all(ok), f"conflict mismatch on rows {np.nonzero(~ok)[0]}"
    print("KERNEL_OK")
</pallas_src>

<mosaic_0001>
module attributes {stable_mosaic.version = 11 : i64} {
  func.func @tiered_kernel(%arg0: i32, %arg1: memref<640x8x64xf32, #tpu.memory_space<vmem>>, %arg2: memref<352x128xf32, #tpu.memory_space<vmem>>, %arg3: memref<64x128xf32, #tpu.memory_space<vmem>>) attributes {dimension_semantics = [#tpu.dimension_semantics<parallel>], iteration_bounds = array<i64: 2>, scalar_prefetch = 0 : i64, scratch_operands = 0 : i64, tpu.core_type = #tpu.core_type<tc>, window_params = [{transform_indices = @transform_0, window_bounds = array<i64: 640, 8, 64>}, {pipeline_mode = #tpu.pipeline_mode<synchronous>, transform_indices = @transform_1, window_bounds = array<i64: 352, 128>}, {transform_indices = @transform_2, window_bounds = array<i64: 64, 128>}]} {
    %c0 = arith.constant 0 : index
    %c0_0 = arith.constant 0 : index
    %c0_1 = arith.constant 0 : index
    %0 = vector.load %arg1[%c0, %c0_0, %c0_1] : memref<640x8x64xf32, #tpu.memory_space<vmem>>, vector<640x8x64xf32>
    %cst = arith.constant dense<0.000000e+00> : vector<640x64xf32>
    %1 = vector.multi_reduction <add>, %0, %cst [1] : vector<640x8x64xf32> to vector<640x64xf32>
    %c0_2 = arith.constant 0 : index
    %c0_3 = arith.constant 0 : index
    %2 = vector.load %arg2[%c0_2, %c0_3] : memref<352x128xf32, #tpu.memory_space<vmem>>, vector<64x128xf32>
    %c96 = arith.constant 96 : index
    %c0_4 = arith.constant 0 : index
    %3 = vector.load %arg2[%c96, %c0_4] : memref<352x128xf32, #tpu.memory_space<vmem>>, vector<1x128xf32>
    %cst_5 = arith.constant dense<0.000000e+00> : vector<640x128xf32>
    %4 = tpu.matmul %1, %2, %cst_5 {dimension_numbers = #tpu.dot_dimension_numbers<[1], [0], [0], [1], [0, 0, 1, 1], [], []>} : vector<640x64xf32>, vector<64x128xf32>, vector<640x128xf32> -> vector<640x128xf32>
    %5 = vector.broadcast %3 : vector<1x128xf32> to vector<640x128xf32>
    %6 = arith.addf %4, %5 : vector<640x128xf32>
    %c64 = arith.constant 64 : index
    %c0_6 = arith.constant 0 : index
    %7 = vector.load %arg2[%c64, %c0_6] : memref<352x128xf32, #tpu.memory_space<vmem>>, vector<32x128xf32>
    %cst_7 = arith.constant 0.000000e+00 : f32
    %8 = vector.broadcast %cst_7 : f32 to vector<128x32xf32>
    %cst_8 = arith.constant 0.000000e+00 : f32
    %9 = vector.broadcast %cst_8 : f32 to vector<128x32xf32>
    %10 = vector.extract_strided_slice %6 {offsets = [0, 0], sizes = [128, 128], strides = [1, 1]} : vector<640x128xf32> to vector<128x128xf32>
    %cst_9 = arith.constant dense<0.000000e+00> : vector<128x128xf32>
    %11 = tpu.matmul %8, %7, %cst_9 {dimension_numbers = #tpu.dot_dimension_numbers<[1], [0], [0], [1], [0, 0, 1, 1], [], []>} : vector<128x32xf32>, vector<32x128xf32>, vector<128x128xf32> -> vector<128x128xf32>
    %12 = arith.addf %10, %11 : vector<128x128xf32>
    %13 = arith.negf %12 : vector<128x128xf32>
    %14 = math.exp %13 : vector<128x128xf32>
    %cst_10 = arith.constant 1.000000e+00 : f32
    %15 = vector.broadcast %cst_10 : f32 to vector<128x128xf32>
    %16 = arith.addf %15, %14 : vector<128x128xf32>
    %17 = arith.divf %15, %16 : vector<128x128xf32>
    %18 = vector.extract_strided_slice %12 {offsets = [0, 64], sizes = [128, 32], strides = [1, 1]} : vector<128x128xf32> to vector<128x32xf32>
    %19 = math.tanh %18 : vector<128x32xf32>
    %20 = vector.extract_strided_slice %17 {offsets = [0, 0], sizes = [128, 32], strides = [1, 1]} : vector<128x128xf32> to vector<128x32xf32>
    %21 = vector.extract_strided_slice %17 {offsets = [0, 32], sizes = [128, 32], strides = [1, 1]} : vector<128x128xf32> to vector<128x32xf32>
    %22 = vector.extract_strided_slice %17 {offsets = [0, 96], sizes = [128, 32], strides = [1, 1]} : vector<128x128xf32> to vector<128x32xf32>
    %23 = arith.mulf %21, %9 : vector<128x32xf32>
    %24 = arith.mulf %20, %19 : vector<128x32xf32>
    %25 = arith.addf %23, %24 : vector<128x32xf32>
    %26 = math.tanh %25 : vector<128x32xf32>
    %27 = arith.mulf %22, %26 : vector<128x32xf32>
    %28 = vector.extract_strided_slice %6 {offsets = [128, 0], sizes = [128, 128], strides = [1, 1]} : vector<640x128xf32> to vector<128x128xf32>
    %cst_11 = arith.constant dense<0.000000e+00> : vector<128x128xf32>
    %29 = tpu.matmul %27, %7, %cst_11 {dimension_numbers = #tpu.dot_dimension_numbers<[1], [0], [0], [1], [0, 0, 1, 1], [], []>} : vector<128x32xf32>, vector<32x128xf32>, vector<128x128xf32> -> vector<128x128xf32>
    %30 = arith.addf %28, %29 : vector<128x128xf32>
    %31 = arith.negf %30 : vector<128x128xf32>
    %32 = math.exp %31 : vector<128x128xf32>
    %cst_12 = arith.constant 1.000000e+00 : f32
    %33 = vector.broadcast %cst_12 : f32 to vector<128x128xf32>
    %34 = arith.addf %33, %32 : vector<128x128xf32>
    %35 = arith.divf %33, %34 : vector<128x128xf32>
    %36 = vector.extract_strided_slice %30 {offsets = [0, 64], sizes = [128, 32], strides = [1, 1]} : vector<128x128xf32> to vector<128x32xf32>
    %37 = math.tanh %36 : vector<128x32xf32>
    %38 = vector.extract_strided_slice %35 {offsets = [0, 0], sizes = [128, 32], strides = [1, 1]} : vector<128x128xf32> to vector<128x32xf32>
    %39 = vector.extract_strided_slice %35 {offsets = [0, 32], sizes = [128, 32], strides = [1, 1]} : vector<128x128xf32> to vector<128x32xf32>
    %40 = vector.extract_strided_slice %35 {offsets = [0, 96], sizes = [128, 32], strides = [1, 1]} : vector<128x128xf32> to vector<128x32xf32>
    %41 = arith.mulf %39, %25 : vector<128x32xf32>
    %42 = arith.mulf %38, %37 : vector<128x32xf32>
    %43 = arith.addf %41, %42 : vector<128x32xf32>
    %44 = math.tanh %43 : vector<128x32xf32>
    %45 = arith.mulf %40, %44 : vector<128x32xf32>
    %46 = vector.extract_strided_slice %6 {offsets = [256, 0], sizes = [128, 128], strides = [1, 1]} : vector<640x128xf32> to vector<128x128xf32>
    %cst_13 = arith.constant dense<0.000000e+00> : vector<128x128xf32>
    %47 = tpu.matmul %45, %7, %cst_13 {dimension_numbers = #tpu.dot_dimension_numbers<[1], [0], [0], [1], [0, 0, 1, 1], [], []>} : vector<128x32xf32>, vector<32x128xf32>, vector<128x128xf32> -> vector<128x128xf32>
    %48 = arith.addf %46, %47 : vector<128x128xf32>
    %49 = arith.negf %48 : vector<128x128xf32>
    %50 = math.exp %49 : vector<128x128xf32>
    %cst_14 = arith.constant 1.000000e+00 : f32
    %51 = vector.broadcast %cst_14 : f32 to vector<128x128xf32>
    %52 = arith.addf %51, %50 : vector<128x128xf32>
    %53 = arith.divf %51, %52 : vector<128x128xf32>
    %54 = vector.extract_strided_slice %48 {offsets = [0, 64], sizes = [128, 32], strides = [1, 1]} : vector<128x128xf32> to vector<128x32xf32>
    %55 = math.tanh %54 : vector<128x32xf32>
    %56 = vector.extract_strided_slice %53 {offsets = [0, 0], sizes = [128, 32], strides = [1, 1]} : vector<128x128xf32> to vector<128x32xf32>
    %57 = vector.extract_strided_slice %53 {offsets = [0, 32], sizes = [128, 32], strides = [1, 1]} : vector<128x128xf32> to vector<128x32xf32>
    %58 = vector.extract_strided_slice %53 {offsets = [0, 96], sizes = [128, 32], strides = [1, 1]} : vector<128x128xf32> to vector<128x32xf32>
    %59 = arith.mulf %57, %43 : vector<128x32xf32>
    %60 = arith.mulf %56, %55 : vector<128x32xf32>
    %61 = arith.addf %59, %60 : vector<128x32xf32>
    %62 = math.tanh %61 : vector<128x32xf32>
    %63 = arith.mulf %58, %62 : vector<128x32xf32>
    %64 = vector.extract_strided_slice %6 {offsets = [384, 0], sizes = [128, 128], strides = [1, 1]} : vector<640x128xf32> to vector<128x128xf32>
    %cst_15 = arith.constant dense<0.000000e+00> : vector<128x128xf32>
    %65 = tpu.matmul %63, %7, %cst_15 {dimension_numbers = #tpu.dot_dimension_numbers<[1], [0], [0], [1], [0, 0, 1, 1], [], []>} : vector<128x32xf32>, vector<32x128xf32>, vector<128x128xf32> -> vector<128x128xf32>
    %66 = arith.addf %64, %65 : vector<128x128xf32>
    %67 = arith.negf %66 : vector<128x128xf32>
    %68 = math.exp %67 : vector<128x128xf32>
    %cst_16 = arith.constant 1.000000e+00 : f32
    %69 = vector.broadcast %cst_16 : f32 to vector<128x128xf32>
    %70 = arith.addf %69, %68 : vector<128x128xf32>
    %71 = arith.divf %69, %70 : vector<128x128xf32>
    %72 = vector.extract_strided_slice %66 {offsets = [0, 64], sizes = [128, 32], strides = [1, 1]} : vector<128x128xf32> to vector<128x32xf32>
    %73 = math.tanh %72 : vector<128x32xf32>
    %74 = vector.extract_strided_slice %71 {offsets = [0, 0], sizes = [128, 32], strides = [1, 1]} : vector<128x128xf32> to vector<128x32xf32>
    %75 = vector.extract_strided_slice %71 {offsets = [0, 32], sizes = [128, 32], strides = [1, 1]} : vector<128x128xf32> to vector<128x32xf32>
    %76 = vector.extract_strided_slice %71 {offsets = [0, 96], sizes = [128, 32], strides = [1, 1]} : vector<128x128xf32> to vector<128x32xf32>
    %77 = arith.mulf %75, %61 : vector<128x32xf32>
    %78 = arith.mulf %74, %73 : vector<128x32xf32>
    %79 = arith.addf %77, %78 : vector<128x32xf32>
    %80 = math.tanh %79 : vector<128x32xf32>
    %81 = arith.mulf %76, %80 : vector<128x32xf32>
    %82 = vector.extract_strided_slice %6 {offsets = [512, 0], sizes = [128, 128], strides = [1, 1]} : vector<640x128xf32> to vector<128x128xf32>
    %cst_17 = arith.constant dense<0.000000e+00> : vector<128x128xf32>
    %83 = tpu.matmul %81, %7, %cst_17 {dimension_numbers = #tpu.dot_dimension_numbers<[1], [0], [0], [1], [0, 0, 1, 1], [], []>} : vector<128x32xf32>, vector<32x128xf32>, vector<128x128xf32> -> vector<128x128xf32>
    %84 = arith.addf %82, %83 : vector<128x128xf32>
    %85 = arith.negf %84 : vector<128x128xf32>
    %86 = math.exp %85 : vector<128x128xf32>
    %cst_18 = arith.constant 1.000000e+00 : f32
    %87 = vector.broadcast %cst_18 : f32 to vector<128x128xf32>
    %88 = arith.addf %87, %86 : vector<128x128xf32>
    %89 = arith.divf %87, %88 : vector<128x128xf32>
    %90 = vector.extract_strided_slice %84 {offsets = [0, 64], sizes = [128, 32], strides = [1, 1]} : vector<128x128xf32> to vector<128x32xf32>
    %91 = math.tanh %90 : vector<128x32xf32>
    %92 = vector.extract_strided_slice %89 {offsets = [0, 0], sizes = [128, 32], strides = [1, 1]} : vector<128x128xf32> to vector<128x32xf32>
    %93 = vector.extract_strided_slice %89 {offsets = [0, 32], sizes = [128, 32], strides = [1, 1]} : vector<128x128xf32> to vector<128x32xf32>
    %94 = vector.extract_strided_slice %89 {offsets = [0, 96], sizes = [128, 32], strides = [1, 1]} : vector<128x128xf32> to vector<128x32xf32>
    %95 = arith.mulf %93, %79 : vector<128x32xf32>
    %96 = arith.mulf %92, %91 : vector<128x32xf32>
    %97 = arith.addf %95, %96 : vector<128x32xf32>
    %98 = math.tanh %97 : vector<128x32xf32>
    %99 = arith.mulf %94, %98 : vector<128x32xf32>
    %100 = tpu.concatenate %27, %45, %63, %81, %99 in 1 : vector<128x32xf32>, vector<128x32xf32>, vector<128x32xf32>, vector<128x32xf32>, vector<128x32xf32> -> vector<128x160xf32>
    %c104 = arith.constant 104 : index
    %c0_19 = arith.constant 0 : index
    %101 = vector.load %arg2[%c104, %c0_19] : memref<352x128xf32, #tpu.memory_space<vmem>>, vector<160x32xf32>
    %c264 = arith.constant 264 : index
    %c0_20 = arith.constant 0 : index
    %102 = vector.load %arg2[%c264, %c0_20] : memref<352x128xf32, #tpu.memory_space<vmem>>, vector<1x32xf32>
    %cst_21 = arith.constant dense<0.000000e+00> : vector<128x32xf32>
    %103 = tpu.matmul %100, %101, %cst_21 {dimension_numbers = #tpu.dot_dimension_numbers<[1], [0], [0], [1], [0, 0, 1, 1], [], []>} : vector<128x160xf32>, vector<160x32xf32>, vector<128x32xf32> -> vector<128x32xf32>
    %104 = vector.broadcast %102 : vector<1x32xf32> to vector<128x32xf32>
    %105 = arith.addf %103, %104 : vector<128x32xf32>
    %cst_22 = arith.constant 0.000000e+00 : f32
    %106 = vector.broadcast %cst_22 : f32 to vector<128x32xf32>
    %107 = arith.maximumf %105, %106 : vector<128x32xf32>
    %c272 = arith.constant 272 : index
    %c0_23 = arith.constant 0 : index
    %108 = vector.load %arg2[%c272, %c0_23] : memref<352x128xf32, #tpu.memory_space<vmem>>, vector<32x10xf32>
    %c304 = arith.constant 304 : index
    %c0_24 = arith.constant 0 : index
    %109 = vector.load %arg2[%c304, %c0_24] : memref<352x128xf32, #tpu.memory_space<vmem>>, vector<1x10xf32>
    %cst_25 = arith.constant dense<0.000000e+00> : vector<128x10xf32>
    %110 = tpu.matmul %107, %108, %cst_25 {dimension_numbers = #tpu.dot_dimension_numbers<[1], [0], [0], [1], [0, 0, 1, 1], [], []>} : vector<128x32xf32>, vector<32x10xf32>, vector<128x10xf32> -> vector<128x10xf32>
    %111 = vector.broadcast %109 : vector<1x10xf32> to vector<128x10xf32>
    %112 = arith.addf %110, %111 : vector<128x10xf32>
    %113 = vector.extract_strided_slice %112 {offsets = [0, 0], sizes = [64, 10], strides = [1, 1]} : vector<128x10xf32> to vector<64x10xf32>
    %114 = vector.extract_strided_slice %112 {offsets = [64, 0], sizes = [64, 10], strides = [1, 1]} : vector<128x10xf32> to vector<64x10xf32>
    %c312 = arith.constant 312 : index
    %c0_26 = arith.constant 0 : index
    %115 = vector.load %arg2[%c312, %c0_26] : memref<352x128xf32, #tpu.memory_space<vmem>>, vector<10x2xf32>
    %c328 = arith.constant 328 : index
    %c0_27 = arith.constant 0 : index
    %116 = vector.load %arg2[%c328, %c0_27] : memref<352x128xf32, #tpu.memory_space<vmem>>, vector<10x2xf32>
    %c344 = arith.constant 344 : index
    %c0_28 = arith.constant 0 : index
    %117 = vector.load %arg2[%c344, %c0_28] : memref<352x128xf32, #tpu.memory_space<vmem>>, vector<1x2xf32>
    %cst_29 = arith.constant 0.000000e+00 : f32
    %118 = vector.broadcast %cst_29 : f32 to vector<64x10xf32>
    %119 = arith.maximumf %113, %118 : vector<64x10xf32>
    %cst_30 = arith.constant dense<0.000000e+00> : vector<64x2xf32>
    %120 = tpu.matmul %119, %115, %cst_30 {dimension_numbers = #tpu.dot_dimension_numbers<[1], [0], [0], [1], [0, 0, 1, 1], [], []>} : vector<64x10xf32>, vector<10x2xf32>, vector<64x2xf32> -> vector<64x2xf32>
    %cst_31 = arith.constant 0.000000e+00 : f32
    %121 = vector.broadcast %cst_31 : f32 to vector<64x10xf32>
    %122 = arith.maximumf %114, %121 : vector<64x10xf32>
    %cst_32 = arith.constant dense<0.000000e+00> : vector<64x2xf32>
    %123 = tpu.matmul %122, %116, %cst_32 {dimension_numbers = #tpu.dot_dimension_numbers<[1], [0], [0], [1], [0, 0, 1, 1], [], []>} : vector<64x10xf32>, vector<10x2xf32>, vector<64x2xf32> -> vector<64x2xf32>
    %124 = arith.addf %120, %123 : vector<64x2xf32>
    %125 = vector.broadcast %117 : vector<1x2xf32> to vector<64x2xf32>
    %126 = arith.addf %124, %125 : vector<64x2xf32>
    %127 = vector.extract_strided_slice %126 {offsets = [0, 0], sizes = [64, 1], strides = [1, 1]} : vector<64x2xf32> to vector<64x1xf32>
    %128 = vector.extract_strided_slice %126 {offsets = [0, 1], sizes = [64, 1], strides = [1, 1]} : vector<64x2xf32> to vector<64x1xf32>
    %129 = arith.cmpf ogt, %127, %128 : vector<64x1xf32>
    %130 = vector.shape_cast %129 : vector<64x1xi1> to vector<64x1xi1>
    %131 = vector.broadcast %130 : vector<64x1xi1> to vector<64x10xi1>
    %132 = arith.select %131, %113, %114 : vector<64x10xi1>, vector<64x10xf32>
    %cst_33 = arith.constant 0.000000e+00 : f32
    %133 = vector.broadcast %cst_33 : f32 to vector<64x116xf32>
    %134 = tpu.concatenate %126, %132, %133 in 1 : vector<64x2xf32>, vector<64x10xf32>, vector<64x116xf32> -> vector<64x128xf32>
    %c0_34 = arith.constant 0 : index
    %c0_35 = arith.constant 0 : index
    %135 = vector.load %arg3[%c0_34, %c0_35] : memref<64x128xf32, #tpu.memory_space<vmem>>, vector<64x128xf32>
    tpu.vector_store %arg3[%c0_34, %c0_35], %134 {strides = array<i32>} : memref<64x128xf32, #tpu.memory_space<vmem>>, vector<64x128xf32>,
    return
  }
  func.func @transform_0(%arg0: i32) -> (i32, i32, i32) {
    %c0_i32 = arith.constant 0 : i32
    %c0_i32_0 = arith.constant 0 : i32
    %c0_i32_1 = arith.constant 0 : i32
    return %arg0, %c0_i32, %c0_i32_0 : i32, i32, i32
  }
  func.func @transform_1(%arg0: i32) -> (i32, i32) {
    %c0_i32 = arith.constant 0 : i32
    %c0_i32_0 = arith.constant 0 : i32
    %c0_i32_1 = arith.constant 0 : i32
    return %c0_i32, %c0_i32_0 : i32, i32
  }
  func.func @transform_2(%arg0: i32) -> (i32, i32) {
    %c0_i32 = arith.constant 0 : i32
    %c0_i32_0 = arith.constant 0 : i32
    return %arg0, %c0_i32 : i32, i32
  }
}

</mosaic_0001>

<llo_original>
// kernel: tpu_custom_call.1
$region0: #{tpu_custom_call.1}
  #allocation0 [shape = 'u32[]', space=smem, size = 0x4, offset = 0x4, fixed_abs, tag = 'smem constant byte address 0x4 - core index']
  #allocation1 [shape = 'u32[144,128]{1,0:T(1,128)}', space=vmem, size = 0x12000, scoped, tag = 'internal scratch']
  %s0 = inlined_call_operand.vmem [shape: f32[1280,8,64], index: 0, kind: input, shape index: {}]
  %s1 = inlined_call_operand.vmem [shape: f32[352,128], index: 1, kind: input, shape index: {}]
  %s2 = inlined_call_operand.hbm [shape: f32[128,128], index: 2, kind: output, shape index: {}]
  %s3 = sld [smem:[#allocation0]]
  $region41: #{tpu_custom_call.1} parent=0
    _
  %s5 = ssub.s32 1, %s3
  %s6 = scalar_select 0, %s5, %s3
  $region1: #{tpu_custom_call.1} parent=0
    #allocation2 [shape = 'u8[65536]{0}', space=vmem, size = 0x10000, scoped, tag = 'output window, operand 0']
    #allocation3 [shape = 's32[2]{0}', space=sflag, size = 0x8, scoped, tag = 'scoped memory for tpu_custom_call.1']
    %7 = vsyncpa [#allocation3], 0
    %s8 = scalar_lea.sflag [#allocation3], 1
    %9 = vsyncpa %s8, 0
    loop: start=0, step=1, limit=4
    $region2: #{tpu_custom_call.1} parent=1 // loop_pre_header
      _
    $region3: #{tpu_custom_call.1} parent=1 // loop_header
      %s11 = sphi 0, %s15
      %p12 = scmp.ge.s32.totalorder %s11, 4
      %s21 = sphi 0, %s23
      %s24 = sphi 0, %s21
      %s25 = sphi 0, %s24
      %s41 = sphi 0, %s25
      %s45 = sphi 0, %s45
      %s47 = sphi 0, %s45
      %s48 = sphi 0, %s47
      %s62 = sphi 0, %s48
      %s68 = sphi 0, %s70
      %s71 = sphi 0, %s68
      %s72 = sphi 0, %s71
      %s88 = sphi 0, %s72
    $region4: #{tpu_custom_call.1} parent=1 // loop_header_branch
      %14 = sbr.rel (%p12) target = $region8
    $region5: #{tpu_custom_call.1} parent=1 // loop_body
      %s16 = ssub.s32 %s11, 1
      %s17 = ssub.s32 %s11, 2
      %s18 = sadd.s32 %s11, 1
      %s19 = ssub.s32 %s11, %s18
      %p20 = scmp.eq.s32.totalorder %s19, 0
      %s22 = sadd.s32 %s21, 1
      %s23 = scalar_select %p20, %s21, %s22
      %p26 = pneg %p20
      %p27 = scmp.eq.s32.totalorder %s11, 1
      %p28 = por %p26, %p27
      %p29 = scmp.ne.s32.totalorder %s21, %s24
      %p30 = scmp.eq.s32.totalorder %s11, 0
      %p31 = por %p29, %p30
      %p32 = scmp.ne.s32.totalorder %s21, %s24
      %p33 = scmp.eq.s32.totalorder %s16, 1
      %p34 = por %p32, %p33
      %p35 = scmp.ne.s32.totalorder %s24, %s25
      %p36 = scmp.eq.s32.totalorder %s16, 0
      %p37 = por %p35, %p36
      %p38 = scmp.ne.s32.totalorder %s24, %s25
      %p39 = scmp.eq.s32.totalorder %s17, 1
      %p40 = por %p38, %p39
      %p42 = scmp.ne.s32.totalorder %s25, %s41
      %p43 = scmp.eq.s32.totalorder %s17, 0
      %p44 = por %p42, %p43
      %s46 = sadd.s32 %s45, 1
      %p49 = scmp.eq.s32.totalorder %s11, 1
      %p50 = scmp.ne.s32.totalorder %s45, %s47
      %p51 = scmp.eq.s32.totalorder %s11, 0
      %p52 = por %p50, %p51
      %p53 = scmp.ne.s32.totalorder %s45, %s47
      %p54 = scmp.eq.s32.totalorder %s16, 1
      %p55 = por %p53, %p54
      %p56 = scmp.ne.s32.totalorder %s47, %s48
      %p57 = scmp.eq.s32.totalorder %s16, 0
      %p58 = por %p56, %p57
      %p59 = scmp.ne.s32.totalorder %s47, %s48
      %p60 = scmp.eq.s32.totalorder %s17, 1
      %p61 = por %p59, %p60
      %p63 = scmp.ne.s32.totalorder %s48, %s62
      %p64 = scmp.eq.s32.totalorder %s17, 0
      %p65 = por %p63, %p64
      %s66 = ssub.s32 %s11, %s18
      %p67 = scmp.eq.s32.totalorder %s66, 0
      %s69 = sadd.s32 %s68, 1
      %s70 = scalar_select %p67, %s68, %s69
      %p73 = pneg %p67
      %p74 = scmp.eq.s32.totalorder %s11, 1
      %p75 = por %p73, %p74
      %p76 = scmp.ne.s32.totalorder %s68, %s71
      %p77 = scmp.eq.s32.totalorder %s11, 0
      %p78 = por %p76, %p77
      %p79 = scmp.ne.s32.totalorder %s68, %s71
      %p80 = scmp.eq.s32.totalorder %s16, 1
      %p81 = por %p79, %p80
      %p82 = scmp.ne.s32.totalorder %s71, %s72
      %p83 = scmp.eq.s32.totalorder %s16, 0
      %p84 = por %p82, %p83
      %p85 = scmp.ne.s32.totalorder %s71, %s72
      %p86 = scmp.eq.s32.totalorder %s17, 1
      %p87 = por %p85, %p86
      %p89 = scmp.ne.s32.totalorder %s72, %s88
      %p90 = scmp.eq.s32.totalorder %s17, 0
      %p91 = por %p89, %p90
      %p92 = scmp.le.s32.totalorder 1, %s11
      %p93 = scmp.lt.s32.totalorder %s11, 3
      %p94 = pnand %p92, %p93
      %p95 = pneg %p94
      // Predicated region
      $region9: #{tpu_custom_call.1} parent=5 // pred_check
        _
      $region10: #{tpu_custom_call.1} parent=5 // pred_check_branch
        %97 = sbr.rel (%p94) target = $region12
      $region11: #{tpu_custom_call.1} parent=5 // pred_region
        %s98 = ssub.s32 %s11, 1
        // Predicated region
        $region13: #{tpu_custom_call.1} parent=11 // pred_check
          %p99 = pneg %p58
        $region14: #{tpu_custom_call.1} parent=11 // pred_check_branch
          %101 = sbr.rel (%p99) target = $region16
        $region15: #{tpu_custom_call.1} parent=11 // pred_region
          _
        $region16: #{tpu_custom_call.1} parent=11 // pred_fallthru
          _
      $region12: #{tpu_custom_call.1} parent=5 // pred_fallthru
        _
      %p102 = scmp.lt.s32.totalorder %s11, 2
      // Predicated region
      $region17: #{tpu_custom_call.1} parent=5 // pred_check
        %p103 = pneg %p102
      $region18: #{tpu_custom_call.1} parent=5 // pred_check_branch
        %105 = sbr.rel (%p103) target = $region20
      $region19: #{tpu_custom_call.1} parent=5 // pred_region
        // Predicated region
        $region21: #{tpu_custom_call.1} parent=19 // pred_check
          %p106 = pneg %p31
        $region22: #{tpu_custom_call.1} parent=19 // pred_check_branch
          %108 = sbr.rel (%p106) target = $region24
        $region23: #{tpu_custom_call.1} parent=19 // pred_region
          %s109 = smul.u32 640, %s11
          %p110 = scmp.lt.s32.totalorder %s109, 1279
          %s111 = scalar_select %p110, %s109, 1279
          %s112 = smul.addr %s111, 8
          %s113 = scalar_lea.vmem %s0, %s112
          %s114 = smul.u32 640, %s11
        $region24: #{tpu_custom_call.1} parent=19 // pred_fallthru
          _
      $region20: #{tpu_custom_call.1} parent=5 // pred_fallthru
        _
      %p115 = scmp.le.s32.totalorder 1, %s11
      %p116 = scmp.lt.s32.totalorder %s11, 3
      %p117 = pnand %p115, %p116
      %p118 = pneg %p117
      // Predicated region
      $region25: #{tpu_custom_call.1} parent=5 // pred_check
        _
      $region26: #{tpu_custom_call.1} parent=5 // pred_check_branch
        %120 = sbr.rel (%p117) target = $region28
      $region27: #{tpu_custom_call.1} parent=5 // pred_region
        %s121 = ssub.s32 %s11, 1
        %s122 = smul.u32 640, %s16
        %p123 = scmp.lt.s32.totalorder %s122, 1279
        %s124 = scalar_select %p123, %s122, 1279
        %s125 = smul.addr %s124, 8
        %s126 = scalar_lea.vmem %s0, %s125
        %p127 = pneg %p37
        %p128 = pneg %p34
        %p129 = pneg %p58
        %p130 = pneg %p55
        %p131 = pneg %p84
        %p132 = pneg %p81
        %s133 = sand.u32 %s71, 1
        %s134 = scalar_lea.sflag [#allocation3], %s133
        %s135 = sand.u32 %s71, 1
        %s136 = smul.addr %s135, 64
        %s137 = scalar_lea.vmem [#allocation2], %s136
        %s138 = smul.u32 640, %s16
        %p139 = scmp.lt.s32.totalorder %s138, 1279
        %s140 = scalar_select %p139, %s138, 1279
        %s141 = smul.addr %s140, 8
        %s142 = scalar_lea.vmem %s0, %s141
        %s143 = smul.u32 640, %s16
        %s144 = smul.u32 8, %s16
        %v145 = vld [vmem:[%s142] sm:$0xff]
        %v146 = vld [vmem:[%s142 + $0x8] sm:$0xff]
        %v147 = vld [vmem:[%s142 + $0x10] sm:$0xff]
        %v148 = vld [vmem:[%s142 + $0x18] sm:$0xff]
        %v149 = vld [vmem:[%s142 + $0x20] sm:$0xff]
        %v150 = vld [vmem:[%s142 + $0x28] sm:$0xff]
        %v151 = vld [vmem:[%s142 + $0x30] sm:$0xff]
        %v152 = vld [vmem:[%s142 + $0x38] sm:$0xff]
        %v153 = vld [vmem:[%s142 + $0x40] sm:$0xff]
        %v154 = vld [vmem:[%s142 + $0x48] sm:$0xff]
        %v155 = vld [vmem:[%s142 + $0x50] sm:$0xff]
        %v156 = vld [vmem:[%s142 + $0x58] sm:$0xff]
        %v157 = vld [vmem:[%s142 + $0x60] sm:$0xff]
        %v158 = vld [vmem:[%s142 + $0x68] sm:$0xff]
        %v159 = vld [vmem:[%s142 + $0x70] sm:$0xff]
        %v160 = vld [vmem:[%s142 + $0x78] sm:$0xff]
        %v161 = vld [vmem:[%s142 + $0x80] sm:$0xff]
        %v162 = vld [vmem:[%s142 + $0x88] sm:$0xff]
        %v163 = vld [vmem:[%s142 + $0x90] sm:$0xff]
        %v164 = vld [vmem:[%s142 + $0x98] sm:$0xff]
        %v165 = vld [vmem:[%s142 + $0xa0] sm:$0xff]
        %v166 = vld [vmem:[%s142 + $0xa8] sm:$0xff]
        %v167 = vld [vmem:[%s142 + $0xb0] sm:$0xff]
        %v168 = vld [vmem:[%s142 + $0xb8] sm:$0xff]
        %v169 = vld [vmem:[%s142 + $0xc0] sm:$0xff]
        %v170 = vld [vmem:[%s142 + $0xc8] sm:$0xff]
        %v171 = vld [vmem:[%s142 + $0xd0] sm:$0xff]
        %v172 = vld [vmem:[%s142 + $0xd8] sm:$0xff]
        %v173 = vld [vmem:[%s142 + $0xe0] sm:$0xff]
        %v174 = vld [vmem:[%s142 + $0xe8] sm:$0xff]
        %v175 = vld [vmem:[%s142 + $0xf0] sm:$0xff]
        %v176 = vld [vmem:[%s142 + $0xf8] sm:$0xff]
        %v177 = vld [vmem:[%s142 + $0x100] sm:$0xff]
        %v178 = vld [vmem:[%s142 + $0x108] sm:$0xff]
        %v179 = vld [vmem:[%s142 + $0x110] sm:$0xff]
        %v180 = vld [vmem:[%s142 + $0x118] sm:$0xff]
        %v181 = vld [vmem:[%s142 + $0x120] sm:$0xff]
        %v182 = vld [vmem:[%s142 + $0x128] sm:$0xff]
        %v183 = vld [vmem:[%s142 + $0x130] sm:$0xff]
        %v184 = vld [vmem:[%s142 + $0x138] sm:$0xff]
        %v185 = vld [vmem:[%s142 + $0x140] sm:$0xff]
        %v186 = vld [vmem:[%s142 + $0x148] sm:$0xff]
        %v187 = vld [vmem:[%s142 + $0x150] sm:$0xff]
        %v188 = vld [vmem:[%s142 + $0x158] sm:$0xff]
        %v189 = vld [vmem:[%s142 + $0x160] sm:$0xff]
        %v190 = vld [vmem:[%s142 + $0x168] sm:$0xff]
        %v191 = vld [vmem:[%s142 + $0x170] sm:$0xff]
        %v192 = vld [vmem:[%s142 + $0x178] sm:$0xff]
        %v193 = vld [vmem:[%s142 + $0x180] sm:$0xff]
        %v194 = vld [vmem:[%s142 + $0x188] sm:$0xff]
        %v195 = vld [vmem:[%s142 + $0x190] sm:$0xff]
        %v196 = vld [vmem:[%s142 + $0x198] sm:$0xff]
        %v197 = vld [vmem:[%s142 + $0x1a0] sm:$0xff]
        %v198 = vld [vmem:[%s142 + $0x1a8] sm:$0xff]
        %v199 = vld [vmem:[%s142 + $0x1b0] sm:$0xff]
        %v200 = vld [vmem:[%s142 + $0x1b8] sm:$0xff]
        %v201 = vld [vmem:[%s142 + $0x1c0] sm:$0xff]
        %v202 = vld [vmem:[%s142 + $0x1c8] sm:$0xff]
        %v203 = vld [vmem:[%s142 + $0x1d0] sm:$0xff]
        %v204 = vld [vmem:[%s142 + $0x1d8] sm:$0xff]
        %v205 = vld [vmem:[%s142 + $0x1e0] sm:$0xff]
        %v206 = vld [vmem:[%s142 + $0x1e8] sm:$0xff]
        %v207 = vld [vmem:[%s142 + $0x1f0] sm:$0xff]
        %v208 = vld [vmem:[%s142 + $0x1f8] sm:$0xff]
        %v209 = vld [vmem:[%s142 + $0x200] sm:$0xff]
        %v210 = vld [vmem:[%s142 + $0x208] sm:$0xff]
        %v211 = vld [vmem:[%s142 + $0x210] sm:$0xff]
        %v212 = vld [vmem:[%s142 + $0x218] sm:$0xff]
        %v213 = vld [vmem:[%s142 + $0x220] sm:$0xff]
        %v214 = vld [vmem:[%s142 + $0x228] sm:$0xff]
        %v215 = vld [vmem:[%s142 + $0x230] sm:$0xff]
        %v216 = vld [vmem:[%s142 + $0x238] sm:$0xff]
        %v217 = vld [vmem:[%s142 + $0x240] sm:$0xff]
        %v218 = vld [vmem:[%s142 + $0x248] sm:$0xff]
        %v219 = vld [vmem:[%s142 + $0x250] sm:$0xff]
        %v220 = vld [vmem:[%s142 + $0x258] sm:$0xff]
        %v221 = vld [vmem:[%s142 + $0x260] sm:$0xff]
        %v222 = vld [vmem:[%s142 + $0x268] sm:$0xff]
        %v223 = vld [vmem:[%s142 + $0x270] sm:$0xff]
        %v224 = vld [vmem:[%s142 + $0x278] sm:$0xff]
        %v225 = vld [vmem:[%s142 + $0x280] sm:$0xff]
        %v226 = vld [vmem:[%s142 + $0x288] sm:$0xff]
        %v227 = vld [vmem:[%s142 + $0x290] sm:$0xff]
        %v228 = vld [vmem:[%s142 + $0x298] sm:$0xff]
        %v229 = vld [vmem:[%s142 + $0x2a0] sm:$0xff]
        %v230 = vld [vmem:[%s142 + $0x2a8] sm:$0xff]
        %v231 = vld [vmem:[%s142 + $0x2b0] sm:$0xff]
        %v232 = vld [vmem:[%s142 + $0x2b8] sm:$0xff]
        %v233 = vld [vmem:[%s142 + $0x2c0] sm:$0xff]
        %v234 = vld [vmem:[%s142 + $0x2c8] sm:$0xff]
        %v235 = vld [vmem:[%s142 + $0x2d0] sm:$0xff]
        %v236 = vld [vmem:[%s142 + $0x2d8] sm:$0xff]
        %v237 = vld [vmem:[%s142 + $0x2e0] sm:$0xff]
        %v238 = vld [vmem:[%s142 + $0x2e8] sm:$0xff]
        %v239 = vld [vmem:[%s142 + $0x2f0] sm:$0xff]
        %v240 = vld [vmem:[%s142 + $0x2f8] sm:$0xff]
        %v241 = vld [vmem:[%s142 + $0x300] sm:$0xff]
        %v242 = vld [vmem:[%s142 + $0x308] sm:$0xff]
        %v243 = vld [vmem:[%s142 + $0x310] sm:$0xff]
        %v244 = vld [vmem:[%s142 + $0x318] sm:$0xff]
        %v245 = vld [vmem:[%s142 + $0x320] sm:$0xff]
        %v246 = vld [vmem:[%s142 + $0x328] sm:$0xff]
        %v247 = vld [vmem:[%s142 + $0x330] sm:$0xff]
        %v248 = vld [vmem:[%s142 + $0x338] sm:$0xff]
        %v249 = vld [vmem:[%s142 + $0x340] sm:$0xff]
        %v250 = vld [vmem:[%s142 + $0x348] sm:$0xff]
        %v251 = vld [vmem:[%s142 + $0x350] sm:$0xff]
        %v252 = vld [vmem:[%s142 + $0x358] sm:$0xff]
        %v253 = vld [vmem:[%s142 + $0x360] sm:$0xff]
        %v254 = vld [vmem:[%s142 + $0x368] sm:$0xff]
        %v255 = vld [vmem:[%s142 + $0x370] sm:$0xff]
        %v256 = vld [vmem:[%s142 + $0x378] sm:$0xff]
        %v257 = vld [vmem:[%s142 + $0x380] sm:$0xff]
        %v258 = vld [vmem:[%s142 + $0x388] sm:$0xff]
        %v259 = vld [vmem:[%s142 + $0x390] sm:$0xff]
        %v260 = vld [vmem:[%s142 + $0x398] sm:$0xff]
        %v261 = vld [vmem:[%s142 + $0x3a0] sm:$0xff]
        %v262 = vld [vmem:[%s142 + $0x3a8] sm:$0xff]
        %v263 = vld [vmem:[%s142 + $0x3b0] sm:$0xff]
        %v264 = vld [vmem:[%s142 + $0x3b8] sm:$0xff]
        %v265 = vld [vmem:[%s142 + $0x3c0] sm:$0xff]
        %v266 = vld [vmem:[%s142 + $0x3c8] sm:$0xff]
        %v267 = vld [vmem:[%s142 + $0x3d0] sm:$0xff]
        %v268 = vld [vmem:[%s142 + $0x3d8] sm:$0xff]
        %v269 = vld [vmem:[%s142 + $0x3e0] sm:$0xff]
        %v270 = vld [vmem:[%s142 + $0x3e8] sm:$0xff]
        %v271 = vld [vmem:[%s142 + $0x3f0] sm:$0xff]
        %v272 = vld [vmem:[%s142 + $0x3f8] sm:$0xff]
        %v273 = vld [vmem:[%s142 + $0x400] sm:$0xff]
        %v274 = vld [vmem:[%s142 + $0x408] sm:$0xff]
        %v275 = vld [vmem:[%s142 + $0x410] sm:$0xff]
        %v276 = vld [vmem:[%s142 + $0x418] sm:$0xff]
        %v277 = vld [vmem:[%s142 + $0x420] sm:$0xff]
        %v278 = vld [vmem:[%s142 + $0x428] sm:$0xff]
        %v279 = vld [vmem:[%s142 + $0x430] sm:$0xff]
        %v280 = vld [vmem:[%s142 + $0x438] sm:$0xff]
        %v281 = vld [vmem:[%s142 + $0x440] sm:$0xff]
        %v282 = vld [vmem:[%s142 + $0x448] sm:$0xff]
        %v283 = vld [vmem:[%s142 + $0x450] sm:$0xff]
        %v284 = vld [vmem:[%s142 + $0x458] sm:$0xff]
        %v285 = vld [vmem:[%s142 + $0x460] sm:$0xff]
        %v286 = vld [vmem:[%s142 + $0x468] sm:$0xff]
        %v287 = vld [vmem:[%s142 + $0x470] sm:$0xff]
        %v288 = vld [vmem:[%s142 + $0x478] sm:$0xff]
        %v289 = vld [vmem:[%s142 + $0x480] sm:$0xff]
        %v290 = vld [vmem:[%s142 + $0x488] sm:$0xff]
        %v291 = vld [vmem:[%s142 + $0x490] sm:$0xff]
        %v292 = vld [vmem:[%s142 + $0x498] sm:$0xff]
        %v293 = vld [vmem:[%s142 + $0x4a0] sm:$0xff]
        %v294 = vld [vmem:[%s142 + $0x4a8] sm:$0xff]
        %v295 = vld [vmem:[%s142 + $0x4b0] sm:$0xff]
        %v296 = vld [vmem:[%s142 + $0x4b8] sm:$0xff]
        %v297 = vld [vmem:[%s142 + $0x4c0] sm:$0xff]
        %v298 = vld [vmem:[%s142 + $0x4c8] sm:$0xff]
        %v299 = vld [vmem:[%s142 + $0x4d0] sm:$0xff]
        %v300 = vld [vmem:[%s142 + $0x4d8] sm:$0xff]
        %v301 = vld [vmem:[%s142 + $0x4e0] sm:$0xff]
        %v302 = vld [vmem:[%s142 + $0x4e8] sm:$0xff]
        %v303 = vld [vmem:[%s142 + $0x4f0] sm:$0xff]
        %v304 = vld [vmem:[%s142 + $0x4f8] sm:$0xff]
        %v305 = vld [vmem:[%s142 + $0x500] sm:$0xff]
        %v306 = vld [vmem:[%s142 + $0x508] sm:$0xff]
        %v307 = vld [vmem:[%s142 + $0x510] sm:$0xff]
        %v308 = vld [vmem:[%s142 + $0x518] sm:$0xff]
        %v309 = vld [vmem:[%s142 + $0x520] sm:$0xff]
        %v310 = vld [vmem:[%s142 + $0x528] sm:$0xff]
        %v311 = vld [vmem:[%s142 + $0x530] sm:$0xff]
        %v312 = vld [vmem:[%s142 + $0x538] sm:$0xff]
        %v313 = vld [vmem:[%s142 + $0x540] sm:$0xff]
        %v314 = vld [vmem:[%s142 + $0x548] sm:$0xff]
        %v315 = vld [vmem:[%s142 + $0x550] sm:$0xff]
        %v316 = vld [vmem:[%s142 + $0x558] sm:$0xff]
        %v317 = vld [vmem:[%s142 + $0x560] sm:$0xff]
        %v318 = vld [vmem:[%s142 + $0x568] sm:$0xff]
        %v319 = vld [vmem:[%s142 + $0x570] sm:$0xff]
        %v320 = vld [vmem:[%s142 + $0x578] sm:$0xff]
        %v321 = vld [vmem:[%s142 + $0x580] sm:$0xff]
        %v322 = vld [vmem:[%s142 + $0x588] sm:$0xff]
        %v323 = vld [vmem:[%s142 + $0x590] sm:$0xff]
        %v324 = vld [vmem:[%s142 + $0x598] sm:$0xff]
        %v325 = vld [vmem:[%s142 + $0x5a0] sm:$0xff]
        %v326 = vld [vmem:[%s142 + $0x5a8] sm:$0xff]
        %v327 = vld [vmem:[%s142 + $0x5b0] sm:$0xff]
        %v328 = vld [vmem:[%s142 + $0x5b8] sm:$0xff]
        %v329 = vld [vmem:[%s142 + $0x5c0] sm:$0xff]
        %v330 = vld [vmem:[%s142 + $0x5c8] sm:$0xff]
        %v331 = vld [vmem:[%s142 + $0x5d0] sm:$0xff]
        %v332 = vld [vmem:[%s142 + $0x5d8] sm:$0xff]
        %v333 = vld [vmem:[%s142 + $0x5e0] sm:$0xff]
        %v334 = vld [vmem:[%s142 + $0x5e8] sm:$0xff]
        %v335 = vld [vmem:[%s142 + $0x5f0] sm:$0xff]
        %v336 = vld [vmem:[%s142 + $0x5f8] sm:$0xff]
        %v337 = vld [vmem:[%s142 + $0x600] sm:$0xff]
        %v338 = vld [vmem:[%s142 + $0x608] sm:$0xff]
        %v339 = vld [vmem:[%s142 + $0x610] sm:$0xff]
        %v340 = vld [vmem:[%s142 + $0x618] sm:$0xff]
        %v341 = vld [vmem:[%s142 + $0x620] sm:$0xff]
        %v342 = vld [vmem:[%s142 + $0x628] sm:$0xff]
        %v343 = vld [vmem:[%s142 + $0x630] sm:$0xff]
        %v344 = vld [vmem:[%s142 + $0x638] sm:$0xff]
        %v345 = vld [vmem:[%s142 + $0x640] sm:$0xff]
        %v346 = vld [vmem:[%s142 + $0x648] sm:$0xff]
        %v347 = vld [vmem:[%s142 + $0x650] sm:$0xff]
        %v348 = vld [vmem:[%s142 + $0x658] sm:$0xff]
        %v349 = vld [vmem:[%s142 + $0x660] sm:$0xff]
        %v350 = vld [vmem:[%s142 + $0x668] sm:$0xff]
        %v351 = vld [vmem:[%s142 + $0x670] sm:$0xff]
        %v352 = vld [vmem:[%s142 + $0x678] sm:$0xff]
        %v353 = vld [vmem:[%s142 + $0x680] sm:$0xff]
        %v354 = vld [vmem:[%s142 + $0x688] sm:$0xff]
        %v355 = vld [vmem:[%s142 + $0x690] sm:$0xff]
        %v356 = vld [vmem:[%s142 + $0x698] sm:$0xff]
        %v357 = vld [vmem:[%s142 + $0x6a0] sm:$0xff]
        %v358 = vld [vmem:[%s142 + $0x6a8] sm:$0xff]
        %v359 = vld [vmem:[%s142 + $0x6b0] sm:$0xff]
        %v360 = vld [vmem:[%s142 + $0x6b8] sm:$0xff]
        %v361 = vld [vmem:[%s142 + $0x6c0] sm:$0xff]
        %v362 = vld [vmem:[%s142 + $0x6c8] sm:$0xff]
        %v363 = vld [vmem:[%s142 + $0x6d0] sm:$0xff]
        %v364 = vld [vmem:[%s142 + $0x6d8] sm:$0xff]
        %v365 = vld [vmem:[%s142 + $0x6e0] sm:$0xff]
        %v366 = vld [vmem:[%s142 + $0x6e8] sm:$0xff]
        %v367 = vld [vmem:[%s142 + $0x6f0] sm:$0xff]
        %v368 = vld [vmem:[%s142 + $0x6f8] sm:$0xff]
        %v369 = vld [vmem:[%s142 + $0x700] sm:$0xff]
        %v370 = vld [vmem:[%s142 + $0x708] sm:$0xff]
        %v371 = vld [vmem:[%s142 + $0x710] sm:$0xff]
        %v372 = vld [vmem:[%s142 + $0x718] sm:$0xff]
        %v373 = vld [vmem:[%s142 + $0x720] sm:$0xff]
        %v374 = vld [vmem:[%s142 + $0x728] sm:$0xff]
        %v375 = vld [vmem:[%s142 + $0x730] sm:$0xff]
        %v376 = vld [vmem:[%s142 + $0x738] sm:$0xff]
        %v377 = vld [vmem:[%s142 + $0x740] sm:$0xff]
        %v378 = vld [vmem:[%s142 + $0x748] sm:$0xff]
        %v379 = vld [vmem:[%s142 + $0x750] sm:$0xff]
        %v380 = vld [vmem:[%s142 + $0x758] sm:$0xff]
        %v381 = vld [vmem:[%s142 + $0x760] sm:$0xff]
        %v382 = vld [vmem:[%s142 + $0x768] sm:$0xff]
        %v383 = vld [vmem:[%s142 + $0x770] sm:$0xff]
        %v384 = vld [vmem:[%s142 + $0x778] sm:$0xff]
        %v385 = vld [vmem:[%s142 + $0x780] sm:$0xff]
        %v386 = vld [vmem:[%s142 + $0x788] sm:$0xff]
        %v387 = vld [vmem:[%s142 + $0x790] sm:$0xff]
        %v388 = vld [vmem:[%s142 + $0x798] sm:$0xff]
        %v389 = vld [vmem:[%s142 + $0x7a0] sm:$0xff]
        %v390 = vld [vmem:[%s142 + $0x7a8] sm:$0xff]
        %v391 = vld [vmem:[%s142 + $0x7b0] sm:$0xff]
        %v392 = vld [vmem:[%s142 + $0x7b8] sm:$0xff]
        %v393 = vld [vmem:[%s142 + $0x7c0] sm:$0xff]
        %v394 = vld [vmem:[%s142 + $0x7c8] sm:$0xff]
        %v395 = vld [vmem:[%s142 + $0x7d0] sm:$0xff]
        %v396 = vld [vmem:[%s142 + $0x7d8] sm:$0xff]
        %v397 = vld [vmem:[%s142 + $0x7e0] sm:$0xff]
        %v398 = vld [vmem:[%s142 + $0x7e8] sm:$0xff]
        %v399 = vld [vmem:[%s142 + $0x7f0] sm:$0xff]
        %v400 = vld [vmem:[%s142 + $0x7f8] sm:$0xff]
        %v401 = vld [vmem:[%s142 + $0x800] sm:$0xff]
        %v402 = vld [vmem:[%s142 + $0x808] sm:$0xff]
        %v403 = vld [vmem:[%s142 + $0x810] sm:$0xff]
        %v404 = vld [vmem:[%s142 + $0x818] sm:$0xff]
        %v405 = vld [vmem:[%s142 + $0x820] sm:$0xff]
        %v406 = vld [vmem:[%s142 + $0x828] sm:$0xff]
        %v407 = vld [vmem:[%s142 + $0x830] sm:$0xff]
        %v408 = vld [vmem:[%s142 + $0x838] sm:$0xff]
        %v409 = vld [vmem:[%s142 + $0x840] sm:$0xff]
        %v410 = vld [vmem:[%s142 + $0x848] sm:$0xff]
        %v411 = vld [vmem:[%s142 + $0x850] sm:$0xff]
        %v412 = vld [vmem:[%s142 + $0x858] sm:$0xff]
        %v413 = vld [vmem:[%s142 + $0x860] sm:$0xff]
        %v414 = vld [vmem:[%s142 + $0x868] sm:$0xff]
        %v415 = vld [vmem:[%s142 + $0x870] sm:$0xff]
        %v416 = vld [vmem:[%s142 + $0x878] sm:$0xff]
        %v417 = vld [vmem:[%s142 + $0x880] sm:$0xff]
        %v418 = vld [vmem:[%s142 + $0x888] sm:$0xff]
        %v419 = vld [vmem:[%s142 + $0x890] sm:$0xff]
        %v420 = vld [vmem:[%s142 + $0x898] sm:$0xff]
        %v421 = vld [vmem:[%s142 + $0x8a0] sm:$0xff]
        %v422 = vld [vmem:[%s142 + $0x8a8] sm:$0xff]
        %v423 = vld [vmem:[%s142 + $0x8b0] sm:$0xff]
        %v424 = vld [vmem:[%s142 + $0x8b8] sm:$0xff]
        %v425 = vld [vmem:[%s142 + $0x8c0] sm:$0xff]
        %v426 = vld [vmem:[%s142 + $0x8c8] sm:$0xff]
        %v427 = vld [vmem:[%s142 + $0x8d0] sm:$0xff]
        %v428 = vld [vmem:[%s142 + $0x8d8] sm:$0xff]
        %v429 = vld [vmem:[%s142 + $0x8e0] sm:$0xff]
        %v430 = vld [vmem:[%s142 + $0x8e8] sm:$0xff]
        %v431 = vld [vmem:[%s142 + $0x8f0] sm:$0xff]
        %v432 = vld [vmem:[%s142 + $0x8f8] sm:$0xff]
        %v433 = vld [vmem:[%s142 + $0x900] sm:$0xff]
        %v434 = vld [vmem:[%s142 + $0x908] sm:$0xff]
        %v435 = vld [vmem:[%s142 + $0x910] sm:$0xff]
        %v436 = vld [vmem:[%s142 + $0x918] sm:$0xff]
        %v437 = vld [vmem:[%s142 + $0x920] sm:$0xff]
        %v438 = vld [vmem:[%s142 + $0x928] sm:$0xff]
        %v439 = vld [vmem:[%s142 + $0x930] sm:$0xff]
        %v440 = vld [vmem:[%s142 + $0x938] sm:$0xff]
        %v441 = vld [vmem:[%s142 + $0x940] sm:$0xff]
        %v442 = vld [vmem:[%s142 + $0x948] sm:$0xff]
        %v443 = vld [vmem:[%s142 + $0x950] sm:$0xff]
        %v444 = vld [vmem:[%s142 + $0x958] sm:$0xff]
        %v445 = vld [vmem:[%s142 + $0x960] sm:$0xff]
        %v446 = vld [vmem:[%s142 + $0x968] sm:$0xff]
        %v447 = vld [vmem:[%s142 + $0x970] sm:$0xff]
        %v448 = vld [vmem:[%s142 + $0x978] sm:$0xff]
        %v449 = vld [vmem:[%s142 + $0x980] sm:$0xff]
        %v450 = vld [vmem:[%s142 + $0x988] sm:$0xff]
        %v451 = vld [vmem:[%s142 + $0x990] sm:$0xff]
        %v452 = vld [vmem:[%s142 + $0x998] sm:$0xff]
        %v453 = vld [vmem:[%s142 + $0x9a0] sm:$0xff]
        %v454 = vld [vmem:[%s142 + $0x9a8] sm:$0xff]
        %v455 = vld [vmem:[%s142 + $0x9b0] sm:$0xff]
        %v456 = vld [vmem:[%s142 + $0x9b8] sm:$0xff]
        %v457 = vld [vmem:[%s142 + $0x9c0] sm:$0xff]
        %v458 = vld [vmem:[%s142 + $0x9c8] sm:$0xff]
        %v459 = vld [vmem:[%s142 + $0x9d0] sm:$0xff]
        %v460 = vld [vmem:[%s142 + $0x9d8] sm:$0xff]
        %v461 = vld [vmem:[%s142 + $0x9e0] sm:$0xff]
        %v462 = vld [vmem:[%s142 + $0x9e8] sm:$0xff]
        %v463 = vld [vmem:[%s142 + $0x9f0] sm:$0xff]
        %v464 = vld [vmem:[%s142 + $0x9f8] sm:$0xff]
        %v465 = vld [vmem:[%s142 + $0xa00] sm:$0xff]
        %v466 = vld [vmem:[%s142 + $0xa08] sm:$0xff]
        %v467 = vld [vmem:[%s142 + $0xa10] sm:$0xff]
        %v468 = vld [vmem:[%s142 + $0xa18] sm:$0xff]
        %v469 = vld [vmem:[%s142 + $0xa20] sm:$0xff]
        %v470 = vld [vmem:[%s142 + $0xa28] sm:$0xff]
        %v471 = vld [vmem:[%s142 + $0xa30] sm:$0xff]
        %v472 = vld [vmem:[%s142 + $0xa38] sm:$0xff]
        %v473 = vld [vmem:[%s142 + $0xa40] sm:$0xff]
        %v474 = vld [vmem:[%s142 + $0xa48] sm:$0xff]
        %v475 = vld [vmem:[%s142 + $0xa50] sm:$0xff]
        %v476 = vld [vmem:[%s142 + $0xa58] sm:$0xff]
        %v477 = vld [vmem:[%s142 + $0xa60] sm:$0xff]
        %v478 = vld [vmem:[%s142 + $0xa68] sm:$0xff]
        %v479 = vld [vmem:[%s142 + $0xa70] sm:$0xff]
        %v480 = vld [vmem:[%s142 + $0xa78] sm:$0xff]
        %v481 = vld [vmem:[%s142 + $0xa80] sm:$0xff]
        %v482 = vld [vmem:[%s142 + $0xa88] sm:$0xff]
        %v483 = vld [vmem:[%s142 + $0xa90] sm:$0xff]
        %v484 = vld [vmem:[%s142 + $0xa98] sm:$0xff]
        %v485 = vld [vmem:[%s142 + $0xaa0] sm:$0xff]
        %v486 = vld [vmem:[%s142 + $0xaa8] sm:$0xff]
        %v487 = vld [vmem:[%s142 + $0xab0] sm:$0xff]
        %v488 = vld [vmem:[%s142 + $0xab8] sm:$0xff]
        %v489 = vld [vmem:[%s142 + $0xac0] sm:$0xff]
        %v490 = vld [vmem:[%s142 + $0xac8] sm:$0xff]
        %v491 = vld [vmem:[%s142 + $0xad0] sm:$0xff]
        %v492 = vld [vmem:[%s142 + $0xad8] sm:$0xff]
        %v493 = vld [vmem:[%s142 + $0xae0] sm:$0xff]
        %v494 = vld [vmem:[%s142 + $0xae8] sm:$0xff]
        %v495 = vld [vmem:[%s142 + $0xaf0] sm:$0xff]
        %v496 = vld [vmem:[%s142 + $0xaf8] sm:$0xff]
        %v497 = vld [vmem:[%s142 + $0xb00] sm:$0xff]
        %v498 = vld [vmem:[%s142 + $0xb08] sm:$0xff]
        %v499 = vld [vmem:[%s142 + $0xb10] sm:$0xff]
        %v500 = vld [vmem:[%s142 + $0xb18] sm:$0xff]
        %v501 = vld [vmem:[%s142 + $0xb20] sm:$0xff]
        %v502 = vld [vmem:[%s142 + $0xb28] sm:$0xff]
        %v503 = vld [vmem:[%s142 + $0xb30] sm:$0xff]
        %v504 = vld [vmem:[%s142 + $0xb38] sm:$0xff]
        %v505 = vld [vmem:[%s142 + $0xb40] sm:$0xff]
        %v506 = vld [vmem:[%s142 + $0xb48] sm:$0xff]
        %v507 = vld [vmem:[%s142 + $0xb50] sm:$0xff]
        %v508 = vld [vmem:[%s142 + $0xb58] sm:$0xff]
        %v509 = vld [vmem:[%s142 + $0xb60] sm:$0xff]
        %v510 = vld [vmem:[%s142 + $0xb68] sm:$0xff]
        %v511 = vld [vmem:[%s142 + $0xb70] sm:$0xff]
        %v512 = vld [vmem:[%s142 + $0xb78] sm:$0xff]
        %v513 = vld [vmem:[%s142 + $0xb80] sm:$0xff]
        %v514 = vld [vmem:[%s142 + $0xb88] sm:$0xff]
        %v515 = vld [vmem:[%s142 + $0xb90] sm:$0xff]
        %v516 = vld [vmem:[%s142 + $0xb98] sm:$0xff]
        %v517 = vld [vmem:[%s142 + $0xba0] sm:$0xff]
        %v518 = vld [vmem:[%s142 + $0xba8] sm:$0xff]
        %v519 = vld [vmem:[%s142 + $0xbb0] sm:$0xff]
        %v520 = vld [vmem:[%s142 + $0xbb8] sm:$0xff]
        %v521 = vld [vmem:[%s142 + $0xbc0] sm:$0xff]
        %v522 = vld [vmem:[%s142 + $0xbc8] sm:$0xff]
        %v523 = vld [vmem:[%s142 + $0xbd0] sm:$0xff]
        %v524 = vld [vmem:[%s142 + $0xbd8] sm:$0xff]
        %v525 = vld [vmem:[%s142 + $0xbe0] sm:$0xff]
        %v526 = vld [vmem:[%s142 + $0xbe8] sm:$0xff]
        %v527 = vld [vmem:[%s142 + $0xbf0] sm:$0xff]
        %v528 = vld [vmem:[%s142 + $0xbf8] sm:$0xff]
        %v529 = vld [vmem:[%s142 + $0xc00] sm:$0xff]
        %v530 = vld [vmem:[%s142 + $0xc08] sm:$0xff]
        %v531 = vld [vmem:[%s142 + $0xc10] sm:$0xff]
        %v532 = vld [vmem:[%s142 + $0xc18] sm:$0xff]
        %v533 = vld [vmem:[%s142 + $0xc20] sm:$0xff]
        %v534 = vld [vmem:[%s142 + $0xc28] sm:$0xff]
        %v535 = vld [vmem:[%s142 + $0xc30] sm:$0xff]
        %v536 = vld [vmem:[%s142 + $0xc38] sm:$0xff]
        %v537 = vld [vmem:[%s142 + $0xc40] sm:$0xff]
        %v538 = vld [vmem:[%s142 + $0xc48] sm:$0xff]
        %v539 = vld [vmem:[%s142 + $0xc50] sm:$0xff]
        %v540 = vld [vmem:[%s142 + $0xc58] sm:$0xff]
        %v541 = vld [vmem:[%s142 + $0xc60] sm:$0xff]
        %v542 = vld [vmem:[%s142 + $0xc68] sm:$0xff]
        %v543 = vld [vmem:[%s142 + $0xc70] sm:$0xff]
        %v544 = vld [vmem:[%s142 + $0xc78] sm:$0xff]
        %v545 = vld [vmem:[%s142 + $0xc80] sm:$0xff]
        %v546 = vld [vmem:[%s142 + $0xc88] sm:$0xff]
        %v547 = vld [vmem:[%s142 + $0xc90] sm:$0xff]
        %v548 = vld [vmem:[%s142 + $0xc98] sm:$0xff]
        %v549 = vld [vmem:[%s142 + $0xca0] sm:$0xff]
        %v550 = vld [vmem:[%s142 + $0xca8] sm:$0xff]
        %v551 = vld [vmem:[%s142 + $0xcb0] sm:$0xff]
        %v552 = vld [vmem:[%s142 + $0xcb8] sm:$0xff]
        %v553 = vld [vmem:[%s142 + $0xcc0] sm:$0xff]
        %v554 = vld [vmem:[%s142 + $0xcc8] sm:$0xff]
        %v555 = vld [vmem:[%s142 + $0xcd0] sm:$0xff]
        %v556 = vld [vmem:[%s142 + $0xcd8] sm:$0xff]
        %v557 = vld [vmem:[%s142 + $0xce0] sm:$0xff]
        %v558 = vld [vmem:[%s142 + $0xce8] sm:$0xff]
        %v559 = vld [vmem:[%s142 + $0xcf0] sm:$0xff]
        %v560 = vld [vmem:[%s142 + $0xcf8] sm:$0xff]
        %v561 = vld [vmem:[%s142 + $0xd00] sm:$0xff]
        %v562 = vld [vmem:[%s142 + $0xd08] sm:$0xff]
        %v563 = vld [vmem:[%s142 + $0xd10] sm:$0xff]
        %v564 = vld [vmem:[%s142 + $0xd18] sm:$0xff]
        %v565 = vld [vmem:[%s142 + $0xd20] sm:$0xff]
        %v566 = vld [vmem:[%s142 + $0xd28] sm:$0xff]
        %v567 = vld [vmem:[%s142 + $0xd30] sm:$0xff]
        %v568 = vld [vmem:[%s142 + $0xd38] sm:$0xff]
        %v569 = vld [vmem:[%s142 + $0xd40] sm:$0xff]
        %v570 = vld [vmem:[%s142 + $0xd48] sm:$0xff]
        %v571 = vld [vmem:[%s142 + $0xd50] sm:$0xff]
        %v572 = vld [vmem:[%s142 + $0xd58] sm:$0xff]
        %v573 = vld [vmem:[%s142 + $0xd60] sm:$0xff]
        %v574 = vld [vmem:[%s142 + $0xd68] sm:$0xff]
        %v575 = vld [vmem:[%s142 + $0xd70] sm:$0xff]
        %v576 = vld [vmem:[%s142 + $0xd78] sm:$0xff]
        %v577 = vld [vmem:[%s142 + $0xd80] sm:$0xff]
        %v578 = vld [vmem:[%s142 + $0xd88] sm:$0xff]
        %v579 = vld [vmem:[%s142 + $0xd90] sm:$0xff]
        %v580 = vld [vmem:[%s142 + $0xd98] sm:$0xff]
        %v581 = vld [vmem:[%s142 + $0xda0] sm:$0xff]
        %v582 = vld [vmem:[%s142 + $0xda8] sm:$0xff]
        %v583 = vld [vmem:[%s142 + $0xdb0] sm:$0xff]
        %v584 = vld [vmem:[%s142 + $0xdb8] sm:$0xff]
        %v585 = vld [vmem:[%s142 + $0xdc0] sm:$0xff]
        %v586 = vld [vmem:[%s142 + $0xdc8] sm:$0xff]
        %v587 = vld [vmem:[%s142 + $0xdd0] sm:$0xff]
        %v588 = vld [vmem:[%s142 + $0xdd8] sm:$0xff]
        %v589 = vld [vmem:[%s142 + $0xde0] sm:$0xff]
        %v590 = vld [vmem:[%s142 + $0xde8] sm:$0xff]
        %v591 = vld [vmem:[%s142 + $0xdf0] sm:$0xff]
        %v592 = vld [vmem:[%s142 + $0xdf8] sm:$0xff]
        %v593 = vld [vmem:[%s142 + $0xe00] sm:$0xff]
        %v594 = vld [vmem:[%s142 + $0xe08] sm:$0xff]
        %v595 = vld [vmem:[%s142 + $0xe10] sm:$0xff]
        %v596 = vld [vmem:[%s142 + $0xe18] sm:$0xff]
        %v597 = vld [vmem:[%s142 + $0xe20] sm:$0xff]
        %v598 = vld [vmem:[%s142 + $0xe28] sm:$0xff]
        %v599 = vld [vmem:[%s142 + $0xe30] sm:$0xff]
        %v600 = vld [vmem:[%s142 + $0xe38] sm:$0xff]
        %v601 = vld [vmem:[%s142 + $0xe40] sm:$0xff]
        %v602 = vld [vmem:[%s142 + $0xe48] sm:$0xff]
        %v603 = vld [vmem:[%s142 + $0xe50] sm:$0xff]
        %v604 = vld [vmem:[%s142 + $0xe58] sm:$0xff]
        %v605 = vld [vmem:[%s142 + $0xe60] sm:$0xff]
        %v606 = vld [vmem:[%s142 + $0xe68] sm:$0xff]
        %v607 = vld [vmem:[%s142 + $0xe70] sm:$0xff]
        %v608 = vld [vmem:[%s142 + $0xe78] sm:$0xff]
        %v609 = vld [vmem:[%s142 + $0xe80] sm:$0xff]
        %v610 = vld [vmem:[%s142 + $0xe88] sm:$0xff]
        %v611 = vld [vmem:[%s142 + $0xe90] sm:$0xff]
        %v612 = vld [vmem:[%s142 + $0xe98] sm:$0xff]
        %v613 = vld [vmem:[%s142 + $0xea0] sm:$0xff]
        %v614 = vld [vmem:[%s142 + $0xea8] sm:$0xff]
        %v615 = vld [vmem:[%s142 + $0xeb0] sm:$0xff]
        %v616 = vld [vmem:[%s142 + $0xeb8] sm:$0xff]
        %v617 = vld [vmem:[%s142 + $0xec0] sm:$0xff]
        %v618 = vld [vmem:[%s142 + $0xec8] sm:$0xff]
        %v619 = vld [vmem:[%s142 + $0xed0] sm:$0xff]
        %v620 = vld [vmem:[%s142 + $0xed8] sm:$0xff]
        %v621 = vld [vmem:[%s142 + $0xee0] sm:$0xff]
        %v622 = vld [vmem:[%s142 + $0xee8] sm:$0xff]
        %v623 = vld [vmem:[%s142 + $0xef0] sm:$0xff]
        %v624 = vld [vmem:[%s142 + $0xef8] sm:$0xff]
        %v625 = vld [vmem:[%s142 + $0xf00] sm:$0xff]
        %v626 = vld [vmem:[%s142 + $0xf08] sm:$0xff]
        %v627 = vld [vmem:[%s142 + $0xf10] sm:$0xff]
        %v628 = vld [vmem:[%s142 + $0xf18] sm:$0xff]
        %v629 = vld [vmem:[%s142 + $0xf20] sm:$0xff]
        %v630 = vld [vmem:[%s142 + $0xf28] sm:$0xff]
        %v631 = vld [vmem:[%s142 + $0xf30] sm:$0xff]
        %v632 = vld [vmem:[%s142 + $0xf38] sm:$0xff]
        %v633 = vld [vmem:[%s142 + $0xf40] sm:$0xff]
        %v634 = vld [vmem:[%s142 + $0xf48] sm:$0xff]
        %v635 = vld [vmem:[%s142 + $0xf50] sm:$0xff]
        %v636 = vld [vmem:[%s142 + $0xf58] sm:$0xff]
        %v637 = vld [vmem:[%s142 + $0xf60] sm:$0xff]
        %v638 = vld [vmem:[%s142 + $0xf68] sm:$0xff]
        %v639 = vld [vmem:[%s142 + $0xf70] sm:$0xff]
        %v640 = vld [vmem:[%s142 + $0xf78] sm:$0xff]
        %v641 = vld [vmem:[%s142 + $0xf80] sm:$0xff]
        %v642 = vld [vmem:[%s142 + $0xf88] sm:$0xff]
        %v643 = vld [vmem:[%s142 + $0xf90] sm:$0xff]
        %v644 = vld [vmem:[%s142 + $0xf98] sm:$0xff]
        %v645 = vld [vmem:[%s142 + $0xfa0] sm:$0xff]
        %v646 = vld [vmem:[%s142 + $0xfa8] sm:$0xff]
        %v647 = vld [vmem:[%s142 + $0xfb0] sm:$0xff]
        %v648 = vld [vmem:[%s142 + $0xfb8] sm:$0xff]
        %v649 = vld [vmem:[%s142 + $0xfc0] sm:$0xff]
        %v650 = vld [vmem:[%s142 + $0xfc8] sm:$0xff]
        %v651 = vld [vmem:[%s142 + $0xfd0] sm:$0xff]
        %v652 = vld [vmem:[%s142 + $0xfd8] sm:$0xff]
        %v653 = vld [vmem:[%s142 + $0xfe0] sm:$0xff]
        %v654 = vld [vmem:[%s142 + $0xfe8] sm:$0xff]
        %v655 = vld [vmem:[%s142 + $0xff0] sm:$0xff]
        %v656 = vld [vmem:[%s142 + $0xff8] sm:$0xff]
        %v657 = vld [vmem:[%s142 + $0x1000] sm:$0xff]
        %v658 = vld [vmem:[%s142 + $0x1008] sm:$0xff]
        %v659 = vld [vmem:[%s142 + $0x1010] sm:$0xff]
        %v660 = vld [vmem:[%s142 + $0x1018] sm:$0xff]
        %v661 = vld [vmem:[%s142 + $0x1020] sm:$0xff]
        %v662 = vld [vmem:[%s142 + $0x1028] sm:$0xff]
        %v663 = vld [vmem:[%s142 + $0x1030] sm:$0xff]
        %v664 = vld [vmem:[%s142 + $0x1038] sm:$0xff]
        %v665 = vld [vmem:[%s142 + $0x1040] sm:$0xff]
        %v666 = vld [vmem:[%s142 + $0x1048] sm:$0xff]
        %v667 = vld [vmem:[%s142 + $0x1050] sm:$0xff]
        %v668 = vld [vmem:[%s142 + $0x1058] sm:$0xff]
        %v669 = vld [vmem:[%s142 + $0x1060] sm:$0xff]
        %v670 = vld [vmem:[%s142 + $0x1068] sm:$0xff]
        %v671 = vld [vmem:[%s142 + $0x1070] sm:$0xff]
        %v672 = vld [vmem:[%s142 + $0x1078] sm:$0xff]
        %v673 = vld [vmem:[%s142 + $0x1080] sm:$0xff]
        %v674 = vld [vmem:[%s142 + $0x1088] sm:$0xff]
        %v675 = vld [vmem:[%s142 + $0x1090] sm:$0xff]
        %v676 = vld [vmem:[%s142 + $0x1098] sm:$0xff]
        %v677 = vld [vmem:[%s142 + $0x10a0] sm:$0xff]
        %v678 = vld [vmem:[%s142 + $0x10a8] sm:$0xff]
        %v679 = vld [vmem:[%s142 + $0x10b0] sm:$0xff]
        %v680 = vld [vmem:[%s142 + $0x10b8] sm:$0xff]
        %v681 = vld [vmem:[%s142 + $0x10c0] sm:$0xff]
        %v682 = vld [vmem:[%s142 + $0x10c8] sm:$0xff]
        %v683 = vld [vmem:[%s142 + $0x10d0] sm:$0xff]
        %v684 = vld [vmem:[%s142 + $0x10d8] sm:$0xff]
        %v685 = vld [vmem:[%s142 + $0x10e0] sm:$0xff]
        %v686 = vld [vmem:[%s142 + $0x10e8] sm:$0xff]
        %v687 = vld [vmem:[%s142 + $0x10f0] sm:$0xff]
        %v688 = vld [vmem:[%s142 + $0x10f8] sm:$0xff]
        %v689 = vld [vmem:[%s142 + $0x1100] sm:$0xff]
        %v690 = vld [vmem:[%s142 + $0x1108] sm:$0xff]
        %v691 = vld [vmem:[%s142 + $0x1110] sm:$0xff]
        %v692 = vld [vmem:[%s142 + $0x1118] sm:$0xff]
        %v693 = vld [vmem:[%s142 + $0x1120] sm:$0xff]
        %v694 = vld [vmem:[%s142 + $0x1128] sm:$0xff]
        %v695 = vld [vmem:[%s142 + $0x1130] sm:$0xff]
        %v696 = vld [vmem:[%s142 + $0x1138] sm:$0xff]
        %v697 = vld [vmem:[%s142 + $0x1140] sm:$0xff]
        %v698 = vld [vmem:[%s142 + $0x1148] sm:$0xff]
        %v699 = vld [vmem:[%s142 + $0x1150] sm:$0xff]
        %v700 = vld [vmem:[%s142 + $0x1158] sm:$0xff]
        %v701 = vld [vmem:[%s142 + $0x1160] sm:$0xff]
        %v702 = vld [vmem:[%s142 + $0x1168] sm:$0xff]
        %v703 = vld [vmem:[%s142 + $0x1170] sm:$0xff]
        %v704 = vld [vmem:[%s142 + $0x1178] sm:$0xff]
        %v705 = vld [vmem:[%s142 + $0x1180] sm:$0xff]
        %v706 = vld [vmem:[%s142 + $0x1188] sm:$0xff]
        %v707 = vld [vmem:[%s142 + $0x1190] sm:$0xff]
        %v708 = vld [vmem:[%s142 + $0x1198] sm:$0xff]
        %v709 = vld [vmem:[%s142 + $0x11a0] sm:$0xff]
        %v710 = vld [vmem:[%s142 + $0x11a8] sm:$0xff]
        %v711 = vld [vmem:[%s142 + $0x11b0] sm:$0xff]
        %v712 = vld [vmem:[%s142 + $0x11b8] sm:$0xff]
        %v713 = vld [vmem:[%s142 + $0x11c0] sm:$0xff]
        %v714 = vld [vmem:[%s142 + $0x11c8] sm:$0xff]
        %v715 = vld [vmem:[%s142 + $0x11d0] sm:$0xff]
        %v716 = vld [vmem:[%s142 + $0x11d8] sm:$0xff]
        %v717 = vld [vmem:[%s142 + $0x11e0] sm:$0xff]
        %v718 = vld [vmem:[%s142 + $0x11e8] sm:$0xff]
        %v719 = vld [vmem:[%s142 + $0x11f0] sm:$0xff]
        %v720 = vld [vmem:[%s142 + $0x11f8] sm:$0xff]
        %v721 = vld [vmem:[%s142 + $0x1200] sm:$0xff]
        %v722 = vld [vmem:[%s142 + $0x1208] sm:$0xff]
        %v723 = vld [vmem:[%s142 + $0x1210] sm:$0xff]
        %v724 = vld [vmem:[%s142 + $0x1218] sm:$0xff]
        %v725 = vld [vmem:[%s142 + $0x1220] sm:$0xff]
        %v726 = vld [vmem:[%s142 + $0x1228] sm:$0xff]
        %v727 = vld [vmem:[%s142 + $0x1230] sm:$0xff]
        %v728 = vld [vmem:[%s142 + $0x1238] sm:$0xff]
        %v729 = vld [vmem:[%s142 + $0x1240] sm:$0xff]
        %v730 = vld [vmem:[%s142 + $0x1248] sm:$0xff]
        %v731 = vld [vmem:[%s142 + $0x1250] sm:$0xff]
        %v732 = vld [vmem:[%s142 + $0x1258] sm:$0xff]
        %v733 = vld [vmem:[%s142 + $0x1260] sm:$0xff]
        %v734 = vld [vmem:[%s142 + $0x1268] sm:$0xff]
        %v735 = vld [vmem:[%s142 + $0x1270] sm:$0xff]
        %v736 = vld [vmem:[%s142 + $0x1278] sm:$0xff]
        %v737 = vld [vmem:[%s142 + $0x1280] sm:$0xff]
        %v738 = vld [vmem:[%s142 + $0x1288] sm:$0xff]
        %v739 = vld [vmem:[%s142 + $0x1290] sm:$0xff]
        %v740 = vld [vmem:[%s142 + $0x1298] sm:$0xff]
        %v741 = vld [vmem:[%s142 + $0x12a0] sm:$0xff]
        %v742 = vld [vmem:[%s142 + $0x12a8] sm:$0xff]
        %v743 = vld [vmem:[%s142 + $0x12b0] sm:$0xff]
        %v744 = vld [vmem:[%s142 + $0x12b8] sm:$0xff]
        %v745 = vld [vmem:[%s142 + $0x12c0] sm:$0xff]
        %v746 = vld [vmem:[%s142 + $0x12c8] sm:$0xff]
        %v747 = vld [vmem:[%s142 + $0x12d0] sm:$0xff]
        %v748 = vld [vmem:[%s142 + $0x12d8] sm:$0xff]
        %v749 = vld [vmem:[%s142 + $0x12e0] sm:$0xff]
        %v750 = vld [vmem:[%s142 + $0x12e8] sm:$0xff]
        %v751 = vld [vmem:[%s142 + $0x12f0] sm:$0xff]
        %v752 = vld [vmem:[%s142 + $0x12f8] sm:$0xff]
        %v753 = vld [vmem:[%s142 + $0x1300] sm:$0xff]
        %v754 = vld [vmem:[%s142 + $0x1308] sm:$0xff]
        %v755 = vld [vmem:[%s142 + $0x1310] sm:$0xff]
        %v756 = vld [vmem:[%s142 + $0x1318] sm:$0xff]
        %v757 = vld [vmem:[%s142 + $0x1320] sm:$0xff]
        %v758 = vld [vmem:[%s142 + $0x1328] sm:$0xff]
        %v759 = vld [vmem:[%s142 + $0x1330] sm:$0xff]
        %v760 = vld [vmem:[%s142 + $0x1338] sm:$0xff]
        %v761 = vld [vmem:[%s142 + $0x1340] sm:$0xff]
        %v762 = vld [vmem:[%s142 + $0x1348] sm:$0xff]
        %v763 = vld [vmem:[%s142 + $0x1350] sm:$0xff]
        %v764 = vld [vmem:[%s142 + $0x1358] sm:$0xff]
        %v765 = vld [vmem:[%s142 + $0x1360] sm:$0xff]
        %v766 = vld [vmem:[%s142 + $0x1368] sm:$0xff]
        %v767 = vld [vmem:[%s142 + $0x1370] sm:$0xff]
        %v768 = vld [vmem:[%s142 + $0x1378] sm:$0xff]
        %v769 = vld [vmem:[%s142 + $0x1380] sm:$0xff]
        %v770 = vld [vmem:[%s142 + $0x1388] sm:$0xff]
        %v771 = vld [vmem:[%s142 + $0x1390] sm:$0xff]
        %v772 = vld [vmem:[%s142 + $0x1398] sm:$0xff]
        %v773 = vld [vmem:[%s142 + $0x13a0] sm:$0xff]
        %v774 = vld [vmem:[%s142 + $0x13a8] sm:$0xff]
        %v775 = vld [vmem:[%s142 + $0x13b0] sm:$0xff]
        %v776 = vld [vmem:[%s142 + $0x13b8] sm:$0xff]
        %v777 = vld [vmem:[%s142 + $0x13c0] sm:$0xff]
        %v778 = vld [vmem:[%s142 + $0x13c8] sm:$0xff]
        %v779 = vld [vmem:[%s142 + $0x13d0] sm:$0xff]
        %v780 = vld [vmem:[%s142 + $0x13d8] sm:$0xff]
        %v781 = vld [vmem:[%s142 + $0x13e0] sm:$0xff]
        %v782 = vld [vmem:[%s142 + $0x13e8] sm:$0xff]
        %v783 = vld [vmem:[%s142 + $0x13f0] sm:$0xff]
        %v784 = vld [vmem:[%s142 + $0x13f8] sm:$0xff]
        %vm785 = vcmask 523264
        %v786 = vsel %vm785, %v145, 0.0
        %v787 = vrot.slane %v786, 4
        %v788 = vadd.f32 %v786, %v787
        %v789 = vrot.slane %v788, 2
        %v790 = vadd.f32 %v788, %v789
        %v791 = vrot.slane %v790, 1
        %v792 = vadd.f32 %v790, %v791
        %v793 = vsel %vm785, %v146, 0.0
        %v794 = vrot.slane %v793, 4
        %v795 = vadd.f32 %v793, %v794
        %v796 = vrot.slane %v795, 2
        %v797 = vadd.f32 %v795, %v796
        %v798 = vrot.slane %v797, 1
        %v799 = vadd.f32 %v797, %v798
        %v800 = vsel %vm785, %v147, 0.0
        %v801 = vrot.slane %v800, 4
        %v802 = vadd.f32 %v800, %v801
        %v803 = vrot.slane %v802, 2
        %v804 = vadd.f32 %v802, %v803
        %v805 = vrot.slane %v804, 1
        %v806 = vadd.f32 %v804, %v805
        %v807 = vsel %vm785, %v148, 0.0
        %v808 = vrot.slane %v807, 4
        %v809 = vadd.f32 %v807, %v808
        %v810 = vrot.slane %v809, 2
        %v811 = vadd.f32 %v809, %v810
        %v812 = vrot.slane %v811, 1
        %v813 = vadd.f32 %v811, %v812
        %v814 = vsel %vm785, %v149, 0.0
        %v815 = vrot.slane %v814, 4
        %v816 = vadd.f32 %v814, %v815
        %v817 = vrot.slane %v816, 2
        %v818 = vadd.f32 %v816, %v817
        %v819 = vrot.slane %v818, 1
        %v820 = vadd.f32 %v818, %v819
        %v821 = vsel %vm785, %v150, 0.0
        %v822 = vrot.slane %v821, 4
        %v823 = vadd.f32 %v821, %v822
        %v824 = vrot.slane %v823, 2
        %v825 = vadd.f32 %v823, %v824
        %v826 = vrot.slane %v825, 1
        %v827 = vadd.f32 %v825, %v826
        %v828 = vsel %vm785, %v151, 0.0
        %v829 = vrot.slane %v828, 4
        %v830 = vadd.f32 %v828, %v829
        %v831 = vrot.slane %v830, 2
        %v832 = vadd.f32 %v830, %v831
        %v833 = vrot.slane %v832, 1
        %v834 = vadd.f32 %v832, %v833
        %v835 = vsel %vm785, %v152, 0.0
        %v836 = vrot.slane %v835, 4
        %v837 = vadd.f32 %v835, %v836
        %v838 = vrot.slane %v837, 2
        %v839 = vadd.f32 %v837, %v838
        %v840 = vrot.slane %v839, 1
        %v841 = vadd.f32 %v839, %v840
        %v842 = vsel %vm785, %v153, 0.0
        %v843 = vrot.slane %v842, 4
        %v844 = vadd.f32 %v842, %v843
        %v845 = vrot.slane %v844, 2
        %v846 = vadd.f32 %v844, %v845
        %v847 = vrot.slane %v846, 1
        %v848 = vadd.f32 %v846, %v847
        %v849 = vsel %vm785, %v154, 0.0
        %v850 = vrot.slane %v849, 4
        %v851 = vadd.f32 %v849, %v850
        %v852 = vrot.slane %v851, 2
        %v853 = vadd.f32 %v851, %v852
        %v854 = vrot.slane %v853, 1
        %v855 = vadd.f32 %v853, %v854
        %v856 = vsel %vm785, %v155, 0.0
        %v857 = vrot.slane %v856, 4
        %v858 = vadd.f32 %v856, %v857
        %v859 = vrot.slane %v858, 2
        %v860 = vadd.f32 %v858, %v859
        %v861 = vrot.slane %v860, 1
        %v862 = vadd.f32 %v860, %v861
        %v863 = vsel %vm785, %v156, 0.0
        %v864 = vrot.slane %v863, 4
        %v865 = vadd.f32 %v863, %v864
        %v866 = vrot.slane %v865, 2
        %v867 = vadd.f32 %v865, %v866
        %v868 = vrot.slane %v867, 1
        %v869 = vadd.f32 %v867, %v868
        %v870 = vsel %vm785, %v157, 0.0
        %v871 = vrot.slane %v870, 4
        %v872 = vadd.f32 %v870, %v871
        %v873 = vrot.slane %v872, 2
        %v874 = vadd.f32 %v872, %v873
        %v875 = vrot.slane %v874, 1
        %v876 = vadd.f32 %v874, %v875
        %v877 = vsel %vm785, %v158, 0.0
        %v878 = vrot.slane %v877, 4
        %v879 = vadd.f32 %v877, %v878
        %v880 = vrot.slane %v879, 2
        %v881 = vadd.f32 %v879, %v880
        %v882 = vrot.slane %v881, 1
        %v883 = vadd.f32 %v881, %v882
        %v884 = vsel %vm785, %v159, 0.0
        %v885 = vrot.slane %v884, 4
        %v886 = vadd.f32 %v884, %v885
        %v887 = vrot.slane %v886, 2
        %v888 = vadd.f32 %v886, %v887
        %v889 = vrot.slane %v888, 1
        %v890 = vadd.f32 %v888, %v889
        %v891 = vsel %vm785, %v160, 0.0
        %v892 = vrot.slane %v891, 4
        %v893 = vadd.f32 %v891, %v892
        %v894 = vrot.slane %v893, 2
        %v895 = vadd.f32 %v893, %v894
        %v896 = vrot.slane %v895, 1
        %v897 = vadd.f32 %v895, %v896
        %v898 = vsel %vm785, %v161, 0.0
        %v899 = vrot.slane %v898, 4
        %v900 = vadd.f32 %v898, %v899
        %v901 = vrot.slane %v900, 2
        %v902 = vadd.f32 %v900, %v901
        %v903 = vrot.slane %v902, 1
        %v904 = vadd.f32 %v902, %v903
        %v905 = vsel %vm785, %v162, 0.0
        %v906 = vrot.slane %v905, 4
        %v907 = vadd.f32 %v905, %v906
        %v908 = vrot.slane %v907, 2
        %v909 = vadd.f32 %v907, %v908
        %v910 = vrot.slane %v909, 1
        %v911 = vadd.f32 %v909, %v910
        %v912 = vsel %vm785, %v163, 0.0
        %v913 = vrot.slane %v912, 4
        %v914 = vadd.f32 %v912, %v913
        %v915 = vrot.slane %v914, 2
        %v916 = vadd.f32 %v914, %v915
        %v917 = vrot.slane %v916, 1
        %v918 = vadd.f32 %v916, %v917
        %v919 = vsel %vm785, %v164, 0.0
        %v920 = vrot.slane %v919, 4
        %v921 = vadd.f32 %v919, %v920
        %v922 = vrot.slane %v921, 2
        %v923 = vadd.f32 %v921, %v922
        %v924 = vrot.slane %v923, 1
        %v925 = vadd.f32 %v923, %v924
        %v926 = vsel %vm785, %v165, 0.0
        %v927 = vrot.slane %v926, 4
        %v928 = vadd.f32 %v926, %v927
        %v929 = vrot.slane %v928, 2
        %v930 = vadd.f32 %v928, %v929
        %v931 = vrot.slane %v930, 1
        %v932 = vadd.f32 %v930, %v931
        %v933 = vsel %vm785, %v166, 0.0
        %v934 = vrot.slane %v933, 4
        %v935 = vadd.f32 %v933, %v934
        %v936 = vrot.slane %v935, 2
        %v937 = vadd.f32 %v935, %v936
        %v938 = vrot.slane %v937, 1
        %v939 = vadd.f32 %v937, %v938
        %v940 = vsel %vm785, %v167, 0.0
        %v941 = vrot.slane %v940, 4
        %v942 = vadd.f32 %v940, %v941
        %v943 = vrot.slane %v942, 2
        %v944 = vadd.f32 %v942, %v943
        %v945 = vrot.slane %v944, 1
        %v946 = vadd.f32 %v944, %v945
        %v947 = vsel %vm785, %v168, 0.0
        %v948 = vrot.slane %v947, 4
        %v949 = vadd.f32 %v947, %v948
        %v950 = vrot.slane %v949, 2
        %v951 = vadd.f32 %v949, %v950
        %v952 = vrot.slane %v951, 1
        %v953 = vadd.f32 %v951, %v952
        %v954 = vsel %vm785, %v169, 0.0
        %v955 = vrot.slane %v954, 4
        %v956 = vadd.f32 %v954, %v955
        %v957 = vrot.slane %v956, 2
        %v958 = vadd.f32 %v956, %v957
        %v959 = vrot.slane %v958, 1
        %v960 = vadd.f32 %v958, %v959
        %v961 = vsel %vm785, %v170, 0.0
        %v962 = vrot.slane %v961, 4
        %v963 = vadd.f32 %v961, %v962
        %v964 = vrot.slane %v963, 2
        %v965 = vadd.f32 %v963, %v964
        %v966 = vrot.slane %v965, 1
        %v967 = vadd.f32 %v965, %v966
        %v968 = vsel %vm785, %v171, 0.0
        %v969 = vrot.slane %v968, 4
        %v970 = vadd.f32 %v968, %v969
        %v971 = vrot.slane %v970, 2
        %v972 = vadd.f32 %v970, %v971
        %v973 = vrot.slane %v972, 1
        %v974 = vadd.f32 %v972, %v973
        %v975 = vsel %vm785, %v172, 0.0
        %v976 = vrot.slane %v975, 4
        %v977 = vadd.f32 %v975, %v976
        %v978 = vrot.slane %v977, 2
        %v979 = vadd.f32 %v977, %v978
        %v980 = vrot.slane %v979, 1
        %v981 = vadd.f32 %v979, %v980
        %v982 = vsel %vm785, %v173, 0.0
        %v983 = vrot.slane %v982, 4
        %v984 = vadd.f32 %v982, %v983
        %v985 = vrot.slane %v984, 2
        %v986 = vadd.f32 %v984, %v985
        %v987 = vrot.slane %v986, 1
        %v988 = vadd.f32 %v986, %v987
        %v989 = vsel %vm785, %v174, 0.0
        %v990 = vrot.slane %v989, 4
        %v991 = vadd.f32 %v989, %v990
        %v992 = vrot.slane %v991, 2
        %v993 = vadd.f32 %v991, %v992
        %v994 = vrot.slane %v993, 1
        %v995 = vadd.f32 %v993, %v994
        %v996 = vsel %vm785, %v175, 0.0
        %v997 = vrot.slane %v996, 4
        %v998 = vadd.f32 %v996, %v997
        %v999 = vrot.slane %v998, 2
        %v1000 = vadd.f32 %v998, %v999
        %v1001 = vrot.slane %v1000, 1
        %v1002 = vadd.f32 %v1000, %v1001
        %v1003 = vsel %vm785, %v176, 0.0
        %v1004 = vrot.slane %v1003, 4
        %v1005 = vadd.f32 %v1003, %v1004
        %v1006 = vrot.slane %v1005, 2
        %v1007 = vadd.f32 %v1005, %v1006
        %v1008 = vrot.slane %v1007, 1
        %v1009 = vadd.f32 %v1007, %v1008
        %v1010 = vsel %vm785, %v177, 0.0
        %v1011 = vrot.slane %v1010, 4
        %v1012 = vadd.f32 %v1010, %v1011
        %v1013 = vrot.slane %v1012, 2
        %v1014 = vadd.f32 %v1012, %v1013
        %v1015 = vrot.slane %v1014, 1
        %v1016 = vadd.f32 %v1014, %v1015
        %v1017 = vsel %vm785, %v178, 0.0
        %v1018 = vrot.slane %v1017, 4
        %v1019 = vadd.f32 %v1017, %v1018
        %v1020 = vrot.slane %v1019, 2
        %v1021 = vadd.f32 %v1019, %v1020
        %v1022 = vrot.slane %v1021, 1
        %v1023 = vadd.f32 %v1021, %v1022
        %v1024 = vsel %vm785, %v179, 0.0
        %v1025 = vrot.slane %v1024, 4
        %v1026 = vadd.f32 %v1024, %v1025
        %v1027 = vrot.slane %v1026, 2
        %v1028 = vadd.f32 %v1026, %v1027
        %v1029 = vrot.slane %v1028, 1
        %v1030 = vadd.f32 %v1028, %v1029
        %v1031 = vsel %vm785, %v180, 0.0
        %v1032 = vrot.slane %v1031, 4
        %v1033 = vadd.f32 %v1031, %v1032
        %v1034 = vrot.slane %v1033, 2
        %v1035 = vadd.f32 %v1033, %v1034
        %v1036 = vrot.slane %v1035, 1
        %v1037 = vadd.f32 %v1035, %v1036
        %v1038 = vsel %vm785, %v181, 0.0
        %v1039 = vrot.slane %v1038, 4
        %v1040 = vadd.f32 %v1038, %v1039
        %v1041 = vrot.slane %v1040, 2
        %v1042 = vadd.f32 %v1040, %v1041
        %v1043 = vrot.slane %v1042, 1
        %v1044 = vadd.f32 %v1042, %v1043
        %v1045 = vsel %vm785, %v182, 0.0
        %v1046 = vrot.slane %v1045, 4
        %v1047 = vadd.f32 %v1045, %v1046
        %v1048 = vrot.slane %v1047, 2
        %v1049 = vadd.f32 %v1047, %v1048
        %v1050 = vrot.slane %v1049, 1
        %v1051 = vadd.f32 %v1049, %v1050
        %v1052 = vsel %vm785, %v183, 0.0
        %v1053 = vrot.slane %v1052, 4
        %v1054 = vadd.f32 %v1052, %v1053
        %v1055 = vrot.slane %v1054, 2
        %v1056 = vadd.f32 %v1054, %v1055
        %v1057 = vrot.slane %v1056, 1
        %v1058 = vadd.f32 %v1056, %v1057
        %v1059 = vsel %vm785, %v184, 0.0
        %v1060 = vrot.slane %v1059, 4
        %v1061 = vadd.f32 %v1059, %v1060
        %v1062 = vrot.slane %v1061, 2
        %v1063 = vadd.f32 %v1061, %v1062
        %v1064 = vrot.slane %v1063, 1
        %v1065 = vadd.f32 %v1063, %v1064
        %v1066 = vsel %vm785, %v185, 0.0
        %v1067 = vrot.slane %v1066, 4
        %v1068 = vadd.f32 %v1066, %v1067
        %v1069 = vrot.slane %v1068, 2
        %v1070 = vadd.f32 %v1068, %v1069
        %v1071 = vrot.slane %v1070, 1
        %v1072 = vadd.f32 %v1070, %v1071
        %v1073 = vsel %vm785, %v186, 0.0
        %v1074 = vrot.slane %v1073, 4
        %v1075 = vadd.f32 %v1073, %v1074
        %v1076 = vrot.slane %v1075, 2
        %v1077 = vadd.f32 %v1075, %v1076
        %v1078 = vrot.slane %v1077, 1
        %v1079 = vadd.f32 %v1077, %v1078
        %v1080 = vsel %vm785, %v187, 0.0
        %v1081 = vrot.slane %v1080, 4
        %v1082 = vadd.f32 %v1080, %v1081
        %v1083 = vrot.slane %v1082, 2
        %v1084 = vadd.f32 %v1082, %v1083
        %v1085 = vrot.slane %v1084, 1
        %v1086 = vadd.f32 %v1084, %v1085
        %v1087 = vsel %vm785, %v188, 0.0
        %v1088 = vrot.slane %v1087, 4
        %v1089 = vadd.f32 %v1087, %v1088
        %v1090 = vrot.slane %v1089, 2
        %v1091 = vadd.f32 %v1089, %v1090
        %v1092 = vrot.slane %v1091, 1
        %v1093 = vadd.f32 %v1091, %v1092
        %v1094 = vsel %vm785, %v189, 0.0
        %v1095 = vrot.slane %v1094, 4
        %v1096 = vadd.f32 %v1094, %v1095
        %v1097 = vrot.slane %v1096, 2
        %v1098 = vadd.f32 %v1096, %v1097
        %v1099 = vrot.slane %v1098, 1
        %v1100 = vadd.f32 %v1098, %v1099
        %v1101 = vsel %vm785, %v190, 0.0
        %v1102 = vrot.slane %v1101, 4
        %v1103 = vadd.f32 %v1101, %v1102
        %v1104 = vrot.slane %v1103, 2
        %v1105 = vadd.f32 %v1103, %v1104
        %v1106 = vrot.slane %v1105, 1
        %v1107 = vadd.f32 %v1105, %v1106
        %v1108 = vsel %vm785, %v191, 0.0
        %v1109 = vrot.slane %v1108, 4
        %v1110 = vadd.f32 %v1108, %v1109
        %v1111 = vrot.slane %v1110, 2
        %v1112 = vadd.f32 %v1110, %v1111
        %v1113 = vrot.slane %v1112, 1
        %v1114 = vadd.f32 %v1112, %v1113
        %v1115 = vsel %vm785, %v192, 0.0
        %v1116 = vrot.slane %v1115, 4
        %v1117 = vadd.f32 %v1115, %v1116
        %v1118 = vrot.slane %v1117, 2
        %v1119 = vadd.f32 %v1117, %v1118
        %v1120 = vrot.slane %v1119, 1
        %v1121 = vadd.f32 %v1119, %v1120
        %v1122 = vsel %vm785, %v193, 0.0
        %v1123 = vrot.slane %v1122, 4
        %v1124 = vadd.f32 %v1122, %v1123
        %v1125 = vrot.slane %v1124, 2
        %v1126 = vadd.f32 %v1124, %v1125
        %v1127 = vrot.slane %v1126, 1
        %v1128 = vadd.f32 %v1126, %v1127
        %v1129 = vsel %vm785, %v194, 0.0
        %v1130 = vrot.slane %v1129, 4
        %v1131 = vadd.f32 %v1129, %v1130
        %v1132 = vrot.slane %v1131, 2
        %v1133 = vadd.f32 %v1131, %v1132
        %v1134 = vrot.slane %v1133, 1
        %v1135 = vadd.f32 %v1133, %v1134
        %v1136 = vsel %vm785, %v195, 0.0
        %v1137 = vrot.slane %v1136, 4
        %v1138 = vadd.f32 %v1136, %v1137
        %v1139 = vrot.slane %v1138, 2
        %v1140 = vadd.f32 %v1138, %v1139
        %v1141 = vrot.slane %v1140, 1
        %v1142 = vadd.f32 %v1140, %v1141
        %v1143 = vsel %vm785, %v196, 0.0
        %v1144 = vrot.slane %v1143, 4
        %v1145 = vadd.f32 %v1143, %v1144
        %v1146 = vrot.slane %v1145, 2
        %v1147 = vadd.f32 %v1145, %v1146
        %v1148 = vrot.slane %v1147, 1
        %v1149 = vadd.f32 %v1147, %v1148
        %v1150 = vsel %vm785, %v197, 0.0
        %v1151 = vrot.slane %v1150, 4
        %v1152 = vadd.f32 %v1150, %v1151
        %v1153 = vrot.slane %v1152, 2
        %v1154 = vadd.f32 %v1152, %v1153
        %v1155 = vrot.slane %v1154, 1
        %v1156 = vadd.f32 %v1154, %v1155
        %v1157 = vsel %vm785, %v198, 0.0
        %v1158 = vrot.slane %v1157, 4
        %v1159 = vadd.f32 %v1157, %v1158
        %v1160 = vrot.slane %v1159, 2
        %v1161 = vadd.f32 %v1159, %v1160
        %v1162 = vrot.slane %v1161, 1
        %v1163 = vadd.f32 %v1161, %v1162
        %v1164 = vsel %vm785, %v199, 0.0
        %v1165 = vrot.slane %v1164, 4
        %v1166 = vadd.f32 %v1164, %v1165
        %v1167 = vrot.slane %v1166, 2
        %v1168 = vadd.f32 %v1166, %v1167
        %v1169 = vrot.slane %v1168, 1
        %v1170 = vadd.f32 %v1168, %v1169
        %v1171 = vsel %vm785, %v200, 0.0
        %v1172 = vrot.slane %v1171, 4
        %v1173 = vadd.f32 %v1171, %v1172
        %v1174 = vrot.slane %v1173, 2
        %v1175 = vadd.f32 %v1173, %v1174
        %v1176 = vrot.slane %v1175, 1
        %v1177 = vadd.f32 %v1175, %v1176
        %v1178 = vsel %vm785, %v201, 0.0
        %v1179 = vrot.slane %v1178, 4
        %v1180 = vadd.f32 %v1178, %v1179
        %v1181 = vrot.slane %v1180, 2
        %v1182 = vadd.f32 %v1180, %v1181
        %v1183 = vrot.slane %v1182, 1
        %v1184 = vadd.f32 %v1182, %v1183
        %v1185 = vsel %vm785, %v202, 0.0
        %v1186 = vrot.slane %v1185, 4
        %v1187 = vadd.f32 %v1185, %v1186
        %v1188 = vrot.slane %v1187, 2
        %v1189 = vadd.f32 %v1187, %v1188
        %v1190 = vrot.slane %v1189, 1
        %v1191 = vadd.f32 %v1189, %v1190
        %v1192 = vsel %vm785, %v203, 0.0
        %v1193 = vrot.slane %v1192, 4
        %v1194 = vadd.f32 %v1192, %v1193
        %v1195 = vrot.slane %v1194, 2
        %v1196 = vadd.f32 %v1194, %v1195
        %v1197 = vrot.slane %v1196, 1
        %v1198 = vadd.f32 %v1196, %v1197
        %v1199 = vsel %vm785, %v204, 0.0
        %v1200 = vrot.slane %v1199, 4
        %v1201 = vadd.f32 %v1199, %v1200
        %v1202 = vrot.slane %v1201, 2
        %v1203 = vadd.f32 %v1201, %v1202
        %v1204 = vrot.slane %v1203, 1
        %v1205 = vadd.f32 %v1203, %v1204
        %v1206 = vsel %vm785, %v205, 0.0
        %v1207 = vrot.slane %v1206, 4
        %v1208 = vadd.f32 %v1206, %v1207
        %v1209 = vrot.slane %v1208, 2
        %v1210 = vadd.f32 %v1208, %v1209
        %v1211 = vrot.slane %v1210, 1
        %v1212 = vadd.f32 %v1210, %v1211
        %v1213 = vsel %vm785, %v206, 0.0
        %v1214 = vrot.slane %v1213, 4
        %v1215 = vadd.f32 %v1213, %v1214
        %v1216 = vrot.slane %v1215, 2
        %v1217 = vadd.f32 %v1215, %v1216
        %v1218 = vrot.slane %v1217, 1
        %v1219 = vadd.f32 %v1217, %v1218
        %v1220 = vsel %vm785, %v207, 0.0
        %v1221 = vrot.slane %v1220, 4
        %v1222 = vadd.f32 %v1220, %v1221
        %v1223 = vrot.slane %v1222, 2
        %v1224 = vadd.f32 %v1222, %v1223
        %v1225 = vrot.slane %v1224, 1
        %v1226 = vadd.f32 %v1224, %v1225
        %v1227 = vsel %vm785, %v208, 0.0
        %v1228 = vrot.slane %v1227, 4
        %v1229 = vadd.f32 %v1227, %v1228
        %v1230 = vrot.slane %v1229, 2
        %v1231 = vadd.f32 %v1229, %v1230
        %v1232 = vrot.slane %v1231, 1
        %v1233 = vadd.f32 %v1231, %v1232
        %v1234 = vsel %vm785, %v209, 0.0
        %v1235 = vrot.slane %v1234, 4
        %v1236 = vadd.f32 %v1234, %v1235
        %v1237 = vrot.slane %v1236, 2
        %v1238 = vadd.f32 %v1236, %v1237
        %v1239 = vrot.slane %v1238, 1
        %v1240 = vadd.f32 %v1238, %v1239
        %v1241 = vsel %vm785, %v210, 0.0
        %v1242 = vrot.slane %v1241, 4
        %v1243 = vadd.f32 %v1241, %v1242
        %v1244 = vrot.slane %v1243, 2
        %v1245 = vadd.f32 %v1243, %v1244
        %v1246 = vrot.slane %v1245, 1
        %v1247 = vadd.f32 %v1245, %v1246
        %v1248 = vsel %vm785, %v211, 0.0
        %v1249 = vrot.slane %v1248, 4
        %v1250 = vadd.f32 %v1248, %v1249
        %v1251 = vrot.slane %v1250, 2
        %v1252 = vadd.f32 %v1250, %v1251
        %v1253 = vrot.slane %v1252, 1
        %v1254 = vadd.f32 %v1252, %v1253
        %v1255 = vsel %vm785, %v212, 0.0
        %v1256 = vrot.slane %v1255, 4
        %v1257 = vadd.f32 %v1255, %v1256
        %v1258 = vrot.slane %v1257, 2
        %v1259 = vadd.f32 %v1257, %v1258
        %v1260 = vrot.slane %v1259, 1
        %v1261 = vadd.f32 %v1259, %v1260
        %v1262 = vsel %vm785, %v213, 0.0
        %v1263 = vrot.slane %v1262, 4
        %v1264 = vadd.f32 %v1262, %v1263
        %v1265 = vrot.slane %v1264, 2
        %v1266 = vadd.f32 %v1264, %v1265
        %v1267 = vrot.slane %v1266, 1
        %v1268 = vadd.f32 %v1266, %v1267
        %v1269 = vsel %vm785, %v214, 0.0
        %v1270 = vrot.slane %v1269, 4
        %v1271 = vadd.f32 %v1269, %v1270
        %v1272 = vrot.slane %v1271, 2
        %v1273 = vadd.f32 %v1271, %v1272
        %v1274 = vrot.slane %v1273, 1
        %v1275 = vadd.f32 %v1273, %v1274
        %v1276 = vsel %vm785, %v215, 0.0
        %v1277 = vrot.slane %v1276, 4
        %v1278 = vadd.f32 %v1276, %v1277
        %v1279 = vrot.slane %v1278, 2
        %v1280 = vadd.f32 %v1278, %v1279
        %v1281 = vrot.slane %v1280, 1
        %v1282 = vadd.f32 %v1280, %v1281
        %v1283 = vsel %vm785, %v216, 0.0
        %v1284 = vrot.slane %v1283, 4
        %v1285 = vadd.f32 %v1283, %v1284
        %v1286 = vrot.slane %v1285, 2
        %v1287 = vadd.f32 %v1285, %v1286
        %v1288 = vrot.slane %v1287, 1
        %v1289 = vadd.f32 %v1287, %v1288
        %v1290 = vsel %vm785, %v217, 0.0
        %v1291 = vrot.slane %v1290, 4
        %v1292 = vadd.f32 %v1290, %v1291
        %v1293 = vrot.slane %v1292, 2
        %v1294 = vadd.f32 %v1292, %v1293
        %v1295 = vrot.slane %v1294, 1
        %v1296 = vadd.f32 %v1294, %v1295
        %v1297 = vsel %vm785, %v218, 0.0
        %v1298 = vrot.slane %v1297, 4
        %v1299 = vadd.f32 %v1297, %v1298
        %v1300 = vrot.slane %v1299, 2
        %v1301 = vadd.f32 %v1299, %v1300
        %v1302 = vrot.slane %v1301, 1
        %v1303 = vadd.f32 %v1301, %v1302
        %v1304 = vsel %vm785, %v219, 0.0
        %v1305 = vrot.slane %v1304, 4
        %v1306 = vadd.f32 %v1304, %v1305
        %v1307 = vrot.slane %v1306, 2
        %v1308 = vadd.f32 %v1306, %v1307
        %v1309 = vrot.slane %v1308, 1
        %v1310 = vadd.f32 %v1308, %v1309
        %v1311 = vsel %vm785, %v220, 0.0
        %v1312 = vrot.slane %v1311, 4
        %v1313 = vadd.f32 %v1311, %v1312
        %v1314 = vrot.slane %v1313, 2
        %v1315 = vadd.f32 %v1313, %v1314
        %v1316 = vrot.slane %v1315, 1
        %v1317 = vadd.f32 %v1315, %v1316
        %v1318 = vsel %vm785, %v221, 0.0
        %v1319 = vrot.slane %v1318, 4
        %v1320 = vadd.f32 %v1318, %v1319
        %v1321 = vrot.slane %v1320, 2
        %v1322 = vadd.f32 %v1320, %v1321
        %v1323 = vrot.slane %v1322, 1
        %v1324 = vadd.f32 %v1322, %v1323
        %v1325 = vsel %vm785, %v222, 0.0
        %v1326 = vrot.slane %v1325, 4
        %v1327 = vadd.f32 %v1325, %v1326
        %v1328 = vrot.slane %v1327, 2
        %v1329 = vadd.f32 %v1327, %v1328
        %v1330 = vrot.slane %v1329, 1
        %v1331 = vadd.f32 %v1329, %v1330
        %v1332 = vsel %vm785, %v223, 0.0
        %v1333 = vrot.slane %v1332, 4
        %v1334 = vadd.f32 %v1332, %v1333
        %v1335 = vrot.slane %v1334, 2
        %v1336 = vadd.f32 %v1334, %v1335
        %v1337 = vrot.slane %v1336, 1
        %v1338 = vadd.f32 %v1336, %v1337
        %v1339 = vsel %vm785, %v224, 0.0
        %v1340 = vrot.slane %v1339, 4
        %v1341 = vadd.f32 %v1339, %v1340
        %v1342 = vrot.slane %v1341, 2
        %v1343 = vadd.f32 %v1341, %v1342
        %v1344 = vrot.slane %v1343, 1
        %v1345 = vadd.f32 %v1343, %v1344
        %v1346 = vsel %vm785, %v225, 0.0
        %v1347 = vrot.slane %v1346, 4
        %v1348 = vadd.f32 %v1346, %v1347
        %v1349 = vrot.slane %v1348, 2
        %v1350 = vadd.f32 %v1348, %v1349
        %v1351 = vrot.slane %v1350, 1
        %v1352 = vadd.f32 %v1350, %v1351
        %v1353 = vsel %vm785, %v226, 0.0
        %v1354 = vrot.slane %v1353, 4
        %v1355 = vadd.f32 %v1353, %v1354
        %v1356 = vrot.slane %v1355, 2
        %v1357 = vadd.f32 %v1355, %v1356
        %v1358 = vrot.slane %v1357, 1
        %v1359 = vadd.f32 %v1357, %v1358
        %v1360 = vsel %vm785, %v227, 0.0
        %v1361 = vrot.slane %v1360, 4
        %v1362 = vadd.f32 %v1360, %v1361
        %v1363 = vrot.slane %v1362, 2
        %v1364 = vadd.f32 %v1362, %v1363
        %v1365 = vrot.slane %v1364, 1
        %v1366 = vadd.f32 %v1364, %v1365
        %v1367 = vsel %vm785, %v228, 0.0
        %v1368 = vrot.slane %v1367, 4
        %v1369 = vadd.f32 %v1367, %v1368
        %v1370 = vrot.slane %v1369, 2
        %v1371 = vadd.f32 %v1369, %v1370
        %v1372 = vrot.slane %v1371, 1
        %v1373 = vadd.f32 %v1371, %v1372
        %v1374 = vsel %vm785, %v229, 0.0
        %v1375 = vrot.slane %v1374, 4
        %v1376 = vadd.f32 %v1374, %v1375
        %v1377 = vrot.slane %v1376, 2
        %v1378 = vadd.f32 %v1376, %v1377
        %v1379 = vrot.slane %v1378, 1
        %v1380 = vadd.f32 %v1378, %v1379
        %v1381 = vsel %vm785, %v230, 0.0
        %v1382 = vrot.slane %v1381, 4
        %v1383 = vadd.f32 %v1381, %v1382
        %v1384 = vrot.slane %v1383, 2
        %v1385 = vadd.f32 %v1383, %v1384
        %v1386 = vrot.slane %v1385, 1
        %v1387 = vadd.f32 %v1385, %v1386
        %v1388 = vsel %vm785, %v231, 0.0
        %v1389 = vrot.slane %v1388, 4
        %v1390 = vadd.f32 %v1388, %v1389
        %v1391 = vrot.slane %v1390, 2
        %v1392 = vadd.f32 %v1390, %v1391
        %v1393 = vrot.slane %v1392, 1
        %v1394 = vadd.f32 %v1392, %v1393
        %v1395 = vsel %vm785, %v232, 0.0
        %v1396 = vrot.slane %v1395, 4
        %v1397 = vadd.f32 %v1395, %v1396
        %v1398 = vrot.slane %v1397, 2
        %v1399 = vadd.f32 %v1397, %v1398
        %v1400 = vrot.slane %v1399, 1
        %v1401 = vadd.f32 %v1399, %v1400
        %v1402 = vsel %vm785, %v233, 0.0
        %v1403 = vrot.slane %v1402, 4
        %v1404 = vadd.f32 %v1402, %v1403
        %v1405 = vrot.slane %v1404, 2
        %v1406 = vadd.f32 %v1404, %v1405
        %v1407 = vrot.slane %v1406, 1
        %v1408 = vadd.f32 %v1406, %v1407
        %v1409 = vsel %vm785, %v234, 0.0
        %v1410 = vrot.slane %v1409, 4
        %v1411 = vadd.f32 %v1409, %v1410
        %v1412 = vrot.slane %v1411, 2
        %v1413 = vadd.f32 %v1411, %v1412
        %v1414 = vrot.slane %v1413, 1
        %v1415 = vadd.f32 %v1413, %v1414
        %v1416 = vsel %vm785, %v235, 0.0
        %v1417 = vrot.slane %v1416, 4
        %v1418 = vadd.f32 %v1416, %v1417
        %v1419 = vrot.slane %v1418, 2
        %v1420 = vadd.f32 %v1418, %v1419
        %v1421 = vrot.slane %v1420, 1
        %v1422 = vadd.f32 %v1420, %v1421
        %v1423 = vsel %vm785, %v236, 0.0
        %v1424 = vrot.slane %v1423, 4
        %v1425 = vadd.f32 %v1423, %v1424
        %v1426 = vrot.slane %v1425, 2
        %v1427 = vadd.f32 %v1425, %v1426
        %v1428 = vrot.slane %v1427, 1
        %v1429 = vadd.f32 %v1427, %v1428
        %v1430 = vsel %vm785, %v237, 0.0
        %v1431 = vrot.slane %v1430, 4
        %v1432 = vadd.f32 %v1430, %v1431
        %v1433 = vrot.slane %v1432, 2
        %v1434 = vadd.f32 %v1432, %v1433
        %v1435 = vrot.slane %v1434, 1
        %v1436 = vadd.f32 %v1434, %v1435
        %v1437 = vsel %vm785, %v238, 0.0
        %v1438 = vrot.slane %v1437, 4
        %v1439 = vadd.f32 %v1437, %v1438
        %v1440 = vrot.slane %v1439, 2
        %v1441 = vadd.f32 %v1439, %v1440
        %v1442 = vrot.slane %v1441, 1
        %v1443 = vadd.f32 %v1441, %v1442
        %v1444 = vsel %vm785, %v239, 0.0
        %v1445 = vrot.slane %v1444, 4
        %v1446 = vadd.f32 %v1444, %v1445
        %v1447 = vrot.slane %v1446, 2
        %v1448 = vadd.f32 %v1446, %v1447
        %v1449 = vrot.slane %v1448, 1
        %v1450 = vadd.f32 %v1448, %v1449
        %v1451 = vsel %vm785, %v240, 0.0
        %v1452 = vrot.slane %v1451, 4
        %v1453 = vadd.f32 %v1451, %v1452
        %v1454 = vrot.slane %v1453, 2
        %v1455 = vadd.f32 %v1453, %v1454
        %v1456 = vrot.slane %v1455, 1
        %v1457 = vadd.f32 %v1455, %v1456
        %v1458 = vsel %vm785, %v241, 0.0
        %v1459 = vrot.slane %v1458, 4
        %v1460 = vadd.f32 %v1458, %v1459
        %v1461 = vrot.slane %v1460, 2
        %v1462 = vadd.f32 %v1460, %v1461
        %v1463 = vrot.slane %v1462, 1
        %v1464 = vadd.f32 %v1462, %v1463
        %v1465 = vsel %vm785, %v242, 0.0
        %v1466 = vrot.slane %v1465, 4
        %v1467 = vadd.f32 %v1465, %v1466
        %v1468 = vrot.slane %v1467, 2
        %v1469 = vadd.f32 %v1467, %v1468
        %v1470 = vrot.slane %v1469, 1
        %v1471 = vadd.f32 %v1469, %v1470
        %v1472 = vsel %vm785, %v243, 0.0
        %v1473 = vrot.slane %v1472, 4
        %v1474 = vadd.f32 %v1472, %v1473
        %v1475 = vrot.slane %v1474, 2
        %v1476 = vadd.f32 %v1474, %v1475
        %v1477 = vrot.slane %v1476, 1
        %v1478 = vadd.f32 %v1476, %v1477
        %v1479 = vsel %vm785, %v244, 0.0
        %v1480 = vrot.slane %v1479, 4
        %v1481 = vadd.f32 %v1479, %v1480
        %v1482 = vrot.slane %v1481, 2
        %v1483 = vadd.f32 %v1481, %v1482
        %v1484 = vrot.slane %v1483, 1
        %v1485 = vadd.f32 %v1483, %v1484
        %v1486 = vsel %vm785, %v245, 0.0
        %v1487 = vrot.slane %v1486, 4
        %v1488 = vadd.f32 %v1486, %v1487
        %v1489 = vrot.slane %v1488, 2
        %v1490 = vadd.f32 %v1488, %v1489
        %v1491 = vrot.slane %v1490, 1
        %v1492 = vadd.f32 %v1490, %v1491
        %v1493 = vsel %vm785, %v246, 0.0
        %v1494 = vrot.slane %v1493, 4
        %v1495 = vadd.f32 %v1493, %v1494
        %v1496 = vrot.slane %v1495, 2
        %v1497 = vadd.f32 %v1495, %v1496
        %v1498 = vrot.slane %v1497, 1
        %v1499 = vadd.f32 %v1497, %v1498
        %v1500 = vsel %vm785, %v247, 0.0
        %v1501 = vrot.slane %v1500, 4
        %v1502 = vadd.f32 %v1500, %v1501
        %v1503 = vrot.slane %v1502, 2
        %v1504 = vadd.f32 %v1502, %v1503
        %v1505 = vrot.slane %v1504, 1
        %v1506 = vadd.f32 %v1504, %v1505
        %v1507 = vsel %vm785, %v248, 0.0
        %v1508 = vrot.slane %v1507, 4
        %v1509 = vadd.f32 %v1507, %v1508
        %v1510 = vrot.slane %v1509, 2
        %v1511 = vadd.f32 %v1509, %v1510
        %v1512 = vrot.slane %v1511, 1
        %v1513 = vadd.f32 %v1511, %v1512
        %v1514 = vsel %vm785, %v249, 0.0
        %v1515 = vrot.slane %v1514, 4
        %v1516 = vadd.f32 %v1514, %v1515
        %v1517 = vrot.slane %v1516, 2
        %v1518 = vadd.f32 %v1516, %v1517
        %v1519 = vrot.slane %v1518, 1
        %v1520 = vadd.f32 %v1518, %v1519
        %v1521 = vsel %vm785, %v250, 0.0
        %v1522 = vrot.slane %v1521, 4
        %v1523 = vadd.f32 %v1521, %v1522
        %v1524 = vrot.slane %v1523, 2
        %v1525 = vadd.f32 %v1523, %v1524
        %v1526 = vrot.slane %v1525, 1
        %v1527 = vadd.f32 %v1525, %v1526
        %v1528 = vsel %vm785, %v251, 0.0
        %v1529 = vrot.slane %v1528, 4
        %v1530 = vadd.f32 %v1528, %v1529
        %v1531 = vrot.slane %v1530, 2
        %v1532 = vadd.f32 %v1530, %v1531
        %v1533 = vrot.slane %v1532, 1
        %v1534 = vadd.f32 %v1532, %v1533
        %v1535 = vsel %vm785, %v252, 0.0
        %v1536 = vrot.slane %v1535, 4
        %v1537 = vadd.f32 %v1535, %v1536
        %v1538 = vrot.slane %v1537, 2
        %v1539 = vadd.f32 %v1537, %v1538
        %v1540 = vrot.slane %v1539, 1
        %v1541 = vadd.f32 %v1539, %v1540
        %v1542 = vsel %vm785, %v253, 0.0
        %v1543 = vrot.slane %v1542, 4
        %v1544 = vadd.f32 %v1542, %v1543
        %v1545 = vrot.slane %v1544, 2
        %v1546 = vadd.f32 %v1544, %v1545
        %v1547 = vrot.slane %v1546, 1
        %v1548 = vadd.f32 %v1546, %v1547
        %v1549 = vsel %vm785, %v254, 0.0
        %v1550 = vrot.slane %v1549, 4
        %v1551 = vadd.f32 %v1549, %v1550
        %v1552 = vrot.slane %v1551, 2
        %v1553 = vadd.f32 %v1551, %v1552
        %v1554 = vrot.slane %v1553, 1
        %v1555 = vadd.f32 %v1553, %v1554
        %v1556 = vsel %vm785, %v255, 0.0
        %v1557 = vrot.slane %v1556, 4
        %v1558 = vadd.f32 %v1556, %v1557
        %v1559 = vrot.slane %v1558, 2
        %v1560 = vadd.f32 %v1558, %v1559
        %v1561 = vrot.slane %v1560, 1
        %v1562 = vadd.f32 %v1560, %v1561
        %v1563 = vsel %vm785, %v256, 0.0
        %v1564 = vrot.slane %v1563, 4
        %v1565 = vadd.f32 %v1563, %v1564
        %v1566 = vrot.slane %v1565, 2
        %v1567 = vadd.f32 %v1565, %v1566
        %v1568 = vrot.slane %v1567, 1
        %v1569 = vadd.f32 %v1567, %v1568
        %v1570 = vsel %vm785, %v257, 0.0
        %v1571 = vrot.slane %v1570, 4
        %v1572 = vadd.f32 %v1570, %v1571
        %v1573 = vrot.slane %v1572, 2
        %v1574 = vadd.f32 %v1572, %v1573
        %v1575 = vrot.slane %v1574, 1
        %v1576 = vadd.f32 %v1574, %v1575
        %v1577 = vsel %vm785, %v258, 0.0
        %v1578 = vrot.slane %v1577, 4
        %v1579 = vadd.f32 %v1577, %v1578
        %v1580 = vrot.slane %v1579, 2
        %v1581 = vadd.f32 %v1579, %v1580
        %v1582 = vrot.slane %v1581, 1
        %v1583 = vadd.f32 %v1581, %v1582
        %v1584 = vsel %vm785, %v259, 0.0
        %v1585 = vrot.slane %v1584, 4
        %v1586 = vadd.f32 %v1584, %v1585
        %v1587 = vrot.slane %v1586, 2
        %v1588 = vadd.f32 %v1586, %v1587
        %v1589 = vrot.slane %v1588, 1
        %v1590 = vadd.f32 %v1588, %v1589
        %v1591 = vsel %vm785, %v260, 0.0
        %v1592 = vrot.slane %v1591, 4
        %v1593 = vadd.f32 %v1591, %v1592
        %v1594 = vrot.slane %v1593, 2
        %v1595 = vadd.f32 %v1593, %v1594
        %v1596 = vrot.slane %v1595, 1
        %v1597 = vadd.f32 %v1595, %v1596
        %v1598 = vsel %vm785, %v261, 0.0
        %v1599 = vrot.slane %v1598, 4
        %v1600 = vadd.f32 %v1598, %v1599
        %v1601 = vrot.slane %v1600, 2
        %v1602 = vadd.f32 %v1600, %v1601
        %v1603 = vrot.slane %v1602, 1
        %v1604 = vadd.f32 %v1602, %v1603
        %v1605 = vsel %vm785, %v262, 0.0
        %v1606 = vrot.slane %v1605, 4
        %v1607 = vadd.f32 %v1605, %v1606
        %v1608 = vrot.slane %v1607, 2
        %v1609 = vadd.f32 %v1607, %v1608
        %v1610 = vrot.slane %v1609, 1
        %v1611 = vadd.f32 %v1609, %v1610
        %v1612 = vsel %vm785, %v263, 0.0
        %v1613 = vrot.slane %v1612, 4
        %v1614 = vadd.f32 %v1612, %v1613
        %v1615 = vrot.slane %v1614, 2
        %v1616 = vadd.f32 %v1614, %v1615
        %v1617 = vrot.slane %v1616, 1
        %v1618 = vadd.f32 %v1616, %v1617
        %v1619 = vsel %vm785, %v264, 0.0
        %v1620 = vrot.slane %v1619, 4
        %v1621 = vadd.f32 %v1619, %v1620
        %v1622 = vrot.slane %v1621, 2
        %v1623 = vadd.f32 %v1621, %v1622
        %v1624 = vrot.slane %v1623, 1
        %v1625 = vadd.f32 %v1623, %v1624
        %v1626 = vsel %vm785, %v265, 0.0
        %v1627 = vrot.slane %v1626, 4
        %v1628 = vadd.f32 %v1626, %v1627
        %v1629 = vrot.slane %v1628, 2
        %v1630 = vadd.f32 %v1628, %v1629
        %v1631 = vrot.slane %v1630, 1
        %v1632 = vadd.f32 %v1630, %v1631
        %v1633 = vsel %vm785, %v266, 0.0
        %v1634 = vrot.slane %v1633, 4
        %v1635 = vadd.f32 %v1633, %v1634
        %v1636 = vrot.slane %v1635, 2
        %v1637 = vadd.f32 %v1635, %v1636
        %v1638 = vrot.slane %v1637, 1
        %v1639 = vadd.f32 %v1637, %v1638
        %v1640 = vsel %vm785, %v267, 0.0
        %v1641 = vrot.slane %v1640, 4
        %v1642 = vadd.f32 %v1640, %v1641
        %v1643 = vrot.slane %v1642, 2
        %v1644 = vadd.f32 %v1642, %v1643
        %v1645 = vrot.slane %v1644, 1
        %v1646 = vadd.f32 %v1644, %v1645
        %v1647 = vsel %vm785, %v268, 0.0
        %v1648 = vrot.slane %v1647, 4
        %v1649 = vadd.f32 %v1647, %v1648
        %v1650 = vrot.slane %v1649, 2
        %v1651 = vadd.f32 %v1649, %v1650
        %v1652 = vrot.slane %v1651, 1
        %v1653 = vadd.f32 %v1651, %v1652
        %v1654 = vsel %vm785, %v269, 0.0
        %v1655 = vrot.slane %v1654, 4
        %v1656 = vadd.f32 %v1654, %v1655
        %v1657 = vrot.slane %v1656, 2
        %v1658 = vadd.f32 %v1656, %v1657
        %v1659 = vrot.slane %v1658, 1
        %v1660 = vadd.f32 %v1658, %v1659
        %v1661 = vsel %vm785, %v270, 0.0
        %v1662 = vrot.slane %v1661, 4
        %v1663 = vadd.f32 %v1661, %v1662
        %v1664 = vrot.slane %v1663, 2
        %v1665 = vadd.f32 %v1663, %v1664
        %v1666 = vrot.slane %v1665, 1
        %v1667 = vadd.f32 %v1665, %v1666
        %v1668 = vsel %vm785, %v271, 0.0
        %v1669 = vrot.slane %v1668, 4
        %v1670 = vadd.f32 %v1668, %v1669
        %v1671 = vrot.slane %v1670, 2
        %v1672 = vadd.f32 %v1670, %v1671
        %v1673 = vrot.slane %v1672, 1
        %v1674 = vadd.f32 %v1672, %v1673
        %v1675 = vsel %vm785, %v272, 0.0
        %v1676 = vrot.slane %v1675, 4
        %v1677 = vadd.f32 %v1675, %v1676
        %v1678 = vrot.slane %v1677, 2
        %v1679 = vadd.f32 %v1677, %v1678
        %v1680 = vrot.slane %v1679, 1
        %v1681 = vadd.f32 %v1679, %v1680
        %v1682 = vsel %vm785, %v273, 0.0
        %v1683 = vrot.slane %v1682, 4
        %v1684 = vadd.f32 %v1682, %v1683
        %v1685 = vrot.slane %v1684, 2
        %v1686 = vadd.f32 %v1684, %v1685
        %v1687 = vrot.slane %v1686, 1
        %v1688 = vadd.f32 %v1686, %v1687
        %v1689 = vsel %vm785, %v274, 0.0
        %v1690 = vrot.slane %v1689, 4
        %v1691 = vadd.f32 %v1689, %v1690
        %v1692 = vrot.slane %v1691, 2
        %v1693 = vadd.f32 %v1691, %v1692
        %v1694 = vrot.slane %v1693, 1
        %v1695 = vadd.f32 %v1693, %v1694
        %v1696 = vsel %vm785, %v275, 0.0
        %v1697 = vrot.slane %v1696, 4
        %v1698 = vadd.f32 %v1696, %v1697
        %v1699 = vrot.slane %v1698, 2
        %v1700 = vadd.f32 %v1698, %v1699
        %v1701 = vrot.slane %v1700, 1
        %v1702 = vadd.f32 %v1700, %v1701
        %v1703 = vsel %vm785, %v276, 0.0
        %v1704 = vrot.slane %v1703, 4
        %v1705 = vadd.f32 %v1703, %v1704
        %v1706 = vrot.slane %v1705, 2
        %v1707 = vadd.f32 %v1705, %v1706
        %v1708 = vrot.slane %v1707, 1
        %v1709 = vadd.f32 %v1707, %v1708
        %v1710 = vsel %vm785, %v277, 0.0
        %v1711 = vrot.slane %v1710, 4
        %v1712 = vadd.f32 %v1710, %v1711
        %v1713 = vrot.slane %v1712, 2
        %v1714 = vadd.f32 %v1712, %v1713
        %v1715 = vrot.slane %v1714, 1
        %v1716 = vadd.f32 %v1714, %v1715
        %v1717 = vsel %vm785, %v278, 0.0
        %v1718 = vrot.slane %v1717, 4
        %v1719 = vadd.f32 %v1717, %v1718
        %v1720 = vrot.slane %v1719, 2
        %v1721 = vadd.f32 %v1719, %v1720
        %v1722 = vrot.slane %v1721, 1
        %v1723 = vadd.f32 %v1721, %v1722
        %v1724 = vsel %vm785, %v279, 0.0
        %v1725 = vrot.slane %v1724, 4
        %v1726 = vadd.f32 %v1724, %v1725
        %v1727 = vrot.slane %v1726, 2
        %v1728 = vadd.f32 %v1726, %v1727
        %v1729 = vrot.slane %v1728, 1
        %v1730 = vadd.f32 %v1728, %v1729
        %v1731 = vsel %vm785, %v280, 0.0
        %v1732 = vrot.slane %v1731, 4
        %v1733 = vadd.f32 %v1731, %v1732
        %v1734 = vrot.slane %v1733, 2
        %v1735 = vadd.f32 %v1733, %v1734
        %v1736 = vrot.slane %v1735, 1
        %v1737 = vadd.f32 %v1735, %v1736
        %v1738 = vsel %vm785, %v281, 0.0
        %v1739 = vrot.slane %v1738, 4
        %v1740 = vadd.f32 %v1738, %v1739
        %v1741 = vrot.slane %v1740, 2
        %v1742 = vadd.f32 %v1740, %v1741
        %v1743 = vrot.slane %v1742, 1
        %v1744 = vadd.f32 %v1742, %v1743
        %v1745 = vsel %vm785, %v282, 0.0
        %v1746 = vrot.slane %v1745, 4
        %v1747 = vadd.f32 %v1745, %v1746
        %v1748 = vrot.slane %v1747, 2
        %v1749 = vadd.f32 %v1747, %v1748
        %v1750 = vrot.slane %v1749, 1
        %v1751 = vadd.f32 %v1749, %v1750
        %v1752 = vsel %vm785, %v283, 0.0
        %v1753 = vrot.slane %v1752, 4
        %v1754 = vadd.f32 %v1752, %v1753
        %v1755 = vrot.slane %v1754, 2
        %v1756 = vadd.f32 %v1754, %v1755
        %v1757 = vrot.slane %v1756, 1
        %v1758 = vadd.f32 %v1756, %v1757
        %v1759 = vsel %vm785, %v284, 0.0
        %v1760 = vrot.slane %v1759, 4
        %v1761 = vadd.f32 %v1759, %v1760
        %v1762 = vrot.slane %v1761, 2
        %v1763 = vadd.f32 %v1761, %v1762
        %v1764 = vrot.slane %v1763, 1
        %v1765 = vadd.f32 %v1763, %v1764
        %v1766 = vsel %vm785, %v285, 0.0
        %v1767 = vrot.slane %v1766, 4
        %v1768 = vadd.f32 %v1766, %v1767
        %v1769 = vrot.slane %v1768, 2
        %v1770 = vadd.f32 %v1768, %v1769
        %v1771 = vrot.slane %v1770, 1
        %v1772 = vadd.f32 %v1770, %v1771
        %v1773 = vsel %vm785, %v286, 0.0
        %v1774 = vrot.slane %v1773, 4
        %v1775 = vadd.f32 %v1773, %v1774
        %v1776 = vrot.slane %v1775, 2
        %v1777 = vadd.f32 %v1775, %v1776
        %v1778 = vrot.slane %v1777, 1
        %v1779 = vadd.f32 %v1777, %v1778
        %v1780 = vsel %vm785, %v287, 0.0
        %v1781 = vrot.slane %v1780, 4
        %v1782 = vadd.f32 %v1780, %v1781
        %v1783 = vrot.slane %v1782, 2
        %v1784 = vadd.f32 %v1782, %v1783
        %v1785 = vrot.slane %v1784, 1
        %v1786 = vadd.f32 %v1784, %v1785
        %v1787 = vsel %vm785, %v288, 0.0
        %v1788 = vrot.slane %v1787, 4
        %v1789 = vadd.f32 %v1787, %v1788
        %v1790 = vrot.slane %v1789, 2
        %v1791 = vadd.f32 %v1789, %v1790
        %v1792 = vrot.slane %v1791, 1
        %v1793 = vadd.f32 %v1791, %v1792
        %v1794 = vsel %vm785, %v289, 0.0
        %v1795 = vrot.slane %v1794, 4
        %v1796 = vadd.f32 %v1794, %v1795
        %v1797 = vrot.slane %v1796, 2
        %v1798 = vadd.f32 %v1796, %v1797
        %v1799 = vrot.slane %v1798, 1
        %v1800 = vadd.f32 %v1798, %v1799
        %v1801 = vsel %vm785, %v290, 0.0
        %v1802 = vrot.slane %v1801, 4
        %v1803 = vadd.f32 %v1801, %v1802
        %v1804 = vrot.slane %v1803, 2
        %v1805 = vadd.f32 %v1803, %v1804
        %v1806 = vrot.slane %v1805, 1
        %v1807 = vadd.f32 %v1805, %v1806
        %v1808 = vsel %vm785, %v291, 0.0
        %v1809 = vrot.slane %v1808, 4
        %v1810 = vadd.f32 %v1808, %v1809
        %v1811 = vrot.slane %v1810, 2
        %v1812 = vadd.f32 %v1810, %v1811
        %v1813 = vrot.slane %v1812, 1
        %v1814 = vadd.f32 %v1812, %v1813
        %v1815 = vsel %vm785, %v292, 0.0
        %v1816 = vrot.slane %v1815, 4
        %v1817 = vadd.f32 %v1815, %v1816
        %v1818 = vrot.slane %v1817, 2
        %v1819 = vadd.f32 %v1817, %v1818
        %v1820 = vrot.slane %v1819, 1
        %v1821 = vadd.f32 %v1819, %v1820
        %v1822 = vsel %vm785, %v293, 0.0
        %v1823 = vrot.slane %v1822, 4
        %v1824 = vadd.f32 %v1822, %v1823
        %v1825 = vrot.slane %v1824, 2
        %v1826 = vadd.f32 %v1824, %v1825
        %v1827 = vrot.slane %v1826, 1
        %v1828 = vadd.f32 %v1826, %v1827
        %v1829 = vsel %vm785, %v294, 0.0
        %v1830 = vrot.slane %v1829, 4
        %v1831 = vadd.f32 %v1829, %v1830
        %v1832 = vrot.slane %v1831, 2
        %v1833 = vadd.f32 %v1831, %v1832
        %v1834 = vrot.slane %v1833, 1
        %v1835 = vadd.f32 %v1833, %v1834
        %v1836 = vsel %vm785, %v295, 0.0
        %v1837 = vrot.slane %v1836, 4
        %v1838 = vadd.f32 %v1836, %v1837
        %v1839 = vrot.slane %v1838, 2
        %v1840 = vadd.f32 %v1838, %v1839
        %v1841 = vrot.slane %v1840, 1
        %v1842 = vadd.f32 %v1840, %v1841
        %v1843 = vsel %vm785, %v296, 0.0
        %v1844 = vrot.slane %v1843, 4
        %v1845 = vadd.f32 %v1843, %v1844
        %v1846 = vrot.slane %v1845, 2
        %v1847 = vadd.f32 %v1845, %v1846
        %v1848 = vrot.slane %v1847, 1
        %v1849 = vadd.f32 %v1847, %v1848
        %v1850 = vsel %vm785, %v297, 0.0
        %v1851 = vrot.slane %v1850, 4
        %v1852 = vadd.f32 %v1850, %v1851
        %v1853 = vrot.slane %v1852, 2
        %v1854 = vadd.f32 %v1852, %v1853
        %v1855 = vrot.slane %v1854, 1
        %v1856 = vadd.f32 %v1854, %v1855
        %v1857 = vsel %vm785, %v298, 0.0
        %v1858 = vrot.slane %v1857, 4
        %v1859 = vadd.f32 %v1857, %v1858
        %v1860 = vrot.slane %v1859, 2
        %v1861 = vadd.f32 %v1859, %v1860
        %v1862 = vrot.slane %v1861, 1
        %v1863 = vadd.f32 %v1861, %v1862
        %v1864 = vsel %vm785, %v299, 0.0
        %v1865 = vrot.slane %v1864, 4
        %v1866 = vadd.f32 %v1864, %v1865
        %v1867 = vrot.slane %v1866, 2
        %v1868 = vadd.f32 %v1866, %v1867
        %v1869 = vrot.slane %v1868, 1
        %v1870 = vadd.f32 %v1868, %v1869
        %v1871 = vsel %vm785, %v300, 0.0
        %v1872 = vrot.slane %v1871, 4
        %v1873 = vadd.f32 %v1871, %v1872
        %v1874 = vrot.slane %v1873, 2
        %v1875 = vadd.f32 %v1873, %v1874
        %v1876 = vrot.slane %v1875, 1
        %v1877 = vadd.f32 %v1875, %v1876
        %v1878 = vsel %vm785, %v301, 0.0
        %v1879 = vrot.slane %v1878, 4
        %v1880 = vadd.f32 %v1878, %v1879
        %v1881 = vrot.slane %v1880, 2
        %v1882 = vadd.f32 %v1880, %v1881
        %v1883 = vrot.slane %v1882, 1
        %v1884 = vadd.f32 %v1882, %v1883
        %v1885 = vsel %vm785, %v302, 0.0
        %v1886 = vrot.slane %v1885, 4
        %v1887 = vadd.f32 %v1885, %v1886
        %v1888 = vrot.slane %v1887, 2
        %v1889 = vadd.f32 %v1887, %v1888
        %v1890 = vrot.slane %v1889, 1
        %v1891 = vadd.f32 %v1889, %v1890
        %v1892 = vsel %vm785, %v303, 0.0
        %v1893 = vrot.slane %v1892, 4
        %v1894 = vadd.f32 %v1892, %v1893
        %v1895 = vrot.slane %v1894, 2
        %v1896 = vadd.f32 %v1894, %v1895
        %v1897 = vrot.slane %v1896, 1
        %v1898 = vadd.f32 %v1896, %v1897
        %v1899 = vsel %vm785, %v304, 0.0
        %v1900 = vrot.slane %v1899, 4
        %v1901 = vadd.f32 %v1899, %v1900
        %v1902 = vrot.slane %v1901, 2
        %v1903 = vadd.f32 %v1901, %v1902
        %v1904 = vrot.slane %v1903, 1
        %v1905 = vadd.f32 %v1903, %v1904
        %v1906 = vsel %vm785, %v305, 0.0
        %v1907 = vrot.slane %v1906, 4
        %v1908 = vadd.f32 %v1906, %v1907
        %v1909 = vrot.slane %v1908, 2
        %v1910 = vadd.f32 %v1908, %v1909
        %v1911 = vrot.slane %v1910, 1
        %v1912 = vadd.f32 %v1910, %v1911
        %v1913 = vsel %vm785, %v306, 0.0
        %v1914 = vrot.slane %v1913, 4
        %v1915 = vadd.f32 %v1913, %v1914
        %v1916 = vrot.slane %v1915, 2
        %v1917 = vadd.f32 %v1915, %v1916
        %v1918 = vrot.slane %v1917, 1
        %v1919 = vadd.f32 %v1917, %v1918
        %v1920 = vsel %vm785, %v307, 0.0
        %v1921 = vrot.slane %v1920, 4
        %v1922 = vadd.f32 %v1920, %v1921
        %v1923 = vrot.slane %v1922, 2
        %v1924 = vadd.f32 %v1922, %v1923
        %v1925 = vrot.slane %v1924, 1
        %v1926 = vadd.f32 %v1924, %v1925
        %v1927 = vsel %vm785, %v308, 0.0
        %v1928 = vrot.slane %v1927, 4
        %v1929 = vadd.f32 %v1927, %v1928
        %v1930 = vrot.slane %v1929, 2
        %v1931 = vadd.f32 %v1929, %v1930
        %v1932 = vrot.slane %v1931, 1
        %v1933 = vadd.f32 %v1931, %v1932
        %v1934 = vsel %vm785, %v309, 0.0
        %v1935 = vrot.slane %v1934, 4
        %v1936 = vadd.f32 %v1934, %v1935
        %v1937 = vrot.slane %v1936, 2
        %v1938 = vadd.f32 %v1936, %v1937
        %v1939 = vrot.slane %v1938, 1
        %v1940 = vadd.f32 %v1938, %v1939
        %v1941 = vsel %vm785, %v310, 0.0
        %v1942 = vrot.slane %v1941, 4
        %v1943 = vadd.f32 %v1941, %v1942
        %v1944 = vrot.slane %v1943, 2
        %v1945 = vadd.f32 %v1943, %v1944
        %v1946 = vrot.slane %v1945, 1
        %v1947 = vadd.f32 %v1945, %v1946
        %v1948 = vsel %vm785, %v311, 0.0
        %v1949 = vrot.slane %v1948, 4
        %v1950 = vadd.f32 %v1948, %v1949
        %v1951 = vrot.slane %v1950, 2
        %v1952 = vadd.f32 %v1950, %v1951
        %v1953 = vrot.slane %v1952, 1
        %v1954 = vadd.f32 %v1952, %v1953
        %v1955 = vsel %vm785, %v312, 0.0
        %v1956 = vrot.slane %v1955, 4
        %v1957 = vadd.f32 %v1955, %v1956
        %v1958 = vrot.slane %v1957, 2
        %v1959 = vadd.f32 %v1957, %v1958
        %v1960 = vrot.slane %v1959, 1
        %v1961 = vadd.f32 %v1959, %v1960
        %v1962 = vsel %vm785, %v313, 0.0
        %v1963 = vrot.slane %v1962, 4
        %v1964 = vadd.f32 %v1962, %v1963
        %v1965 = vrot.slane %v1964, 2
        %v1966 = vadd.f32 %v1964, %v1965
        %v1967 = vrot.slane %v1966, 1
        %v1968 = vadd.f32 %v1966, %v1967
        %v1969 = vsel %vm785, %v314, 0.0
        %v1970 = vrot.slane %v1969, 4
        %v1971 = vadd.f32 %v1969, %v1970
        %v1972 = vrot.slane %v1971, 2
        %v1973 = vadd.f32 %v1971, %v1972
        %v1974 = vrot.slane %v1973, 1
        %v1975 = vadd.f32 %v1973, %v1974
        %v1976 = vsel %vm785, %v315, 0.0
        %v1977 = vrot.slane %v1976, 4
        %v1978 = vadd.f32 %v1976, %v1977
        %v1979 = vrot.slane %v1978, 2
        %v1980 = vadd.f32 %v1978, %v1979
        %v1981 = vrot.slane %v1980, 1
        %v1982 = vadd.f32 %v1980, %v1981
        %v1983 = vsel %vm785, %v316, 0.0
        %v1984 = vrot.slane %v1983, 4
        %v1985 = vadd.f32 %v1983, %v1984
        %v1986 = vrot.slane %v1985, 2
        %v1987 = vadd.f32 %v1985, %v1986
        %v1988 = vrot.slane %v1987, 1
        %v1989 = vadd.f32 %v1987, %v1988
        %v1990 = vsel %vm785, %v317, 0.0
        %v1991 = vrot.slane %v1990, 4
        %v1992 = vadd.f32 %v1990, %v1991
        %v1993 = vrot.slane %v1992, 2
        %v1994 = vadd.f32 %v1992, %v1993
        %v1995 = vrot.slane %v1994, 1
        %v1996 = vadd.f32 %v1994, %v1995
        %v1997 = vsel %vm785, %v318, 0.0
        %v1998 = vrot.slane %v1997, 4
        %v1999 = vadd.f32 %v1997, %v1998
        %v2000 = vrot.slane %v1999, 2
        %v2001 = vadd.f32 %v1999, %v2000
        %v2002 = vrot.slane %v2001, 1
        %v2003 = vadd.f32 %v2001, %v2002
        %v2004 = vsel %vm785, %v319, 0.0
        %v2005 = vrot.slane %v2004, 4
        %v2006 = vadd.f32 %v2004, %v2005
        %v2007 = vrot.slane %v2006, 2
        %v2008 = vadd.f32 %v2006, %v2007
        %v2009 = vrot.slane %v2008, 1
        %v2010 = vadd.f32 %v2008, %v2009
        %v2011 = vsel %vm785, %v320, 0.0
        %v2012 = vrot.slane %v2011, 4
        %v2013 = vadd.f32 %v2011, %v2012
        %v2014 = vrot.slane %v2013, 2
        %v2015 = vadd.f32 %v2013, %v2014
        %v2016 = vrot.slane %v2015, 1
        %v2017 = vadd.f32 %v2015, %v2016
        %v2018 = vsel %vm785, %v321, 0.0
        %v2019 = vrot.slane %v2018, 4
        %v2020 = vadd.f32 %v2018, %v2019
        %v2021 = vrot.slane %v2020, 2
        %v2022 = vadd.f32 %v2020, %v2021
        %v2023 = vrot.slane %v2022, 1
        %v2024 = vadd.f32 %v2022, %v2023
        %v2025 = vsel %vm785, %v322, 0.0
        %v2026 = vrot.slane %v2025, 4
        %v2027 = vadd.f32 %v2025, %v2026
        %v2028 = vrot.slane %v2027, 2
        %v2029 = vadd.f32 %v2027, %v2028
        %v2030 = vrot.slane %v2029, 1
        %v2031 = vadd.f32 %v2029, %v2030
        %v2032 = vsel %vm785, %v323, 0.0
        %v2033 = vrot.slane %v2032, 4
        %v2034 = vadd.f32 %v2032, %v2033
        %v2035 = vrot.slane %v2034, 2
        %v2036 = vadd.f32 %v2034, %v2035
        %v2037 = vrot.slane %v2036, 1
        %v2038 = vadd.f32 %v2036, %v2037
        %v2039 = vsel %vm785, %v324, 0.0
        %v2040 = vrot.slane %v2039, 4
        %v2041 = vadd.f32 %v2039, %v2040
        %v2042 = vrot.slane %v2041, 2
        %v2043 = vadd.f32 %v2041, %v2042
        %v2044 = vrot.slane %v2043, 1
        %v2045 = vadd.f32 %v2043, %v2044
        %v2046 = vsel %vm785, %v325, 0.0
        %v2047 = vrot.slane %v2046, 4
        %v2048 = vadd.f32 %v2046, %v2047
        %v2049 = vrot.slane %v2048, 2
        %v2050 = vadd.f32 %v2048, %v2049
        %v2051 = vrot.slane %v2050, 1
        %v2052 = vadd.f32 %v2050, %v2051
        %v2053 = vsel %vm785, %v326, 0.0
        %v2054 = vrot.slane %v2053, 4
        %v2055 = vadd.f32 %v2053, %v2054
        %v2056 = vrot.slane %v2055, 2
        %v2057 = vadd.f32 %v2055, %v2056
        %v2058 = vrot.slane %v2057, 1
        %v2059 = vadd.f32 %v2057, %v2058
        %v2060 = vsel %vm785, %v327, 0.0
        %v2061 = vrot.slane %v2060, 4
        %v2062 = vadd.f32 %v2060, %v2061
        %v2063 = vrot.slane %v2062, 2
        %v2064 = vadd.f32 %v2062, %v2063
        %v2065 = vrot.slane %v2064, 1
        %v2066 = vadd.f32 %v2064, %v2065
        %v2067 = vsel %vm785, %v328, 0.0
        %v2068 = vrot.slane %v2067, 4
        %v2069 = vadd.f32 %v2067, %v2068
        %v2070 = vrot.slane %v2069, 2
        %v2071 = vadd.f32 %v2069, %v2070
        %v2072 = vrot.slane %v2071, 1
        %v2073 = vadd.f32 %v2071, %v2072
        %v2074 = vsel %vm785, %v329, 0.0
        %v2075 = vrot.slane %v2074, 4
        %v2076 = vadd.f32 %v2074, %v2075
        %v2077 = vrot.slane %v2076, 2
        %v2078 = vadd.f32 %v2076, %v2077
        %v2079 = vrot.slane %v2078, 1
        %v2080 = vadd.f32 %v2078, %v2079
        %v2081 = vsel %vm785, %v330, 0.0
        %v2082 = vrot.slane %v2081, 4
        %v2083 = vadd.f32 %v2081, %v2082
        %v2084 = vrot.slane %v2083, 2
        %v2085 = vadd.f32 %v2083, %v2084
        %v2086 = vrot.slane %v2085, 1
        %v2087 = vadd.f32 %v2085, %v2086
        %v2088 = vsel %vm785, %v331, 0.0
        %v2089 = vrot.slane %v2088, 4
        %v2090 = vadd.f32 %v2088, %v2089
        %v2091 = vrot.slane %v2090, 2
        %v2092 = vadd.f32 %v2090, %v2091
        %v2093 = vrot.slane %v2092, 1
        %v2094 = vadd.f32 %v2092, %v2093
        %v2095 = vsel %vm785, %v332, 0.0
        %v2096 = vrot.slane %v2095, 4
        %v2097 = vadd.f32 %v2095, %v2096
        %v2098 = vrot.slane %v2097, 2
        %v2099 = vadd.f32 %v2097, %v2098
        %v2100 = vrot.slane %v2099, 1
        %v2101 = vadd.f32 %v2099, %v2100
        %v2102 = vsel %vm785, %v333, 0.0
        %v2103 = vrot.slane %v2102, 4
        %v2104 = vadd.f32 %v2102, %v2103
        %v2105 = vrot.slane %v2104, 2
        %v2106 = vadd.f32 %v2104, %v2105
        %v2107 = vrot.slane %v2106, 1
        %v2108 = vadd.f32 %v2106, %v2107
        %v2109 = vsel %vm785, %v334, 0.0
        %v2110 = vrot.slane %v2109, 4
        %v2111 = vadd.f32 %v2109, %v2110
        %v2112 = vrot.slane %v2111, 2
        %v2113 = vadd.f32 %v2111, %v2112
        %v2114 = vrot.slane %v2113, 1
        %v2115 = vadd.f32 %v2113, %v2114
        %v2116 = vsel %vm785, %v335, 0.0
        %v2117 = vrot.slane %v2116, 4
        %v2118 = vadd.f32 %v2116, %v2117
        %v2119 = vrot.slane %v2118, 2
        %v2120 = vadd.f32 %v2118, %v2119
        %v2121 = vrot.slane %v2120, 1
        %v2122 = vadd.f32 %v2120, %v2121
        %v2123 = vsel %vm785, %v336, 0.0
        %v2124 = vrot.slane %v2123, 4
        %v2125 = vadd.f32 %v2123, %v2124
        %v2126 = vrot.slane %v2125, 2
        %v2127 = vadd.f32 %v2125, %v2126
        %v2128 = vrot.slane %v2127, 1
        %v2129 = vadd.f32 %v2127, %v2128
        %v2130 = vsel %vm785, %v337, 0.0
        %v2131 = vrot.slane %v2130, 4
        %v2132 = vadd.f32 %v2130, %v2131
        %v2133 = vrot.slane %v2132, 2
        %v2134 = vadd.f32 %v2132, %v2133
        %v2135 = vrot.slane %v2134, 1
        %v2136 = vadd.f32 %v2134, %v2135
        %v2137 = vsel %vm785, %v338, 0.0
        %v2138 = vrot.slane %v2137, 4
        %v2139 = vadd.f32 %v2137, %v2138
        %v2140 = vrot.slane %v2139, 2
        %v2141 = vadd.f32 %v2139, %v2140
        %v2142 = vrot.slane %v2141, 1
        %v2143 = vadd.f32 %v2141, %v2142
        %v2144 = vsel %vm785, %v339, 0.0
        %v2145 = vrot.slane %v2144, 4
        %v2146 = vadd.f32 %v2144, %v2145
        %v2147 = vrot.slane %v2146, 2
        %v2148 = vadd.f32 %v2146, %v2147
        %v2149 = vrot.slane %v2148, 1
        %v2150 = vadd.f32 %v2148, %v2149
        %v2151 = vsel %vm785, %v340, 0.0
        %v2152 = vrot.slane %v2151, 4
        %v2153 = vadd.f32 %v2151, %v2152
        %v2154 = vrot.slane %v2153, 2
        %v2155 = vadd.f32 %v2153, %v2154
        %v2156 = vrot.slane %v2155, 1
        %v2157 = vadd.f32 %v2155, %v2156
        %v2158 = vsel %vm785, %v341, 0.0
        %v2159 = vrot.slane %v2158, 4
        %v2160 = vadd.f32 %v2158, %v2159
        %v2161 = vrot.slane %v2160, 2
        %v2162 = vadd.f32 %v2160, %v2161
        %v2163 = vrot.slane %v2162, 1
        %v2164 = vadd.f32 %v2162, %v2163
        %v2165 = vsel %vm785, %v342, 0.0
        %v2166 = vrot.slane %v2165, 4
        %v2167 = vadd.f32 %v2165, %v2166
        %v2168 = vrot.slane %v2167, 2
        %v2169 = vadd.f32 %v2167, %v2168
        %v2170 = vrot.slane %v2169, 1
        %v2171 = vadd.f32 %v2169, %v2170
        %v2172 = vsel %vm785, %v343, 0.0
        %v2173 = vrot.slane %v2172, 4
        %v2174 = vadd.f32 %v2172, %v2173
        %v2175 = vrot.slane %v2174, 2
        %v2176 = vadd.f32 %v2174, %v2175
        %v2177 = vrot.slane %v2176, 1
        %v2178 = vadd.f32 %v2176, %v2177
        %v2179 = vsel %vm785, %v344, 0.0
        %v2180 = vrot.slane %v2179, 4
        %v2181 = vadd.f32 %v2179, %v2180
        %v2182 = vrot.slane %v2181, 2
        %v2183 = vadd.f32 %v2181, %v2182
        %v2184 = vrot.slane %v2183, 1
        %v2185 = vadd.f32 %v2183, %v2184
        %v2186 = vsel %vm785, %v345, 0.0
        %v2187 = vrot.slane %v2186, 4
        %v2188 = vadd.f32 %v2186, %v2187
        %v2189 = vrot.slane %v2188, 2
        %v2190 = vadd.f32 %v2188, %v2189
        %v2191 = vrot.slane %v2190, 1
        %v2192 = vadd.f32 %v2190, %v2191
        %v2193 = vsel %vm785, %v346, 0.0
        %v2194 = vrot.slane %v2193, 4
        %v2195 = vadd.f32 %v2193, %v2194
        %v2196 = vrot.slane %v2195, 2
        %v2197 = vadd.f32 %v2195, %v2196
        %v2198 = vrot.slane %v2197, 1
        %v2199 = vadd.f32 %v2197, %v2198
        %v2200 = vsel %vm785, %v347, 0.0
        %v2201 = vrot.slane %v2200, 4
        %v2202 = vadd.f32 %v2200, %v2201
        %v2203 = vrot.slane %v2202, 2
        %v2204 = vadd.f32 %v2202, %v2203
        %v2205 = vrot.slane %v2204, 1
        %v2206 = vadd.f32 %v2204, %v2205
        %v2207 = vsel %vm785, %v348, 0.0
        %v2208 = vrot.slane %v2207, 4
        %v2209 = vadd.f32 %v2207, %v2208
        %v2210 = vrot.slane %v2209, 2
        %v2211 = vadd.f32 %v2209, %v2210
        %v2212 = vrot.slane %v2211, 1
        %v2213 = vadd.f32 %v2211, %v2212
        %v2214 = vsel %vm785, %v349, 0.0
        %v2215 = vrot.slane %v2214, 4
        %v2216 = vadd.f32 %v2214, %v2215
        %v2217 = vrot.slane %v2216, 2
        %v2218 = vadd.f32 %v2216, %v2217
        %v2219 = vrot.slane %v2218, 1
        %v2220 = vadd.f32 %v2218, %v2219
        %v2221 = vsel %vm785, %v350, 0.0
        %v2222 = vrot.slane %v2221, 4
        %v2223 = vadd.f32 %v2221, %v2222
        %v2224 = vrot.slane %v2223, 2
        %v2225 = vadd.f32 %v2223, %v2224
        %v2226 = vrot.slane %v2225, 1
        %v2227 = vadd.f32 %v2225, %v2226
        %v2228 = vsel %vm785, %v351, 0.0
        %v2229 = vrot.slane %v2228, 4
        %v2230 = vadd.f32 %v2228, %v2229
        %v2231 = vrot.slane %v2230, 2
        %v2232 = vadd.f32 %v2230, %v2231
        %v2233 = vrot.slane %v2232, 1
        %v2234 = vadd.f32 %v2232, %v2233
        %v2235 = vsel %vm785, %v352, 0.0
        %v2236 = vrot.slane %v2235, 4
        %v2237 = vadd.f32 %v2235, %v2236
        %v2238 = vrot.slane %v2237, 2
        %v2239 = vadd.f32 %v2237, %v2238
        %v2240 = vrot.slane %v2239, 1
        %v2241 = vadd.f32 %v2239, %v2240
        %v2242 = vsel %vm785, %v353, 0.0
        %v2243 = vrot.slane %v2242, 4
        %v2244 = vadd.f32 %v2242, %v2243
        %v2245 = vrot.slane %v2244, 2
        %v2246 = vadd.f32 %v2244, %v2245
        %v2247 = vrot.slane %v2246, 1
        %v2248 = vadd.f32 %v2246, %v2247
        %v2249 = vsel %vm785, %v354, 0.0
        %v2250 = vrot.slane %v2249, 4
        %v2251 = vadd.f32 %v2249, %v2250
        %v2252 = vrot.slane %v2251, 2
        %v2253 = vadd.f32 %v2251, %v2252
        %v2254 = vrot.slane %v2253, 1
        %v2255 = vadd.f32 %v2253, %v2254
        %v2256 = vsel %vm785, %v355, 0.0
        %v2257 = vrot.slane %v2256, 4
        %v2258 = vadd.f32 %v2256, %v2257
        %v2259 = vrot.slane %v2258, 2
        %v2260 = vadd.f32 %v2258, %v2259
        %v2261 = vrot.slane %v2260, 1
        %v2262 = vadd.f32 %v2260, %v2261
        %v2263 = vsel %vm785, %v356, 0.0
        %v2264 = vrot.slane %v2263, 4
        %v2265 = vadd.f32 %v2263, %v2264
        %v2266 = vrot.slane %v2265, 2
        %v2267 = vadd.f32 %v2265, %v2266
        %v2268 = vrot.slane %v2267, 1
        %v2269 = vadd.f32 %v2267, %v2268
        %v2270 = vsel %vm785, %v357, 0.0
        %v2271 = vrot.slane %v2270, 4
        %v2272 = vadd.f32 %v2270, %v2271
        %v2273 = vrot.slane %v2272, 2
        %v2274 = vadd.f32 %v2272, %v2273
        %v2275 = vrot.slane %v2274, 1
        %v2276 = vadd.f32 %v2274, %v2275
        %v2277 = vsel %vm785, %v358, 0.0
        %v2278 = vrot.slane %v2277, 4
        %v2279 = vadd.f32 %v2277, %v2278
        %v2280 = vrot.slane %v2279, 2
        %v2281 = vadd.f32 %v2279, %v2280
        %v2282 = vrot.slane %v2281, 1
        %v2283 = vadd.f32 %v2281, %v2282
        %v2284 = vsel %vm785, %v359, 0.0
        %v2285 = vrot.slane %v2284, 4
        %v2286 = vadd.f32 %v2284, %v2285
        %v2287 = vrot.slane %v2286, 2
        %v2288 = vadd.f32 %v2286, %v2287
        %v2289 = vrot.slane %v2288, 1
        %v2290 = vadd.f32 %v2288, %v2289
        %v2291 = vsel %vm785, %v360, 0.0
        %v2292 = vrot.slane %v2291, 4
        %v2293 = vadd.f32 %v2291, %v2292
        %v2294 = vrot.slane %v2293, 2
        %v2295 = vadd.f32 %v2293, %v2294
        %v2296 = vrot.slane %v2295, 1
        %v2297 = vadd.f32 %v2295, %v2296
        %v2298 = vsel %vm785, %v361, 0.0
        %v2299 = vrot.slane %v2298, 4
        %v2300 = vadd.f32 %v2298, %v2299
        %v2301 = vrot.slane %v2300, 2
        %v2302 = vadd.f32 %v2300, %v2301
        %v2303 = vrot.slane %v2302, 1
        %v2304 = vadd.f32 %v2302, %v2303
        %v2305 = vsel %vm785, %v362, 0.0
        %v2306 = vrot.slane %v2305, 4
        %v2307 = vadd.f32 %v2305, %v2306
        %v2308 = vrot.slane %v2307, 2
        %v2309 = vadd.f32 %v2307, %v2308
        %v2310 = vrot.slane %v2309, 1
        %v2311 = vadd.f32 %v2309, %v2310
        %v2312 = vsel %vm785, %v363, 0.0
        %v2313 = vrot.slane %v2312, 4
        %v2314 = vadd.f32 %v2312, %v2313
        %v2315 = vrot.slane %v2314, 2
        %v2316 = vadd.f32 %v2314, %v2315
        %v2317 = vrot.slane %v2316, 1
        %v2318 = vadd.f32 %v2316, %v2317
        %v2319 = vsel %vm785, %v364, 0.0
        %v2320 = vrot.slane %v2319, 4
        %v2321 = vadd.f32 %v2319, %v2320
        %v2322 = vrot.slane %v2321, 2
        %v2323 = vadd.f32 %v2321, %v2322
        %v2324 = vrot.slane %v2323, 1
        %v2325 = vadd.f32 %v2323, %v2324
        %v2326 = vsel %vm785, %v365, 0.0
        %v2327 = vrot.slane %v2326, 4
        %v2328 = vadd.f32 %v2326, %v2327
        %v2329 = vrot.slane %v2328, 2
        %v2330 = vadd.f32 %v2328, %v2329
        %v2331 = vrot.slane %v2330, 1
        %v2332 = vadd.f32 %v2330, %v2331
        %v2333 = vsel %vm785, %v366, 0.0
        %v2334 = vrot.slane %v2333, 4
        %v2335 = vadd.f32 %v2333, %v2334
        %v2336 = vrot.slane %v2335, 2
        %v2337 = vadd.f32 %v2335, %v2336
        %v2338 = vrot.slane %v2337, 1
        %v2339 = vadd.f32 %v2337, %v2338
        %v2340 = vsel %vm785, %v367, 0.0
        %v2341 = vrot.slane %v2340, 4
        %v2342 = vadd.f32 %v2340, %v2341
        %v2343 = vrot.slane %v2342, 2
        %v2344 = vadd.f32 %v2342, %v2343
        %v2345 = vrot.slane %v2344, 1
        %v2346 = vadd.f32 %v2344, %v2345
        %v2347 = vsel %vm785, %v368, 0.0
        %v2348 = vrot.slane %v2347, 4
        %v2349 = vadd.f32 %v2347, %v2348
        %v2350 = vrot.slane %v2349, 2
        %v2351 = vadd.f32 %v2349, %v2350
        %v2352 = vrot.slane %v2351, 1
        %v2353 = vadd.f32 %v2351, %v2352
        %v2354 = vsel %vm785, %v369, 0.0
        %v2355 = vrot.slane %v2354, 4
        %v2356 = vadd.f32 %v2354, %v2355
        %v2357 = vrot.slane %v2356, 2
        %v2358 = vadd.f32 %v2356, %v2357
        %v2359 = vrot.slane %v2358, 1
        %v2360 = vadd.f32 %v2358, %v2359
        %v2361 = vsel %vm785, %v370, 0.0
        %v2362 = vrot.slane %v2361, 4
        %v2363 = vadd.f32 %v2361, %v2362
        %v2364 = vrot.slane %v2363, 2
        %v2365 = vadd.f32 %v2363, %v2364
        %v2366 = vrot.slane %v2365, 1
        %v2367 = vadd.f32 %v2365, %v2366
        %v2368 = vsel %vm785, %v371, 0.0
        %v2369 = vrot.slane %v2368, 4
        %v2370 = vadd.f32 %v2368, %v2369
        %v2371 = vrot.slane %v2370, 2
        %v2372 = vadd.f32 %v2370, %v2371
        %v2373 = vrot.slane %v2372, 1
        %v2374 = vadd.f32 %v2372, %v2373
        %v2375 = vsel %vm785, %v372, 0.0
        %v2376 = vrot.slane %v2375, 4
        %v2377 = vadd.f32 %v2375, %v2376
        %v2378 = vrot.slane %v2377, 2
        %v2379 = vadd.f32 %v2377, %v2378
        %v2380 = vrot.slane %v2379, 1
        %v2381 = vadd.f32 %v2379, %v2380
        %v2382 = vsel %vm785, %v373, 0.0
        %v2383 = vrot.slane %v2382, 4
        %v2384 = vadd.f32 %v2382, %v2383
        %v2385 = vrot.slane %v2384, 2
        %v2386 = vadd.f32 %v2384, %v2385
        %v2387 = vrot.slane %v2386, 1
        %v2388 = vadd.f32 %v2386, %v2387
        %v2389 = vsel %vm785, %v374, 0.0
        %v2390 = vrot.slane %v2389, 4
        %v2391 = vadd.f32 %v2389, %v2390
        %v2392 = vrot.slane %v2391, 2
        %v2393 = vadd.f32 %v2391, %v2392
        %v2394 = vrot.slane %v2393, 1
        %v2395 = vadd.f32 %v2393, %v2394
        %v2396 = vsel %vm785, %v375, 0.0
        %v2397 = vrot.slane %v2396, 4
        %v2398 = vadd.f32 %v2396, %v2397
        %v2399 = vrot.slane %v2398, 2
        %v2400 = vadd.f32 %v2398, %v2399
        %v2401 = vrot.slane %v2400, 1
        %v2402 = vadd.f32 %v2400, %v2401
        %v2403 = vsel %vm785, %v376, 0.0
        %v2404 = vrot.slane %v2403, 4
        %v2405 = vadd.f32 %v2403, %v2404
        %v2406 = vrot.slane %v2405, 2
        %v2407 = vadd.f32 %v2405, %v2406
        %v2408 = vrot.slane %v2407, 1
        %v2409 = vadd.f32 %v2407, %v2408
        %v2410 = vsel %vm785, %v377, 0.0
        %v2411 = vrot.slane %v2410, 4
        %v2412 = vadd.f32 %v2410, %v2411
        %v2413 = vrot.slane %v2412, 2
        %v2414 = vadd.f32 %v2412, %v2413
        %v2415 = vrot.slane %v2414, 1
        %v2416 = vadd.f32 %v2414, %v2415
        %v2417 = vsel %vm785, %v378, 0.0
        %v2418 = vrot.slane %v2417, 4
        %v2419 = vadd.f32 %v2417, %v2418
        %v2420 = vrot.slane %v2419, 2
        %v2421 = vadd.f32 %v2419, %v2420
        %v2422 = vrot.slane %v2421, 1
        %v2423 = vadd.f32 %v2421, %v2422
        %v2424 = vsel %vm785, %v379, 0.0
        %v2425 = vrot.slane %v2424, 4
        %v2426 = vadd.f32 %v2424, %v2425
        %v2427 = vrot.slane %v2426, 2
        %v2428 = vadd.f32 %v2426, %v2427
        %v2429 = vrot.slane %v2428, 1
        %v2430 = vadd.f32 %v2428, %v2429
        %v2431 = vsel %vm785, %v380, 0.0
        %v2432 = vrot.slane %v2431, 4
        %v2433 = vadd.f32 %v2431, %v2432
        %v2434 = vrot.slane %v2433, 2
        %v2435 = vadd.f32 %v2433, %v2434
        %v2436 = vrot.slane %v2435, 1
        %v2437 = vadd.f32 %v2435, %v2436
        %v2438 = vsel %vm785, %v381, 0.0
        %v2439 = vrot.slane %v2438, 4
        %v2440 = vadd.f32 %v2438, %v2439
        %v2441 = vrot.slane %v2440, 2
        %v2442 = vadd.f32 %v2440, %v2441
        %v2443 = vrot.slane %v2442, 1
        %v2444 = vadd.f32 %v2442, %v2443
        %v2445 = vsel %vm785, %v382, 0.0
        %v2446 = vrot.slane %v2445, 4
        %v2447 = vadd.f32 %v2445, %v2446
        %v2448 = vrot.slane %v2447, 2
        %v2449 = vadd.f32 %v2447, %v2448
        %v2450 = vrot.slane %v2449, 1
        %v2451 = vadd.f32 %v2449, %v2450
        %v2452 = vsel %vm785, %v383, 0.0
        %v2453 = vrot.slane %v2452, 4
        %v2454 = vadd.f32 %v2452, %v2453
        %v2455 = vrot.slane %v2454, 2
        %v2456 = vadd.f32 %v2454, %v2455
        %v2457 = vrot.slane %v2456, 1
        %v2458 = vadd.f32 %v2456, %v2457
        %v2459 = vsel %vm785, %v384, 0.0
        %v2460 = vrot.slane %v2459, 4
        %v2461 = vadd.f32 %v2459, %v2460
        %v2462 = vrot.slane %v2461, 2
        %v2463 = vadd.f32 %v2461, %v2462
        %v2464 = vrot.slane %v2463, 1
        %v2465 = vadd.f32 %v2463, %v2464
        %v2466 = vsel %vm785, %v385, 0.0
        %v2467 = vrot.slane %v2466, 4
        %v2468 = vadd.f32 %v2466, %v2467
        %v2469 = vrot.slane %v2468, 2
        %v2470 = vadd.f32 %v2468, %v2469
        %v2471 = vrot.slane %v2470, 1
        %v2472 = vadd.f32 %v2470, %v2471
        %v2473 = vsel %vm785, %v386, 0.0
        %v2474 = vrot.slane %v2473, 4
        %v2475 = vadd.f32 %v2473, %v2474
        %v2476 = vrot.slane %v2475, 2
        %v2477 = vadd.f32 %v2475, %v2476
        %v2478 = vrot.slane %v2477, 1
        %v2479 = vadd.f32 %v2477, %v2478
        %v2480 = vsel %vm785, %v387, 0.0
        %v2481 = vrot.slane %v2480, 4
        %v2482 = vadd.f32 %v2480, %v2481
        %v2483 = vrot.slane %v2482, 2
        %v2484 = vadd.f32 %v2482, %v2483
        %v2485 = vrot.slane %v2484, 1
        %v2486 = vadd.f32 %v2484, %v2485
        %v2487 = vsel %vm785, %v388, 0.0
        %v2488 = vrot.slane %v2487, 4
        %v2489 = vadd.f32 %v2487, %v2488
        %v2490 = vrot.slane %v2489, 2
        %v2491 = vadd.f32 %v2489, %v2490
        %v2492 = vrot.slane %v2491, 1
        %v2493 = vadd.f32 %v2491, %v2492
        %v2494 = vsel %vm785, %v389, 0.0
        %v2495 = vrot.slane %v2494, 4
        %v2496 = vadd.f32 %v2494, %v2495
        %v2497 = vrot.slane %v2496, 2
        %v2498 = vadd.f32 %v2496, %v2497
        %v2499 = vrot.slane %v2498, 1
        %v2500 = vadd.f32 %v2498, %v2499
        %v2501 = vsel %vm785, %v390, 0.0
        %v2502 = vrot.slane %v2501, 4
        %v2503 = vadd.f32 %v2501, %v2502
        %v2504 = vrot.slane %v2503, 2
        %v2505 = vadd.f32 %v2503, %v2504
        %v2506 = vrot.slane %v2505, 1
        %v2507 = vadd.f32 %v2505, %v2506
        %v2508 = vsel %vm785, %v391, 0.0
        %v2509 = vrot.slane %v2508, 4
        %v2510 = vadd.f32 %v2508, %v2509
        %v2511 = vrot.slane %v2510, 2
        %v2512 = vadd.f32 %v2510, %v2511
        %v2513 = vrot.slane %v2512, 1
        %v2514 = vadd.f32 %v2512, %v2513
        %v2515 = vsel %vm785, %v392, 0.0
        %v2516 = vrot.slane %v2515, 4
        %v2517 = vadd.f32 %v2515, %v2516
        %v2518 = vrot.slane %v2517, 2
        %v2519 = vadd.f32 %v2517, %v2518
        %v2520 = vrot.slane %v2519, 1
        %v2521 = vadd.f32 %v2519, %v2520
        %v2522 = vsel %vm785, %v393, 0.0
        %v2523 = vrot.slane %v2522, 4
        %v2524 = vadd.f32 %v2522, %v2523
        %v2525 = vrot.slane %v2524, 2
        %v2526 = vadd.f32 %v2524, %v2525
        %v2527 = vrot.slane %v2526, 1
        %v2528 = vadd.f32 %v2526, %v2527
        %v2529 = vsel %vm785, %v394, 0.0
        %v2530 = vrot.slane %v2529, 4
        %v2531 = vadd.f32 %v2529, %v2530
        %v2532 = vrot.slane %v2531, 2
        %v2533 = vadd.f32 %v2531, %v2532
        %v2534 = vrot.slane %v2533, 1
        %v2535 = vadd.f32 %v2533, %v2534
        %v2536 = vsel %vm785, %v395, 0.0
        %v2537 = vrot.slane %v2536, 4
        %v2538 = vadd.f32 %v2536, %v2537
        %v2539 = vrot.slane %v2538, 2
        %v2540 = vadd.f32 %v2538, %v2539
        %v2541 = vrot.slane %v2540, 1
        %v2542 = vadd.f32 %v2540, %v2541
        %v2543 = vsel %vm785, %v396, 0.0
        %v2544 = vrot.slane %v2543, 4
        %v2545 = vadd.f32 %v2543, %v2544
        %v2546 = vrot.slane %v2545, 2
        %v2547 = vadd.f32 %v2545, %v2546
        %v2548 = vrot.slane %v2547, 1
        %v2549 = vadd.f32 %v2547, %v2548
        %v2550 = vsel %vm785, %v397, 0.0
        %v2551 = vrot.slane %v2550, 4
        %v2552 = vadd.f32 %v2550, %v2551
        %v2553 = vrot.slane %v2552, 2
        %v2554 = vadd.f32 %v2552, %v2553
        %v2555 = vrot.slane %v2554, 1
        %v2556 = vadd.f32 %v2554, %v2555
        %v2557 = vsel %vm785, %v398, 0.0
        %v2558 = vrot.slane %v2557, 4
        %v2559 = vadd.f32 %v2557, %v2558
        %v2560 = vrot.slane %v2559, 2
        %v2561 = vadd.f32 %v2559, %v2560
        %v2562 = vrot.slane %v2561, 1
        %v2563 = vadd.f32 %v2561, %v2562
        %v2564 = vsel %vm785, %v399, 0.0
        %v2565 = vrot.slane %v2564, 4
        %v2566 = vadd.f32 %v2564, %v2565
        %v2567 = vrot.slane %v2566, 2
        %v2568 = vadd.f32 %v2566, %v2567
        %v2569 = vrot.slane %v2568, 1
        %v2570 = vadd.f32 %v2568, %v2569
        %v2571 = vsel %vm785, %v400, 0.0
        %v2572 = vrot.slane %v2571, 4
        %v2573 = vadd.f32 %v2571, %v2572
        %v2574 = vrot.slane %v2573, 2
        %v2575 = vadd.f32 %v2573, %v2574
        %v2576 = vrot.slane %v2575, 1
        %v2577 = vadd.f32 %v2575, %v2576
        %v2578 = vsel %vm785, %v401, 0.0
        %v2579 = vrot.slane %v2578, 4
        %v2580 = vadd.f32 %v2578, %v2579
        %v2581 = vrot.slane %v2580, 2
        %v2582 = vadd.f32 %v2580, %v2581
        %v2583 = vrot.slane %v2582, 1
        %v2584 = vadd.f32 %v2582, %v2583
        %v2585 = vsel %vm785, %v402, 0.0
        %v2586 = vrot.slane %v2585, 4
        %v2587 = vadd.f32 %v2585, %v2586
        %v2588 = vrot.slane %v2587, 2
        %v2589 = vadd.f32 %v2587, %v2588
        %v2590 = vrot.slane %v2589, 1
        %v2591 = vadd.f32 %v2589, %v2590
        %v2592 = vsel %vm785, %v403, 0.0
        %v2593 = vrot.slane %v2592, 4
        %v2594 = vadd.f32 %v2592, %v2593
        %v2595 = vrot.slane %v2594, 2
        %v2596 = vadd.f32 %v2594, %v2595
        %v2597 = vrot.slane %v2596, 1
        %v2598 = vadd.f32 %v2596, %v2597
        %v2599 = vsel %vm785, %v404, 0.0
        %v2600 = vrot.slane %v2599, 4
        %v2601 = vadd.f32 %v2599, %v2600
        %v2602 = vrot.slane %v2601, 2
        %v2603 = vadd.f32 %v2601, %v2602
        %v2604 = vrot.slane %v2603, 1
        %v2605 = vadd.f32 %v2603, %v2604
        %v2606 = vsel %vm785, %v405, 0.0
        %v2607 = vrot.slane %v2606, 4
        %v2608 = vadd.f32 %v2606, %v2607
        %v2609 = vrot.slane %v2608, 2
        %v2610 = vadd.f32 %v2608, %v2609
        %v2611 = vrot.slane %v2610, 1
        %v2612 = vadd.f32 %v2610, %v2611
        %v2613 = vsel %vm785, %v406, 0.0
        %v2614 = vrot.slane %v2613, 4
        %v2615 = vadd.f32 %v2613, %v2614
        %v2616 = vrot.slane %v2615, 2
        %v2617 = vadd.f32 %v2615, %v2616
        %v2618 = vrot.slane %v2617, 1
        %v2619 = vadd.f32 %v2617, %v2618
        %v2620 = vsel %vm785, %v407, 0.0
        %v2621 = vrot.slane %v2620, 4
        %v2622 = vadd.f32 %v2620, %v2621
        %v2623 = vrot.slane %v2622, 2
        %v2624 = vadd.f32 %v2622, %v2623
        %v2625 = vrot.slane %v2624, 1
        %v2626 = vadd.f32 %v2624, %v2625
        %v2627 = vsel %vm785, %v408, 0.0
        %v2628 = vrot.slane %v2627, 4
        %v2629 = vadd.f32 %v2627, %v2628
        %v2630 = vrot.slane %v2629, 2
        %v2631 = vadd.f32 %v2629, %v2630
        %v2632 = vrot.slane %v2631, 1
        %v2633 = vadd.f32 %v2631, %v2632
        %v2634 = vsel %vm785, %v409, 0.0
        %v2635 = vrot.slane %v2634, 4
        %v2636 = vadd.f32 %v2634, %v2635
        %v2637 = vrot.slane %v2636, 2
        %v2638 = vadd.f32 %v2636, %v2637
        %v2639 = vrot.slane %v2638, 1
        %v2640 = vadd.f32 %v2638, %v2639
        %v2641 = vsel %vm785, %v410, 0.0
        %v2642 = vrot.slane %v2641, 4
        %v2643 = vadd.f32 %v2641, %v2642
        %v2644 = vrot.slane %v2643, 2
        %v2645 = vadd.f32 %v2643, %v2644
        %v2646 = vrot.slane %v2645, 1
        %v2647 = vadd.f32 %v2645, %v2646
        %v2648 = vsel %vm785, %v411, 0.0
        %v2649 = vrot.slane %v2648, 4
        %v2650 = vadd.f32 %v2648, %v2649
        %v2651 = vrot.slane %v2650, 2
        %v2652 = vadd.f32 %v2650, %v2651
        %v2653 = vrot.slane %v2652, 1
        %v2654 = vadd.f32 %v2652, %v2653
        %v2655 = vsel %vm785, %v412, 0.0
        %v2656 = vrot.slane %v2655, 4
        %v2657 = vadd.f32 %v2655, %v2656
        %v2658 = vrot.slane %v2657, 2
        %v2659 = vadd.f32 %v2657, %v2658
        %v2660 = vrot.slane %v2659, 1
        %v2661 = vadd.f32 %v2659, %v2660
        %v2662 = vsel %vm785, %v413, 0.0
        %v2663 = vrot.slane %v2662, 4
        %v2664 = vadd.f32 %v2662, %v2663
        %v2665 = vrot.slane %v2664, 2
        %v2666 = vadd.f32 %v2664, %v2665
        %v2667 = vrot.slane %v2666, 1
        %v2668 = vadd.f32 %v2666, %v2667
        %v2669 = vsel %vm785, %v414, 0.0
        %v2670 = vrot.slane %v2669, 4
        %v2671 = vadd.f32 %v2669, %v2670
        %v2672 = vrot.slane %v2671, 2
        %v2673 = vadd.f32 %v2671, %v2672
        %v2674 = vrot.slane %v2673, 1
        %v2675 = vadd.f32 %v2673, %v2674
        %v2676 = vsel %vm785, %v415, 0.0
        %v2677 = vrot.slane %v2676, 4
        %v2678 = vadd.f32 %v2676, %v2677
        %v2679 = vrot.slane %v2678, 2
        %v2680 = vadd.f32 %v2678, %v2679
        %v2681 = vrot.slane %v2680, 1
        %v2682 = vadd.f32 %v2680, %v2681
        %v2683 = vsel %vm785, %v416, 0.0
        %v2684 = vrot.slane %v2683, 4
        %v2685 = vadd.f32 %v2683, %v2684
        %v2686 = vrot.slane %v2685, 2
        %v2687 = vadd.f32 %v2685, %v2686
        %v2688 = vrot.slane %v2687, 1
        %v2689 = vadd.f32 %v2687, %v2688
        %v2690 = vsel %vm785, %v417, 0.0
        %v2691 = vrot.slane %v2690, 4
        %v2692 = vadd.f32 %v2690, %v2691
        %v2693 = vrot.slane %v2692, 2
        %v2694 = vadd.f32 %v2692, %v2693
        %v2695 = vrot.slane %v2694, 1
        %v2696 = vadd.f32 %v2694, %v2695
        %v2697 = vsel %vm785, %v418, 0.0
        %v2698 = vrot.slane %v2697, 4
        %v2699 = vadd.f32 %v2697, %v2698
        %v2700 = vrot.slane %v2699, 2
        %v2701 = vadd.f32 %v2699, %v2700
        %v2702 = vrot.slane %v2701, 1
        %v2703 = vadd.f32 %v2701, %v2702
        %v2704 = vsel %vm785, %v419, 0.0
        %v2705 = vrot.slane %v2704, 4
        %v2706 = vadd.f32 %v2704, %v2705
        %v2707 = vrot.slane %v2706, 2
        %v2708 = vadd.f32 %v2706, %v2707
        %v2709 = vrot.slane %v2708, 1
        %v2710 = vadd.f32 %v2708, %v2709
        %v2711 = vsel %vm785, %v420, 0.0
        %v2712 = vrot.slane %v2711, 4
        %v2713 = vadd.f32 %v2711, %v2712
        %v2714 = vrot.slane %v2713, 2
        %v2715 = vadd.f32 %v2713, %v2714
        %v2716 = vrot.slane %v2715, 1
        %v2717 = vadd.f32 %v2715, %v2716
        %v2718 = vsel %vm785, %v421, 0.0
        %v2719 = vrot.slane %v2718, 4
        %v2720 = vadd.f32 %v2718, %v2719
        %v2721 = vrot.slane %v2720, 2
        %v2722 = vadd.f32 %v2720, %v2721
        %v2723 = vrot.slane %v2722, 1
        %v2724 = vadd.f32 %v2722, %v2723
        %v2725 = vsel %vm785, %v422, 0.0
        %v2726 = vrot.slane %v2725, 4
        %v2727 = vadd.f32 %v2725, %v2726
        %v2728 = vrot.slane %v2727, 2
        %v2729 = vadd.f32 %v2727, %v2728
        %v2730 = vrot.slane %v2729, 1
        %v2731 = vadd.f32 %v2729, %v2730
        %v2732 = vsel %vm785, %v423, 0.0
        %v2733 = vrot.slane %v2732, 4
        %v2734 = vadd.f32 %v2732, %v2733
        %v2735 = vrot.slane %v2734, 2
        %v2736 = vadd.f32 %v2734, %v2735
        %v2737 = vrot.slane %v2736, 1
        %v2738 = vadd.f32 %v2736, %v2737
        %v2739 = vsel %vm785, %v424, 0.0
        %v2740 = vrot.slane %v2739, 4
        %v2741 = vadd.f32 %v2739, %v2740
        %v2742 = vrot.slane %v2741, 2
        %v2743 = vadd.f32 %v2741, %v2742
        %v2744 = vrot.slane %v2743, 1
        %v2745 = vadd.f32 %v2743, %v2744
        %v2746 = vsel %vm785, %v425, 0.0
        %v2747 = vrot.slane %v2746, 4
        %v2748 = vadd.f32 %v2746, %v2747
        %v2749 = vrot.slane %v2748, 2
        %v2750 = vadd.f32 %v2748, %v2749
        %v2751 = vrot.slane %v2750, 1
        %v2752 = vadd.f32 %v2750, %v2751
        %v2753 = vsel %vm785, %v426, 0.0
        %v2754 = vrot.slane %v2753, 4
        %v2755 = vadd.f32 %v2753, %v2754
        %v2756 = vrot.slane %v2755, 2
        %v2757 = vadd.f32 %v2755, %v2756
        %v2758 = vrot.slane %v2757, 1
        %v2759 = vadd.f32 %v2757, %v2758
        %v2760 = vsel %vm785, %v427, 0.0
        %v2761 = vrot.slane %v2760, 4
        %v2762 = vadd.f32 %v2760, %v2761
        %v2763 = vrot.slane %v2762, 2
        %v2764 = vadd.f32 %v2762, %v2763
        %v2765 = vrot.slane %v2764, 1
        %v2766 = vadd.f32 %v2764, %v2765
        %v2767 = vsel %vm785, %v428, 0.0
        %v2768 = vrot.slane %v2767, 4
        %v2769 = vadd.f32 %v2767, %v2768
        %v2770 = vrot.slane %v2769, 2
        %v2771 = vadd.f32 %v2769, %v2770
        %v2772 = vrot.slane %v2771, 1
        %v2773 = vadd.f32 %v2771, %v2772
        %v2774 = vsel %vm785, %v429, 0.0
        %v2775 = vrot.slane %v2774, 4
        %v2776 = vadd.f32 %v2774, %v2775
        %v2777 = vrot.slane %v2776, 2
        %v2778 = vadd.f32 %v2776, %v2777
        %v2779 = vrot.slane %v2778, 1
        %v2780 = vadd.f32 %v2778, %v2779
        %v2781 = vsel %vm785, %v430, 0.0
        %v2782 = vrot.slane %v2781, 4
        %v2783 = vadd.f32 %v2781, %v2782
        %v2784 = vrot.slane %v2783, 2
        %v2785 = vadd.f32 %v2783, %v2784
        %v2786 = vrot.slane %v2785, 1
        %v2787 = vadd.f32 %v2785, %v2786
        %v2788 = vsel %vm785, %v431, 0.0
        %v2789 = vrot.slane %v2788, 4
        %v2790 = vadd.f32 %v2788, %v2789
        %v2791 = vrot.slane %v2790, 2
        %v2792 = vadd.f32 %v2790, %v2791
        %v2793 = vrot.slane %v2792, 1
        %v2794 = vadd.f32 %v2792, %v2793
        %v2795 = vsel %vm785, %v432, 0.0
        %v2796 = vrot.slane %v2795, 4
        %v2797 = vadd.f32 %v2795, %v2796
        %v2798 = vrot.slane %v2797, 2
        %v2799 = vadd.f32 %v2797, %v2798
        %v2800 = vrot.slane %v2799, 1
        %v2801 = vadd.f32 %v2799, %v2800
        %v2802 = vsel %vm785, %v433, 0.0
        %v2803 = vrot.slane %v2802, 4
        %v2804 = vadd.f32 %v2802, %v2803
        %v2805 = vrot.slane %v2804, 2
        %v2806 = vadd.f32 %v2804, %v2805
        %v2807 = vrot.slane %v2806, 1
        %v2808 = vadd.f32 %v2806, %v2807
        %v2809 = vsel %vm785, %v434, 0.0
        %v2810 = vrot.slane %v2809, 4
        %v2811 = vadd.f32 %v2809, %v2810
        %v2812 = vrot.slane %v2811, 2
        %v2813 = vadd.f32 %v2811, %v2812
        %v2814 = vrot.slane %v2813, 1
        %v2815 = vadd.f32 %v2813, %v2814
        %v2816 = vsel %vm785, %v435, 0.0
        %v2817 = vrot.slane %v2816, 4
        %v2818 = vadd.f32 %v2816, %v2817
        %v2819 = vrot.slane %v2818, 2
        %v2820 = vadd.f32 %v2818, %v2819
        %v2821 = vrot.slane %v2820, 1
        %v2822 = vadd.f32 %v2820, %v2821
        %v2823 = vsel %vm785, %v436, 0.0
        %v2824 = vrot.slane %v2823, 4
        %v2825 = vadd.f32 %v2823, %v2824
        %v2826 = vrot.slane %v2825, 2
        %v2827 = vadd.f32 %v2825, %v2826
        %v2828 = vrot.slane %v2827, 1
        %v2829 = vadd.f32 %v2827, %v2828
        %v2830 = vsel %vm785, %v437, 0.0
        %v2831 = vrot.slane %v2830, 4
        %v2832 = vadd.f32 %v2830, %v2831
        %v2833 = vrot.slane %v2832, 2
        %v2834 = vadd.f32 %v2832, %v2833
        %v2835 = vrot.slane %v2834, 1
        %v2836 = vadd.f32 %v2834, %v2835
        %v2837 = vsel %vm785, %v438, 0.0
        %v2838 = vrot.slane %v2837, 4
        %v2839 = vadd.f32 %v2837, %v2838
        %v2840 = vrot.slane %v2839, 2
        %v2841 = vadd.f32 %v2839, %v2840
        %v2842 = vrot.slane %v2841, 1
        %v2843 = vadd.f32 %v2841, %v2842
        %v2844 = vsel %vm785, %v439, 0.0
        %v2845 = vrot.slane %v2844, 4
        %v2846 = vadd.f32 %v2844, %v2845
        %v2847 = vrot.slane %v2846, 2
        %v2848 = vadd.f32 %v2846, %v2847
        %v2849 = vrot.slane %v2848, 1
        %v2850 = vadd.f32 %v2848, %v2849
        %v2851 = vsel %vm785, %v440, 0.0
        %v2852 = vrot.slane %v2851, 4
        %v2853 = vadd.f32 %v2851, %v2852
        %v2854 = vrot.slane %v2853, 2
        %v2855 = vadd.f32 %v2853, %v2854
        %v2856 = vrot.slane %v2855, 1
        %v2857 = vadd.f32 %v2855, %v2856
        %v2858 = vsel %vm785, %v441, 0.0
        %v2859 = vrot.slane %v2858, 4
        %v2860 = vadd.f32 %v2858, %v2859
        %v2861 = vrot.slane %v2860, 2
        %v2862 = vadd.f32 %v2860, %v2861
        %v2863 = vrot.slane %v2862, 1
        %v2864 = vadd.f32 %v2862, %v2863
        %v2865 = vsel %vm785, %v442, 0.0
        %v2866 = vrot.slane %v2865, 4
        %v2867 = vadd.f32 %v2865, %v2866
        %v2868 = vrot.slane %v2867, 2
        %v2869 = vadd.f32 %v2867, %v2868
        %v2870 = vrot.slane %v2869, 1
        %v2871 = vadd.f32 %v2869, %v2870
        %v2872 = vsel %vm785, %v443, 0.0
        %v2873 = vrot.slane %v2872, 4
        %v2874 = vadd.f32 %v2872, %v2873
        %v2875 = vrot.slane %v2874, 2
        %v2876 = vadd.f32 %v2874, %v2875
        %v2877 = vrot.slane %v2876, 1
        %v2878 = vadd.f32 %v2876, %v2877
        %v2879 = vsel %vm785, %v444, 0.0
        %v2880 = vrot.slane %v2879, 4
        %v2881 = vadd.f32 %v2879, %v2880
        %v2882 = vrot.slane %v2881, 2
        %v2883 = vadd.f32 %v2881, %v2882
        %v2884 = vrot.slane %v2883, 1
        %v2885 = vadd.f32 %v2883, %v2884
        %v2886 = vsel %vm785, %v445, 0.0
        %v2887 = vrot.slane %v2886, 4
        %v2888 = vadd.f32 %v2886, %v2887
        %v2889 = vrot.slane %v2888, 2
        %v2890 = vadd.f32 %v2888, %v2889
        %v2891 = vrot.slane %v2890, 1
        %v2892 = vadd.f32 %v2890, %v2891
        %v2893 = vsel %vm785, %v446, 0.0
        %v2894 = vrot.slane %v2893, 4
        %v2895 = vadd.f32 %v2893, %v2894
        %v2896 = vrot.slane %v2895, 2
        %v2897 = vadd.f32 %v2895, %v2896
        %v2898 = vrot.slane %v2897, 1
        %v2899 = vadd.f32 %v2897, %v2898
        %v2900 = vsel %vm785, %v447, 0.0
        %v2901 = vrot.slane %v2900, 4
        %v2902 = vadd.f32 %v2900, %v2901
        %v2903 = vrot.slane %v2902, 2
        %v2904 = vadd.f32 %v2902, %v2903
        %v2905 = vrot.slane %v2904, 1
        %v2906 = vadd.f32 %v2904, %v2905
        %v2907 = vsel %vm785, %v448, 0.0
        %v2908 = vrot.slane %v2907, 4
        %v2909 = vadd.f32 %v2907, %v2908
        %v2910 = vrot.slane %v2909, 2
        %v2911 = vadd.f32 %v2909, %v2910
        %v2912 = vrot.slane %v2911, 1
        %v2913 = vadd.f32 %v2911, %v2912
        %v2914 = vsel %vm785, %v449, 0.0
        %v2915 = vrot.slane %v2914, 4
        %v2916 = vadd.f32 %v2914, %v2915
        %v2917 = vrot.slane %v2916, 2
        %v2918 = vadd.f32 %v2916, %v2917
        %v2919 = vrot.slane %v2918, 1
        %v2920 = vadd.f32 %v2918, %v2919
        %v2921 = vsel %vm785, %v450, 0.0
        %v2922 = vrot.slane %v2921, 4
        %v2923 = vadd.f32 %v2921, %v2922
        %v2924 = vrot.slane %v2923, 2
        %v2925 = vadd.f32 %v2923, %v2924
        %v2926 = vrot.slane %v2925, 1
        %v2927 = vadd.f32 %v2925, %v2926
        %v2928 = vsel %vm785, %v451, 0.0
        %v2929 = vrot.slane %v2928, 4
        %v2930 = vadd.f32 %v2928, %v2929
        %v2931 = vrot.slane %v2930, 2
        %v2932 = vadd.f32 %v2930, %v2931
        %v2933 = vrot.slane %v2932, 1
        %v2934 = vadd.f32 %v2932, %v2933
        %v2935 = vsel %vm785, %v452, 0.0
        %v2936 = vrot.slane %v2935, 4
        %v2937 = vadd.f32 %v2935, %v2936
        %v2938 = vrot.slane %v2937, 2
        %v2939 = vadd.f32 %v2937, %v2938
        %v2940 = vrot.slane %v2939, 1
        %v2941 = vadd.f32 %v2939, %v2940
        %v2942 = vsel %vm785, %v453, 0.0
        %v2943 = vrot.slane %v2942, 4
        %v2944 = vadd.f32 %v2942, %v2943
        %v2945 = vrot.slane %v2944, 2
        %v2946 = vadd.f32 %v2944, %v2945
        %v2947 = vrot.slane %v2946, 1
        %v2948 = vadd.f32 %v2946, %v2947
        %v2949 = vsel %vm785, %v454, 0.0
        %v2950 = vrot.slane %v2949, 4
        %v2951 = vadd.f32 %v2949, %v2950
        %v2952 = vrot.slane %v2951, 2
        %v2953 = vadd.f32 %v2951, %v2952
        %v2954 = vrot.slane %v2953, 1
        %v2955 = vadd.f32 %v2953, %v2954
        %v2956 = vsel %vm785, %v455, 0.0
        %v2957 = vrot.slane %v2956, 4
        %v2958 = vadd.f32 %v2956, %v2957
        %v2959 = vrot.slane %v2958, 2
        %v2960 = vadd.f32 %v2958, %v2959
        %v2961 = vrot.slane %v2960, 1
        %v2962 = vadd.f32 %v2960, %v2961
        %v2963 = vsel %vm785, %v456, 0.0
        %v2964 = vrot.slane %v2963, 4
        %v2965 = vadd.f32 %v2963, %v2964
        %v2966 = vrot.slane %v2965, 2
        %v2967 = vadd.f32 %v2965, %v2966
        %v2968 = vrot.slane %v2967, 1
        %v2969 = vadd.f32 %v2967, %v2968
        %v2970 = vsel %vm785, %v457, 0.0
        %v2971 = vrot.slane %v2970, 4
        %v2972 = vadd.f32 %v2970, %v2971
        %v2973 = vrot.slane %v2972, 2
        %v2974 = vadd.f32 %v2972, %v2973
        %v2975 = vrot.slane %v2974, 1
        %v2976 = vadd.f32 %v2974, %v2975
        %v2977 = vsel %vm785, %v458, 0.0
        %v2978 = vrot.slane %v2977, 4
        %v2979 = vadd.f32 %v2977, %v2978
        %v2980 = vrot.slane %v2979, 2
        %v2981 = vadd.f32 %v2979, %v2980
        %v2982 = vrot.slane %v2981, 1
        %v2983 = vadd.f32 %v2981, %v2982
        %v2984 = vsel %vm785, %v459, 0.0
        %v2985 = vrot.slane %v2984, 4
        %v2986 = vadd.f32 %v2984, %v2985
        %v2987 = vrot.slane %v2986, 2
        %v2988 = vadd.f32 %v2986, %v2987
        %v2989 = vrot.slane %v2988, 1
        %v2990 = vadd.f32 %v2988, %v2989
        %v2991 = vsel %vm785, %v460, 0.0
        %v2992 = vrot.slane %v2991, 4
        %v2993 = vadd.f32 %v2991, %v2992
        %v2994 = vrot.slane %v2993, 2
        %v2995 = vadd.f32 %v2993, %v2994
        %v2996 = vrot.slane %v2995, 1
        %v2997 = vadd.f32 %v2995, %v2996
        %v2998 = vsel %vm785, %v461, 0.0
        %v2999 = vrot.slane %v2998, 4
        %v3000 = vadd.f32 %v2998, %v2999
        %v3001 = vrot.slane %v3000, 2
        %v3002 = vadd.f32 %v3000, %v3001
        %v3003 = vrot.slane %v3002, 1
        %v3004 = vadd.f32 %v3002, %v3003
        %v3005 = vsel %vm785, %v462, 0.0
        %v3006 = vrot.slane %v3005, 4
        %v3007 = vadd.f32 %v3005, %v3006
        %v3008 = vrot.slane %v3007, 2
        %v3009 = vadd.f32 %v3007, %v3008
        %v3010 = vrot.slane %v3009, 1
        %v3011 = vadd.f32 %v3009, %v3010
        %v3012 = vsel %vm785, %v463, 0.0
        %v3013 = vrot.slane %v3012, 4
        %v3014 = vadd.f32 %v3012, %v3013
        %v3015 = vrot.slane %v3014, 2
        %v3016 = vadd.f32 %v3014, %v3015
        %v3017 = vrot.slane %v3016, 1
        %v3018 = vadd.f32 %v3016, %v3017
        %v3019 = vsel %vm785, %v464, 0.0
        %v3020 = vrot.slane %v3019, 4
        %v3021 = vadd.f32 %v3019, %v3020
        %v3022 = vrot.slane %v3021, 2
        %v3023 = vadd.f32 %v3021, %v3022
        %v3024 = vrot.slane %v3023, 1
        %v3025 = vadd.f32 %v3023, %v3024
        %v3026 = vsel %vm785, %v465, 0.0
        %v3027 = vrot.slane %v3026, 4
        %v3028 = vadd.f32 %v3026, %v3027
        %v3029 = vrot.slane %v3028, 2
        %v3030 = vadd.f32 %v3028, %v3029
        %v3031 = vrot.slane %v3030, 1
        %v3032 = vadd.f32 %v3030, %v3031
        %v3033 = vsel %vm785, %v466, 0.0
        %v3034 = vrot.slane %v3033, 4
        %v3035 = vadd.f32 %v3033, %v3034
        %v3036 = vrot.slane %v3035, 2
        %v3037 = vadd.f32 %v3035, %v3036
        %v3038 = vrot.slane %v3037, 1
        %v3039 = vadd.f32 %v3037, %v3038
        %v3040 = vsel %vm785, %v467, 0.0
        %v3041 = vrot.slane %v3040, 4
        %v3042 = vadd.f32 %v3040, %v3041
        %v3043 = vrot.slane %v3042, 2
        %v3044 = vadd.f32 %v3042, %v3043
        %v3045 = vrot.slane %v3044, 1
        %v3046 = vadd.f32 %v3044, %v3045
        %v3047 = vsel %vm785, %v468, 0.0
        %v3048 = vrot.slane %v3047, 4
        %v3049 = vadd.f32 %v3047, %v3048
        %v3050 = vrot.slane %v3049, 2
        %v3051 = vadd.f32 %v3049, %v3050
        %v3052 = vrot.slane %v3051, 1
        %v3053 = vadd.f32 %v3051, %v3052
        %v3054 = vsel %vm785, %v469, 0.0
        %v3055 = vrot.slane %v3054, 4
        %v3056 = vadd.f32 %v3054, %v3055
        %v3057 = vrot.slane %v3056, 2
        %v3058 = vadd.f32 %v3056, %v3057
        %v3059 = vrot.slane %v3058, 1
        %v3060 = vadd.f32 %v3058, %v3059
        %v3061 = vsel %vm785, %v470, 0.0
        %v3062 = vrot.slane %v3061, 4
        %v3063 = vadd.f32 %v3061, %v3062
        %v3064 = vrot.slane %v3063, 2
        %v3065 = vadd.f32 %v3063, %v3064
        %v3066 = vrot.slane %v3065, 1
        %v3067 = vadd.f32 %v3065, %v3066
        %v3068 = vsel %vm785, %v471, 0.0
        %v3069 = vrot.slane %v3068, 4
        %v3070 = vadd.f32 %v3068, %v3069
        %v3071 = vrot.slane %v3070, 2
        %v3072 = vadd.f32 %v3070, %v3071
        %v3073 = vrot.slane %v3072, 1
        %v3074 = vadd.f32 %v3072, %v3073
        %v3075 = vsel %vm785, %v472, 0.0
        %v3076 = vrot.slane %v3075, 4
        %v3077 = vadd.f32 %v3075, %v3076
        %v3078 = vrot.slane %v3077, 2
        %v3079 = vadd.f32 %v3077, %v3078
        %v3080 = vrot.slane %v3079, 1
        %v3081 = vadd.f32 %v3079, %v3080
        %v3082 = vsel %vm785, %v473, 0.0
        %v3083 = vrot.slane %v3082, 4
        %v3084 = vadd.f32 %v3082, %v3083
        %v3085 = vrot.slane %v3084, 2
        %v3086 = vadd.f32 %v3084, %v3085
        %v3087 = vrot.slane %v3086, 1
        %v3088 = vadd.f32 %v3086, %v3087
        %v3089 = vsel %vm785, %v474, 0.0
        %v3090 = vrot.slane %v3089, 4
        %v3091 = vadd.f32 %v3089, %v3090
        %v3092 = vrot.slane %v3091, 2
        %v3093 = vadd.f32 %v3091, %v3092
        %v3094 = vrot.slane %v3093, 1
        %v3095 = vadd.f32 %v3093, %v3094
        %v3096 = vsel %vm785, %v475, 0.0
        %v3097 = vrot.slane %v3096, 4
        %v3098 = vadd.f32 %v3096, %v3097
        %v3099 = vrot.slane %v3098, 2
        %v3100 = vadd.f32 %v3098, %v3099
        %v3101 = vrot.slane %v3100, 1
        %v3102 = vadd.f32 %v3100, %v3101
        %v3103 = vsel %vm785, %v476, 0.0
        %v3104 = vrot.slane %v3103, 4
        %v3105 = vadd.f32 %v3103, %v3104
        %v3106 = vrot.slane %v3105, 2
        %v3107 = vadd.f32 %v3105, %v3106
        %v3108 = vrot.slane %v3107, 1
        %v3109 = vadd.f32 %v3107, %v3108
        %v3110 = vsel %vm785, %v477, 0.0
        %v3111 = vrot.slane %v3110, 4
        %v3112 = vadd.f32 %v3110, %v3111
        %v3113 = vrot.slane %v3112, 2
        %v3114 = vadd.f32 %v3112, %v3113
        %v3115 = vrot.slane %v3114, 1
        %v3116 = vadd.f32 %v3114, %v3115
        %v3117 = vsel %vm785, %v478, 0.0
        %v3118 = vrot.slane %v3117, 4
        %v3119 = vadd.f32 %v3117, %v3118
        %v3120 = vrot.slane %v3119, 2
        %v3121 = vadd.f32 %v3119, %v3120
        %v3122 = vrot.slane %v3121, 1
        %v3123 = vadd.f32 %v3121, %v3122
        %v3124 = vsel %vm785, %v479, 0.0
        %v3125 = vrot.slane %v3124, 4
        %v3126 = vadd.f32 %v3124, %v3125
        %v3127 = vrot.slane %v3126, 2
        %v3128 = vadd.f32 %v3126, %v3127
        %v3129 = vrot.slane %v3128, 1
        %v3130 = vadd.f32 %v3128, %v3129
        %v3131 = vsel %vm785, %v480, 0.0
        %v3132 = vrot.slane %v3131, 4
        %v3133 = vadd.f32 %v3131, %v3132
        %v3134 = vrot.slane %v3133, 2
        %v3135 = vadd.f32 %v3133, %v3134
        %v3136 = vrot.slane %v3135, 1
        %v3137 = vadd.f32 %v3135, %v3136
        %v3138 = vsel %vm785, %v481, 0.0
        %v3139 = vrot.slane %v3138, 4
        %v3140 = vadd.f32 %v3138, %v3139
        %v3141 = vrot.slane %v3140, 2
        %v3142 = vadd.f32 %v3140, %v3141
        %v3143 = vrot.slane %v3142, 1
        %v3144 = vadd.f32 %v3142, %v3143
        %v3145 = vsel %vm785, %v482, 0.0
        %v3146 = vrot.slane %v3145, 4
        %v3147 = vadd.f32 %v3145, %v3146
        %v3148 = vrot.slane %v3147, 2
        %v3149 = vadd.f32 %v3147, %v3148
        %v3150 = vrot.slane %v3149, 1
        %v3151 = vadd.f32 %v3149, %v3150
        %v3152 = vsel %vm785, %v483, 0.0
        %v3153 = vrot.slane %v3152, 4
        %v3154 = vadd.f32 %v3152, %v3153
        %v3155 = vrot.slane %v3154, 2
        %v3156 = vadd.f32 %v3154, %v3155
        %v3157 = vrot.slane %v3156, 1
        %v3158 = vadd.f32 %v3156, %v3157
        %v3159 = vsel %vm785, %v484, 0.0
        %v3160 = vrot.slane %v3159, 4
        %v3161 = vadd.f32 %v3159, %v3160
        %v3162 = vrot.slane %v3161, 2
        %v3163 = vadd.f32 %v3161, %v3162
        %v3164 = vrot.slane %v3163, 1
        %v3165 = vadd.f32 %v3163, %v3164
        %v3166 = vsel %vm785, %v485, 0.0
        %v3167 = vrot.slane %v3166, 4
        %v3168 = vadd.f32 %v3166, %v3167
        %v3169 = vrot.slane %v3168, 2
        %v3170 = vadd.f32 %v3168, %v3169
        %v3171 = vrot.slane %v3170, 1
        %v3172 = vadd.f32 %v3170, %v3171
        %v3173 = vsel %vm785, %v486, 0.0
        %v3174 = vrot.slane %v3173, 4
        %v3175 = vadd.f32 %v3173, %v3174
        %v3176 = vrot.slane %v3175, 2
        %v3177 = vadd.f32 %v3175, %v3176
        %v3178 = vrot.slane %v3177, 1
        %v3179 = vadd.f32 %v3177, %v3178
        %v3180 = vsel %vm785, %v487, 0.0
        %v3181 = vrot.slane %v3180, 4
        %v3182 = vadd.f32 %v3180, %v3181
        %v3183 = vrot.slane %v3182, 2
        %v3184 = vadd.f32 %v3182, %v3183
        %v3185 = vrot.slane %v3184, 1
        %v3186 = vadd.f32 %v3184, %v3185
        %v3187 = vsel %vm785, %v488, 0.0
        %v3188 = vrot.slane %v3187, 4
        %v3189 = vadd.f32 %v3187, %v3188
        %v3190 = vrot.slane %v3189, 2
        %v3191 = vadd.f32 %v3189, %v3190
        %v3192 = vrot.slane %v3191, 1
        %v3193 = vadd.f32 %v3191, %v3192
        %v3194 = vsel %vm785, %v489, 0.0
        %v3195 = vrot.slane %v3194, 4
        %v3196 = vadd.f32 %v3194, %v3195
        %v3197 = vrot.slane %v3196, 2
        %v3198 = vadd.f32 %v3196, %v3197
        %v3199 = vrot.slane %v3198, 1
        %v3200 = vadd.f32 %v3198, %v3199
        %v3201 = vsel %vm785, %v490, 0.0
        %v3202 = vrot.slane %v3201, 4
        %v3203 = vadd.f32 %v3201, %v3202
        %v3204 = vrot.slane %v3203, 2
        %v3205 = vadd.f32 %v3203, %v3204
        %v3206 = vrot.slane %v3205, 1
        %v3207 = vadd.f32 %v3205, %v3206
        %v3208 = vsel %vm785, %v491, 0.0
        %v3209 = vrot.slane %v3208, 4
        %v3210 = vadd.f32 %v3208, %v3209
        %v3211 = vrot.slane %v3210, 2
        %v3212 = vadd.f32 %v3210, %v3211
        %v3213 = vrot.slane %v3212, 1
        %v3214 = vadd.f32 %v3212, %v3213
        %v3215 = vsel %vm785, %v492, 0.0
        %v3216 = vrot.slane %v3215, 4
        %v3217 = vadd.f32 %v3215, %v3216
        %v3218 = vrot.slane %v3217, 2
        %v3219 = vadd.f32 %v3217, %v3218
        %v3220 = vrot.slane %v3219, 1
        %v3221 = vadd.f32 %v3219, %v3220
        %v3222 = vsel %vm785, %v493, 0.0
        %v3223 = vrot.slane %v3222, 4
        %v3224 = vadd.f32 %v3222, %v3223
        %v3225 = vrot.slane %v3224, 2
        %v3226 = vadd.f32 %v3224, %v3225
        %v3227 = vrot.slane %v3226, 1
        %v3228 = vadd.f32 %v3226, %v3227
        %v3229 = vsel %vm785, %v494, 0.0
        %v3230 = vrot.slane %v3229, 4
        %v3231 = vadd.f32 %v3229, %v3230
        %v3232 = vrot.slane %v3231, 2
        %v3233 = vadd.f32 %v3231, %v3232
        %v3234 = vrot.slane %v3233, 1
        %v3235 = vadd.f32 %v3233, %v3234
        %v3236 = vsel %vm785, %v495, 0.0
        %v3237 = vrot.slane %v3236, 4
        %v3238 = vadd.f32 %v3236, %v3237
        %v3239 = vrot.slane %v3238, 2
        %v3240 = vadd.f32 %v3238, %v3239
        %v3241 = vrot.slane %v3240, 1
        %v3242 = vadd.f32 %v3240, %v3241
        %v3243 = vsel %vm785, %v496, 0.0
        %v3244 = vrot.slane %v3243, 4
        %v3245 = vadd.f32 %v3243, %v3244
        %v3246 = vrot.slane %v3245, 2
        %v3247 = vadd.f32 %v3245, %v3246
        %v3248 = vrot.slane %v3247, 1
        %v3249 = vadd.f32 %v3247, %v3248
        %v3250 = vsel %vm785, %v497, 0.0
        %v3251 = vrot.slane %v3250, 4
        %v3252 = vadd.f32 %v3250, %v3251
        %v3253 = vrot.slane %v3252, 2
        %v3254 = vadd.f32 %v3252, %v3253
        %v3255 = vrot.slane %v3254, 1
        %v3256 = vadd.f32 %v3254, %v3255
        %v3257 = vsel %vm785, %v498, 0.0
        %v3258 = vrot.slane %v3257, 4
        %v3259 = vadd.f32 %v3257, %v3258
        %v3260 = vrot.slane %v3259, 2
        %v3261 = vadd.f32 %v3259, %v3260
        %v3262 = vrot.slane %v3261, 1
        %v3263 = vadd.f32 %v3261, %v3262
        %v3264 = vsel %vm785, %v499, 0.0
        %v3265 = vrot.slane %v3264, 4
        %v3266 = vadd.f32 %v3264, %v3265
        %v3267 = vrot.slane %v3266, 2
        %v3268 = vadd.f32 %v3266, %v3267
        %v3269 = vrot.slane %v3268, 1
        %v3270 = vadd.f32 %v3268, %v3269
        %v3271 = vsel %vm785, %v500, 0.0
        %v3272 = vrot.slane %v3271, 4
        %v3273 = vadd.f32 %v3271, %v3272
        %v3274 = vrot.slane %v3273, 2
        %v3275 = vadd.f32 %v3273, %v3274
        %v3276 = vrot.slane %v3275, 1
        %v3277 = vadd.f32 %v3275, %v3276
        %v3278 = vsel %vm785, %v501, 0.0
        %v3279 = vrot.slane %v3278, 4
        %v3280 = vadd.f32 %v3278, %v3279
        %v3281 = vrot.slane %v3280, 2
        %v3282 = vadd.f32 %v3280, %v3281
        %v3283 = vrot.slane %v3282, 1
        %v3284 = vadd.f32 %v3282, %v3283
        %v3285 = vsel %vm785, %v502, 0.0
        %v3286 = vrot.slane %v3285, 4
        %v3287 = vadd.f32 %v3285, %v3286
        %v3288 = vrot.slane %v3287, 2
        %v3289 = vadd.f32 %v3287, %v3288
        %v3290 = vrot.slane %v3289, 1
        %v3291 = vadd.f32 %v3289, %v3290
        %v3292 = vsel %vm785, %v503, 0.0
        %v3293 = vrot.slane %v3292, 4
        %v3294 = vadd.f32 %v3292, %v3293
        %v3295 = vrot.slane %v3294, 2
        %v3296 = vadd.f32 %v3294, %v3295
        %v3297 = vrot.slane %v3296, 1
        %v3298 = vadd.f32 %v3296, %v3297
        %v3299 = vsel %vm785, %v504, 0.0
        %v3300 = vrot.slane %v3299, 4
        %v3301 = vadd.f32 %v3299, %v3300
        %v3302 = vrot.slane %v3301, 2
        %v3303 = vadd.f32 %v3301, %v3302
        %v3304 = vrot.slane %v3303, 1
        %v3305 = vadd.f32 %v3303, %v3304
        %v3306 = vsel %vm785, %v505, 0.0
        %v3307 = vrot.slane %v3306, 4
        %v3308 = vadd.f32 %v3306, %v3307
        %v3309 = vrot.slane %v3308, 2
        %v3310 = vadd.f32 %v3308, %v3309
        %v3311 = vrot.slane %v3310, 1
        %v3312 = vadd.f32 %v3310, %v3311
        %v3313 = vsel %vm785, %v506, 0.0
        %v3314 = vrot.slane %v3313, 4
        %v3315 = vadd.f32 %v3313, %v3314
        %v3316 = vrot.slane %v3315, 2
        %v3317 = vadd.f32 %v3315, %v3316
        %v3318 = vrot.slane %v3317, 1
        %v3319 = vadd.f32 %v3317, %v3318
        %v3320 = vsel %vm785, %v507, 0.0
        %v3321 = vrot.slane %v3320, 4
        %v3322 = vadd.f32 %v3320, %v3321
        %v3323 = vrot.slane %v3322, 2
        %v3324 = vadd.f32 %v3322, %v3323
        %v3325 = vrot.slane %v3324, 1
        %v3326 = vadd.f32 %v3324, %v3325
        %v3327 = vsel %vm785, %v508, 0.0
        %v3328 = vrot.slane %v3327, 4
        %v3329 = vadd.f32 %v3327, %v3328
        %v3330 = vrot.slane %v3329, 2
        %v3331 = vadd.f32 %v3329, %v3330
        %v3332 = vrot.slane %v3331, 1
        %v3333 = vadd.f32 %v3331, %v3332
        %v3334 = vsel %vm785, %v509, 0.0
        %v3335 = vrot.slane %v3334, 4
        %v3336 = vadd.f32 %v3334, %v3335
        %v3337 = vrot.slane %v3336, 2
        %v3338 = vadd.f32 %v3336, %v3337
        %v3339 = vrot.slane %v3338, 1
        %v3340 = vadd.f32 %v3338, %v3339
        %v3341 = vsel %vm785, %v510, 0.0
        %v3342 = vrot.slane %v3341, 4
        %v3343 = vadd.f32 %v3341, %v3342
        %v3344 = vrot.slane %v3343, 2
        %v3345 = vadd.f32 %v3343, %v3344
        %v3346 = vrot.slane %v3345, 1
        %v3347 = vadd.f32 %v3345, %v3346
        %v3348 = vsel %vm785, %v511, 0.0
        %v3349 = vrot.slane %v3348, 4
        %v3350 = vadd.f32 %v3348, %v3349
        %v3351 = vrot.slane %v3350, 2
        %v3352 = vadd.f32 %v3350, %v3351
        %v3353 = vrot.slane %v3352, 1
        %v3354 = vadd.f32 %v3352, %v3353
        %v3355 = vsel %vm785, %v512, 0.0
        %v3356 = vrot.slane %v3355, 4
        %v3357 = vadd.f32 %v3355, %v3356
        %v3358 = vrot.slane %v3357, 2
        %v3359 = vadd.f32 %v3357, %v3358
        %v3360 = vrot.slane %v3359, 1
        %v3361 = vadd.f32 %v3359, %v3360
        %v3362 = vsel %vm785, %v513, 0.0
        %v3363 = vrot.slane %v3362, 4
        %v3364 = vadd.f32 %v3362, %v3363
        %v3365 = vrot.slane %v3364, 2
        %v3366 = vadd.f32 %v3364, %v3365
        %v3367 = vrot.slane %v3366, 1
        %v3368 = vadd.f32 %v3366, %v3367
        %v3369 = vsel %vm785, %v514, 0.0
        %v3370 = vrot.slane %v3369, 4
        %v3371 = vadd.f32 %v3369, %v3370
        %v3372 = vrot.slane %v3371, 2
        %v3373 = vadd.f32 %v3371, %v3372
        %v3374 = vrot.slane %v3373, 1
        %v3375 = vadd.f32 %v3373, %v3374
        %v3376 = vsel %vm785, %v515, 0.0
        %v3377 = vrot.slane %v3376, 4
        %v3378 = vadd.f32 %v3376, %v3377
        %v3379 = vrot.slane %v3378, 2
        %v3380 = vadd.f32 %v3378, %v3379
        %v3381 = vrot.slane %v3380, 1
        %v3382 = vadd.f32 %v3380, %v3381
        %v3383 = vsel %vm785, %v516, 0.0
        %v3384 = vrot.slane %v3383, 4
        %v3385 = vadd.f32 %v3383, %v3384
        %v3386 = vrot.slane %v3385, 2
        %v3387 = vadd.f32 %v3385, %v3386
        %v3388 = vrot.slane %v3387, 1
        %v3389 = vadd.f32 %v3387, %v3388
        %v3390 = vsel %vm785, %v517, 0.0
        %v3391 = vrot.slane %v3390, 4
        %v3392 = vadd.f32 %v3390, %v3391
        %v3393 = vrot.slane %v3392, 2
        %v3394 = vadd.f32 %v3392, %v3393
        %v3395 = vrot.slane %v3394, 1
        %v3396 = vadd.f32 %v3394, %v3395
        %v3397 = vsel %vm785, %v518, 0.0
        %v3398 = vrot.slane %v3397, 4
        %v3399 = vadd.f32 %v3397, %v3398
        %v3400 = vrot.slane %v3399, 2
        %v3401 = vadd.f32 %v3399, %v3400
        %v3402 = vrot.slane %v3401, 1
        %v3403 = vadd.f32 %v3401, %v3402
        %v3404 = vsel %vm785, %v519, 0.0
        %v3405 = vrot.slane %v3404, 4
        %v3406 = vadd.f32 %v3404, %v3405
        %v3407 = vrot.slane %v3406, 2
        %v3408 = vadd.f32 %v3406, %v3407
        %v3409 = vrot.slane %v3408, 1
        %v3410 = vadd.f32 %v3408, %v3409
        %v3411 = vsel %vm785, %v520, 0.0
        %v3412 = vrot.slane %v3411, 4
        %v3413 = vadd.f32 %v3411, %v3412
        %v3414 = vrot.slane %v3413, 2
        %v3415 = vadd.f32 %v3413, %v3414
        %v3416 = vrot.slane %v3415, 1
        %v3417 = vadd.f32 %v3415, %v3416
        %v3418 = vsel %vm785, %v521, 0.0
        %v3419 = vrot.slane %v3418, 4
        %v3420 = vadd.f32 %v3418, %v3419
        %v3421 = vrot.slane %v3420, 2
        %v3422 = vadd.f32 %v3420, %v3421
        %v3423 = vrot.slane %v3422, 1
        %v3424 = vadd.f32 %v3422, %v3423
        %v3425 = vsel %vm785, %v522, 0.0
        %v3426 = vrot.slane %v3425, 4
        %v3427 = vadd.f32 %v3425, %v3426
        %v3428 = vrot.slane %v3427, 2
        %v3429 = vadd.f32 %v3427, %v3428
        %v3430 = vrot.slane %v3429, 1
        %v3431 = vadd.f32 %v3429, %v3430
        %v3432 = vsel %vm785, %v523, 0.0
        %v3433 = vrot.slane %v3432, 4
        %v3434 = vadd.f32 %v3432, %v3433
        %v3435 = vrot.slane %v3434, 2
        %v3436 = vadd.f32 %v3434, %v3435
        %v3437 = vrot.slane %v3436, 1
        %v3438 = vadd.f32 %v3436, %v3437
        %v3439 = vsel %vm785, %v524, 0.0
        %v3440 = vrot.slane %v3439, 4
        %v3441 = vadd.f32 %v3439, %v3440
        %v3442 = vrot.slane %v3441, 2
        %v3443 = vadd.f32 %v3441, %v3442
        %v3444 = vrot.slane %v3443, 1
        %v3445 = vadd.f32 %v3443, %v3444
        %v3446 = vsel %vm785, %v525, 0.0
        %v3447 = vrot.slane %v3446, 4
        %v3448 = vadd.f32 %v3446, %v3447
        %v3449 = vrot.slane %v3448, 2
        %v3450 = vadd.f32 %v3448, %v3449
        %v3451 = vrot.slane %v3450, 1
        %v3452 = vadd.f32 %v3450, %v3451
        %v3453 = vsel %vm785, %v526, 0.0
        %v3454 = vrot.slane %v3453, 4
        %v3455 = vadd.f32 %v3453, %v3454
        %v3456 = vrot.slane %v3455, 2
        %v3457 = vadd.f32 %v3455, %v3456
        %v3458 = vrot.slane %v3457, 1
        %v3459 = vadd.f32 %v3457, %v3458
        %v3460 = vsel %vm785, %v527, 0.0
        %v3461 = vrot.slane %v3460, 4
        %v3462 = vadd.f32 %v3460, %v3461
        %v3463 = vrot.slane %v3462, 2
        %v3464 = vadd.f32 %v3462, %v3463
        %v3465 = vrot.slane %v3464, 1
        %v3466 = vadd.f32 %v3464, %v3465
        %v3467 = vsel %vm785, %v528, 0.0
        %v3468 = vrot.slane %v3467, 4
        %v3469 = vadd.f32 %v3467, %v3468
        %v3470 = vrot.slane %v3469, 2
        %v3471 = vadd.f32 %v3469, %v3470
        %v3472 = vrot.slane %v3471, 1
        %v3473 = vadd.f32 %v3471, %v3472
        %v3474 = vsel %vm785, %v529, 0.0
        %v3475 = vrot.slane %v3474, 4
        %v3476 = vadd.f32 %v3474, %v3475
        %v3477 = vrot.slane %v3476, 2
        %v3478 = vadd.f32 %v3476, %v3477
        %v3479 = vrot.slane %v3478, 1
        %v3480 = vadd.f32 %v3478, %v3479
        %v3481 = vsel %vm785, %v530, 0.0
        %v3482 = vrot.slane %v3481, 4
        %v3483 = vadd.f32 %v3481, %v3482
        %v3484 = vrot.slane %v3483, 2
        %v3485 = vadd.f32 %v3483, %v3484
        %v3486 = vrot.slane %v3485, 1
        %v3487 = vadd.f32 %v3485, %v3486
        %v3488 = vsel %vm785, %v531, 0.0
        %v3489 = vrot.slane %v3488, 4
        %v3490 = vadd.f32 %v3488, %v3489
        %v3491 = vrot.slane %v3490, 2
        %v3492 = vadd.f32 %v3490, %v3491
        %v3493 = vrot.slane %v3492, 1
        %v3494 = vadd.f32 %v3492, %v3493
        %v3495 = vsel %vm785, %v532, 0.0
        %v3496 = vrot.slane %v3495, 4
        %v3497 = vadd.f32 %v3495, %v3496
        %v3498 = vrot.slane %v3497, 2
        %v3499 = vadd.f32 %v3497, %v3498
        %v3500 = vrot.slane %v3499, 1
        %v3501 = vadd.f32 %v3499, %v3500
        %v3502 = vsel %vm785, %v533, 0.0
        %v3503 = vrot.slane %v3502, 4
        %v3504 = vadd.f32 %v3502, %v3503
        %v3505 = vrot.slane %v3504, 2
        %v3506 = vadd.f32 %v3504, %v3505
        %v3507 = vrot.slane %v3506, 1
        %v3508 = vadd.f32 %v3506, %v3507
        %v3509 = vsel %vm785, %v534, 0.0
        %v3510 = vrot.slane %v3509, 4
        %v3511 = vadd.f32 %v3509, %v3510
        %v3512 = vrot.slane %v3511, 2
        %v3513 = vadd.f32 %v3511, %v3512
        %v3514 = vrot.slane %v3513, 1
        %v3515 = vadd.f32 %v3513, %v3514
        %v3516 = vsel %vm785, %v535, 0.0
        %v3517 = vrot.slane %v3516, 4
        %v3518 = vadd.f32 %v3516, %v3517
        %v3519 = vrot.slane %v3518, 2
        %v3520 = vadd.f32 %v3518, %v3519
        %v3521 = vrot.slane %v3520, 1
        %v3522 = vadd.f32 %v3520, %v3521
        %v3523 = vsel %vm785, %v536, 0.0
        %v3524 = vrot.slane %v3523, 4
        %v3525 = vadd.f32 %v3523, %v3524
        %v3526 = vrot.slane %v3525, 2
        %v3527 = vadd.f32 %v3525, %v3526
        %v3528 = vrot.slane %v3527, 1
        %v3529 = vadd.f32 %v3527, %v3528
        %v3530 = vsel %vm785, %v537, 0.0
        %v3531 = vrot.slane %v3530, 4
        %v3532 = vadd.f32 %v3530, %v3531
        %v3533 = vrot.slane %v3532, 2
        %v3534 = vadd.f32 %v3532, %v3533
        %v3535 = vrot.slane %v3534, 1
        %v3536 = vadd.f32 %v3534, %v3535
        %v3537 = vsel %vm785, %v538, 0.0
        %v3538 = vrot.slane %v3537, 4
        %v3539 = vadd.f32 %v3537, %v3538
        %v3540 = vrot.slane %v3539, 2
        %v3541 = vadd.f32 %v3539, %v3540
        %v3542 = vrot.slane %v3541, 1
        %v3543 = vadd.f32 %v3541, %v3542
        %v3544 = vsel %vm785, %v539, 0.0
        %v3545 = vrot.slane %v3544, 4
        %v3546 = vadd.f32 %v3544, %v3545
        %v3547 = vrot.slane %v3546, 2
        %v3548 = vadd.f32 %v3546, %v3547
        %v3549 = vrot.slane %v3548, 1
        %v3550 = vadd.f32 %v3548, %v3549
        %v3551 = vsel %vm785, %v540, 0.0
        %v3552 = vrot.slane %v3551, 4
        %v3553 = vadd.f32 %v3551, %v3552
        %v3554 = vrot.slane %v3553, 2
        %v3555 = vadd.f32 %v3553, %v3554
        %v3556 = vrot.slane %v3555, 1
        %v3557 = vadd.f32 %v3555, %v3556
        %v3558 = vsel %vm785, %v541, 0.0
        %v3559 = vrot.slane %v3558, 4
        %v3560 = vadd.f32 %v3558, %v3559
        %v3561 = vrot.slane %v3560, 2
        %v3562 = vadd.f32 %v3560, %v3561
        %v3563 = vrot.slane %v3562, 1
        %v3564 = vadd.f32 %v3562, %v3563
        %v3565 = vsel %vm785, %v542, 0.0
        %v3566 = vrot.slane %v3565, 4
        %v3567 = vadd.f32 %v3565, %v3566
        %v3568 = vrot.slane %v3567, 2
        %v3569 = vadd.f32 %v3567, %v3568
        %v3570 = vrot.slane %v3569, 1
        %v3571 = vadd.f32 %v3569, %v3570
        %v3572 = vsel %vm785, %v543, 0.0
        %v3573 = vrot.slane %v3572, 4
        %v3574 = vadd.f32 %v3572, %v3573
        %v3575 = vrot.slane %v3574, 2
        %v3576 = vadd.f32 %v3574, %v3575
        %v3577 = vrot.slane %v3576, 1
        %v3578 = vadd.f32 %v3576, %v3577
        %v3579 = vsel %vm785, %v544, 0.0
        %v3580 = vrot.slane %v3579, 4
        %v3581 = vadd.f32 %v3579, %v3580
        %v3582 = vrot.slane %v3581, 2
        %v3583 = vadd.f32 %v3581, %v3582
        %v3584 = vrot.slane %v3583, 1
        %v3585 = vadd.f32 %v3583, %v3584
        %v3586 = vsel %vm785, %v545, 0.0
        %v3587 = vrot.slane %v3586, 4
        %v3588 = vadd.f32 %v3586, %v3587
        %v3589 = vrot.slane %v3588, 2
        %v3590 = vadd.f32 %v3588, %v3589
        %v3591 = vrot.slane %v3590, 1
        %v3592 = vadd.f32 %v3590, %v3591
        %v3593 = vsel %vm785, %v546, 0.0
        %v3594 = vrot.slane %v3593, 4
        %v3595 = vadd.f32 %v3593, %v3594
        %v3596 = vrot.slane %v3595, 2
        %v3597 = vadd.f32 %v3595, %v3596
        %v3598 = vrot.slane %v3597, 1
        %v3599 = vadd.f32 %v3597, %v3598
        %v3600 = vsel %vm785, %v547, 0.0
        %v3601 = vrot.slane %v3600, 4
        %v3602 = vadd.f32 %v3600, %v3601
        %v3603 = vrot.slane %v3602, 2
        %v3604 = vadd.f32 %v3602, %v3603
        %v3605 = vrot.slane %v3604, 1
        %v3606 = vadd.f32 %v3604, %v3605
        %v3607 = vsel %vm785, %v548, 0.0
        %v3608 = vrot.slane %v3607, 4
        %v3609 = vadd.f32 %v3607, %v3608
        %v3610 = vrot.slane %v3609, 2
        %v3611 = vadd.f32 %v3609, %v3610
        %v3612 = vrot.slane %v3611, 1
        %v3613 = vadd.f32 %v3611, %v3612
        %v3614 = vsel %vm785, %v549, 0.0
        %v3615 = vrot.slane %v3614, 4
        %v3616 = vadd.f32 %v3614, %v3615
        %v3617 = vrot.slane %v3616, 2
        %v3618 = vadd.f32 %v3616, %v3617
        %v3619 = vrot.slane %v3618, 1
        %v3620 = vadd.f32 %v3618, %v3619
        %v3621 = vsel %vm785, %v550, 0.0
        %v3622 = vrot.slane %v3621, 4
        %v3623 = vadd.f32 %v3621, %v3622
        %v3624 = vrot.slane %v3623, 2
        %v3625 = vadd.f32 %v3623, %v3624
        %v3626 = vrot.slane %v3625, 1
        %v3627 = vadd.f32 %v3625, %v3626
        %v3628 = vsel %vm785, %v551, 0.0
        %v3629 = vrot.slane %v3628, 4
        %v3630 = vadd.f32 %v3628, %v3629
        %v3631 = vrot.slane %v3630, 2
        %v3632 = vadd.f32 %v3630, %v3631
        %v3633 = vrot.slane %v3632, 1
        %v3634 = vadd.f32 %v3632, %v3633
        %v3635 = vsel %vm785, %v552, 0.0
        %v3636 = vrot.slane %v3635, 4
        %v3637 = vadd.f32 %v3635, %v3636
        %v3638 = vrot.slane %v3637, 2
        %v3639 = vadd.f32 %v3637, %v3638
        %v3640 = vrot.slane %v3639, 1
        %v3641 = vadd.f32 %v3639, %v3640
        %v3642 = vsel %vm785, %v553, 0.0
        %v3643 = vrot.slane %v3642, 4
        %v3644 = vadd.f32 %v3642, %v3643
        %v3645 = vrot.slane %v3644, 2
        %v3646 = vadd.f32 %v3644, %v3645
        %v3647 = vrot.slane %v3646, 1
        %v3648 = vadd.f32 %v3646, %v3647
        %v3649 = vsel %vm785, %v554, 0.0
        %v3650 = vrot.slane %v3649, 4
        %v3651 = vadd.f32 %v3649, %v3650
        %v3652 = vrot.slane %v3651, 2
        %v3653 = vadd.f32 %v3651, %v3652
        %v3654 = vrot.slane %v3653, 1
        %v3655 = vadd.f32 %v3653, %v3654
        %v3656 = vsel %vm785, %v555, 0.0
        %v3657 = vrot.slane %v3656, 4
        %v3658 = vadd.f32 %v3656, %v3657
        %v3659 = vrot.slane %v3658, 2
        %v3660 = vadd.f32 %v3658, %v3659
        %v3661 = vrot.slane %v3660, 1
        %v3662 = vadd.f32 %v3660, %v3661
        %v3663 = vsel %vm785, %v556, 0.0
        %v3664 = vrot.slane %v3663, 4
        %v3665 = vadd.f32 %v3663, %v3664
        %v3666 = vrot.slane %v3665, 2
        %v3667 = vadd.f32 %v3665, %v3666
        %v3668 = vrot.slane %v3667, 1
        %v3669 = vadd.f32 %v3667, %v3668
        %v3670 = vsel %vm785, %v557, 0.0
        %v3671 = vrot.slane %v3670, 4
        %v3672 = vadd.f32 %v3670, %v3671
        %v3673 = vrot.slane %v3672, 2
        %v3674 = vadd.f32 %v3672, %v3673
        %v3675 = vrot.slane %v3674, 1
        %v3676 = vadd.f32 %v3674, %v3675
        %v3677 = vsel %vm785, %v558, 0.0
        %v3678 = vrot.slane %v3677, 4
        %v3679 = vadd.f32 %v3677, %v3678
        %v3680 = vrot.slane %v3679, 2
        %v3681 = vadd.f32 %v3679, %v3680
        %v3682 = vrot.slane %v3681, 1
        %v3683 = vadd.f32 %v3681, %v3682
        %v3684 = vsel %vm785, %v559, 0.0
        %v3685 = vrot.slane %v3684, 4
        %v3686 = vadd.f32 %v3684, %v3685
        %v3687 = vrot.slane %v3686, 2
        %v3688 = vadd.f32 %v3686, %v3687
        %v3689 = vrot.slane %v3688, 1
        %v3690 = vadd.f32 %v3688, %v3689
        %v3691 = vsel %vm785, %v560, 0.0
        %v3692 = vrot.slane %v3691, 4
        %v3693 = vadd.f32 %v3691, %v3692
        %v3694 = vrot.slane %v3693, 2
        %v3695 = vadd.f32 %v3693, %v3694
        %v3696 = vrot.slane %v3695, 1
        %v3697 = vadd.f32 %v3695, %v3696
        %v3698 = vsel %vm785, %v561, 0.0
        %v3699 = vrot.slane %v3698, 4
        %v3700 = vadd.f32 %v3698, %v3699
        %v3701 = vrot.slane %v3700, 2
        %v3702 = vadd.f32 %v3700, %v3701
        %v3703 = vrot.slane %v3702, 1
        %v3704 = vadd.f32 %v3702, %v3703
        %v3705 = vsel %vm785, %v562, 0.0
        %v3706 = vrot.slane %v3705, 4
        %v3707 = vadd.f32 %v3705, %v3706
        %v3708 = vrot.slane %v3707, 2
        %v3709 = vadd.f32 %v3707, %v3708
        %v3710 = vrot.slane %v3709, 1
        %v3711 = vadd.f32 %v3709, %v3710
        %v3712 = vsel %vm785, %v563, 0.0
        %v3713 = vrot.slane %v3712, 4
        %v3714 = vadd.f32 %v3712, %v3713
        %v3715 = vrot.slane %v3714, 2
        %v3716 = vadd.f32 %v3714, %v3715
        %v3717 = vrot.slane %v3716, 1
        %v3718 = vadd.f32 %v3716, %v3717
        %v3719 = vsel %vm785, %v564, 0.0
        %v3720 = vrot.slane %v3719, 4
        %v3721 = vadd.f32 %v3719, %v3720
        %v3722 = vrot.slane %v3721, 2
        %v3723 = vadd.f32 %v3721, %v3722
        %v3724 = vrot.slane %v3723, 1
        %v3725 = vadd.f32 %v3723, %v3724
        %v3726 = vsel %vm785, %v565, 0.0
        %v3727 = vrot.slane %v3726, 4
        %v3728 = vadd.f32 %v3726, %v3727
        %v3729 = vrot.slane %v3728, 2
        %v3730 = vadd.f32 %v3728, %v3729
        %v3731 = vrot.slane %v3730, 1
        %v3732 = vadd.f32 %v3730, %v3731
        %v3733 = vsel %vm785, %v566, 0.0
        %v3734 = vrot.slane %v3733, 4
        %v3735 = vadd.f32 %v3733, %v3734
        %v3736 = vrot.slane %v3735, 2
        %v3737 = vadd.f32 %v3735, %v3736
        %v3738 = vrot.slane %v3737, 1
        %v3739 = vadd.f32 %v3737, %v3738
        %v3740 = vsel %vm785, %v567, 0.0
        %v3741 = vrot.slane %v3740, 4
        %v3742 = vadd.f32 %v3740, %v3741
        %v3743 = vrot.slane %v3742, 2
        %v3744 = vadd.f32 %v3742, %v3743
        %v3745 = vrot.slane %v3744, 1
        %v3746 = vadd.f32 %v3744, %v3745
        %v3747 = vsel %vm785, %v568, 0.0
        %v3748 = vrot.slane %v3747, 4
        %v3749 = vadd.f32 %v3747, %v3748
        %v3750 = vrot.slane %v3749, 2
        %v3751 = vadd.f32 %v3749, %v3750
        %v3752 = vrot.slane %v3751, 1
        %v3753 = vadd.f32 %v3751, %v3752
        %v3754 = vsel %vm785, %v569, 0.0
        %v3755 = vrot.slane %v3754, 4
        %v3756 = vadd.f32 %v3754, %v3755
        %v3757 = vrot.slane %v3756, 2
        %v3758 = vadd.f32 %v3756, %v3757
        %v3759 = vrot.slane %v3758, 1
        %v3760 = vadd.f32 %v3758, %v3759
        %v3761 = vsel %vm785, %v570, 0.0
        %v3762 = vrot.slane %v3761, 4
        %v3763 = vadd.f32 %v3761, %v3762
        %v3764 = vrot.slane %v3763, 2
        %v3765 = vadd.f32 %v3763, %v3764
        %v3766 = vrot.slane %v3765, 1
        %v3767 = vadd.f32 %v3765, %v3766
        %v3768 = vsel %vm785, %v571, 0.0
        %v3769 = vrot.slane %v3768, 4
        %v3770 = vadd.f32 %v3768, %v3769
        %v3771 = vrot.slane %v3770, 2
        %v3772 = vadd.f32 %v3770, %v3771
        %v3773 = vrot.slane %v3772, 1
        %v3774 = vadd.f32 %v3772, %v3773
        %v3775 = vsel %vm785, %v572, 0.0
        %v3776 = vrot.slane %v3775, 4
        %v3777 = vadd.f32 %v3775, %v3776
        %v3778 = vrot.slane %v3777, 2
        %v3779 = vadd.f32 %v3777, %v3778
        %v3780 = vrot.slane %v3779, 1
        %v3781 = vadd.f32 %v3779, %v3780
        %v3782 = vsel %vm785, %v573, 0.0
        %v3783 = vrot.slane %v3782, 4
        %v3784 = vadd.f32 %v3782, %v3783
        %v3785 = vrot.slane %v3784, 2
        %v3786 = vadd.f32 %v3784, %v3785
        %v3787 = vrot.slane %v3786, 1
        %v3788 = vadd.f32 %v3786, %v3787
        %v3789 = vsel %vm785, %v574, 0.0
        %v3790 = vrot.slane %v3789, 4
        %v3791 = vadd.f32 %v3789, %v3790
        %v3792 = vrot.slane %v3791, 2
        %v3793 = vadd.f32 %v3791, %v3792
        %v3794 = vrot.slane %v3793, 1
        %v3795 = vadd.f32 %v3793, %v3794
        %v3796 = vsel %vm785, %v575, 0.0
        %v3797 = vrot.slane %v3796, 4
        %v3798 = vadd.f32 %v3796, %v3797
        %v3799 = vrot.slane %v3798, 2
        %v3800 = vadd.f32 %v3798, %v3799
        %v3801 = vrot.slane %v3800, 1
        %v3802 = vadd.f32 %v3800, %v3801
        %v3803 = vsel %vm785, %v576, 0.0
        %v3804 = vrot.slane %v3803, 4
        %v3805 = vadd.f32 %v3803, %v3804
        %v3806 = vrot.slane %v3805, 2
        %v3807 = vadd.f32 %v3805, %v3806
        %v3808 = vrot.slane %v3807, 1
        %v3809 = vadd.f32 %v3807, %v3808
        %v3810 = vsel %vm785, %v577, 0.0
        %v3811 = vrot.slane %v3810, 4
        %v3812 = vadd.f32 %v3810, %v3811
        %v3813 = vrot.slane %v3812, 2
        %v3814 = vadd.f32 %v3812, %v3813
        %v3815 = vrot.slane %v3814, 1
        %v3816 = vadd.f32 %v3814, %v3815
        %v3817 = vsel %vm785, %v578, 0.0
        %v3818 = vrot.slane %v3817, 4
        %v3819 = vadd.f32 %v3817, %v3818
        %v3820 = vrot.slane %v3819, 2
        %v3821 = vadd.f32 %v3819, %v3820
        %v3822 = vrot.slane %v3821, 1
        %v3823 = vadd.f32 %v3821, %v3822
        %v3824 = vsel %vm785, %v579, 0.0
        %v3825 = vrot.slane %v3824, 4
        %v3826 = vadd.f32 %v3824, %v3825
        %v3827 = vrot.slane %v3826, 2
        %v3828 = vadd.f32 %v3826, %v3827
        %v3829 = vrot.slane %v3828, 1
        %v3830 = vadd.f32 %v3828, %v3829
        %v3831 = vsel %vm785, %v580, 0.0
        %v3832 = vrot.slane %v3831, 4
        %v3833 = vadd.f32 %v3831, %v3832
        %v3834 = vrot.slane %v3833, 2
        %v3835 = vadd.f32 %v3833, %v3834
        %v3836 = vrot.slane %v3835, 1
        %v3837 = vadd.f32 %v3835, %v3836
        %v3838 = vsel %vm785, %v581, 0.0
        %v3839 = vrot.slane %v3838, 4
        %v3840 = vadd.f32 %v3838, %v3839
        %v3841 = vrot.slane %v3840, 2
        %v3842 = vadd.f32 %v3840, %v3841
        %v3843 = vrot.slane %v3842, 1
        %v3844 = vadd.f32 %v3842, %v3843
        %v3845 = vsel %vm785, %v582, 0.0
        %v3846 = vrot.slane %v3845, 4
        %v3847 = vadd.f32 %v3845, %v3846
        %v3848 = vrot.slane %v3847, 2
        %v3849 = vadd.f32 %v3847, %v3848
        %v3850 = vrot.slane %v3849, 1
        %v3851 = vadd.f32 %v3849, %v3850
        %v3852 = vsel %vm785, %v583, 0.0
        %v3853 = vrot.slane %v3852, 4
        %v3854 = vadd.f32 %v3852, %v3853
        %v3855 = vrot.slane %v3854, 2
        %v3856 = vadd.f32 %v3854, %v3855
        %v3857 = vrot.slane %v3856, 1
        %v3858 = vadd.f32 %v3856, %v3857
        %v3859 = vsel %vm785, %v584, 0.0
        %v3860 = vrot.slane %v3859, 4
        %v3861 = vadd.f32 %v3859, %v3860
        %v3862 = vrot.slane %v3861, 2
        %v3863 = vadd.f32 %v3861, %v3862
        %v3864 = vrot.slane %v3863, 1
        %v3865 = vadd.f32 %v3863, %v3864
        %v3866 = vsel %vm785, %v585, 0.0
        %v3867 = vrot.slane %v3866, 4
        %v3868 = vadd.f32 %v3866, %v3867
        %v3869 = vrot.slane %v3868, 2
        %v3870 = vadd.f32 %v3868, %v3869
        %v3871 = vrot.slane %v3870, 1
        %v3872 = vadd.f32 %v3870, %v3871
        %v3873 = vsel %vm785, %v586, 0.0
        %v3874 = vrot.slane %v3873, 4
        %v3875 = vadd.f32 %v3873, %v3874
        %v3876 = vrot.slane %v3875, 2
        %v3877 = vadd.f32 %v3875, %v3876
        %v3878 = vrot.slane %v3877, 1
        %v3879 = vadd.f32 %v3877, %v3878
        %v3880 = vsel %vm785, %v587, 0.0
        %v3881 = vrot.slane %v3880, 4
        %v3882 = vadd.f32 %v3880, %v3881
        %v3883 = vrot.slane %v3882, 2
        %v3884 = vadd.f32 %v3882, %v3883
        %v3885 = vrot.slane %v3884, 1
        %v3886 = vadd.f32 %v3884, %v3885
        %v3887 = vsel %vm785, %v588, 0.0
        %v3888 = vrot.slane %v3887, 4
        %v3889 = vadd.f32 %v3887, %v3888
        %v3890 = vrot.slane %v3889, 2
        %v3891 = vadd.f32 %v3889, %v3890
        %v3892 = vrot.slane %v3891, 1
        %v3893 = vadd.f32 %v3891, %v3892
        %v3894 = vsel %vm785, %v589, 0.0
        %v3895 = vrot.slane %v3894, 4
        %v3896 = vadd.f32 %v3894, %v3895
        %v3897 = vrot.slane %v3896, 2
        %v3898 = vadd.f32 %v3896, %v3897
        %v3899 = vrot.slane %v3898, 1
        %v3900 = vadd.f32 %v3898, %v3899
        %v3901 = vsel %vm785, %v590, 0.0
        %v3902 = vrot.slane %v3901, 4
        %v3903 = vadd.f32 %v3901, %v3902
        %v3904 = vrot.slane %v3903, 2
        %v3905 = vadd.f32 %v3903, %v3904
        %v3906 = vrot.slane %v3905, 1
        %v3907 = vadd.f32 %v3905, %v3906
        %v3908 = vsel %vm785, %v591, 0.0
        %v3909 = vrot.slane %v3908, 4
        %v3910 = vadd.f32 %v3908, %v3909
        %v3911 = vrot.slane %v3910, 2
        %v3912 = vadd.f32 %v3910, %v3911
        %v3913 = vrot.slane %v3912, 1
        %v3914 = vadd.f32 %v3912, %v3913
        %v3915 = vsel %vm785, %v592, 0.0
        %v3916 = vrot.slane %v3915, 4
        %v3917 = vadd.f32 %v3915, %v3916
        %v3918 = vrot.slane %v3917, 2
        %v3919 = vadd.f32 %v3917, %v3918
        %v3920 = vrot.slane %v3919, 1
        %v3921 = vadd.f32 %v3919, %v3920
        %v3922 = vsel %vm785, %v593, 0.0
        %v3923 = vrot.slane %v3922, 4
        %v3924 = vadd.f32 %v3922, %v3923
        %v3925 = vrot.slane %v3924, 2
        %v3926 = vadd.f32 %v3924, %v3925
        %v3927 = vrot.slane %v3926, 1
        %v3928 = vadd.f32 %v3926, %v3927
        %v3929 = vsel %vm785, %v594, 0.0
        %v3930 = vrot.slane %v3929, 4
        %v3931 = vadd.f32 %v3929, %v3930
        %v3932 = vrot.slane %v3931, 2
        %v3933 = vadd.f32 %v3931, %v3932
        %v3934 = vrot.slane %v3933, 1
        %v3935 = vadd.f32 %v3933, %v3934
        %v3936 = vsel %vm785, %v595, 0.0
        %v3937 = vrot.slane %v3936, 4
        %v3938 = vadd.f32 %v3936, %v3937
        %v3939 = vrot.slane %v3938, 2
        %v3940 = vadd.f32 %v3938, %v3939
        %v3941 = vrot.slane %v3940, 1
        %v3942 = vadd.f32 %v3940, %v3941
        %v3943 = vsel %vm785, %v596, 0.0
        %v3944 = vrot.slane %v3943, 4
        %v3945 = vadd.f32 %v3943, %v3944
        %v3946 = vrot.slane %v3945, 2
        %v3947 = vadd.f32 %v3945, %v3946
        %v3948 = vrot.slane %v3947, 1
        %v3949 = vadd.f32 %v3947, %v3948
        %v3950 = vsel %vm785, %v597, 0.0
        %v3951 = vrot.slane %v3950, 4
        %v3952 = vadd.f32 %v3950, %v3951
        %v3953 = vrot.slane %v3952, 2
        %v3954 = vadd.f32 %v3952, %v3953
        %v3955 = vrot.slane %v3954, 1
        %v3956 = vadd.f32 %v3954, %v3955
        %v3957 = vsel %vm785, %v598, 0.0
        %v3958 = vrot.slane %v3957, 4
        %v3959 = vadd.f32 %v3957, %v3958
        %v3960 = vrot.slane %v3959, 2
        %v3961 = vadd.f32 %v3959, %v3960
        %v3962 = vrot.slane %v3961, 1
        %v3963 = vadd.f32 %v3961, %v3962
        %v3964 = vsel %vm785, %v599, 0.0
        %v3965 = vrot.slane %v3964, 4
        %v3966 = vadd.f32 %v3964, %v3965
        %v3967 = vrot.slane %v3966, 2
        %v3968 = vadd.f32 %v3966, %v3967
        %v3969 = vrot.slane %v3968, 1
        %v3970 = vadd.f32 %v3968, %v3969
        %v3971 = vsel %vm785, %v600, 0.0
        %v3972 = vrot.slane %v3971, 4
        %v3973 = vadd.f32 %v3971, %v3972
        %v3974 = vrot.slane %v3973, 2
        %v3975 = vadd.f32 %v3973, %v3974
        %v3976 = vrot.slane %v3975, 1
        %v3977 = vadd.f32 %v3975, %v3976
        %v3978 = vsel %vm785, %v601, 0.0
        %v3979 = vrot.slane %v3978, 4
        %v3980 = vadd.f32 %v3978, %v3979
        %v3981 = vrot.slane %v3980, 2
        %v3982 = vadd.f32 %v3980, %v3981
        %v3983 = vrot.slane %v3982, 1
        %v3984 = vadd.f32 %v3982, %v3983
        %v3985 = vsel %vm785, %v602, 0.0
        %v3986 = vrot.slane %v3985, 4
        %v3987 = vadd.f32 %v3985, %v3986
        %v3988 = vrot.slane %v3987, 2
        %v3989 = vadd.f32 %v3987, %v3988
        %v3990 = vrot.slane %v3989, 1
        %v3991 = vadd.f32 %v3989, %v3990
        %v3992 = vsel %vm785, %v603, 0.0
        %v3993 = vrot.slane %v3992, 4
        %v3994 = vadd.f32 %v3992, %v3993
        %v3995 = vrot.slane %v3994, 2
        %v3996 = vadd.f32 %v3994, %v3995
        %v3997 = vrot.slane %v3996, 1
        %v3998 = vadd.f32 %v3996, %v3997
        %v3999 = vsel %vm785, %v604, 0.0
        %v4000 = vrot.slane %v3999, 4
        %v4001 = vadd.f32 %v3999, %v4000
        %v4002 = vrot.slane %v4001, 2
        %v4003 = vadd.f32 %v4001, %v4002
        %v4004 = vrot.slane %v4003, 1
        %v4005 = vadd.f32 %v4003, %v4004
        %v4006 = vsel %vm785, %v605, 0.0
        %v4007 = vrot.slane %v4006, 4
        %v4008 = vadd.f32 %v4006, %v4007
        %v4009 = vrot.slane %v4008, 2
        %v4010 = vadd.f32 %v4008, %v4009
        %v4011 = vrot.slane %v4010, 1
        %v4012 = vadd.f32 %v4010, %v4011
        %v4013 = vsel %vm785, %v606, 0.0
        %v4014 = vrot.slane %v4013, 4
        %v4015 = vadd.f32 %v4013, %v4014
        %v4016 = vrot.slane %v4015, 2
        %v4017 = vadd.f32 %v4015, %v4016
        %v4018 = vrot.slane %v4017, 1
        %v4019 = vadd.f32 %v4017, %v4018
        %v4020 = vsel %vm785, %v607, 0.0
        %v4021 = vrot.slane %v4020, 4
        %v4022 = vadd.f32 %v4020, %v4021
        %v4023 = vrot.slane %v4022, 2
        %v4024 = vadd.f32 %v4022, %v4023
        %v4025 = vrot.slane %v4024, 1
        %v4026 = vadd.f32 %v4024, %v4025
        %v4027 = vsel %vm785, %v608, 0.0
        %v4028 = vrot.slane %v4027, 4
        %v4029 = vadd.f32 %v4027, %v4028
        %v4030 = vrot.slane %v4029, 2
        %v4031 = vadd.f32 %v4029, %v4030
        %v4032 = vrot.slane %v4031, 1
        %v4033 = vadd.f32 %v4031, %v4032
        %v4034 = vsel %vm785, %v609, 0.0
        %v4035 = vrot.slane %v4034, 4
        %v4036 = vadd.f32 %v4034, %v4035
        %v4037 = vrot.slane %v4036, 2
        %v4038 = vadd.f32 %v4036, %v4037
        %v4039 = vrot.slane %v4038, 1
        %v4040 = vadd.f32 %v4038, %v4039
        %v4041 = vsel %vm785, %v610, 0.0
        %v4042 = vrot.slane %v4041, 4
        %v4043 = vadd.f32 %v4041, %v4042
        %v4044 = vrot.slane %v4043, 2
        %v4045 = vadd.f32 %v4043, %v4044
        %v4046 = vrot.slane %v4045, 1
        %v4047 = vadd.f32 %v4045, %v4046
        %v4048 = vsel %vm785, %v611, 0.0
        %v4049 = vrot.slane %v4048, 4
        %v4050 = vadd.f32 %v4048, %v4049
        %v4051 = vrot.slane %v4050, 2
        %v4052 = vadd.f32 %v4050, %v4051
        %v4053 = vrot.slane %v4052, 1
        %v4054 = vadd.f32 %v4052, %v4053
        %v4055 = vsel %vm785, %v612, 0.0
        %v4056 = vrot.slane %v4055, 4
        %v4057 = vadd.f32 %v4055, %v4056
        %v4058 = vrot.slane %v4057, 2
        %v4059 = vadd.f32 %v4057, %v4058
        %v4060 = vrot.slane %v4059, 1
        %v4061 = vadd.f32 %v4059, %v4060
        %v4062 = vsel %vm785, %v613, 0.0
        %v4063 = vrot.slane %v4062, 4
        %v4064 = vadd.f32 %v4062, %v4063
        %v4065 = vrot.slane %v4064, 2
        %v4066 = vadd.f32 %v4064, %v4065
        %v4067 = vrot.slane %v4066, 1
        %v4068 = vadd.f32 %v4066, %v4067
        %v4069 = vsel %vm785, %v614, 0.0
        %v4070 = vrot.slane %v4069, 4
        %v4071 = vadd.f32 %v4069, %v4070
        %v4072 = vrot.slane %v4071, 2
        %v4073 = vadd.f32 %v4071, %v4072
        %v4074 = vrot.slane %v4073, 1
        %v4075 = vadd.f32 %v4073, %v4074
        %v4076 = vsel %vm785, %v615, 0.0
        %v4077 = vrot.slane %v4076, 4
        %v4078 = vadd.f32 %v4076, %v4077
        %v4079 = vrot.slane %v4078, 2
        %v4080 = vadd.f32 %v4078, %v4079
        %v4081 = vrot.slane %v4080, 1
        %v4082 = vadd.f32 %v4080, %v4081
        %v4083 = vsel %vm785, %v616, 0.0
        %v4084 = vrot.slane %v4083, 4
        %v4085 = vadd.f32 %v4083, %v4084
        %v4086 = vrot.slane %v4085, 2
        %v4087 = vadd.f32 %v4085, %v4086
        %v4088 = vrot.slane %v4087, 1
        %v4089 = vadd.f32 %v4087, %v4088
        %v4090 = vsel %vm785, %v617, 0.0
        %v4091 = vrot.slane %v4090, 4
        %v4092 = vadd.f32 %v4090, %v4091
        %v4093 = vrot.slane %v4092, 2
        %v4094 = vadd.f32 %v4092, %v4093
        %v4095 = vrot.slane %v4094, 1
        %v4096 = vadd.f32 %v4094, %v4095
        %v4097 = vsel %vm785, %v618, 0.0
        %v4098 = vrot.slane %v4097, 4
        %v4099 = vadd.f32 %v4097, %v4098
        %v4100 = vrot.slane %v4099, 2
        %v4101 = vadd.f32 %v4099, %v4100
        %v4102 = vrot.slane %v4101, 1
        %v4103 = vadd.f32 %v4101, %v4102
        %v4104 = vsel %vm785, %v619, 0.0
        %v4105 = vrot.slane %v4104, 4
        %v4106 = vadd.f32 %v4104, %v4105
        %v4107 = vrot.slane %v4106, 2
        %v4108 = vadd.f32 %v4106, %v4107
        %v4109 = vrot.slane %v4108, 1
        %v4110 = vadd.f32 %v4108, %v4109
        %v4111 = vsel %vm785, %v620, 0.0
        %v4112 = vrot.slane %v4111, 4
        %v4113 = vadd.f32 %v4111, %v4112
        %v4114 = vrot.slane %v4113, 2
        %v4115 = vadd.f32 %v4113, %v4114
        %v4116 = vrot.slane %v4115, 1
        %v4117 = vadd.f32 %v4115, %v4116
        %v4118 = vsel %vm785, %v621, 0.0
        %v4119 = vrot.slane %v4118, 4
        %v4120 = vadd.f32 %v4118, %v4119
        %v4121 = vrot.slane %v4120, 2
        %v4122 = vadd.f32 %v4120, %v4121
        %v4123 = vrot.slane %v4122, 1
        %v4124 = vadd.f32 %v4122, %v4123
        %v4125 = vsel %vm785, %v622, 0.0
        %v4126 = vrot.slane %v4125, 4
        %v4127 = vadd.f32 %v4125, %v4126
        %v4128 = vrot.slane %v4127, 2
        %v4129 = vadd.f32 %v4127, %v4128
        %v4130 = vrot.slane %v4129, 1
        %v4131 = vadd.f32 %v4129, %v4130
        %v4132 = vsel %vm785, %v623, 0.0
        %v4133 = vrot.slane %v4132, 4
        %v4134 = vadd.f32 %v4132, %v4133
        %v4135 = vrot.slane %v4134, 2
        %v4136 = vadd.f32 %v4134, %v4135
        %v4137 = vrot.slane %v4136, 1
        %v4138 = vadd.f32 %v4136, %v4137
        %v4139 = vsel %vm785, %v624, 0.0
        %v4140 = vrot.slane %v4139, 4
        %v4141 = vadd.f32 %v4139, %v4140
        %v4142 = vrot.slane %v4141, 2
        %v4143 = vadd.f32 %v4141, %v4142
        %v4144 = vrot.slane %v4143, 1
        %v4145 = vadd.f32 %v4143, %v4144
        %v4146 = vsel %vm785, %v625, 0.0
        %v4147 = vrot.slane %v4146, 4
        %v4148 = vadd.f32 %v4146, %v4147
        %v4149 = vrot.slane %v4148, 2
        %v4150 = vadd.f32 %v4148, %v4149
        %v4151 = vrot.slane %v4150, 1
        %v4152 = vadd.f32 %v4150, %v4151
        %v4153 = vsel %vm785, %v626, 0.0
        %v4154 = vrot.slane %v4153, 4
        %v4155 = vadd.f32 %v4153, %v4154
        %v4156 = vrot.slane %v4155, 2
        %v4157 = vadd.f32 %v4155, %v4156
        %v4158 = vrot.slane %v4157, 1
        %v4159 = vadd.f32 %v4157, %v4158
        %v4160 = vsel %vm785, %v627, 0.0
        %v4161 = vrot.slane %v4160, 4
        %v4162 = vadd.f32 %v4160, %v4161
        %v4163 = vrot.slane %v4162, 2
        %v4164 = vadd.f32 %v4162, %v4163
        %v4165 = vrot.slane %v4164, 1
        %v4166 = vadd.f32 %v4164, %v4165
        %v4167 = vsel %vm785, %v628, 0.0
        %v4168 = vrot.slane %v4167, 4
        %v4169 = vadd.f32 %v4167, %v4168
        %v4170 = vrot.slane %v4169, 2
        %v4171 = vadd.f32 %v4169, %v4170
        %v4172 = vrot.slane %v4171, 1
        %v4173 = vadd.f32 %v4171, %v4172
        %v4174 = vsel %vm785, %v629, 0.0
        %v4175 = vrot.slane %v4174, 4
        %v4176 = vadd.f32 %v4174, %v4175
        %v4177 = vrot.slane %v4176, 2
        %v4178 = vadd.f32 %v4176, %v4177
        %v4179 = vrot.slane %v4178, 1
        %v4180 = vadd.f32 %v4178, %v4179
        %v4181 = vsel %vm785, %v630, 0.0
        %v4182 = vrot.slane %v4181, 4
        %v4183 = vadd.f32 %v4181, %v4182
        %v4184 = vrot.slane %v4183, 2
        %v4185 = vadd.f32 %v4183, %v4184
        %v4186 = vrot.slane %v4185, 1
        %v4187 = vadd.f32 %v4185, %v4186
        %v4188 = vsel %vm785, %v631, 0.0
        %v4189 = vrot.slane %v4188, 4
        %v4190 = vadd.f32 %v4188, %v4189
        %v4191 = vrot.slane %v4190, 2
        %v4192 = vadd.f32 %v4190, %v4191
        %v4193 = vrot.slane %v4192, 1
        %v4194 = vadd.f32 %v4192, %v4193
        %v4195 = vsel %vm785, %v632, 0.0
        %v4196 = vrot.slane %v4195, 4
        %v4197 = vadd.f32 %v4195, %v4196
        %v4198 = vrot.slane %v4197, 2
        %v4199 = vadd.f32 %v4197, %v4198
        %v4200 = vrot.slane %v4199, 1
        %v4201 = vadd.f32 %v4199, %v4200
        %v4202 = vsel %vm785, %v633, 0.0
        %v4203 = vrot.slane %v4202, 4
        %v4204 = vadd.f32 %v4202, %v4203
        %v4205 = vrot.slane %v4204, 2
        %v4206 = vadd.f32 %v4204, %v4205
        %v4207 = vrot.slane %v4206, 1
        %v4208 = vadd.f32 %v4206, %v4207
        %v4209 = vsel %vm785, %v634, 0.0
        %v4210 = vrot.slane %v4209, 4
        %v4211 = vadd.f32 %v4209, %v4210
        %v4212 = vrot.slane %v4211, 2
        %v4213 = vadd.f32 %v4211, %v4212
        %v4214 = vrot.slane %v4213, 1
        %v4215 = vadd.f32 %v4213, %v4214
        %v4216 = vsel %vm785, %v635, 0.0
        %v4217 = vrot.slane %v4216, 4
        %v4218 = vadd.f32 %v4216, %v4217
        %v4219 = vrot.slane %v4218, 2
        %v4220 = vadd.f32 %v4218, %v4219
        %v4221 = vrot.slane %v4220, 1
        %v4222 = vadd.f32 %v4220, %v4221
        %v4223 = vsel %vm785, %v636, 0.0
        %v4224 = vrot.slane %v4223, 4
        %v4225 = vadd.f32 %v4223, %v4224
        %v4226 = vrot.slane %v4225, 2
        %v4227 = vadd.f32 %v4225, %v4226
        %v4228 = vrot.slane %v4227, 1
        %v4229 = vadd.f32 %v4227, %v4228
        %v4230 = vsel %vm785, %v637, 0.0
        %v4231 = vrot.slane %v4230, 4
        %v4232 = vadd.f32 %v4230, %v4231
        %v4233 = vrot.slane %v4232, 2
        %v4234 = vadd.f32 %v4232, %v4233
        %v4235 = vrot.slane %v4234, 1
        %v4236 = vadd.f32 %v4234, %v4235
        %v4237 = vsel %vm785, %v638, 0.0
        %v4238 = vrot.slane %v4237, 4
        %v4239 = vadd.f32 %v4237, %v4238
        %v4240 = vrot.slane %v4239, 2
        %v4241 = vadd.f32 %v4239, %v4240
        %v4242 = vrot.slane %v4241, 1
        %v4243 = vadd.f32 %v4241, %v4242
        %v4244 = vsel %vm785, %v639, 0.0
        %v4245 = vrot.slane %v4244, 4
        %v4246 = vadd.f32 %v4244, %v4245
        %v4247 = vrot.slane %v4246, 2
        %v4248 = vadd.f32 %v4246, %v4247
        %v4249 = vrot.slane %v4248, 1
        %v4250 = vadd.f32 %v4248, %v4249
        %v4251 = vsel %vm785, %v640, 0.0
        %v4252 = vrot.slane %v4251, 4
        %v4253 = vadd.f32 %v4251, %v4252
        %v4254 = vrot.slane %v4253, 2
        %v4255 = vadd.f32 %v4253, %v4254
        %v4256 = vrot.slane %v4255, 1
        %v4257 = vadd.f32 %v4255, %v4256
        %v4258 = vsel %vm785, %v641, 0.0
        %v4259 = vrot.slane %v4258, 4
        %v4260 = vadd.f32 %v4258, %v4259
        %v4261 = vrot.slane %v4260, 2
        %v4262 = vadd.f32 %v4260, %v4261
        %v4263 = vrot.slane %v4262, 1
        %v4264 = vadd.f32 %v4262, %v4263
        %v4265 = vsel %vm785, %v642, 0.0
        %v4266 = vrot.slane %v4265, 4
        %v4267 = vadd.f32 %v4265, %v4266
        %v4268 = vrot.slane %v4267, 2
        %v4269 = vadd.f32 %v4267, %v4268
        %v4270 = vrot.slane %v4269, 1
        %v4271 = vadd.f32 %v4269, %v4270
        %v4272 = vsel %vm785, %v643, 0.0
        %v4273 = vrot.slane %v4272, 4
        %v4274 = vadd.f32 %v4272, %v4273
        %v4275 = vrot.slane %v4274, 2
        %v4276 = vadd.f32 %v4274, %v4275
        %v4277 = vrot.slane %v4276, 1
        %v4278 = vadd.f32 %v4276, %v4277
        %v4279 = vsel %vm785, %v644, 0.0
        %v4280 = vrot.slane %v4279, 4
        %v4281 = vadd.f32 %v4279, %v4280
        %v4282 = vrot.slane %v4281, 2
        %v4283 = vadd.f32 %v4281, %v4282
        %v4284 = vrot.slane %v4283, 1
        %v4285 = vadd.f32 %v4283, %v4284
        %v4286 = vsel %vm785, %v645, 0.0
        %v4287 = vrot.slane %v4286, 4
        %v4288 = vadd.f32 %v4286, %v4287
        %v4289 = vrot.slane %v4288, 2
        %v4290 = vadd.f32 %v4288, %v4289
        %v4291 = vrot.slane %v4290, 1
        %v4292 = vadd.f32 %v4290, %v4291
        %v4293 = vsel %vm785, %v646, 0.0
        %v4294 = vrot.slane %v4293, 4
        %v4295 = vadd.f32 %v4293, %v4294
        %v4296 = vrot.slane %v4295, 2
        %v4297 = vadd.f32 %v4295, %v4296
        %v4298 = vrot.slane %v4297, 1
        %v4299 = vadd.f32 %v4297, %v4298
        %v4300 = vsel %vm785, %v647, 0.0
        %v4301 = vrot.slane %v4300, 4
        %v4302 = vadd.f32 %v4300, %v4301
        %v4303 = vrot.slane %v4302, 2
        %v4304 = vadd.f32 %v4302, %v4303
        %v4305 = vrot.slane %v4304, 1
        %v4306 = vadd.f32 %v4304, %v4305
        %v4307 = vsel %vm785, %v648, 0.0
        %v4308 = vrot.slane %v4307, 4
        %v4309 = vadd.f32 %v4307, %v4308
        %v4310 = vrot.slane %v4309, 2
        %v4311 = vadd.f32 %v4309, %v4310
        %v4312 = vrot.slane %v4311, 1
        %v4313 = vadd.f32 %v4311, %v4312
        %v4314 = vsel %vm785, %v649, 0.0
        %v4315 = vrot.slane %v4314, 4
        %v4316 = vadd.f32 %v4314, %v4315
        %v4317 = vrot.slane %v4316, 2
        %v4318 = vadd.f32 %v4316, %v4317
        %v4319 = vrot.slane %v4318, 1
        %v4320 = vadd.f32 %v4318, %v4319
        %v4321 = vsel %vm785, %v650, 0.0
        %v4322 = vrot.slane %v4321, 4
        %v4323 = vadd.f32 %v4321, %v4322
        %v4324 = vrot.slane %v4323, 2
        %v4325 = vadd.f32 %v4323, %v4324
        %v4326 = vrot.slane %v4325, 1
        %v4327 = vadd.f32 %v4325, %v4326
        %v4328 = vsel %vm785, %v651, 0.0
        %v4329 = vrot.slane %v4328, 4
        %v4330 = vadd.f32 %v4328, %v4329
        %v4331 = vrot.slane %v4330, 2
        %v4332 = vadd.f32 %v4330, %v4331
        %v4333 = vrot.slane %v4332, 1
        %v4334 = vadd.f32 %v4332, %v4333
        %v4335 = vsel %vm785, %v652, 0.0
        %v4336 = vrot.slane %v4335, 4
        %v4337 = vadd.f32 %v4335, %v4336
        %v4338 = vrot.slane %v4337, 2
        %v4339 = vadd.f32 %v4337, %v4338
        %v4340 = vrot.slane %v4339, 1
        %v4341 = vadd.f32 %v4339, %v4340
        %v4342 = vsel %vm785, %v653, 0.0
        %v4343 = vrot.slane %v4342, 4
        %v4344 = vadd.f32 %v4342, %v4343
        %v4345 = vrot.slane %v4344, 2
        %v4346 = vadd.f32 %v4344, %v4345
        %v4347 = vrot.slane %v4346, 1
        %v4348 = vadd.f32 %v4346, %v4347
        %v4349 = vsel %vm785, %v654, 0.0
        %v4350 = vrot.slane %v4349, 4
        %v4351 = vadd.f32 %v4349, %v4350
        %v4352 = vrot.slane %v4351, 2
        %v4353 = vadd.f32 %v4351, %v4352
        %v4354 = vrot.slane %v4353, 1
        %v4355 = vadd.f32 %v4353, %v4354
        %v4356 = vsel %vm785, %v655, 0.0
        %v4357 = vrot.slane %v4356, 4
        %v4358 = vadd.f32 %v4356, %v4357
        %v4359 = vrot.slane %v4358, 2
        %v4360 = vadd.f32 %v4358, %v4359
        %v4361 = vrot.slane %v4360, 1
        %v4362 = vadd.f32 %v4360, %v4361
        %v4363 = vsel %vm785, %v656, 0.0
        %v4364 = vrot.slane %v4363, 4
        %v4365 = vadd.f32 %v4363, %v4364
        %v4366 = vrot.slane %v4365, 2
        %v4367 = vadd.f32 %v4365, %v4366
        %v4368 = vrot.slane %v4367, 1
        %v4369 = vadd.f32 %v4367, %v4368
        %v4370 = vsel %vm785, %v657, 0.0
        %v4371 = vrot.slane %v4370, 4
        %v4372 = vadd.f32 %v4370, %v4371
        %v4373 = vrot.slane %v4372, 2
        %v4374 = vadd.f32 %v4372, %v4373
        %v4375 = vrot.slane %v4374, 1
        %v4376 = vadd.f32 %v4374, %v4375
        %v4377 = vsel %vm785, %v658, 0.0
        %v4378 = vrot.slane %v4377, 4
        %v4379 = vadd.f32 %v4377, %v4378
        %v4380 = vrot.slane %v4379, 2
        %v4381 = vadd.f32 %v4379, %v4380
        %v4382 = vrot.slane %v4381, 1
        %v4383 = vadd.f32 %v4381, %v4382
        %v4384 = vsel %vm785, %v659, 0.0
        %v4385 = vrot.slane %v4384, 4
        %v4386 = vadd.f32 %v4384, %v4385
        %v4387 = vrot.slane %v4386, 2
        %v4388 = vadd.f32 %v4386, %v4387
        %v4389 = vrot.slane %v4388, 1
        %v4390 = vadd.f32 %v4388, %v4389
        %v4391 = vsel %vm785, %v660, 0.0
        %v4392 = vrot.slane %v4391, 4
        %v4393 = vadd.f32 %v4391, %v4392
        %v4394 = vrot.slane %v4393, 2
        %v4395 = vadd.f32 %v4393, %v4394
        %v4396 = vrot.slane %v4395, 1
        %v4397 = vadd.f32 %v4395, %v4396
        %v4398 = vsel %vm785, %v661, 0.0
        %v4399 = vrot.slane %v4398, 4
        %v4400 = vadd.f32 %v4398, %v4399
        %v4401 = vrot.slane %v4400, 2
        %v4402 = vadd.f32 %v4400, %v4401
        %v4403 = vrot.slane %v4402, 1
        %v4404 = vadd.f32 %v4402, %v4403
        %v4405 = vsel %vm785, %v662, 0.0
        %v4406 = vrot.slane %v4405, 4
        %v4407 = vadd.f32 %v4405, %v4406
        %v4408 = vrot.slane %v4407, 2
        %v4409 = vadd.f32 %v4407, %v4408
        %v4410 = vrot.slane %v4409, 1
        %v4411 = vadd.f32 %v4409, %v4410
        %v4412 = vsel %vm785, %v663, 0.0
        %v4413 = vrot.slane %v4412, 4
        %v4414 = vadd.f32 %v4412, %v4413
        %v4415 = vrot.slane %v4414, 2
        %v4416 = vadd.f32 %v4414, %v4415
        %v4417 = vrot.slane %v4416, 1
        %v4418 = vadd.f32 %v4416, %v4417
        %v4419 = vsel %vm785, %v664, 0.0
        %v4420 = vrot.slane %v4419, 4
        %v4421 = vadd.f32 %v4419, %v4420
        %v4422 = vrot.slane %v4421, 2
        %v4423 = vadd.f32 %v4421, %v4422
        %v4424 = vrot.slane %v4423, 1
        %v4425 = vadd.f32 %v4423, %v4424
        %v4426 = vsel %vm785, %v665, 0.0
        %v4427 = vrot.slane %v4426, 4
        %v4428 = vadd.f32 %v4426, %v4427
        %v4429 = vrot.slane %v4428, 2
        %v4430 = vadd.f32 %v4428, %v4429
        %v4431 = vrot.slane %v4430, 1
        %v4432 = vadd.f32 %v4430, %v4431
        %v4433 = vsel %vm785, %v666, 0.0
        %v4434 = vrot.slane %v4433, 4
        %v4435 = vadd.f32 %v4433, %v4434
        %v4436 = vrot.slane %v4435, 2
        %v4437 = vadd.f32 %v4435, %v4436
        %v4438 = vrot.slane %v4437, 1
        %v4439 = vadd.f32 %v4437, %v4438
        %v4440 = vsel %vm785, %v667, 0.0
        %v4441 = vrot.slane %v4440, 4
        %v4442 = vadd.f32 %v4440, %v4441
        %v4443 = vrot.slane %v4442, 2
        %v4444 = vadd.f32 %v4442, %v4443
        %v4445 = vrot.slane %v4444, 1
        %v4446 = vadd.f32 %v4444, %v4445
        %v4447 = vsel %vm785, %v668, 0.0
        %v4448 = vrot.slane %v4447, 4
        %v4449 = vadd.f32 %v4447, %v4448
        %v4450 = vrot.slane %v4449, 2
        %v4451 = vadd.f32 %v4449, %v4450
        %v4452 = vrot.slane %v4451, 1
        %v4453 = vadd.f32 %v4451, %v4452
        %v4454 = vsel %vm785, %v669, 0.0
        %v4455 = vrot.slane %v4454, 4
        %v4456 = vadd.f32 %v4454, %v4455
        %v4457 = vrot.slane %v4456, 2
        %v4458 = vadd.f32 %v4456, %v4457
        %v4459 = vrot.slane %v4458, 1
        %v4460 = vadd.f32 %v4458, %v4459
        %v4461 = vsel %vm785, %v670, 0.0
        %v4462 = vrot.slane %v4461, 4
        %v4463 = vadd.f32 %v4461, %v4462
        %v4464 = vrot.slane %v4463, 2
        %v4465 = vadd.f32 %v4463, %v4464
        %v4466 = vrot.slane %v4465, 1
        %v4467 = vadd.f32 %v4465, %v4466
        %v4468 = vsel %vm785, %v671, 0.0
        %v4469 = vrot.slane %v4468, 4
        %v4470 = vadd.f32 %v4468, %v4469
        %v4471 = vrot.slane %v4470, 2
        %v4472 = vadd.f32 %v4470, %v4471
        %v4473 = vrot.slane %v4472, 1
        %v4474 = vadd.f32 %v4472, %v4473
        %v4475 = vsel %vm785, %v672, 0.0
        %v4476 = vrot.slane %v4475, 4
        %v4477 = vadd.f32 %v4475, %v4476
        %v4478 = vrot.slane %v4477, 2
        %v4479 = vadd.f32 %v4477, %v4478
        %v4480 = vrot.slane %v4479, 1
        %v4481 = vadd.f32 %v4479, %v4480
        %v4482 = vsel %vm785, %v673, 0.0
        %v4483 = vrot.slane %v4482, 4
        %v4484 = vadd.f32 %v4482, %v4483
        %v4485 = vrot.slane %v4484, 2
        %v4486 = vadd.f32 %v4484, %v4485
        %v4487 = vrot.slane %v4486, 1
        %v4488 = vadd.f32 %v4486, %v4487
        %v4489 = vsel %vm785, %v674, 0.0
        %v4490 = vrot.slane %v4489, 4
        %v4491 = vadd.f32 %v4489, %v4490
        %v4492 = vrot.slane %v4491, 2
        %v4493 = vadd.f32 %v4491, %v4492
        %v4494 = vrot.slane %v4493, 1
        %v4495 = vadd.f32 %v4493, %v4494
        %v4496 = vsel %vm785, %v675, 0.0
        %v4497 = vrot.slane %v4496, 4
        %v4498 = vadd.f32 %v4496, %v4497
        %v4499 = vrot.slane %v4498, 2
        %v4500 = vadd.f32 %v4498, %v4499
        %v4501 = vrot.slane %v4500, 1
        %v4502 = vadd.f32 %v4500, %v4501
        %v4503 = vsel %vm785, %v676, 0.0
        %v4504 = vrot.slane %v4503, 4
        %v4505 = vadd.f32 %v4503, %v4504
        %v4506 = vrot.slane %v4505, 2
        %v4507 = vadd.f32 %v4505, %v4506
        %v4508 = vrot.slane %v4507, 1
        %v4509 = vadd.f32 %v4507, %v4508
        %v4510 = vsel %vm785, %v677, 0.0
        %v4511 = vrot.slane %v4510, 4
        %v4512 = vadd.f32 %v4510, %v4511
        %v4513 = vrot.slane %v4512, 2
        %v4514 = vadd.f32 %v4512, %v4513
        %v4515 = vrot.slane %v4514, 1
        %v4516 = vadd.f32 %v4514, %v4515
        %v4517 = vsel %vm785, %v678, 0.0
        %v4518 = vrot.slane %v4517, 4
        %v4519 = vadd.f32 %v4517, %v4518
        %v4520 = vrot.slane %v4519, 2
        %v4521 = vadd.f32 %v4519, %v4520
        %v4522 = vrot.slane %v4521, 1
        %v4523 = vadd.f32 %v4521, %v4522
        %v4524 = vsel %vm785, %v679, 0.0
        %v4525 = vrot.slane %v4524, 4
        %v4526 = vadd.f32 %v4524, %v4525
        %v4527 = vrot.slane %v4526, 2
        %v4528 = vadd.f32 %v4526, %v4527
        %v4529 = vrot.slane %v4528, 1
        %v4530 = vadd.f32 %v4528, %v4529
        %v4531 = vsel %vm785, %v680, 0.0
        %v4532 = vrot.slane %v4531, 4
        %v4533 = vadd.f32 %v4531, %v4532
        %v4534 = vrot.slane %v4533, 2
        %v4535 = vadd.f32 %v4533, %v4534
        %v4536 = vrot.slane %v4535, 1
        %v4537 = vadd.f32 %v4535, %v4536
        %v4538 = vsel %vm785, %v681, 0.0
        %v4539 = vrot.slane %v4538, 4
        %v4540 = vadd.f32 %v4538, %v4539
        %v4541 = vrot.slane %v4540, 2
        %v4542 = vadd.f32 %v4540, %v4541
        %v4543 = vrot.slane %v4542, 1
        %v4544 = vadd.f32 %v4542, %v4543
        %v4545 = vsel %vm785, %v682, 0.0
        %v4546 = vrot.slane %v4545, 4
        %v4547 = vadd.f32 %v4545, %v4546
        %v4548 = vrot.slane %v4547, 2
        %v4549 = vadd.f32 %v4547, %v4548
        %v4550 = vrot.slane %v4549, 1
        %v4551 = vadd.f32 %v4549, %v4550
        %v4552 = vsel %vm785, %v683, 0.0
        %v4553 = vrot.slane %v4552, 4
        %v4554 = vadd.f32 %v4552, %v4553
        %v4555 = vrot.slane %v4554, 2
        %v4556 = vadd.f32 %v4554, %v4555
        %v4557 = vrot.slane %v4556, 1
        %v4558 = vadd.f32 %v4556, %v4557
        %v4559 = vsel %vm785, %v684, 0.0
        %v4560 = vrot.slane %v4559, 4
        %v4561 = vadd.f32 %v4559, %v4560
        %v4562 = vrot.slane %v4561, 2
        %v4563 = vadd.f32 %v4561, %v4562
        %v4564 = vrot.slane %v4563, 1
        %v4565 = vadd.f32 %v4563, %v4564
        %v4566 = vsel %vm785, %v685, 0.0
        %v4567 = vrot.slane %v4566, 4
        %v4568 = vadd.f32 %v4566, %v4567
        %v4569 = vrot.slane %v4568, 2
        %v4570 = vadd.f32 %v4568, %v4569
        %v4571 = vrot.slane %v4570, 1
        %v4572 = vadd.f32 %v4570, %v4571
        %v4573 = vsel %vm785, %v686, 0.0
        %v4574 = vrot.slane %v4573, 4
        %v4575 = vadd.f32 %v4573, %v4574
        %v4576 = vrot.slane %v4575, 2
        %v4577 = vadd.f32 %v4575, %v4576
        %v4578 = vrot.slane %v4577, 1
        %v4579 = vadd.f32 %v4577, %v4578
        %v4580 = vsel %vm785, %v687, 0.0
        %v4581 = vrot.slane %v4580, 4
        %v4582 = vadd.f32 %v4580, %v4581
        %v4583 = vrot.slane %v4582, 2
        %v4584 = vadd.f32 %v4582, %v4583
        %v4585 = vrot.slane %v4584, 1
        %v4586 = vadd.f32 %v4584, %v4585
        %v4587 = vsel %vm785, %v688, 0.0
        %v4588 = vrot.slane %v4587, 4
        %v4589 = vadd.f32 %v4587, %v4588
        %v4590 = vrot.slane %v4589, 2
        %v4591 = vadd.f32 %v4589, %v4590
        %v4592 = vrot.slane %v4591, 1
        %v4593 = vadd.f32 %v4591, %v4592
        %v4594 = vsel %vm785, %v689, 0.0
        %v4595 = vrot.slane %v4594, 4
        %v4596 = vadd.f32 %v4594, %v4595
        %v4597 = vrot.slane %v4596, 2
        %v4598 = vadd.f32 %v4596, %v4597
        %v4599 = vrot.slane %v4598, 1
        %v4600 = vadd.f32 %v4598, %v4599
        %v4601 = vsel %vm785, %v690, 0.0
        %v4602 = vrot.slane %v4601, 4
        %v4603 = vadd.f32 %v4601, %v4602
        %v4604 = vrot.slane %v4603, 2
        %v4605 = vadd.f32 %v4603, %v4604
        %v4606 = vrot.slane %v4605, 1
        %v4607 = vadd.f32 %v4605, %v4606
        %v4608 = vsel %vm785, %v691, 0.0
        %v4609 = vrot.slane %v4608, 4
        %v4610 = vadd.f32 %v4608, %v4609
        %v4611 = vrot.slane %v4610, 2
        %v4612 = vadd.f32 %v4610, %v4611
        %v4613 = vrot.slane %v4612, 1
        %v4614 = vadd.f32 %v4612, %v4613
        %v4615 = vsel %vm785, %v692, 0.0
        %v4616 = vrot.slane %v4615, 4
        %v4617 = vadd.f32 %v4615, %v4616
        %v4618 = vrot.slane %v4617, 2
        %v4619 = vadd.f32 %v4617, %v4618
        %v4620 = vrot.slane %v4619, 1
        %v4621 = vadd.f32 %v4619, %v4620
        %v4622 = vsel %vm785, %v693, 0.0
        %v4623 = vrot.slane %v4622, 4
        %v4624 = vadd.f32 %v4622, %v4623
        %v4625 = vrot.slane %v4624, 2
        %v4626 = vadd.f32 %v4624, %v4625
        %v4627 = vrot.slane %v4626, 1
        %v4628 = vadd.f32 %v4626, %v4627
        %v4629 = vsel %vm785, %v694, 0.0
        %v4630 = vrot.slane %v4629, 4
        %v4631 = vadd.f32 %v4629, %v4630
        %v4632 = vrot.slane %v4631, 2
        %v4633 = vadd.f32 %v4631, %v4632
        %v4634 = vrot.slane %v4633, 1
        %v4635 = vadd.f32 %v4633, %v4634
        %v4636 = vsel %vm785, %v695, 0.0
        %v4637 = vrot.slane %v4636, 4
        %v4638 = vadd.f32 %v4636, %v4637
        %v4639 = vrot.slane %v4638, 2
        %v4640 = vadd.f32 %v4638, %v4639
        %v4641 = vrot.slane %v4640, 1
        %v4642 = vadd.f32 %v4640, %v4641
        %v4643 = vsel %vm785, %v696, 0.0
        %v4644 = vrot.slane %v4643, 4
        %v4645 = vadd.f32 %v4643, %v4644
        %v4646 = vrot.slane %v4645, 2
        %v4647 = vadd.f32 %v4645, %v4646
        %v4648 = vrot.slane %v4647, 1
        %v4649 = vadd.f32 %v4647, %v4648
        %v4650 = vsel %vm785, %v697, 0.0
        %v4651 = vrot.slane %v4650, 4
        %v4652 = vadd.f32 %v4650, %v4651
        %v4653 = vrot.slane %v4652, 2
        %v4654 = vadd.f32 %v4652, %v4653
        %v4655 = vrot.slane %v4654, 1
        %v4656 = vadd.f32 %v4654, %v4655
        %v4657 = vsel %vm785, %v698, 0.0
        %v4658 = vrot.slane %v4657, 4
        %v4659 = vadd.f32 %v4657, %v4658
        %v4660 = vrot.slane %v4659, 2
        %v4661 = vadd.f32 %v4659, %v4660
        %v4662 = vrot.slane %v4661, 1
        %v4663 = vadd.f32 %v4661, %v4662
        %v4664 = vsel %vm785, %v699, 0.0
        %v4665 = vrot.slane %v4664, 4
        %v4666 = vadd.f32 %v4664, %v4665
        %v4667 = vrot.slane %v4666, 2
        %v4668 = vadd.f32 %v4666, %v4667
        %v4669 = vrot.slane %v4668, 1
        %v4670 = vadd.f32 %v4668, %v4669
        %v4671 = vsel %vm785, %v700, 0.0
        %v4672 = vrot.slane %v4671, 4
        %v4673 = vadd.f32 %v4671, %v4672
        %v4674 = vrot.slane %v4673, 2
        %v4675 = vadd.f32 %v4673, %v4674
        %v4676 = vrot.slane %v4675, 1
        %v4677 = vadd.f32 %v4675, %v4676
        %v4678 = vsel %vm785, %v701, 0.0
        %v4679 = vrot.slane %v4678, 4
        %v4680 = vadd.f32 %v4678, %v4679
        %v4681 = vrot.slane %v4680, 2
        %v4682 = vadd.f32 %v4680, %v4681
        %v4683 = vrot.slane %v4682, 1
        %v4684 = vadd.f32 %v4682, %v4683
        %v4685 = vsel %vm785, %v702, 0.0
        %v4686 = vrot.slane %v4685, 4
        %v4687 = vadd.f32 %v4685, %v4686
        %v4688 = vrot.slane %v4687, 2
        %v4689 = vadd.f32 %v4687, %v4688
        %v4690 = vrot.slane %v4689, 1
        %v4691 = vadd.f32 %v4689, %v4690
        %v4692 = vsel %vm785, %v703, 0.0
        %v4693 = vrot.slane %v4692, 4
        %v4694 = vadd.f32 %v4692, %v4693
        %v4695 = vrot.slane %v4694, 2
        %v4696 = vadd.f32 %v4694, %v4695
        %v4697 = vrot.slane %v4696, 1
        %v4698 = vadd.f32 %v4696, %v4697
        %v4699 = vsel %vm785, %v704, 0.0
        %v4700 = vrot.slane %v4699, 4
        %v4701 = vadd.f32 %v4699, %v4700
        %v4702 = vrot.slane %v4701, 2
        %v4703 = vadd.f32 %v4701, %v4702
        %v4704 = vrot.slane %v4703, 1
        %v4705 = vadd.f32 %v4703, %v4704
        %v4706 = vsel %vm785, %v705, 0.0
        %v4707 = vrot.slane %v4706, 4
        %v4708 = vadd.f32 %v4706, %v4707
        %v4709 = vrot.slane %v4708, 2
        %v4710 = vadd.f32 %v4708, %v4709
        %v4711 = vrot.slane %v4710, 1
        %v4712 = vadd.f32 %v4710, %v4711
        %v4713 = vsel %vm785, %v706, 0.0
        %v4714 = vrot.slane %v4713, 4
        %v4715 = vadd.f32 %v4713, %v4714
        %v4716 = vrot.slane %v4715, 2
        %v4717 = vadd.f32 %v4715, %v4716
        %v4718 = vrot.slane %v4717, 1
        %v4719 = vadd.f32 %v4717, %v4718
        %v4720 = vsel %vm785, %v707, 0.0
        %v4721 = vrot.slane %v4720, 4
        %v4722 = vadd.f32 %v4720, %v4721
        %v4723 = vrot.slane %v4722, 2
        %v4724 = vadd.f32 %v4722, %v4723
        %v4725 = vrot.slane %v4724, 1
        %v4726 = vadd.f32 %v4724, %v4725
        %v4727 = vsel %vm785, %v708, 0.0
        %v4728 = vrot.slane %v4727, 4
        %v4729 = vadd.f32 %v4727, %v4728
        %v4730 = vrot.slane %v4729, 2
        %v4731 = vadd.f32 %v4729, %v4730
        %v4732 = vrot.slane %v4731, 1
        %v4733 = vadd.f32 %v4731, %v4732
        %v4734 = vsel %vm785, %v709, 0.0
        %v4735 = vrot.slane %v4734, 4
        %v4736 = vadd.f32 %v4734, %v4735
        %v4737 = vrot.slane %v4736, 2
        %v4738 = vadd.f32 %v4736, %v4737
        %v4739 = vrot.slane %v4738, 1
        %v4740 = vadd.f32 %v4738, %v4739
        %v4741 = vsel %vm785, %v710, 0.0
        %v4742 = vrot.slane %v4741, 4
        %v4743 = vadd.f32 %v4741, %v4742
        %v4744 = vrot.slane %v4743, 2
        %v4745 = vadd.f32 %v4743, %v4744
        %v4746 = vrot.slane %v4745, 1
        %v4747 = vadd.f32 %v4745, %v4746
        %v4748 = vsel %vm785, %v711, 0.0
        %v4749 = vrot.slane %v4748, 4
        %v4750 = vadd.f32 %v4748, %v4749
        %v4751 = vrot.slane %v4750, 2
        %v4752 = vadd.f32 %v4750, %v4751
        %v4753 = vrot.slane %v4752, 1
        %v4754 = vadd.f32 %v4752, %v4753
        %v4755 = vsel %vm785, %v712, 0.0
        %v4756 = vrot.slane %v4755, 4
        %v4757 = vadd.f32 %v4755, %v4756
        %v4758 = vrot.slane %v4757, 2
        %v4759 = vadd.f32 %v4757, %v4758
        %v4760 = vrot.slane %v4759, 1
        %v4761 = vadd.f32 %v4759, %v4760
        %v4762 = vsel %vm785, %v713, 0.0
        %v4763 = vrot.slane %v4762, 4
        %v4764 = vadd.f32 %v4762, %v4763
        %v4765 = vrot.slane %v4764, 2
        %v4766 = vadd.f32 %v4764, %v4765
        %v4767 = vrot.slane %v4766, 1
        %v4768 = vadd.f32 %v4766, %v4767
        %v4769 = vsel %vm785, %v714, 0.0
        %v4770 = vrot.slane %v4769, 4
        %v4771 = vadd.f32 %v4769, %v4770
        %v4772 = vrot.slane %v4771, 2
        %v4773 = vadd.f32 %v4771, %v4772
        %v4774 = vrot.slane %v4773, 1
        %v4775 = vadd.f32 %v4773, %v4774
        %v4776 = vsel %vm785, %v715, 0.0
        %v4777 = vrot.slane %v4776, 4
        %v4778 = vadd.f32 %v4776, %v4777
        %v4779 = vrot.slane %v4778, 2
        %v4780 = vadd.f32 %v4778, %v4779
        %v4781 = vrot.slane %v4780, 1
        %v4782 = vadd.f32 %v4780, %v4781
        %v4783 = vsel %vm785, %v716, 0.0
        %v4784 = vrot.slane %v4783, 4
        %v4785 = vadd.f32 %v4783, %v4784
        %v4786 = vrot.slane %v4785, 2
        %v4787 = vadd.f32 %v4785, %v4786
        %v4788 = vrot.slane %v4787, 1
        %v4789 = vadd.f32 %v4787, %v4788
        %v4790 = vsel %vm785, %v717, 0.0
        %v4791 = vrot.slane %v4790, 4
        %v4792 = vadd.f32 %v4790, %v4791
        %v4793 = vrot.slane %v4792, 2
        %v4794 = vadd.f32 %v4792, %v4793
        %v4795 = vrot.slane %v4794, 1
        %v4796 = vadd.f32 %v4794, %v4795
        %v4797 = vsel %vm785, %v718, 0.0
        %v4798 = vrot.slane %v4797, 4
        %v4799 = vadd.f32 %v4797, %v4798
        %v4800 = vrot.slane %v4799, 2
        %v4801 = vadd.f32 %v4799, %v4800
        %v4802 = vrot.slane %v4801, 1
        %v4803 = vadd.f32 %v4801, %v4802
        %v4804 = vsel %vm785, %v719, 0.0
        %v4805 = vrot.slane %v4804, 4
        %v4806 = vadd.f32 %v4804, %v4805
        %v4807 = vrot.slane %v4806, 2
        %v4808 = vadd.f32 %v4806, %v4807
        %v4809 = vrot.slane %v4808, 1
        %v4810 = vadd.f32 %v4808, %v4809
        %v4811 = vsel %vm785, %v720, 0.0
        %v4812 = vrot.slane %v4811, 4
        %v4813 = vadd.f32 %v4811, %v4812
        %v4814 = vrot.slane %v4813, 2
        %v4815 = vadd.f32 %v4813, %v4814
        %v4816 = vrot.slane %v4815, 1
        %v4817 = vadd.f32 %v4815, %v4816
        %v4818 = vsel %vm785, %v721, 0.0
        %v4819 = vrot.slane %v4818, 4
        %v4820 = vadd.f32 %v4818, %v4819
        %v4821 = vrot.slane %v4820, 2
        %v4822 = vadd.f32 %v4820, %v4821
        %v4823 = vrot.slane %v4822, 1
        %v4824 = vadd.f32 %v4822, %v4823
        %v4825 = vsel %vm785, %v722, 0.0
        %v4826 = vrot.slane %v4825, 4
        %v4827 = vadd.f32 %v4825, %v4826
        %v4828 = vrot.slane %v4827, 2
        %v4829 = vadd.f32 %v4827, %v4828
        %v4830 = vrot.slane %v4829, 1
        %v4831 = vadd.f32 %v4829, %v4830
        %v4832 = vsel %vm785, %v723, 0.0
        %v4833 = vrot.slane %v4832, 4
        %v4834 = vadd.f32 %v4832, %v4833
        %v4835 = vrot.slane %v4834, 2
        %v4836 = vadd.f32 %v4834, %v4835
        %v4837 = vrot.slane %v4836, 1
        %v4838 = vadd.f32 %v4836, %v4837
        %v4839 = vsel %vm785, %v724, 0.0
        %v4840 = vrot.slane %v4839, 4
        %v4841 = vadd.f32 %v4839, %v4840
        %v4842 = vrot.slane %v4841, 2
        %v4843 = vadd.f32 %v4841, %v4842
        %v4844 = vrot.slane %v4843, 1
        %v4845 = vadd.f32 %v4843, %v4844
        %v4846 = vsel %vm785, %v725, 0.0
        %v4847 = vrot.slane %v4846, 4
        %v4848 = vadd.f32 %v4846, %v4847
        %v4849 = vrot.slane %v4848, 2
        %v4850 = vadd.f32 %v4848, %v4849
        %v4851 = vrot.slane %v4850, 1
        %v4852 = vadd.f32 %v4850, %v4851
        %v4853 = vsel %vm785, %v726, 0.0
        %v4854 = vrot.slane %v4853, 4
        %v4855 = vadd.f32 %v4853, %v4854
        %v4856 = vrot.slane %v4855, 2
        %v4857 = vadd.f32 %v4855, %v4856
        %v4858 = vrot.slane %v4857, 1
        %v4859 = vadd.f32 %v4857, %v4858
        %v4860 = vsel %vm785, %v727, 0.0
        %v4861 = vrot.slane %v4860, 4
        %v4862 = vadd.f32 %v4860, %v4861
        %v4863 = vrot.slane %v4862, 2
        %v4864 = vadd.f32 %v4862, %v4863
        %v4865 = vrot.slane %v4864, 1
        %v4866 = vadd.f32 %v4864, %v4865
        %v4867 = vsel %vm785, %v728, 0.0
        %v4868 = vrot.slane %v4867, 4
        %v4869 = vadd.f32 %v4867, %v4868
        %v4870 = vrot.slane %v4869, 2
        %v4871 = vadd.f32 %v4869, %v4870
        %v4872 = vrot.slane %v4871, 1
        %v4873 = vadd.f32 %v4871, %v4872
        %v4874 = vsel %vm785, %v729, 0.0
        %v4875 = vrot.slane %v4874, 4
        %v4876 = vadd.f32 %v4874, %v4875
        %v4877 = vrot.slane %v4876, 2
        %v4878 = vadd.f32 %v4876, %v4877
        %v4879 = vrot.slane %v4878, 1
        %v4880 = vadd.f32 %v4878, %v4879
        %v4881 = vsel %vm785, %v730, 0.0
        %v4882 = vrot.slane %v4881, 4
        %v4883 = vadd.f32 %v4881, %v4882
        %v4884 = vrot.slane %v4883, 2
        %v4885 = vadd.f32 %v4883, %v4884
        %v4886 = vrot.slane %v4885, 1
        %v4887 = vadd.f32 %v4885, %v4886
        %v4888 = vsel %vm785, %v731, 0.0
        %v4889 = vrot.slane %v4888, 4
        %v4890 = vadd.f32 %v4888, %v4889
        %v4891 = vrot.slane %v4890, 2
        %v4892 = vadd.f32 %v4890, %v4891
        %v4893 = vrot.slane %v4892, 1
        %v4894 = vadd.f32 %v4892, %v4893
        %v4895 = vsel %vm785, %v732, 0.0
        %v4896 = vrot.slane %v4895, 4
        %v4897 = vadd.f32 %v4895, %v4896
        %v4898 = vrot.slane %v4897, 2
        %v4899 = vadd.f32 %v4897, %v4898
        %v4900 = vrot.slane %v4899, 1
        %v4901 = vadd.f32 %v4899, %v4900
        %v4902 = vsel %vm785, %v733, 0.0
        %v4903 = vrot.slane %v4902, 4
        %v4904 = vadd.f32 %v4902, %v4903
        %v4905 = vrot.slane %v4904, 2
        %v4906 = vadd.f32 %v4904, %v4905
        %v4907 = vrot.slane %v4906, 1
        %v4908 = vadd.f32 %v4906, %v4907
        %v4909 = vsel %vm785, %v734, 0.0
        %v4910 = vrot.slane %v4909, 4
        %v4911 = vadd.f32 %v4909, %v4910
        %v4912 = vrot.slane %v4911, 2
        %v4913 = vadd.f32 %v4911, %v4912
        %v4914 = vrot.slane %v4913, 1
        %v4915 = vadd.f32 %v4913, %v4914
        %v4916 = vsel %vm785, %v735, 0.0
        %v4917 = vrot.slane %v4916, 4
        %v4918 = vadd.f32 %v4916, %v4917
        %v4919 = vrot.slane %v4918, 2
        %v4920 = vadd.f32 %v4918, %v4919
        %v4921 = vrot.slane %v4920, 1
        %v4922 = vadd.f32 %v4920, %v4921
        %v4923 = vsel %vm785, %v736, 0.0
        %v4924 = vrot.slane %v4923, 4
        %v4925 = vadd.f32 %v4923, %v4924
        %v4926 = vrot.slane %v4925, 2
        %v4927 = vadd.f32 %v4925, %v4926
        %v4928 = vrot.slane %v4927, 1
        %v4929 = vadd.f32 %v4927, %v4928
        %v4930 = vsel %vm785, %v737, 0.0
        %v4931 = vrot.slane %v4930, 4
        %v4932 = vadd.f32 %v4930, %v4931
        %v4933 = vrot.slane %v4932, 2
        %v4934 = vadd.f32 %v4932, %v4933
        %v4935 = vrot.slane %v4934, 1
        %v4936 = vadd.f32 %v4934, %v4935
        %v4937 = vsel %vm785, %v738, 0.0
        %v4938 = vrot.slane %v4937, 4
        %v4939 = vadd.f32 %v4937, %v4938
        %v4940 = vrot.slane %v4939, 2
        %v4941 = vadd.f32 %v4939, %v4940
        %v4942 = vrot.slane %v4941, 1
        %v4943 = vadd.f32 %v4941, %v4942
        %v4944 = vsel %vm785, %v739, 0.0
        %v4945 = vrot.slane %v4944, 4
        %v4946 = vadd.f32 %v4944, %v4945
        %v4947 = vrot.slane %v4946, 2
        %v4948 = vadd.f32 %v4946, %v4947
        %v4949 = vrot.slane %v4948, 1
        %v4950 = vadd.f32 %v4948, %v4949
        %v4951 = vsel %vm785, %v740, 0.0
        %v4952 = vrot.slane %v4951, 4
        %v4953 = vadd.f32 %v4951, %v4952
        %v4954 = vrot.slane %v4953, 2
        %v4955 = vadd.f32 %v4953, %v4954
        %v4956 = vrot.slane %v4955, 1
        %v4957 = vadd.f32 %v4955, %v4956
        %v4958 = vsel %vm785, %v741, 0.0
        %v4959 = vrot.slane %v4958, 4
        %v4960 = vadd.f32 %v4958, %v4959
        %v4961 = vrot.slane %v4960, 2
        %v4962 = vadd.f32 %v4960, %v4961
        %v4963 = vrot.slane %v4962, 1
        %v4964 = vadd.f32 %v4962, %v4963
        %v4965 = vsel %vm785, %v742, 0.0
        %v4966 = vrot.slane %v4965, 4
        %v4967 = vadd.f32 %v4965, %v4966
        %v4968 = vrot.slane %v4967, 2
        %v4969 = vadd.f32 %v4967, %v4968
        %v4970 = vrot.slane %v4969, 1
        %v4971 = vadd.f32 %v4969, %v4970
        %v4972 = vsel %vm785, %v743, 0.0
        %v4973 = vrot.slane %v4972, 4
        %v4974 = vadd.f32 %v4972, %v4973
        %v4975 = vrot.slane %v4974, 2
        %v4976 = vadd.f32 %v4974, %v4975
        %v4977 = vrot.slane %v4976, 1
        %v4978 = vadd.f32 %v4976, %v4977
        %v4979 = vsel %vm785, %v744, 0.0
        %v4980 = vrot.slane %v4979, 4
        %v4981 = vadd.f32 %v4979, %v4980
        %v4982 = vrot.slane %v4981, 2
        %v4983 = vadd.f32 %v4981, %v4982
        %v4984 = vrot.slane %v4983, 1
        %v4985 = vadd.f32 %v4983, %v4984
        %v4986 = vsel %vm785, %v745, 0.0
        %v4987 = vrot.slane %v4986, 4
        %v4988 = vadd.f32 %v4986, %v4987
        %v4989 = vrot.slane %v4988, 2
        %v4990 = vadd.f32 %v4988, %v4989
        %v4991 = vrot.slane %v4990, 1
        %v4992 = vadd.f32 %v4990, %v4991
        %v4993 = vsel %vm785, %v746, 0.0
        %v4994 = vrot.slane %v4993, 4
        %v4995 = vadd.f32 %v4993, %v4994
        %v4996 = vrot.slane %v4995, 2
        %v4997 = vadd.f32 %v4995, %v4996
        %v4998 = vrot.slane %v4997, 1
        %v4999 = vadd.f32 %v4997, %v4998
        %v5000 = vsel %vm785, %v747, 0.0
        %v5001 = vrot.slane %v5000, 4
        %v5002 = vadd.f32 %v5000, %v5001
        %v5003 = vrot.slane %v5002, 2
        %v5004 = vadd.f32 %v5002, %v5003
        %v5005 = vrot.slane %v5004, 1
        %v5006 = vadd.f32 %v5004, %v5005
        %v5007 = vsel %vm785, %v748, 0.0
        %v5008 = vrot.slane %v5007, 4
        %v5009 = vadd.f32 %v5007, %v5008
        %v5010 = vrot.slane %v5009, 2
        %v5011 = vadd.f32 %v5009, %v5010
        %v5012 = vrot.slane %v5011, 1
        %v5013 = vadd.f32 %v5011, %v5012
        %v5014 = vsel %vm785, %v749, 0.0
        %v5015 = vrot.slane %v5014, 4
        %v5016 = vadd.f32 %v5014, %v5015
        %v5017 = vrot.slane %v5016, 2
        %v5018 = vadd.f32 %v5016, %v5017
        %v5019 = vrot.slane %v5018, 1
        %v5020 = vadd.f32 %v5018, %v5019
        %v5021 = vsel %vm785, %v750, 0.0
        %v5022 = vrot.slane %v5021, 4
        %v5023 = vadd.f32 %v5021, %v5022
        %v5024 = vrot.slane %v5023, 2
        %v5025 = vadd.f32 %v5023, %v5024
        %v5026 = vrot.slane %v5025, 1
        %v5027 = vadd.f32 %v5025, %v5026
        %v5028 = vsel %vm785, %v751, 0.0
        %v5029 = vrot.slane %v5028, 4
        %v5030 = vadd.f32 %v5028, %v5029
        %v5031 = vrot.slane %v5030, 2
        %v5032 = vadd.f32 %v5030, %v5031
        %v5033 = vrot.slane %v5032, 1
        %v5034 = vadd.f32 %v5032, %v5033
        %v5035 = vsel %vm785, %v752, 0.0
        %v5036 = vrot.slane %v5035, 4
        %v5037 = vadd.f32 %v5035, %v5036
        %v5038 = vrot.slane %v5037, 2
        %v5039 = vadd.f32 %v5037, %v5038
        %v5040 = vrot.slane %v5039, 1
        %v5041 = vadd.f32 %v5039, %v5040
        %v5042 = vsel %vm785, %v753, 0.0
        %v5043 = vrot.slane %v5042, 4
        %v5044 = vadd.f32 %v5042, %v5043
        %v5045 = vrot.slane %v5044, 2
        %v5046 = vadd.f32 %v5044, %v5045
        %v5047 = vrot.slane %v5046, 1
        %v5048 = vadd.f32 %v5046, %v5047
        %v5049 = vsel %vm785, %v754, 0.0
        %v5050 = vrot.slane %v5049, 4
        %v5051 = vadd.f32 %v5049, %v5050
        %v5052 = vrot.slane %v5051, 2
        %v5053 = vadd.f32 %v5051, %v5052
        %v5054 = vrot.slane %v5053, 1
        %v5055 = vadd.f32 %v5053, %v5054
        %v5056 = vsel %vm785, %v755, 0.0
        %v5057 = vrot.slane %v5056, 4
        %v5058 = vadd.f32 %v5056, %v5057
        %v5059 = vrot.slane %v5058, 2
        %v5060 = vadd.f32 %v5058, %v5059
        %v5061 = vrot.slane %v5060, 1
        %v5062 = vadd.f32 %v5060, %v5061
        %v5063 = vsel %vm785, %v756, 0.0
        %v5064 = vrot.slane %v5063, 4
        %v5065 = vadd.f32 %v5063, %v5064
        %v5066 = vrot.slane %v5065, 2
        %v5067 = vadd.f32 %v5065, %v5066
        %v5068 = vrot.slane %v5067, 1
        %v5069 = vadd.f32 %v5067, %v5068
        %v5070 = vsel %vm785, %v757, 0.0
        %v5071 = vrot.slane %v5070, 4
        %v5072 = vadd.f32 %v5070, %v5071
        %v5073 = vrot.slane %v5072, 2
        %v5074 = vadd.f32 %v5072, %v5073
        %v5075 = vrot.slane %v5074, 1
        %v5076 = vadd.f32 %v5074, %v5075
        %v5077 = vsel %vm785, %v758, 0.0
        %v5078 = vrot.slane %v5077, 4
        %v5079 = vadd.f32 %v5077, %v5078
        %v5080 = vrot.slane %v5079, 2
        %v5081 = vadd.f32 %v5079, %v5080
        %v5082 = vrot.slane %v5081, 1
        %v5083 = vadd.f32 %v5081, %v5082
        %v5084 = vsel %vm785, %v759, 0.0
        %v5085 = vrot.slane %v5084, 4
        %v5086 = vadd.f32 %v5084, %v5085
        %v5087 = vrot.slane %v5086, 2
        %v5088 = vadd.f32 %v5086, %v5087
        %v5089 = vrot.slane %v5088, 1
        %v5090 = vadd.f32 %v5088, %v5089
        %v5091 = vsel %vm785, %v760, 0.0
        %v5092 = vrot.slane %v5091, 4
        %v5093 = vadd.f32 %v5091, %v5092
        %v5094 = vrot.slane %v5093, 2
        %v5095 = vadd.f32 %v5093, %v5094
        %v5096 = vrot.slane %v5095, 1
        %v5097 = vadd.f32 %v5095, %v5096
        %v5098 = vsel %vm785, %v761, 0.0
        %v5099 = vrot.slane %v5098, 4
        %v5100 = vadd.f32 %v5098, %v5099
        %v5101 = vrot.slane %v5100, 2
        %v5102 = vadd.f32 %v5100, %v5101
        %v5103 = vrot.slane %v5102, 1
        %v5104 = vadd.f32 %v5102, %v5103
        %v5105 = vsel %vm785, %v762, 0.0
        %v5106 = vrot.slane %v5105, 4
        %v5107 = vadd.f32 %v5105, %v5106
        %v5108 = vrot.slane %v5107, 2
        %v5109 = vadd.f32 %v5107, %v5108
        %v5110 = vrot.slane %v5109, 1
        %v5111 = vadd.f32 %v5109, %v5110
        %v5112 = vsel %vm785, %v763, 0.0
        %v5113 = vrot.slane %v5112, 4
        %v5114 = vadd.f32 %v5112, %v5113
        %v5115 = vrot.slane %v5114, 2
        %v5116 = vadd.f32 %v5114, %v5115
        %v5117 = vrot.slane %v5116, 1
        %v5118 = vadd.f32 %v5116, %v5117
        %v5119 = vsel %vm785, %v764, 0.0
        %v5120 = vrot.slane %v5119, 4
        %v5121 = vadd.f32 %v5119, %v5120
        %v5122 = vrot.slane %v5121, 2
        %v5123 = vadd.f32 %v5121, %v5122
        %v5124 = vrot.slane %v5123, 1
        %v5125 = vadd.f32 %v5123, %v5124
        %v5126 = vsel %vm785, %v765, 0.0
        %v5127 = vrot.slane %v5126, 4
        %v5128 = vadd.f32 %v5126, %v5127
        %v5129 = vrot.slane %v5128, 2
        %v5130 = vadd.f32 %v5128, %v5129
        %v5131 = vrot.slane %v5130, 1
        %v5132 = vadd.f32 %v5130, %v5131
        %v5133 = vsel %vm785, %v766, 0.0
        %v5134 = vrot.slane %v5133, 4
        %v5135 = vadd.f32 %v5133, %v5134
        %v5136 = vrot.slane %v5135, 2
        %v5137 = vadd.f32 %v5135, %v5136
        %v5138 = vrot.slane %v5137, 1
        %v5139 = vadd.f32 %v5137, %v5138
        %v5140 = vsel %vm785, %v767, 0.0
        %v5141 = vrot.slane %v5140, 4
        %v5142 = vadd.f32 %v5140, %v5141
        %v5143 = vrot.slane %v5142, 2
        %v5144 = vadd.f32 %v5142, %v5143
        %v5145 = vrot.slane %v5144, 1
        %v5146 = vadd.f32 %v5144, %v5145
        %v5147 = vsel %vm785, %v768, 0.0
        %v5148 = vrot.slane %v5147, 4
        %v5149 = vadd.f32 %v5147, %v5148
        %v5150 = vrot.slane %v5149, 2
        %v5151 = vadd.f32 %v5149, %v5150
        %v5152 = vrot.slane %v5151, 1
        %v5153 = vadd.f32 %v5151, %v5152
        %v5154 = vsel %vm785, %v769, 0.0
        %v5155 = vrot.slane %v5154, 4
        %v5156 = vadd.f32 %v5154, %v5155
        %v5157 = vrot.slane %v5156, 2
        %v5158 = vadd.f32 %v5156, %v5157
        %v5159 = vrot.slane %v5158, 1
        %v5160 = vadd.f32 %v5158, %v5159
        %v5161 = vsel %vm785, %v770, 0.0
        %v5162 = vrot.slane %v5161, 4
        %v5163 = vadd.f32 %v5161, %v5162
        %v5164 = vrot.slane %v5163, 2
        %v5165 = vadd.f32 %v5163, %v5164
        %v5166 = vrot.slane %v5165, 1
        %v5167 = vadd.f32 %v5165, %v5166
        %v5168 = vsel %vm785, %v771, 0.0
        %v5169 = vrot.slane %v5168, 4
        %v5170 = vadd.f32 %v5168, %v5169
        %v5171 = vrot.slane %v5170, 2
        %v5172 = vadd.f32 %v5170, %v5171
        %v5173 = vrot.slane %v5172, 1
        %v5174 = vadd.f32 %v5172, %v5173
        %v5175 = vsel %vm785, %v772, 0.0
        %v5176 = vrot.slane %v5175, 4
        %v5177 = vadd.f32 %v5175, %v5176
        %v5178 = vrot.slane %v5177, 2
        %v5179 = vadd.f32 %v5177, %v5178
        %v5180 = vrot.slane %v5179, 1
        %v5181 = vadd.f32 %v5179, %v5180
        %v5182 = vsel %vm785, %v773, 0.0
        %v5183 = vrot.slane %v5182, 4
        %v5184 = vadd.f32 %v5182, %v5183
        %v5185 = vrot.slane %v5184, 2
        %v5186 = vadd.f32 %v5184, %v5185
        %v5187 = vrot.slane %v5186, 1
        %v5188 = vadd.f32 %v5186, %v5187
        %v5189 = vsel %vm785, %v774, 0.0
        %v5190 = vrot.slane %v5189, 4
        %v5191 = vadd.f32 %v5189, %v5190
        %v5192 = vrot.slane %v5191, 2
        %v5193 = vadd.f32 %v5191, %v5192
        %v5194 = vrot.slane %v5193, 1
        %v5195 = vadd.f32 %v5193, %v5194
        %v5196 = vsel %vm785, %v775, 0.0
        %v5197 = vrot.slane %v5196, 4
        %v5198 = vadd.f32 %v5196, %v5197
        %v5199 = vrot.slane %v5198, 2
        %v5200 = vadd.f32 %v5198, %v5199
        %v5201 = vrot.slane %v5200, 1
        %v5202 = vadd.f32 %v5200, %v5201
        %v5203 = vsel %vm785, %v776, 0.0
        %v5204 = vrot.slane %v5203, 4
        %v5205 = vadd.f32 %v5203, %v5204
        %v5206 = vrot.slane %v5205, 2
        %v5207 = vadd.f32 %v5205, %v5206
        %v5208 = vrot.slane %v5207, 1
        %v5209 = vadd.f32 %v5207, %v5208
        %v5210 = vsel %vm785, %v777, 0.0
        %v5211 = vrot.slane %v5210, 4
        %v5212 = vadd.f32 %v5210, %v5211
        %v5213 = vrot.slane %v5212, 2
        %v5214 = vadd.f32 %v5212, %v5213
        %v5215 = vrot.slane %v5214, 1
        %v5216 = vadd.f32 %v5214, %v5215
        %v5217 = vsel %vm785, %v778, 0.0
        %v5218 = vrot.slane %v5217, 4
        %v5219 = vadd.f32 %v5217, %v5218
        %v5220 = vrot.slane %v5219, 2
        %v5221 = vadd.f32 %v5219, %v5220
        %v5222 = vrot.slane %v5221, 1
        %v5223 = vadd.f32 %v5221, %v5222
        %v5224 = vsel %vm785, %v779, 0.0
        %v5225 = vrot.slane %v5224, 4
        %v5226 = vadd.f32 %v5224, %v5225
        %v5227 = vrot.slane %v5226, 2
        %v5228 = vadd.f32 %v5226, %v5227
        %v5229 = vrot.slane %v5228, 1
        %v5230 = vadd.f32 %v5228, %v5229
        %v5231 = vsel %vm785, %v780, 0.0
        %v5232 = vrot.slane %v5231, 4
        %v5233 = vadd.f32 %v5231, %v5232
        %v5234 = vrot.slane %v5233, 2
        %v5235 = vadd.f32 %v5233, %v5234
        %v5236 = vrot.slane %v5235, 1
        %v5237 = vadd.f32 %v5235, %v5236
        %v5238 = vsel %vm785, %v781, 0.0
        %v5239 = vrot.slane %v5238, 4
        %v5240 = vadd.f32 %v5238, %v5239
        %v5241 = vrot.slane %v5240, 2
        %v5242 = vadd.f32 %v5240, %v5241
        %v5243 = vrot.slane %v5242, 1
        %v5244 = vadd.f32 %v5242, %v5243
        %v5245 = vsel %vm785, %v782, 0.0
        %v5246 = vrot.slane %v5245, 4
        %v5247 = vadd.f32 %v5245, %v5246
        %v5248 = vrot.slane %v5247, 2
        %v5249 = vadd.f32 %v5247, %v5248
        %v5250 = vrot.slane %v5249, 1
        %v5251 = vadd.f32 %v5249, %v5250
        %v5252 = vsel %vm785, %v783, 0.0
        %v5253 = vrot.slane %v5252, 4
        %v5254 = vadd.f32 %v5252, %v5253
        %v5255 = vrot.slane %v5254, 2
        %v5256 = vadd.f32 %v5254, %v5255
        %v5257 = vrot.slane %v5256, 1
        %v5258 = vadd.f32 %v5256, %v5257
        %v5259 = vsel %vm785, %v784, 0.0
        %v5260 = vrot.slane %v5259, 4
        %v5261 = vadd.f32 %v5259, %v5260
        %v5262 = vrot.slane %v5261, 2
        %v5263 = vadd.f32 %v5261, %v5262
        %v5264 = vrot.slane %v5263, 1
        %v5265 = vadd.f32 %v5263, %v5264
        %v5266 = vld [vmem:[%s1] sm:$0xff]
        %v5267 = vld [vmem:[%s1 + $0x8] sm:$0xff]
        %v5268 = vld [vmem:[%s1 + $0x10] sm:$0xff]
        %v5269 = vld [vmem:[%s1 + $0x18] sm:$0xff]
        %v5270 = vld [vmem:[%s1 + $0x20] sm:$0xff]
        %v5271 = vld [vmem:[%s1 + $0x28] sm:$0xff]
        %v5272 = vld [vmem:[%s1 + $0x30] sm:$0xff]
        %v5273 = vld [vmem:[%s1 + $0x38] sm:$0xff]
        %v5274 = vld [vmem:[%s1 + $0x60] sm:$0x1]
        %v5275 = vlaneseq
        %v5276 = vshrl.u32 %v5275, 7
        %v5277 = vsub.s32 0, %v5276
        %v5278 = vrot.slane %v5274, %v5277
        %vm5919 = vcmask 1041409
        %v5920 = vsel %vm5919, %v799, %v792
        %vm5921 = vcmask 1042434
        %v5922 = vsel %vm5921, %v806, %v5920
        %vm5923 = vcmask 1043459
        %v5924 = vsel %vm5923, %v813, %v5922
        %vm5925 = vcmask 1044484
        %v5926 = vsel %vm5925, %v820, %v5924
        %vm5927 = vcmask 1045509
        %v5928 = vsel %vm5927, %v827, %v5926
        %vm5929 = vcmask 1046534
        %v5930 = vsel %vm5929, %v834, %v5928
        %vm5931 = vcmask 1047559
        %v5932 = vsel %vm5931, %v841, %v5930
        %v5933 = vsel %vm5919, %v855, %v848
        %v5934 = vsel %vm5921, %v862, %v5933
        %v5935 = vsel %vm5923, %v869, %v5934
        %v5936 = vsel %vm5925, %v876, %v5935
        %v5937 = vsel %vm5927, %v883, %v5936
        %v5938 = vsel %vm5929, %v890, %v5937
        %v5939 = vsel %vm5931, %v897, %v5938
        %v5940 = vsel %vm5919, %v911, %v904
        %v5941 = vsel %vm5921, %v918, %v5940
        %v5942 = vsel %vm5923, %v925, %v5941
        %v5943 = vsel %vm5925, %v932, %v5942
        %v5944 = vsel %vm5927, %v939, %v5943
        %v5945 = vsel %vm5929, %v946, %v5944
        %v5946 = vsel %vm5931, %v953, %v5945
        %v5947 = vsel %vm5919, %v967, %v960
        %v5948 = vsel %vm5921, %v974, %v5947
        %v5949 = vsel %vm5923, %v981, %v5948
        %v5950 = vsel %vm5925, %v988, %v5949
        %v5951 = vsel %vm5927, %v995, %v5950
        %v5952 = vsel %vm5929, %v1002, %v5951
        %v5953 = vsel %vm5931, %v1009, %v5952
        %v5954 = vsel %vm5919, %v1023, %v1016
        %v5955 = vsel %vm5921, %v1030, %v5954
        %v5956 = vsel %vm5923, %v1037, %v5955
        %v5957 = vsel %vm5925, %v1044, %v5956
        %v5958 = vsel %vm5927, %v1051, %v5957
        %v5959 = vsel %vm5929, %v1058, %v5958
        %v5960 = vsel %vm5931, %v1065, %v5959
        %v5961 = vsel %vm5919, %v1079, %v1072
        %v5962 = vsel %vm5921, %v1086, %v5961
        %v5963 = vsel %vm5923, %v1093, %v5962
        %v5964 = vsel %vm5925, %v1100, %v5963
        %v5965 = vsel %vm5927, %v1107, %v5964
        %v5966 = vsel %vm5929, %v1114, %v5965
        %v5967 = vsel %vm5931, %v1121, %v5966
        %v5968 = vsel %vm5919, %v1135, %v1128
        %v5969 = vsel %vm5921, %v1142, %v5968
        %v5970 = vsel %vm5923, %v1149, %v5969
        %v5971 = vsel %vm5925, %v1156, %v5970
        %v5972 = vsel %vm5927, %v1163, %v5971
        %v5973 = vsel %vm5929, %v1170, %v5972
        %v5974 = vsel %vm5931, %v1177, %v5973
        %v5975 = vsel %vm5919, %v1191, %v1184
        %v5976 = vsel %vm5921, %v1198, %v5975
        %v5977 = vsel %vm5923, %v1205, %v5976
        %v5978 = vsel %vm5925, %v1212, %v5977
        %v5979 = vsel %vm5927, %v1219, %v5978
        %v5980 = vsel %vm5929, %v1226, %v5979
        %v5981 = vsel %vm5931, %v1233, %v5980
        %v5982 = vsel %vm5919, %v1247, %v1240
        %v5983 = vsel %vm5921, %v1254, %v5982
        %v5984 = vsel %vm5923, %v1261, %v5983
        %v5985 = vsel %vm5925, %v1268, %v5984
        %v5986 = vsel %vm5927, %v1275, %v5985
        %v5987 = vsel %vm5929, %v1282, %v5986
        %v5988 = vsel %vm5931, %v1289, %v5987
        %v5989 = vsel %vm5919, %v1303, %v1296
        %v5990 = vsel %vm5921, %v1310, %v5989
        %v5991 = vsel %vm5923, %v1317, %v5990
        %v5992 = vsel %vm5925, %v1324, %v5991
        %v5993 = vsel %vm5927, %v1331, %v5992
        %v5994 = vsel %vm5929, %v1338, %v5993
        %v5995 = vsel %vm5931, %v1345, %v5994
        %v5996 = vsel %vm5919, %v1359, %v1352
        %v5997 = vsel %vm5921, %v1366, %v5996
        %v5998 = vsel %vm5923, %v1373, %v5997
        %v5999 = vsel %vm5925, %v1380, %v5998
        %v6000 = vsel %vm5927, %v1387, %v5999
        %v6001 = vsel %vm5929, %v1394, %v6000
        %v6002 = vsel %vm5931, %v1401, %v6001
        %v6003 = vsel %vm5919, %v1415, %v1408
        %v6004 = vsel %vm5921, %v1422, %v6003
        %v6005 = vsel %vm5923, %v1429, %v6004
        %v6006 = vsel %vm5925, %v1436, %v6005
        %v6007 = vsel %vm5927, %v1443, %v6006
        %v6008 = vsel %vm5929, %v1450, %v6007
        %v6009 = vsel %vm5931, %v1457, %v6008
        %v6010 = vsel %vm5919, %v1471, %v1464
        %v6011 = vsel %vm5921, %v1478, %v6010
        %v6012 = vsel %vm5923, %v1485, %v6011
        %v6013 = vsel %vm5925, %v1492, %v6012
        %v6014 = vsel %vm5927, %v1499, %v6013
        %v6015 = vsel %vm5929, %v1506, %v6014
        %v6016 = vsel %vm5931, %v1513, %v6015
        %v6017 = vsel %vm5919, %v1527, %v1520
        %v6018 = vsel %vm5921, %v1534, %v6017
        %v6019 = vsel %vm5923, %v1541, %v6018
        %v6020 = vsel %vm5925, %v1548, %v6019
        %v6021 = vsel %vm5927, %v1555, %v6020
        %v6022 = vsel %vm5929, %v1562, %v6021
        %v6023 = vsel %vm5931, %v1569, %v6022
        %v6024 = vsel %vm5919, %v1583, %v1576
        %v6025 = vsel %vm5921, %v1590, %v6024
        %v6026 = vsel %vm5923, %v1597, %v6025
        %v6027 = vsel %vm5925, %v1604, %v6026
        %v6028 = vsel %vm5927, %v1611, %v6027
        %v6029 = vsel %vm5929, %v1618, %v6028
        %v6030 = vsel %vm5931, %v1625, %v6029
        %v6031 = vsel %vm5919, %v1639, %v1632
        %v6032 = vsel %vm5921, %v1646, %v6031
        %v6033 = vsel %vm5923, %v1653, %v6032
        %v6034 = vsel %vm5925, %v1660, %v6033
        %v6035 = vsel %vm5927, %v1667, %v6034
        %v6036 = vsel %vm5929, %v1674, %v6035
        %v6037 = vsel %vm5931, %v1681, %v6036
        %v6038 = vsel %vm5919, %v1695, %v1688
        %v6039 = vsel %vm5921, %v1702, %v6038
        %v6040 = vsel %vm5923, %v1709, %v6039
        %v6041 = vsel %vm5925, %v1716, %v6040
        %v6042 = vsel %vm5927, %v1723, %v6041
        %v6043 = vsel %vm5929, %v1730, %v6042
        %v6044 = vsel %vm5931, %v1737, %v6043
        %v6045 = vsel %vm5919, %v1751, %v1744
        %v6046 = vsel %vm5921, %v1758, %v6045
        %v6047 = vsel %vm5923, %v1765, %v6046
        %v6048 = vsel %vm5925, %v1772, %v6047
        %v6049 = vsel %vm5927, %v1779, %v6048
        %v6050 = vsel %vm5929, %v1786, %v6049
        %v6051 = vsel %vm5931, %v1793, %v6050
        %v6052 = vsel %vm5919, %v1807, %v1800
        %v6053 = vsel %vm5921, %v1814, %v6052
        %v6054 = vsel %vm5923, %v1821, %v6053
        %v6055 = vsel %vm5925, %v1828, %v6054
        %v6056 = vsel %vm5927, %v1835, %v6055
        %v6057 = vsel %vm5929, %v1842, %v6056
        %v6058 = vsel %vm5931, %v1849, %v6057
        %v6059 = vsel %vm5919, %v1863, %v1856
        %v6060 = vsel %vm5921, %v1870, %v6059
        %v6061 = vsel %vm5923, %v1877, %v6060
        %v6062 = vsel %vm5925, %v1884, %v6061
        %v6063 = vsel %vm5927, %v1891, %v6062
        %v6064 = vsel %vm5929, %v1898, %v6063
        %v6065 = vsel %vm5931, %v1905, %v6064
        %v6066 = vsel %vm5919, %v1919, %v1912
        %v6067 = vsel %vm5921, %v1926, %v6066
        %v6068 = vsel %vm5923, %v1933, %v6067
        %v6069 = vsel %vm5925, %v1940, %v6068
        %v6070 = vsel %vm5927, %v1947, %v6069
        %v6071 = vsel %vm5929, %v1954, %v6070
        %v6072 = vsel %vm5931, %v1961, %v6071
        %v6073 = vsel %vm5919, %v1975, %v1968
        %v6074 = vsel %vm5921, %v1982, %v6073
        %v6075 = vsel %vm5923, %v1989, %v6074
        %v6076 = vsel %vm5925, %v1996, %v6075
        %v6077 = vsel %vm5927, %v2003, %v6076
        %v6078 = vsel %vm5929, %v2010, %v6077
        %v6079 = vsel %vm5931, %v2017, %v6078
        %v6080 = vsel %vm5919, %v2031, %v2024
        %v6081 = vsel %vm5921, %v2038, %v6080
        %v6082 = vsel %vm5923, %v2045, %v6081
        %v6083 = vsel %vm5925, %v2052, %v6082
        %v6084 = vsel %vm5927, %v2059, %v6083
        %v6085 = vsel %vm5929, %v2066, %v6084
        %v6086 = vsel %vm5931, %v2073, %v6085
        %v6087 = vsel %vm5919, %v2087, %v2080
        %v6088 = vsel %vm5921, %v2094, %v6087
        %v6089 = vsel %vm5923, %v2101, %v6088
        %v6090 = vsel %vm5925, %v2108, %v6089
        %v6091 = vsel %vm5927, %v2115, %v6090
        %v6092 = vsel %vm5929, %v2122, %v6091
        %v6093 = vsel %vm5931, %v2129, %v6092
        %v6094 = vsel %vm5919, %v2143, %v2136
        %v6095 = vsel %vm5921, %v2150, %v6094
        %v6096 = vsel %vm5923, %v2157, %v6095
        %v6097 = vsel %vm5925, %v2164, %v6096
        %v6098 = vsel %vm5927, %v2171, %v6097
        %v6099 = vsel %vm5929, %v2178, %v6098
        %v6100 = vsel %vm5931, %v2185, %v6099
        %v6101 = vsel %vm5919, %v2199, %v2192
        %v6102 = vsel %vm5921, %v2206, %v6101
        %v6103 = vsel %vm5923, %v2213, %v6102
        %v6104 = vsel %vm5925, %v2220, %v6103
        %v6105 = vsel %vm5927, %v2227, %v6104
        %v6106 = vsel %vm5929, %v2234, %v6105
        %v6107 = vsel %vm5931, %v2241, %v6106
        %v6108 = vsel %vm5919, %v2255, %v2248
        %v6109 = vsel %vm5921, %v2262, %v6108
        %v6110 = vsel %vm5923, %v2269, %v6109
        %v6111 = vsel %vm5925, %v2276, %v6110
        %v6112 = vsel %vm5927, %v2283, %v6111
        %v6113 = vsel %vm5929, %v2290, %v6112
        %v6114 = vsel %vm5931, %v2297, %v6113
        %v6115 = vsel %vm5919, %v2311, %v2304
        %v6116 = vsel %vm5921, %v2318, %v6115
        %v6117 = vsel %vm5923, %v2325, %v6116
        %v6118 = vsel %vm5925, %v2332, %v6117
        %v6119 = vsel %vm5927, %v2339, %v6118
        %v6120 = vsel %vm5929, %v2346, %v6119
        %v6121 = vsel %vm5931, %v2353, %v6120
        %v6122 = vsel %vm5919, %v2367, %v2360
        %v6123 = vsel %vm5921, %v2374, %v6122
        %v6124 = vsel %vm5923, %v2381, %v6123
        %v6125 = vsel %vm5925, %v2388, %v6124
        %v6126 = vsel %vm5927, %v2395, %v6125
        %v6127 = vsel %vm5929, %v2402, %v6126
        %v6128 = vsel %vm5931, %v2409, %v6127
        %v6129 = vsel %vm5919, %v2423, %v2416
        %v6130 = vsel %vm5921, %v2430, %v6129
        %v6131 = vsel %vm5923, %v2437, %v6130
        %v6132 = vsel %vm5925, %v2444, %v6131
        %v6133 = vsel %vm5927, %v2451, %v6132
        %v6134 = vsel %vm5929, %v2458, %v6133
        %v6135 = vsel %vm5931, %v2465, %v6134
        %v6136 = vsel %vm5919, %v2479, %v2472
        %v6137 = vsel %vm5921, %v2486, %v6136
        %v6138 = vsel %vm5923, %v2493, %v6137
        %v6139 = vsel %vm5925, %v2500, %v6138
        %v6140 = vsel %vm5927, %v2507, %v6139
        %v6141 = vsel %vm5929, %v2514, %v6140
        %v6142 = vsel %vm5931, %v2521, %v6141
        %v6143 = vsel %vm5919, %v2535, %v2528
        %v6144 = vsel %vm5921, %v2542, %v6143
        %v6145 = vsel %vm5923, %v2549, %v6144
        %v6146 = vsel %vm5925, %v2556, %v6145
        %v6147 = vsel %vm5927, %v2563, %v6146
        %v6148 = vsel %vm5929, %v2570, %v6147
        %v6149 = vsel %vm5931, %v2577, %v6148
        %v6150 = vsel %vm5919, %v2591, %v2584
        %v6151 = vsel %vm5921, %v2598, %v6150
        %v6152 = vsel %vm5923, %v2605, %v6151
        %v6153 = vsel %vm5925, %v2612, %v6152
        %v6154 = vsel %vm5927, %v2619, %v6153
        %v6155 = vsel %vm5929, %v2626, %v6154
        %v6156 = vsel %vm5931, %v2633, %v6155
        %v6157 = vsel %vm5919, %v2647, %v2640
        %v6158 = vsel %vm5921, %v2654, %v6157
        %v6159 = vsel %vm5923, %v2661, %v6158
        %v6160 = vsel %vm5925, %v2668, %v6159
        %v6161 = vsel %vm5927, %v2675, %v6160
        %v6162 = vsel %vm5929, %v2682, %v6161
        %v6163 = vsel %vm5931, %v2689, %v6162
        %v6164 = vsel %vm5919, %v2703, %v2696
        %v6165 = vsel %vm5921, %v2710, %v6164
        %v6166 = vsel %vm5923, %v2717, %v6165
        %v6167 = vsel %vm5925, %v2724, %v6166
        %v6168 = vsel %vm5927, %v2731, %v6167
        %v6169 = vsel %vm5929, %v2738, %v6168
        %v6170 = vsel %vm5931, %v2745, %v6169
        %v6171 = vsel %vm5919, %v2759, %v2752
        %v6172 = vsel %vm5921, %v2766, %v6171
        %v6173 = vsel %vm5923, %v2773, %v6172
        %v6174 = vsel %vm5925, %v2780, %v6173
        %v6175 = vsel %vm5927, %v2787, %v6174
        %v6176 = vsel %vm5929, %v2794, %v6175
        %v6177 = vsel %vm5931, %v2801, %v6176
        %v6178 = vsel %vm5919, %v2815, %v2808
        %v6179 = vsel %vm5921, %v2822, %v6178
        %v6180 = vsel %vm5923, %v2829, %v6179
        %v6181 = vsel %vm5925, %v2836, %v6180
        %v6182 = vsel %vm5927, %v2843, %v6181
        %v6183 = vsel %vm5929, %v2850, %v6182
        %v6184 = vsel %vm5931, %v2857, %v6183
        %v6185 = vsel %vm5919, %v2871, %v2864
        %v6186 = vsel %vm5921, %v2878, %v6185
        %v6187 = vsel %vm5923, %v2885, %v6186
        %v6188 = vsel %vm5925, %v2892, %v6187
        %v6189 = vsel %vm5927, %v2899, %v6188
        %v6190 = vsel %vm5929, %v2906, %v6189
        %v6191 = vsel %vm5931, %v2913, %v6190
        %v6192 = vsel %vm5919, %v2927, %v2920
        %v6193 = vsel %vm5921, %v2934, %v6192
        %v6194 = vsel %vm5923, %v2941, %v6193
        %v6195 = vsel %vm5925, %v2948, %v6194
        %v6196 = vsel %vm5927, %v2955, %v6195
        %v6197 = vsel %vm5929, %v2962, %v6196
        %v6198 = vsel %vm5931, %v2969, %v6197
        %v6199 = vsel %vm5919, %v2983, %v2976
        %v6200 = vsel %vm5921, %v2990, %v6199
        %v6201 = vsel %vm5923, %v2997, %v6200
        %v6202 = vsel %vm5925, %v3004, %v6201
        %v6203 = vsel %vm5927, %v3011, %v6202
        %v6204 = vsel %vm5929, %v3018, %v6203
        %v6205 = vsel %vm5931, %v3025, %v6204
        %v6206 = vsel %vm5919, %v3039, %v3032
        %v6207 = vsel %vm5921, %v3046, %v6206
        %v6208 = vsel %vm5923, %v3053, %v6207
        %v6209 = vsel %vm5925, %v3060, %v6208
        %v6210 = vsel %vm5927, %v3067, %v6209
        %v6211 = vsel %vm5929, %v3074, %v6210
        %v6212 = vsel %vm5931, %v3081, %v6211
        %v6213 = vsel %vm5919, %v3095, %v3088
        %v6214 = vsel %vm5921, %v3102, %v6213
        %v6215 = vsel %vm5923, %v3109, %v6214
        %v6216 = vsel %vm5925, %v3116, %v6215
        %v6217 = vsel %vm5927, %v3123, %v6216
        %v6218 = vsel %vm5929, %v3130, %v6217
        %v6219 = vsel %vm5931, %v3137, %v6218
        %v6220 = vsel %vm5919, %v3151, %v3144
        %v6221 = vsel %vm5921, %v3158, %v6220
        %v6222 = vsel %vm5923, %v3165, %v6221
        %v6223 = vsel %vm5925, %v3172, %v6222
        %v6224 = vsel %vm5927, %v3179, %v6223
        %v6225 = vsel %vm5929, %v3186, %v6224
        %v6226 = vsel %vm5931, %v3193, %v6225
        %v6227 = vsel %vm5919, %v3207, %v3200
        %v6228 = vsel %vm5921, %v3214, %v6227
        %v6229 = vsel %vm5923, %v3221, %v6228
        %v6230 = vsel %vm5925, %v3228, %v6229
        %v6231 = vsel %vm5927, %v3235, %v6230
        %v6232 = vsel %vm5929, %v3242, %v6231
        %v6233 = vsel %vm5931, %v3249, %v6232
        %v6234 = vsel %vm5919, %v3263, %v3256
        %v6235 = vsel %vm5921, %v3270, %v6234
        %v6236 = vsel %vm5923, %v3277, %v6235
        %v6237 = vsel %vm5925, %v3284, %v6236
        %v6238 = vsel %vm5927, %v3291, %v6237
        %v6239 = vsel %vm5929, %v3298, %v6238
        %v6240 = vsel %vm5931, %v3305, %v6239
        %v6241 = vsel %vm5919, %v3319, %v3312
        %v6242 = vsel %vm5921, %v3326, %v6241
        %v6243 = vsel %vm5923, %v3333, %v6242
        %v6244 = vsel %vm5925, %v3340, %v6243
        %v6245 = vsel %vm5927, %v3347, %v6244
        %v6246 = vsel %vm5929, %v3354, %v6245
        %v6247 = vsel %vm5931, %v3361, %v6246
        %v6248 = vsel %vm5919, %v3375, %v3368
        %v6249 = vsel %vm5921, %v3382, %v6248
        %v6250 = vsel %vm5923, %v3389, %v6249
        %v6251 = vsel %vm5925, %v3396, %v6250
        %v6252 = vsel %vm5927, %v3403, %v6251
        %v6253 = vsel %vm5929, %v3410, %v6252
        %v6254 = vsel %vm5931, %v3417, %v6253
        %v6255 = vsel %vm5919, %v3431, %v3424
        %v6256 = vsel %vm5921, %v3438, %v6255
        %v6257 = vsel %vm5923, %v3445, %v6256
        %v6258 = vsel %vm5925, %v3452, %v6257
        %v6259 = vsel %vm5927, %v3459, %v6258
        %v6260 = vsel %vm5929, %v3466, %v6259
        %v6261 = vsel %vm5931, %v3473, %v6260
        %v6262 = vsel %vm5919, %v3487, %v3480
        %v6263 = vsel %vm5921, %v3494, %v6262
        %v6264 = vsel %vm5923, %v3501, %v6263
        %v6265 = vsel %vm5925, %v3508, %v6264
        %v6266 = vsel %vm5927, %v3515, %v6265
        %v6267 = vsel %vm5929, %v3522, %v6266
        %v6268 = vsel %vm5931, %v3529, %v6267
        %v6269 = vsel %vm5919, %v3543, %v3536
        %v6270 = vsel %vm5921, %v3550, %v6269
        %v6271 = vsel %vm5923, %v3557, %v6270
        %v6272 = vsel %vm5925, %v3564, %v6271
        %v6273 = vsel %vm5927, %v3571, %v6272
        %v6274 = vsel %vm5929, %v3578, %v6273
        %v6275 = vsel %vm5931, %v3585, %v6274
        %v6276 = vsel %vm5919, %v3599, %v3592
        %v6277 = vsel %vm5921, %v3606, %v6276
        %v6278 = vsel %vm5923, %v3613, %v6277
        %v6279 = vsel %vm5925, %v3620, %v6278
        %v6280 = vsel %vm5927, %v3627, %v6279
        %v6281 = vsel %vm5929, %v3634, %v6280
        %v6282 = vsel %vm5931, %v3641, %v6281
        %v6283 = vsel %vm5919, %v3655, %v3648
        %v6284 = vsel %vm5921, %v3662, %v6283
        %v6285 = vsel %vm5923, %v3669, %v6284
        %v6286 = vsel %vm5925, %v3676, %v6285
        %v6287 = vsel %vm5927, %v3683, %v6286
        %v6288 = vsel %vm5929, %v3690, %v6287
        %v6289 = vsel %vm5931, %v3697, %v6288
        %v6290 = vsel %vm5919, %v3711, %v3704
        %v6291 = vsel %vm5921, %v3718, %v6290
        %v6292 = vsel %vm5923, %v3725, %v6291
        %v6293 = vsel %vm5925, %v3732, %v6292
        %v6294 = vsel %vm5927, %v3739, %v6293
        %v6295 = vsel %vm5929, %v3746, %v6294
        %v6296 = vsel %vm5931, %v3753, %v6295
        %v6297 = vsel %vm5919, %v3767, %v3760
        %v6298 = vsel %vm5921, %v3774, %v6297
        %v6299 = vsel %vm5923, %v3781, %v6298
        %v6300 = vsel %vm5925, %v3788, %v6299
        %v6301 = vsel %vm5927, %v3795, %v6300
        %v6302 = vsel %vm5929, %v3802, %v6301
        %v6303 = vsel %vm5931, %v3809, %v6302
        %v6304 = vsel %vm5919, %v3823, %v3816
        %v6305 = vsel %vm5921, %v3830, %v6304
        %v6306 = vsel %vm5923, %v3837, %v6305
        %v6307 = vsel %vm5925, %v3844, %v6306
        %v6308 = vsel %vm5927, %v3851, %v6307
        %v6309 = vsel %vm5929, %v3858, %v6308
        %v6310 = vsel %vm5931, %v3865, %v6309
        %v6311 = vsel %vm5919, %v3879, %v3872
        %v6312 = vsel %vm5921, %v3886, %v6311
        %v6313 = vsel %vm5923, %v3893, %v6312
        %v6314 = vsel %vm5925, %v3900, %v6313
        %v6315 = vsel %vm5927, %v3907, %v6314
        %v6316 = vsel %vm5929, %v3914, %v6315
        %v6317 = vsel %vm5931, %v3921, %v6316
        %v6318 = vsel %vm5919, %v3935, %v3928
        %v6319 = vsel %vm5921, %v3942, %v6318
        %v6320 = vsel %vm5923, %v3949, %v6319
        %v6321 = vsel %vm5925, %v3956, %v6320
        %v6322 = vsel %vm5927, %v3963, %v6321
        %v6323 = vsel %vm5929, %v3970, %v6322
        %v6324 = vsel %vm5931, %v3977, %v6323
        %v6325 = vsel %vm5919, %v3991, %v3984
        %v6326 = vsel %vm5921, %v3998, %v6325
        %v6327 = vsel %vm5923, %v4005, %v6326
        %v6328 = vsel %vm5925, %v4012, %v6327
        %v6329 = vsel %vm5927, %v4019, %v6328
        %v6330 = vsel %vm5929, %v4026, %v6329
        %v6331 = vsel %vm5931, %v4033, %v6330
        %v6332 = vsel %vm5919, %v4047, %v4040
        %v6333 = vsel %vm5921, %v4054, %v6332
        %v6334 = vsel %vm5923, %v4061, %v6333
        %v6335 = vsel %vm5925, %v4068, %v6334
        %v6336 = vsel %vm5927, %v4075, %v6335
        %v6337 = vsel %vm5929, %v4082, %v6336
        %v6338 = vsel %vm5931, %v4089, %v6337
        %v6339 = vsel %vm5919, %v4103, %v4096
        %v6340 = vsel %vm5921, %v4110, %v6339
        %v6341 = vsel %vm5923, %v4117, %v6340
        %v6342 = vsel %vm5925, %v4124, %v6341
        %v6343 = vsel %vm5927, %v4131, %v6342
        %v6344 = vsel %vm5929, %v4138, %v6343
        %v6345 = vsel %vm5931, %v4145, %v6344
        %v6346 = vsel %vm5919, %v4159, %v4152
        %v6347 = vsel %vm5921, %v4166, %v6346
        %v6348 = vsel %vm5923, %v4173, %v6347
        %v6349 = vsel %vm5925, %v4180, %v6348
        %v6350 = vsel %vm5927, %v4187, %v6349
        %v6351 = vsel %vm5929, %v4194, %v6350
        %v6352 = vsel %vm5931, %v4201, %v6351
        %v6353 = vsel %vm5919, %v4215, %v4208
        %v6354 = vsel %vm5921, %v4222, %v6353
        %v6355 = vsel %vm5923, %v4229, %v6354
        %v6356 = vsel %vm5925, %v4236, %v6355
        %v6357 = vsel %vm5927, %v4243, %v6356
        %v6358 = vsel %vm5929, %v4250, %v6357
        %v6359 = vsel %vm5931, %v4257, %v6358
        %v6360 = vsel %vm5919, %v4271, %v4264
        %v6361 = vsel %vm5921, %v4278, %v6360
        %v6362 = vsel %vm5923, %v4285, %v6361
        %v6363 = vsel %vm5925, %v4292, %v6362
        %v6364 = vsel %vm5927, %v4299, %v6363
        %v6365 = vsel %vm5929, %v4306, %v6364
        %v6366 = vsel %vm5931, %v4313, %v6365
        %v6367 = vsel %vm5919, %v4327, %v4320
        %v6368 = vsel %vm5921, %v4334, %v6367
        %v6369 = vsel %vm5923, %v4341, %v6368
        %v6370 = vsel %vm5925, %v4348, %v6369
        %v6371 = vsel %vm5927, %v4355, %v6370
        %v6372 = vsel %vm5929, %v4362, %v6371
        %v6373 = vsel %vm5931, %v4369, %v6372
        %v6374 = vsel %vm5919, %v4383, %v4376
        %v6375 = vsel %vm5921, %v4390, %v6374
        %v6376 = vsel %vm5923, %v4397, %v6375
        %v6377 = vsel %vm5925, %v4404, %v6376
        %v6378 = vsel %vm5927, %v4411, %v6377
        %v6379 = vsel %vm5929, %v4418, %v6378
        %v6380 = vsel %vm5931, %v4425, %v6379
        %v6381 = vsel %vm5919, %v4439, %v4432
        %v6382 = vsel %vm5921, %v4446, %v6381
        %v6383 = vsel %vm5923, %v4453, %v6382
        %v6384 = vsel %vm5925, %v4460, %v6383
        %v6385 = vsel %vm5927, %v4467, %v6384
        %v6386 = vsel %vm5929, %v4474, %v6385
        %v6387 = vsel %vm5931, %v4481, %v6386
        %v6388 = vsel %vm5919, %v4495, %v4488
        %v6389 = vsel %vm5921, %v4502, %v6388
        %v6390 = vsel %vm5923, %v4509, %v6389
        %v6391 = vsel %vm5925, %v4516, %v6390
        %v6392 = vsel %vm5927, %v4523, %v6391
        %v6393 = vsel %vm5929, %v4530, %v6392
        %v6394 = vsel %vm5931, %v4537, %v6393
        %v6395 = vsel %vm5919, %v4551, %v4544
        %v6396 = vsel %vm5921, %v4558, %v6395
        %v6397 = vsel %vm5923, %v4565, %v6396
        %v6398 = vsel %vm5925, %v4572, %v6397
        %v6399 = vsel %vm5927, %v4579, %v6398
        %v6400 = vsel %vm5929, %v4586, %v6399
        %v6401 = vsel %vm5931, %v4593, %v6400
        %v6402 = vsel %vm5919, %v4607, %v4600
        %v6403 = vsel %vm5921, %v4614, %v6402
        %v6404 = vsel %vm5923, %v4621, %v6403
        %v6405 = vsel %vm5925, %v4628, %v6404
        %v6406 = vsel %vm5927, %v4635, %v6405
        %v6407 = vsel %vm5929, %v4642, %v6406
        %v6408 = vsel %vm5931, %v4649, %v6407
        %v6409 = vsel %vm5919, %v4663, %v4656
        %v6410 = vsel %vm5921, %v4670, %v6409
        %v6411 = vsel %vm5923, %v4677, %v6410
        %v6412 = vsel %vm5925, %v4684, %v6411
        %v6413 = vsel %vm5927, %v4691, %v6412
        %v6414 = vsel %vm5929, %v4698, %v6413
        %v6415 = vsel %vm5931, %v4705, %v6414
        %v6416 = vsel %vm5919, %v4719, %v4712
        %v6417 = vsel %vm5921, %v4726, %v6416
        %v6418 = vsel %vm5923, %v4733, %v6417
        %v6419 = vsel %vm5925, %v4740, %v6418
        %v6420 = vsel %vm5927, %v4747, %v6419
        %v6421 = vsel %vm5929, %v4754, %v6420
        %v6422 = vsel %vm5931, %v4761, %v6421
        %v6423 = vsel %vm5919, %v4775, %v4768
        %v6424 = vsel %vm5921, %v4782, %v6423
        %v6425 = vsel %vm5923, %v4789, %v6424
        %v6426 = vsel %vm5925, %v4796, %v6425
        %v6427 = vsel %vm5927, %v4803, %v6426
        %v6428 = vsel %vm5929, %v4810, %v6427
        %v6429 = vsel %vm5931, %v4817, %v6428
        %v6430 = vsel %vm5919, %v4831, %v4824
        %v6431 = vsel %vm5921, %v4838, %v6430
        %v6432 = vsel %vm5923, %v4845, %v6431
        %v6433 = vsel %vm5925, %v4852, %v6432
        %v6434 = vsel %vm5927, %v4859, %v6433
        %v6435 = vsel %vm5929, %v4866, %v6434
        %v6436 = vsel %vm5931, %v4873, %v6435
        %v6437 = vsel %vm5919, %v4887, %v4880
        %v6438 = vsel %vm5921, %v4894, %v6437
        %v6439 = vsel %vm5923, %v4901, %v6438
        %v6440 = vsel %vm5925, %v4908, %v6439
        %v6441 = vsel %vm5927, %v4915, %v6440
        %v6442 = vsel %vm5929, %v4922, %v6441
        %v6443 = vsel %vm5931, %v4929, %v6442
        %v6444 = vsel %vm5919, %v4943, %v4936
        %v6445 = vsel %vm5921, %v4950, %v6444
        %v6446 = vsel %vm5923, %v4957, %v6445
        %v6447 = vsel %vm5925, %v4964, %v6446
        %v6448 = vsel %vm5927, %v4971, %v6447
        %v6449 = vsel %vm5929, %v4978, %v6448
        %v6450 = vsel %vm5931, %v4985, %v6449
        %v6451 = vsel %vm5919, %v4999, %v4992
        %v6452 = vsel %vm5921, %v5006, %v6451
        %v6453 = vsel %vm5923, %v5013, %v6452
        %v6454 = vsel %vm5925, %v5020, %v6453
        %v6455 = vsel %vm5927, %v5027, %v6454
        %v6456 = vsel %vm5929, %v5034, %v6455
        %v6457 = vsel %vm5931, %v5041, %v6456
        %v6458 = vsel %vm5919, %v5055, %v5048
        %v6459 = vsel %vm5921, %v5062, %v6458
        %v6460 = vsel %vm5923, %v5069, %v6459
        %v6461 = vsel %vm5925, %v5076, %v6460
        %v6462 = vsel %vm5927, %v5083, %v6461
        %v6463 = vsel %vm5929, %v5090, %v6462
        %v6464 = vsel %vm5931, %v5097, %v6463
        %v6465 = vsel %vm5919, %v5111, %v5104
        %v6466 = vsel %vm5921, %v5118, %v6465
        %v6467 = vsel %vm5923, %v5125, %v6466
        %v6468 = vsel %vm5925, %v5132, %v6467
        %v6469 = vsel %vm5927, %v5139, %v6468
        %v6470 = vsel %vm5929, %v5146, %v6469
        %v6471 = vsel %vm5931, %v5153, %v6470
        %v6472 = vsel %vm5919, %v5167, %v5160
        %v6473 = vsel %vm5921, %v5174, %v6472
        %v6474 = vsel %vm5923, %v5181, %v6473
        %v6475 = vsel %vm5925, %v5188, %v6474
        %v6476 = vsel %vm5927, %v5195, %v6475
        %v6477 = vsel %vm5929, %v5202, %v6476
        %v6478 = vsel %vm5931, %v5209, %v6477
        %v6479 = vsel %vm5919, %v5223, %v5216
        %v6480 = vsel %vm5921, %v5230, %v6479
        %v6481 = vsel %vm5923, %v5237, %v6480
        %v6482 = vsel %vm5925, %v5244, %v6481
        %v6483 = vsel %vm5927, %v5251, %v6482
        %v6484 = vsel %vm5929, %v5258, %v6483
        %v6485 = vsel %vm5931, %v5265, %v6484
        %v6486 = vsel %vm785, %v5932, 0
        %v6488 = vsel %vm785, %v5939, 0
        %v6490 = vsel %vm785, %v5946, 0
        %v6492 = vsel %vm785, %v5953, 0
        %v6494 = vsel %vm785, %v5960, 0
        %v6496 = vsel %vm785, %v5967, 0
        %v6498 = vsel %vm785, %v5974, 0
        %v6500 = vsel %vm785, %v5981, 0
        %v6502 = vsel %vm785, %v5988, 0
        %v6504 = vsel %vm785, %v5995, 0
        %v6506 = vsel %vm785, %v6002, 0
        %v6508 = vsel %vm785, %v6009, 0
        %v6510 = vsel %vm785, %v6016, 0
        %v6512 = vsel %vm785, %v6023, 0
        %v6514 = vsel %vm785, %v6030, 0
        %v6516 = vsel %vm785, %v6037, 0
        %v6518 = vsel %vm785, %v6044, 0
        %v6520 = vsel %vm785, %v6051, 0
        %v6522 = vsel %vm785, %v6058, 0
        %v6524 = vsel %vm785, %v6065, 0
        %v6526 = vsel %vm785, %v6072, 0
        %v6528 = vsel %vm785, %v6079, 0
        %v6530 = vsel %vm785, %v6086, 0
        %v6532 = vsel %vm785, %v6093, 0
        %v6534 = vsel %vm785, %v6100, 0
        %v6536 = vsel %vm785, %v6107, 0
        %v6538 = vsel %vm785, %v6114, 0
        %v6540 = vsel %vm785, %v6121, 0
        %v6542 = vsel %vm785, %v6128, 0
        %v6544 = vsel %vm785, %v6135, 0
        %v6546 = vsel %vm785, %v6142, 0
        %v6548 = vsel %vm785, %v6149, 0
        %v6550 = vsel %vm785, %v6156, 0
        %v6552 = vsel %vm785, %v6163, 0
        %v6554 = vsel %vm785, %v6170, 0
        %v6556 = vsel %vm785, %v6177, 0
        %v6558 = vsel %vm785, %v6184, 0
        %v6560 = vsel %vm785, %v6191, 0
        %v6562 = vsel %vm785, %v6198, 0
        %v6564 = vsel %vm785, %v6205, 0
        %v6566 = vsel %vm785, %v6212, 0
        %v6568 = vsel %vm785, %v6219, 0
        %v6570 = vsel %vm785, %v6226, 0
        %v6572 = vsel %vm785, %v6233, 0
        %v6574 = vsel %vm785, %v6240, 0
        %v6576 = vsel %vm785, %v6247, 0
        %v6578 = vsel %vm785, %v6254, 0
        %v6580 = vsel %vm785, %v6261, 0
        %v6582 = vsel %vm785, %v6268, 0
        %v6584 = vsel %vm785, %v6275, 0
        %v6586 = vsel %vm785, %v6282, 0
        %v6588 = vsel %vm785, %v6289, 0
        %v6590 = vsel %vm785, %v6296, 0
        %v6592 = vsel %vm785, %v6303, 0
        %v6594 = vsel %vm785, %v6310, 0
        %v6596 = vsel %vm785, %v6317, 0
        %v6598 = vsel %vm785, %v6324, 0
        %v6600 = vsel %vm785, %v6331, 0
        %v6602 = vsel %vm785, %v6338, 0
        %v6604 = vsel %vm785, %v6345, 0
        %v6606 = vsel %vm785, %v6352, 0
        %v6608 = vsel %vm785, %v6359, 0
        %v6610 = vsel %vm785, %v6366, 0
        %v6612 = vsel %vm785, %v6373, 0
        %v6614 = vsel %vm785, %v6380, 0
        %v6616 = vsel %vm785, %v6387, 0
        %v6618 = vsel %vm785, %v6394, 0
        %v6620 = vsel %vm785, %v6401, 0
        %v6622 = vsel %vm785, %v6408, 0
        %v6624 = vsel %vm785, %v6415, 0
        %v6626 = vsel %vm785, %v6422, 0
        %v6628 = vsel %vm785, %v6429, 0
        %v6630 = vsel %vm785, %v6436, 0
        %v6632 = vsel %vm785, %v6443, 0
        %v6634 = vsel %vm785, %v6450, 0
        %v6636 = vsel %vm785, %v6457, 0
        %v6638 = vsel %vm785, %v6464, 0
        %v6640 = vsel %vm785, %v6471, 0
        %v6642 = vsel %vm785, %v6478, 0
        %v6644 = vsel %vm785, %v6485, 0
        %6646 = vmatprep.subr.mxu0 0.0
        %6647 = vmatpush1.msra.mxu0 0.0
        %6648 = vmatprep.subr.mxu0 0.0
        %6649 = vmatpush1.msra.mxu0 0.0
        %6650 = vmatprep.subr.mxu0 0.0
        %6651 = vmatpush1.msra.mxu0 0.0
        %6652 = vmatprep.subr.mxu0 0.0
        %6653 = vmatpush1.msra.mxu0 0.0
        %6654 = vmatprep.subr.mxu0 0.0
        %6655 = vmatpush1.msra.mxu0 0.0
        %6656 = vmatprep.subr.mxu0 0.0
        %6657 = vmatpush1.msra.mxu0 0.0
        %6658 = vmatprep.subr.mxu0 0.0
        %6659 = vmatpush1.msra.mxu0 0.0
        %6660 = vmatprep.subr.mxu0 0.0
        %6661 = vmatpush1.msra.mxu0 0.0
        %6662 = vmatprep.subr.mxu0 0.0
        %6663 = vmatpush1.msra.mxu0 %v5273
        %6664 = vmatprep.subr.mxu0 0.0
        %6665 = vmatpush1.msra.mxu0 %v5272
        %6666 = vmatprep.subr.mxu0 0.0
        %6667 = vmatpush1.msra.mxu0 %v5271
        %6668 = vmatprep.subr.mxu0 0.0
        %6669 = vmatpush1.msra.mxu0 %v5270
        %6670 = vmatprep.subr.mxu0 0.0
        %6671 = vmatpush1.msra.mxu0 %v5269
        %6672 = vmatprep.subr.mxu0 0.0
        %6673 = vmatpush1.msra.mxu0 %v5268
        %6674 = vmatprep.subr.mxu0 0.0
        %6675 = vmatpush1.msra.mxu0 %v5267
        %6676 = vmatprep.subr.mxu0 0.0
        %6677 = vmatpush1.msra.mxu0 %v5266
        %6678 = vmatprep.subr.mxu0 0.0
        %6679 = vmatpush2.msra.mxu0 0.0
        %6680 = vmatprep.subr.mxu0 0.0
        %6681 = vmatpush2.msra.mxu0 0.0
        %6682 = vmatprep.subr.mxu0 0.0
        %6683 = vmatpush2.msra.mxu0 0.0
        %6684 = vmatprep.subr.mxu0 0.0
        %6685 = vmatpush2.msra.mxu0 0.0
        %6686 = vmatprep.subr.mxu0 0.0
        %6687 = vmatpush2.msra.mxu0 0.0
        %6688 = vmatprep.subr.mxu0 0.0
        %6689 = vmatpush2.msra.mxu0 0.0
        %6690 = vmatprep.subr.mxu0 0.0
        %6691 = vmatpush2.msra.mxu0 0.0
        %6692 = vmatprep.subr.mxu0 0.0
        %6693 = vmatpush2.msra.mxu0 0.0
        %6694 = vmatprep.subr.mxu0 0.0
        %6695 = vmatpush2.msra.mxu0 0.0
        %6696 = vmatprep.subr.mxu0 0.0
        %6697 = vmatpush2.msra.mxu0 0.0
        %6698 = vmatprep.subr.mxu0 0.0
        %6699 = vmatpush2.msra.mxu0 0.0
        %6700 = vmatprep.subr.mxu0 0.0
        %6701 = vmatpush2.msra.mxu0 0.0
        %6702 = vmatprep.subr.mxu0 0.0
        %6703 = vmatpush2.msra.mxu0 0.0
        %6704 = vmatprep.subr.mxu0 0.0
        %6705 = vmatpush2.msra.mxu0 0.0
        %6706 = vmatprep.subr.mxu0 0.0
        %6707 = vmatpush2.msra.mxu0 0.0
        %6708 = vmatprep.subr.mxu0 0.0
        %6709 = vmatpush2.msra.mxu0 0.0
        %6710 = vmatprep.mubr.f32.mxu0 0.0
        %6711 = vmatmul.mubr.f32.gmra.mxu0 %v6486
        %v6712 = vpop.f32.mrf.mxu0
        %v6713 = vadd.f32 %v5278, %v6712
        %v6714 = vpop.f32.mrf.mxu0
        %6715 = vmatprep.mubr.f32.mxu0 0.0
        %6716 = vmatmul.mubr.f32.gmra.mxu0 %v6488
        %v6717 = vpop.f32.mrf.mxu0
        %v6718 = vadd.f32 %v5278, %v6717
        %v6719 = vpop.f32.mrf.mxu0
        %6720 = vmatprep.mubr.f32.mxu0 0.0
        %6721 = vmatmul.mubr.f32.gmra.mxu0 %v6490
        %v6722 = vpop.f32.mrf.mxu0
        %v6723 = vadd.f32 %v5278, %v6722
        %v6724 = vpop.f32.mrf.mxu0
        %6725 = vmatprep.mubr.f32.mxu0 0.0
        %6726 = vmatmul.mubr.f32.gmra.mxu0 %v6492
        %v6727 = vpop.f32.mrf.mxu0
        %v6728 = vadd.f32 %v5278, %v6727
        %v6729 = vpop.f32.mrf.mxu0
        %6730 = vmatprep.mubr.f32.mxu0 0.0
        %6731 = vmatmul.mubr.f32.gmra.mxu0 %v6494
        %v6732 = vpop.f32.mrf.mxu0
        %v6733 = vadd.f32 %v5278, %v6732
        %v6734 = vpop.f32.mrf.mxu0
        %6735 = vmatprep.mubr.f32.mxu0 0.0
        %6736 = vmatmul.mubr.f32.gmra.mxu0 %v6496
        %v6737 = vpop.f32.mrf.mxu0
        %v6738 = vadd.f32 %v5278, %v6737
        %v6739 = vpop.f32.mrf.mxu0
        %6740 = vmatprep.mubr.f32.mxu0 0.0
        %6741 = vmatmul.mubr.f32.gmra.mxu0 %v6498
        %v6742 = vpop.f32.mrf.mxu0
        %v6743 = vadd.f32 %v5278, %v6742
        %v6744 = vpop.f32.mrf.mxu0
        %6745 = vmatprep.mubr.f32.mxu0 0.0
        %6746 = vmatmul.mubr.f32.gmra.mxu0 %v6500
        %v6747 = vpop.f32.mrf.mxu0
        %v6748 = vadd.f32 %v5278, %v6747
        %v6749 = vpop.f32.mrf.mxu0
        %6750 = vmatprep.mubr.f32.mxu0 0.0
        %6751 = vmatmul.mubr.f32.gmra.mxu0 %v6502
        %v6752 = vpop.f32.mrf.mxu0
        %v6753 = vadd.f32 %v5278, %v6752
        %v6754 = vpop.f32.mrf.mxu0
        %6755 = vmatprep.mubr.f32.mxu0 0.0
        %6756 = vmatmul.mubr.f32.gmra.mxu0 %v6504
        %v6757 = vpop.f32.mrf.mxu0
        %v6758 = vadd.f32 %v5278, %v6757
        %v6759 = vpop.f32.mrf.mxu0
        %6760 = vmatprep.mubr.f32.mxu0 0.0
        %6761 = vmatmul.mubr.f32.gmra.mxu0 %v6506
        %v6762 = vpop.f32.mrf.mxu0
        %v6763 = vadd.f32 %v5278, %v6762
        %v6764 = vpop.f32.mrf.mxu0
        %6765 = vmatprep.mubr.f32.mxu0 0.0
        %6766 = vmatmul.mubr.f32.gmra.mxu0 %v6508
        %v6767 = vpop.f32.mrf.mxu0
        %v6768 = vadd.f32 %v5278, %v6767
        %v6769 = vpop.f32.mrf.mxu0
        %6770 = vmatprep.mubr.f32.mxu0 0.0
        %6771 = vmatmul.mubr.f32.gmra.mxu0 %v6510
        %v6772 = vpop.f32.mrf.mxu0
        %v6773 = vadd.f32 %v5278, %v6772
        %v6774 = vpop.f32.mrf.mxu0
        %6775 = vmatprep.mubr.f32.mxu0 0.0
        %6776 = vmatmul.mubr.f32.gmra.mxu0 %v6512
        %v6777 = vpop.f32.mrf.mxu0
        %v6778 = vadd.f32 %v5278, %v6777
        %v6779 = vpop.f32.mrf.mxu0
        %6780 = vmatprep.mubr.f32.mxu0 0.0
        %6781 = vmatmul.mubr.f32.gmra.mxu0 %v6514
        %v6782 = vpop.f32.mrf.mxu0
        %v6783 = vadd.f32 %v5278, %v6782
        %v6784 = vpop.f32.mrf.mxu0
        %6785 = vmatprep.mubr.f32.mxu0 0.0
        %6786 = vmatmul.mubr.f32.gmra.mxu0 %v6516
        %v6787 = vpop.f32.mrf.mxu0
        %v6788 = vadd.f32 %v5278, %v6787
        %v6789 = vpop.f32.mrf.mxu0
        %6790 = vmatprep.mubr.f32.mxu0 0.0
        %6791 = vmatmul.mubr.f32.gmra.mxu0 %v6518
        %v6792 = vpop.f32.mrf.mxu0
        %v6793 = vadd.f32 %v5278, %v6792
        %v6794 = vpop.f32.mrf.mxu0
        %6795 = vmatprep.mubr.f32.mxu0 0.0
        %6796 = vmatmul.mubr.f32.gmra.mxu0 %v6520
        %v6797 = vpop.f32.mrf.mxu0
        %v6798 = vadd.f32 %v5278, %v6797
        %v6799 = vpop.f32.mrf.mxu0
        %6800 = vmatprep.mubr.f32.mxu0 0.0
        %6801 = vmatmul.mubr.f32.gmra.mxu0 %v6522
        %v6802 = vpop.f32.mrf.mxu0
        %v6803 = vadd.f32 %v5278, %v6802
        %v6804 = vpop.f32.mrf.mxu0
        %6805 = vmatprep.mubr.f32.mxu0 0.0
        %6806 = vmatmul.mubr.f32.gmra.mxu0 %v6524
        %v6807 = vpop.f32.mrf.mxu0
        %v6808 = vadd.f32 %v5278, %v6807
        %v6809 = vpop.f32.mrf.mxu0
        %6810 = vmatprep.mubr.f32.mxu0 0.0
        %6811 = vmatmul.mubr.f32.gmra.mxu0 %v6526
        %v6812 = vpop.f32.mrf.mxu0
        %v6813 = vadd.f32 %v5278, %v6812
        %v6814 = vpop.f32.mrf.mxu0
        %6815 = vmatprep.mubr.f32.mxu0 0.0
        %6816 = vmatmul.mubr.f32.gmra.mxu0 %v6528
        %v6817 = vpop.f32.mrf.mxu0
        %v6818 = vadd.f32 %v5278, %v6817
        %v6819 = vpop.f32.mrf.mxu0
        %6820 = vmatprep.mubr.f32.mxu0 0.0
        %6821 = vmatmul.mubr.f32.gmra.mxu0 %v6530
        %v6822 = vpop.f32.mrf.mxu0
        %v6823 = vadd.f32 %v5278, %v6822
        %v6824 = vpop.f32.mrf.mxu0
        %6825 = vmatprep.mubr.f32.mxu0 0.0
        %6826 = vmatmul.mubr.f32.gmra.mxu0 %v6532
        %v6827 = vpop.f32.mrf.mxu0
        %v6828 = vadd.f32 %v5278, %v6827
        %v6829 = vpop.f32.mrf.mxu0
        %6830 = vmatprep.mubr.f32.mxu0 0.0
        %6831 = vmatmul.mubr.f32.gmra.mxu0 %v6534
        %v6832 = vpop.f32.mrf.mxu0
        %v6833 = vadd.f32 %v5278, %v6832
        %v6834 = vpop.f32.mrf.mxu0
        %6835 = vmatprep.mubr.f32.mxu0 0.0
        %6836 = vmatmul.mubr.f32.gmra.mxu0 %v6536
        %v6837 = vpop.f32.mrf.mxu0
        %v6838 = vadd.f32 %v5278, %v6837
        %v6839 = vpop.f32.mrf.mxu0
        %6840 = vmatprep.mubr.f32.mxu0 0.0
        %6841 = vmatmul.mubr.f32.gmra.mxu0 %v6538
        %v6842 = vpop.f32.mrf.mxu0
        %v6843 = vadd.f32 %v5278, %v6842
        %v6844 = vpop.f32.mrf.mxu0
        %6845 = vmatprep.mubr.f32.mxu0 0.0
        %6846 = vmatmul.mubr.f32.gmra.mxu0 %v6540
        %v6847 = vpop.f32.mrf.mxu0
        %v6848 = vadd.f32 %v5278, %v6847
        %v6849 = vpop.f32.mrf.mxu0
        %6850 = vmatprep.mubr.f32.mxu0 0.0
        %6851 = vmatmul.mubr.f32.gmra.mxu0 %v6542
        %v6852 = vpop.f32.mrf.mxu0
        %v6853 = vadd.f32 %v5278, %v6852
        %v6854 = vpop.f32.mrf.mxu0
        %6855 = vmatprep.mubr.f32.mxu0 0.0
        %6856 = vmatmul.mubr.f32.gmra.mxu0 %v6544
        %v6857 = vpop.f32.mrf.mxu0
        %v6858 = vadd.f32 %v5278, %v6857
        %v6859 = vpop.f32.mrf.mxu0
        %6860 = vmatprep.mubr.f32.mxu0 0.0
        %6861 = vmatmul.mubr.f32.gmra.mxu0 %v6546
        %v6862 = vpop.f32.mrf.mxu0
        %v6863 = vadd.f32 %v5278, %v6862
        %v6864 = vpop.f32.mrf.mxu0
        %6865 = vmatprep.mubr.f32.mxu0 0.0
        %6866 = vmatmul.mubr.f32.gmra.mxu0 %v6548
        %v6867 = vpop.f32.mrf.mxu0
        %v6868 = vadd.f32 %v5278, %v6867
        %v6869 = vpop.f32.mrf.mxu0
        %6870 = vmatprep.mubr.f32.mxu0 0.0
        %6871 = vmatmul.mubr.f32.gmra.mxu0 %v6550
        %v6872 = vpop.f32.mrf.mxu0
        %v6873 = vadd.f32 %v5278, %v6872
        %v6874 = vpop.f32.mrf.mxu0
        %6875 = vmatprep.mubr.f32.mxu0 0.0
        %6876 = vmatmul.mubr.f32.gmra.mxu0 %v6552
        %v6877 = vpop.f32.mrf.mxu0
        %v6878 = vadd.f32 %v5278, %v6877
        %v6879 = vpop.f32.mrf.mxu0
        %6880 = vmatprep.mubr.f32.mxu0 0.0
        %6881 = vmatmul.mubr.f32.gmra.mxu0 %v6554
        %v6882 = vpop.f32.mrf.mxu0
        %v6883 = vadd.f32 %v5278, %v6882
        %v6884 = vpop.f32.mrf.mxu0
        %6885 = vmatprep.mubr.f32.mxu0 0.0
        %6886 = vmatmul.mubr.f32.gmra.mxu0 %v6556
        %v6887 = vpop.f32.mrf.mxu0
        %v6888 = vadd.f32 %v5278, %v6887
        %v6889 = vpop.f32.mrf.mxu0
        %6890 = vmatprep.mubr.f32.mxu0 0.0
        %6891 = vmatmul.mubr.f32.gmra.mxu0 %v6558
        %v6892 = vpop.f32.mrf.mxu0
        %v6893 = vadd.f32 %v5278, %v6892
        %v6894 = vpop.f32.mrf.mxu0
        %6895 = vmatprep.mubr.f32.mxu0 0.0
        %6896 = vmatmul.mubr.f32.gmra.mxu0 %v6560
        %v6897 = vpop.f32.mrf.mxu0
        %v6898 = vadd.f32 %v5278, %v6897
        %v6899 = vpop.f32.mrf.mxu0
        %6900 = vmatprep.mubr.f32.mxu0 0.0
        %6901 = vmatmul.mubr.f32.gmra.mxu0 %v6562
        %v6902 = vpop.f32.mrf.mxu0
        %v6903 = vadd.f32 %v5278, %v6902
        %v6904 = vpop.f32.mrf.mxu0
        %6905 = vmatprep.mubr.f32.mxu0 0.0
        %6906 = vmatmul.mubr.f32.gmra.mxu0 %v6564
        %v6907 = vpop.f32.mrf.mxu0
        %v6908 = vadd.f32 %v5278, %v6907
        %v6909 = vpop.f32.mrf.mxu0
        %6910 = vmatprep.mubr.f32.mxu0 0.0
        %6911 = vmatmul.mubr.f32.gmra.mxu0 %v6566
        %v6912 = vpop.f32.mrf.mxu0
        %v6913 = vadd.f32 %v5278, %v6912
        %v6914 = vpop.f32.mrf.mxu0
        %6915 = vmatprep.mubr.f32.mxu0 0.0
        %6916 = vmatmul.mubr.f32.gmra.mxu0 %v6568
        %v6917 = vpop.f32.mrf.mxu0
        %v6918 = vadd.f32 %v5278, %v6917
        %v6919 = vpop.f32.mrf.mxu0
        %6920 = vmatprep.mubr.f32.mxu0 0.0
        %6921 = vmatmul.mubr.f32.gmra.mxu0 %v6570
        %v6922 = vpop.f32.mrf.mxu0
        %v6923 = vadd.f32 %v5278, %v6922
        %v6924 = vpop.f32.mrf.mxu0
        %6925 = vmatprep.mubr.f32.mxu0 0.0
        %6926 = vmatmul.mubr.f32.gmra.mxu0 %v6572
        %v6927 = vpop.f32.mrf.mxu0
        %v6928 = vadd.f32 %v5278, %v6927
        %v6929 = vpop.f32.mrf.mxu0
        %6930 = vmatprep.mubr.f32.mxu0 0.0
        %6931 = vmatmul.mubr.f32.gmra.mxu0 %v6574
        %v6932 = vpop.f32.mrf.mxu0
        %v6933 = vadd.f32 %v5278, %v6932
        %v6934 = vpop.f32.mrf.mxu0
        %6935 = vmatprep.mubr.f32.mxu0 0.0
        %6936 = vmatmul.mubr.f32.gmra.mxu0 %v6576
        %v6937 = vpop.f32.mrf.mxu0
        %v6938 = vadd.f32 %v5278, %v6937
        %v6939 = vpop.f32.mrf.mxu0
        %6940 = vmatprep.mubr.f32.mxu0 0.0
        %6941 = vmatmul.mubr.f32.gmra.mxu0 %v6578
        %v6942 = vpop.f32.mrf.mxu0
        %v6943 = vadd.f32 %v5278, %v6942
        %v6944 = vpop.f32.mrf.mxu0
        %6945 = vmatprep.mubr.f32.mxu0 0.0
        %6946 = vmatmul.mubr.f32.gmra.mxu0 %v6580
        %v6947 = vpop.f32.mrf.mxu0
        %v6948 = vadd.f32 %v5278, %v6947
        %v6949 = vpop.f32.mrf.mxu0
        %6950 = vmatprep.mubr.f32.mxu0 0.0
        %6951 = vmatmul.mubr.f32.gmra.mxu0 %v6582
        %v6952 = vpop.f32.mrf.mxu0
        %v6953 = vadd.f32 %v5278, %v6952
        %v6954 = vpop.f32.mrf.mxu0
        %6955 = vmatprep.mubr.f32.mxu0 0.0
        %6956 = vmatmul.mubr.f32.gmra.mxu0 %v6584
        %v6957 = vpop.f32.mrf.mxu0
        %v6958 = vadd.f32 %v5278, %v6957
        %v6959 = vpop.f32.mrf.mxu0
        %6960 = vmatprep.mubr.f32.mxu0 0.0
        %6961 = vmatmul.mubr.f32.gmra.mxu0 %v6586
        %v6962 = vpop.f32.mrf.mxu0
        %v6963 = vadd.f32 %v5278, %v6962
        %v6964 = vpop.f32.mrf.mxu0
        %6965 = vmatprep.mubr.f32.mxu0 0.0
        %6966 = vmatmul.mubr.f32.gmra.mxu0 %v6588
        %v6967 = vpop.f32.mrf.mxu0
        %v6968 = vadd.f32 %v5278, %v6967
        %v6969 = vpop.f32.mrf.mxu0
        %6970 = vmatprep.mubr.f32.mxu0 0.0
        %6971 = vmatmul.mubr.f32.gmra.mxu0 %v6590
        %v6972 = vpop.f32.mrf.mxu0
        %v6973 = vadd.f32 %v5278, %v6972
        %v6974 = vpop.f32.mrf.mxu0
        %6975 = vmatprep.mubr.f32.mxu0 0.0
        %6976 = vmatmul.mubr.f32.gmra.mxu0 %v6592
        %v6977 = vpop.f32.mrf.mxu0
        %v6978 = vadd.f32 %v5278, %v6977
        %v6979 = vpop.f32.mrf.mxu0
        %6980 = vmatprep.mubr.f32.mxu0 0.0
        %6981 = vmatmul.mubr.f32.gmra.mxu0 %v6594
        %v6982 = vpop.f32.mrf.mxu0
        %v6983 = vadd.f32 %v5278, %v6982
        %v6984 = vpop.f32.mrf.mxu0
        %6985 = vmatprep.mubr.f32.mxu0 0.0
        %6986 = vmatmul.mubr.f32.gmra.mxu0 %v6596
        %v6987 = vpop.f32.mrf.mxu0
        %v6988 = vadd.f32 %v5278, %v6987
        %v6989 = vpop.f32.mrf.mxu0
        %6990 = vmatprep.mubr.f32.mxu0 0.0
        %6991 = vmatmul.mubr.f32.gmra.mxu0 %v6598
        %v6992 = vpop.f32.mrf.mxu0
        %v6993 = vadd.f32 %v5278, %v6992
        %v6994 = vpop.f32.mrf.mxu0
        %6995 = vmatprep.mubr.f32.mxu0 0.0
        %6996 = vmatmul.mubr.f32.gmra.mxu0 %v6600
        %v6997 = vpop.f32.mrf.mxu0
        %v6998 = vadd.f32 %v5278, %v6997
        %v6999 = vpop.f32.mrf.mxu0
        %7000 = vmatprep.mubr.f32.mxu0 0.0
        %7001 = vmatmul.mubr.f32.gmra.mxu0 %v6602
        %v7002 = vpop.f32.mrf.mxu0
        %v7003 = vadd.f32 %v5278, %v7002
        %v7004 = vpop.f32.mrf.mxu0
        %7005 = vmatprep.mubr.f32.mxu0 0.0
        %7006 = vmatmul.mubr.f32.gmra.mxu0 %v6604
        %v7007 = vpop.f32.mrf.mxu0
        %v7008 = vadd.f32 %v5278, %v7007
        %v7009 = vpop.f32.mrf.mxu0
        %7010 = vmatprep.mubr.f32.mxu0 0.0
        %7011 = vmatmul.mubr.f32.gmra.mxu0 %v6606
        %v7012 = vpop.f32.mrf.mxu0
        %v7013 = vadd.f32 %v5278, %v7012
        %v7014 = vpop.f32.mrf.mxu0
        %7015 = vmatprep.mubr.f32.mxu0 0.0
        %7016 = vmatmul.mubr.f32.gmra.mxu0 %v6608
        %v7017 = vpop.f32.mrf.mxu0
        %v7018 = vadd.f32 %v5278, %v7017
        %v7019 = vpop.f32.mrf.mxu0
        %7020 = vmatprep.mubr.f32.mxu0 0.0
        %7021 = vmatmul.mubr.f32.gmra.mxu0 %v6610
        %v7022 = vpop.f32.mrf.mxu0
        %v7023 = vadd.f32 %v5278, %v7022
        %v7024 = vpop.f32.mrf.mxu0
        %7025 = vmatprep.mubr.f32.mxu0 0.0
        %7026 = vmatmul.mubr.f32.gmra.mxu0 %v6612
        %v7027 = vpop.f32.mrf.mxu0
        %v7028 = vadd.f32 %v5278, %v7027
        %v7029 = vpop.f32.mrf.mxu0
        %7030 = vmatprep.mubr.f32.mxu0 0.0
        %7031 = vmatmul.mubr.f32.gmra.mxu0 %v6614
        %v7032 = vpop.f32.mrf.mxu0
        %v7033 = vadd.f32 %v5278, %v7032
        %v7034 = vpop.f32.mrf.mxu0
        %7035 = vmatprep.mubr.f32.mxu0 0.0
        %7036 = vmatmul.mubr.f32.gmra.mxu0 %v6616
        %v7037 = vpop.f32.mrf.mxu0
        %v7038 = vadd.f32 %v5278, %v7037
        %v7039 = vpop.f32.mrf.mxu0
        %7040 = vmatprep.mubr.f32.mxu0 0.0
        %7041 = vmatmul.mubr.f32.gmra.mxu0 %v6618
        %v7042 = vpop.f32.mrf.mxu0
        %v7043 = vadd.f32 %v5278, %v7042
        %v7044 = vpop.f32.mrf.mxu0
        %7045 = vmatprep.mubr.f32.mxu0 0.0
        %7046 = vmatmul.mubr.f32.gmra.mxu0 %v6620
        %v7047 = vpop.f32.mrf.mxu0
        %v7048 = vadd.f32 %v5278, %v7047
        %v7049 = vpop.f32.mrf.mxu0
        %7050 = vmatprep.mubr.f32.mxu0 0.0
        %7051 = vmatmul.mubr.f32.gmra.mxu0 %v6622
        %v7052 = vpop.f32.mrf.mxu0
        %v7053 = vadd.f32 %v5278, %v7052
        %v7054 = vpop.f32.mrf.mxu0
        %7055 = vmatprep.mubr.f32.mxu0 0.0
        %7056 = vmatmul.mubr.f32.gmra.mxu0 %v6624
        %v7057 = vpop.f32.mrf.mxu0
        %v7058 = vadd.f32 %v5278, %v7057
        %v7059 = vpop.f32.mrf.mxu0
        %7060 = vmatprep.mubr.f32.mxu0 0.0
        %7061 = vmatmul.mubr.f32.gmra.mxu0 %v6626
        %v7062 = vpop.f32.mrf.mxu0
        %v7063 = vadd.f32 %v5278, %v7062
        %v7064 = vpop.f32.mrf.mxu0
        %7065 = vmatprep.mubr.f32.mxu0 0.0
        %7066 = vmatmul.mubr.f32.gmra.mxu0 %v6628
        %v7067 = vpop.f32.mrf.mxu0
        %v7068 = vadd.f32 %v5278, %v7067
        %v7069 = vpop.f32.mrf.mxu0
        %7070 = vmatprep.mubr.f32.mxu0 0.0
        %7071 = vmatmul.mubr.f32.gmra.mxu0 %v6630
        %v7072 = vpop.f32.mrf.mxu0
        %v7073 = vadd.f32 %v5278, %v7072
        %v7074 = vpop.f32.mrf.mxu0
        %7075 = vmatprep.mubr.f32.mxu0 0.0
        %7076 = vmatmul.mubr.f32.gmra.mxu0 %v6632
        %v7077 = vpop.f32.mrf.mxu0
        %v7078 = vadd.f32 %v5278, %v7077
        %v7079 = vpop.f32.mrf.mxu0
        %7080 = vmatprep.mubr.f32.mxu0 0.0
        %7081 = vmatmul.mubr.f32.gmra.mxu0 %v6634
        %v7082 = vpop.f32.mrf.mxu0
        %v7083 = vadd.f32 %v5278, %v7082
        %v7084 = vpop.f32.mrf.mxu0
        %7085 = vmatprep.mubr.f32.mxu0 0.0
        %7086 = vmatmul.mubr.f32.gmra.mxu0 %v6636
        %v7087 = vpop.f32.mrf.mxu0
        %v7088 = vadd.f32 %v5278, %v7087
        %v7089 = vpop.f32.mrf.mxu0
        %7090 = vmatprep.mubr.f32.mxu0 0.0
        %7091 = vmatmul.mubr.f32.gmra.mxu0 %v6638
        %v7092 = vpop.f32.mrf.mxu0
        %v7093 = vadd.f32 %v5278, %v7092
        %v7094 = vpop.f32.mrf.mxu0
        %7095 = vmatprep.mubr.f32.mxu0 0.0
        %7096 = vmatmul.mubr.f32.gmra.mxu0 %v6640
        %v7097 = vpop.f32.mrf.mxu0
        %v7098 = vadd.f32 %v5278, %v7097
        %v7099 = vpop.f32.mrf.mxu0
        %7100 = vmatprep.mubr.f32.mxu0 0.0
        %7101 = vmatmul.mubr.f32.gmra.mxu0 %v6642
        %v7102 = vpop.f32.mrf.mxu0
        %v7103 = vadd.f32 %v5278, %v7102
        %v7104 = vpop.f32.mrf.mxu0
        %7105 = vmatprep.mubr.f32.mxu0 0.0
        %7106 = vmatmul.mubr.f32.gmra.mxu0 %v6644
        %v7107 = vpop.f32.mrf.mxu0
        %v7108 = vadd.f32 %v5278, %v7107
        %v7109 = vpop.f32.mrf.mxu0
        %7110 = vdwg.mxu0
        %v7111 = vld [vmem:[%s1 + $0x40] sm:$0xff]
        %v7112 = vld [vmem:[%s1 + $0x48] sm:$0xff]
        %v7113 = vld [vmem:[%s1 + $0x50] sm:$0xff]
        %v7114 = vld [vmem:[%s1 + $0x58] sm:$0xff]
        %vm7115 = vcmask 261120
        %v7117 = vsel %vm7115, 0.0, 0
        %7119 = vmatprep.subr.mxu0 0.0
        %7120 = vmatpush1.msra.mxu0 0.0
        %7121 = vmatprep.subr.mxu0 0.0
        %7122 = vmatpush1.msra.mxu0 0.0
        %7123 = vmatprep.subr.mxu0 0.0
        %7124 = vmatpush1.msra.mxu0 0.0
        %7125 = vmatprep.subr.mxu0 0.0
        %7126 = vmatpush1.msra.mxu0 0.0
        %7127 = vmatprep.subr.mxu0 0.0
        %7128 = vmatpush1.msra.mxu0 0.0
        %7129 = vmatprep.subr.mxu0 0.0
        %7130 = vmatpush1.msra.mxu0 0.0
        %7131 = vmatprep.subr.mxu0 0.0
        %7132 = vmatpush1.msra.mxu0 0.0
        %7133 = vmatprep.subr.mxu0 0.0
        %7134 = vmatpush1.msra.mxu0 0.0
        %7135 = vmatprep.subr.mxu0 0.0
        %7136 = vmatpush1.msra.mxu0 0.0
        %7137 = vmatprep.subr.mxu0 0.0
        %7138 = vmatpush1.msra.mxu0 0.0
        %7139 = vmatprep.subr.mxu0 0.0
        %7140 = vmatpush1.msra.mxu0 0.0
        %7141 = vmatprep.subr.mxu0 0.0
        %7142 = vmatpush1.msra.mxu0 0.0
        %7143 = vmatprep.subr.mxu0 0.0
        %7144 = vmatpush1.msra.mxu0 %v7114
        %7145 = vmatprep.subr.mxu0 0.0
        %7146 = vmatpush1.msra.mxu0 %v7113
        %7147 = vmatprep.subr.mxu0 0.0
        %7148 = vmatpush1.msra.mxu0 %v7112
        %7149 = vmatprep.subr.mxu0 0.0
        %7150 = vmatpush1.msra.mxu0 %v7111
        %7151 = vmatprep.subr.mxu0 0.0
        %7152 = vmatpush2.msra.mxu0 0.0
        %7153 = vmatprep.subr.mxu0 0.0
        %7154 = vmatpush2.msra.mxu0 0.0
        %7155 = vmatprep.subr.mxu0 0.0
        %7156 = vmatpush2.msra.mxu0 0.0
        %7157 = vmatprep.subr.mxu0 0.0
        %7158 = vmatpush2.msra.mxu0 0.0
        %7159 = vmatprep.subr.mxu0 0.0
        %7160 = vmatpush2.msra.mxu0 0.0
        %7161 = vmatprep.subr.mxu0 0.0
        %7162 = vmatpush2.msra.mxu0 0.0
        %7163 = vmatprep.subr.mxu0 0.0
        %7164 = vmatpush2.msra.mxu0 0.0
        %7165 = vmatprep.subr.mxu0 0.0
        %7166 = vmatpush2.msra.mxu0 0.0
        %7167 = vmatprep.subr.mxu0 0.0
        %7168 = vmatpush2.msra.mxu0 0.0
        %7169 = vmatprep.subr.mxu0 0.0
        %7170 = vmatpush2.msra.mxu0 0.0
        %7171 = vmatprep.subr.mxu0 0.0
        %7172 = vmatpush2.msra.mxu0 0.0
        %7173 = vmatprep.subr.mxu0 0.0
        %7174 = vmatpush2.msra.mxu0 0.0
        %7175 = vmatprep.subr.mxu0 0.0
        %7176 = vmatpush2.msra.mxu0 0.0
        %7177 = vmatprep.subr.mxu0 0.0
        %7178 = vmatpush2.msra.mxu0 0.0
        %7179 = vmatprep.subr.mxu0 0.0
        %7180 = vmatpush2.msra.mxu0 0.0
        %7181 = vmatprep.subr.mxu0 0.0
        %7182 = vmatpush2.msra.mxu0 0.0
        %7183 = vmatprep.mubr.f32.mxu0 0.0
        %7184 = vmatmul.mubr.f32.gmra.mxu0 %v7117
        %v7185 = vpop.f32.mrf.mxu0
        %v7186 = vadd.f32 0.0, %v7185
        %v7187 = vpop.f32.mrf.mxu0
        %7188 = vmatprep.mubr.f32.mxu0 0.0
        %7189 = vmatmul.mubr.f32.gmra.mxu0 %v7117
        %v7190 = vpop.f32.mrf.mxu0
        %v7191 = vadd.f32 0.0, %v7190
        %v7192 = vpop.f32.mrf.mxu0
        %7193 = vmatprep.mubr.f32.mxu0 0.0
        %7194 = vmatmul.mubr.f32.gmra.mxu0 %v7117
        %v7195 = vpop.f32.mrf.mxu0
        %v7196 = vadd.f32 0.0, %v7195
        %v7197 = vpop.f32.mrf.mxu0
        %7198 = vmatprep.mubr.f32.mxu0 0.0
        %7199 = vmatmul.mubr.f32.gmra.mxu0 %v7117
        %v7200 = vpop.f32.mrf.mxu0
        %v7201 = vadd.f32 0.0, %v7200
        %v7202 = vpop.f32.mrf.mxu0
        %7203 = vmatprep.mubr.f32.mxu0 0.0
        %7204 = vmatmul.mubr.f32.gmra.mxu0 %v7117
        %v7205 = vpop.f32.mrf.mxu0
        %v7206 = vadd.f32 0.0, %v7205
        %v7207 = vpop.f32.mrf.mxu0
        %7208 = vmatprep.mubr.f32.mxu0 0.0
        %7209 = vmatmul.mubr.f32.gmra.mxu0 %v7117
        %v7210 = vpop.f32.mrf.mxu0
        %v7211 = vadd.f32 0.0, %v7210
        %v7212 = vpop.f32.mrf.mxu0
        %7213 = vmatprep.mubr.f32.mxu0 0.0
        %7214 = vmatmul.mubr.f32.gmra.mxu0 %v7117
        %v7215 = vpop.f32.mrf.mxu0
        %v7216 = vadd.f32 0.0, %v7215
        %v7217 = vpop.f32.mrf.mxu0
        %7218 = vmatprep.mubr.f32.mxu0 0.0
        %7219 = vmatmul.mubr.f32.gmra.mxu0 %v7117
        %v7220 = vpop.f32.mrf.mxu0
        %v7221 = vadd.f32 0.0, %v7220
        %v7222 = vpop.f32.mrf.mxu0
        %7223 = vmatprep.mubr.f32.mxu0 0.0
        %7224 = vmatmul.mubr.f32.gmra.mxu0 %v7117
        %v7225 = vpop.f32.mrf.mxu0
        %v7226 = vadd.f32 0.0, %v7225
        %v7227 = vpop.f32.mrf.mxu0
        %7228 = vmatprep.mubr.f32.mxu0 0.0
        %7229 = vmatmul.mubr.f32.gmra.mxu0 %v7117
        %v7230 = vpop.f32.mrf.mxu0
        %v7231 = vadd.f32 0.0, %v7230
        %v7232 = vpop.f32.mrf.mxu0
        %7233 = vmatprep.mubr.f32.mxu0 0.0
        %7234 = vmatmul.mubr.f32.gmra.mxu0 %v7117
        %v7235 = vpop.f32.mrf.mxu0
        %v7236 = vadd.f32 0.0, %v7235
        %v7237 = vpop.f32.mrf.mxu0
        %7238 = vmatprep.mubr.f32.mxu0 0.0
        %7239 = vmatmul.mubr.f32.gmra.mxu0 %v7117
        %v7240 = vpop.f32.mrf.mxu0
        %v7241 = vadd.f32 0.0, %v7240
        %v7242 = vpop.f32.mrf.mxu0
        %7243 = vmatprep.mubr.f32.mxu0 0.0
        %7244 = vmatmul.mubr.f32.gmra.mxu0 %v7117
        %v7245 = vpop.f32.mrf.mxu0
        %v7246 = vadd.f32 0.0, %v7245
        %v7247 = vpop.f32.mrf.mxu0
        %7248 = vmatprep.mubr.f32.mxu0 0.0
        %7249 = vmatmul.mubr.f32.gmra.mxu0 %v7117
        %v7250 = vpop.f32.mrf.mxu0
        %v7251 = vadd.f32 0.0, %v7250
        %v7252 = vpop.f32.mrf.mxu0
        %7253 = vmatprep.mubr.f32.mxu0 0.0
        %7254 = vmatmul.mubr.f32.gmra.mxu0 %v7117
        %v7255 = vpop.f32.mrf.mxu0
        %v7256 = vadd.f32 0.0, %v7255
        %v7257 = vpop.f32.mrf.mxu0
        %7258 = vmatprep.mubr.f32.mxu0 0.0
        %7259 = vmatmul.mubr.f32.gmra.mxu0 %v7117
        %v7260 = vpop.f32.mrf.mxu0
        %v7261 = vadd.f32 0.0, %v7260
        %v7262 = vpop.f32.mrf.mxu0
        %7263 = vdwg.mxu0
        %v7264 = vadd.f32 %v6713, %v7186
        %v7265 = vadd.f32 %v6718, %v7191
        %v7266 = vadd.f32 %v6723, %v7196
        %v7267 = vadd.f32 %v6728, %v7201
        %v7268 = vadd.f32 %v6733, %v7206
        %v7269 = vadd.f32 %v6738, %v7211
        %v7270 = vadd.f32 %v6743, %v7216
        %v7271 = vadd.f32 %v6748, %v7221
        %v7272 = vadd.f32 %v6753, %v7226
        %v7273 = vadd.f32 %v6758, %v7231
        %v7274 = vadd.f32 %v6763, %v7236
        %v7275 = vadd.f32 %v6768, %v7241
        %v7276 = vadd.f32 %v6773, %v7246
        %v7277 = vadd.f32 %v6778, %v7251
        %v7278 = vadd.f32 %v6783, %v7256
        %v7279 = vadd.f32 %v6788, %v7261
        %v7280 = vxor.u32 %v7264, 2147483648
        %v7281 = vxor.u32 %v7265, 2147483648
        %v7282 = vxor.u32 %v7266, 2147483648
        %v7283 = vxor.u32 %v7267, 2147483648
        %v7284 = vxor.u32 %v7268, 2147483648
        %v7285 = vxor.u32 %v7269, 2147483648
        %v7286 = vxor.u32 %v7270, 2147483648
        %v7287 = vxor.u32 %v7271, 2147483648
        %v7288 = vxor.u32 %v7272, 2147483648
        %v7289 = vxor.u32 %v7273, 2147483648
        %v7290 = vxor.u32 %v7274, 2147483648
        %v7291 = vxor.u32 %v7275, 2147483648
        %v7292 = vxor.u32 %v7276, 2147483648
        %v7293 = vxor.u32 %v7277, 2147483648
        %v7294 = vxor.u32 %v7278, 2147483648
        %v7295 = vxor.u32 %v7279, 2147483648
        %v7296 = vmul.f32 %v7280, 1.442695
        %v7297 = vpow.pop %v7296
        %v7298 = vmul.f32 %v7281, 1.442695
        %v7299 = vpow.pop %v7298
        %v7300 = vmul.f32 %v7282, 1.442695
        %v7301 = vpow.pop %v7300
        %v7302 = vmul.f32 %v7283, 1.442695
        %v7303 = vpow.pop %v7302
        %v7304 = vmul.f32 %v7284, 1.442695
        %v7305 = vpow.pop %v7304
        %v7306 = vmul.f32 %v7285, 1.442695
        %v7307 = vpow.pop %v7306
        %v7308 = vmul.f32 %v7286, 1.442695
        %v7309 = vpow.pop %v7308
        %v7310 = vmul.f32 %v7287, 1.442695
        %v7311 = vpow.pop %v7310
        %v7312 = vmul.f32 %v7288, 1.442695
        %v7313 = vpow.pop %v7312
        %v7314 = vmul.f32 %v7289, 1.442695
        %v7315 = vpow.pop %v7314
        %v7316 = vmul.f32 %v7290, 1.442695
        %v7317 = vpow.pop %v7316
        %v7318 = vmul.f32 %v7291, 1.442695
        %v7319 = vpow.pop %v7318
        %v7320 = vmul.f32 %v7292, 1.442695
        %v7321 = vpow.pop %v7320
        %v7322 = vmul.f32 %v7293, 1.442695
        %v7323 = vpow.pop %v7322
        %v7324 = vmul.f32 %v7294, 1.442695
        %v7325 = vpow.pop %v7324
        %v7326 = vmul.f32 %v7295, 1.442695
        %v7327 = vpow.pop %v7326
        %v7328 = vadd.f32 %v7297, 1.0
        %v7329 = vadd.f32 %v7299, 1.0
        %v7330 = vadd.f32 %v7301, 1.0
        %v7331 = vadd.f32 %v7303, 1.0
        %v7332 = vadd.f32 %v7305, 1.0
        %v7333 = vadd.f32 %v7307, 1.0
        %v7334 = vadd.f32 %v7309, 1.0
        %v7335 = vadd.f32 %v7311, 1.0
        %v7336 = vadd.f32 %v7313, 1.0
        %v7337 = vadd.f32 %v7315, 1.0
        %v7338 = vadd.f32 %v7317, 1.0
        %v7339 = vadd.f32 %v7319, 1.0
        %v7340 = vadd.f32 %v7321, 1.0
        %v7341 = vadd.f32 %v7323, 1.0
        %v7342 = vadd.f32 %v7325, 1.0
        %v7343 = vadd.f32 %v7327, 1.0
        %v7344 = vrcp.pop %v7328
        %v7345 = vmul.f32 1.0, %v7344
        %v7346 = vrcp.pop %v7329
        %v7347 = vmul.f32 1.0, %v7346
        %v7348 = vrcp.pop %v7330
        %v7349 = vmul.f32 1.0, %v7348
        %v7350 = vrcp.pop %v7331
        %v7351 = vmul.f32 1.0, %v7350
        %v7352 = vrcp.pop %v7332
        %v7353 = vmul.f32 1.0, %v7352
        %v7354 = vrcp.pop %v7333
        %v7355 = vmul.f32 1.0, %v7354
        %v7356 = vrcp.pop %v7334
        %v7357 = vmul.f32 1.0, %v7356
        %v7358 = vrcp.pop %v7335
        %v7359 = vmul.f32 1.0, %v7358
        %v7360 = vrcp.pop %v7336
        %v7361 = vmul.f32 1.0, %v7360
        %v7362 = vrcp.pop %v7337
        %v7363 = vmul.f32 1.0, %v7362
        %v7364 = vrcp.pop %v7338
        %v7365 = vmul.f32 1.0, %v7364
        %v7366 = vrcp.pop %v7339
        %v7367 = vmul.f32 1.0, %v7366
        %v7368 = vrcp.pop %v7340
        %v7369 = vmul.f32 1.0, %v7368
        %v7370 = vrcp.pop %v7341
        %v7371 = vmul.f32 1.0, %v7370
        %v7372 = vrcp.pop %v7342
        %v7373 = vmul.f32 1.0, %v7372
        %v7374 = vrcp.pop %v7343
        %v7375 = vmul.f32 1.0, %v7374
        %v7376 = vtanh.pop %v7264
        %v7377 = vtanh.pop %v7265
        %v7378 = vtanh.pop %v7266
        %v7379 = vtanh.pop %v7267
        %v7380 = vtanh.pop %v7268
        %v7381 = vtanh.pop %v7269
        %v7382 = vtanh.pop %v7270
        %v7383 = vtanh.pop %v7271
        %v7384 = vtanh.pop %v7272
        %v7385 = vtanh.pop %v7273
        %v7386 = vtanh.pop %v7274
        %v7387 = vtanh.pop %v7275
        %v7388 = vtanh.pop %v7276
        %v7389 = vtanh.pop %v7277
        %v7390 = vtanh.pop %v7278
        %v7391 = vtanh.pop %v7279
        %v7392 = vmul.f32 %v7345, 0.0
        %v7393 = vmul.f32 %v7347, 0.0
        %v7394 = vmul.f32 %v7349, 0.0
        %v7395 = vmul.f32 %v7351, 0.0
        %v7396 = vmul.f32 %v7353, 0.0
        %v7397 = vmul.f32 %v7355, 0.0
        %v7398 = vmul.f32 %v7357, 0.0
        %v7399 = vmul.f32 %v7359, 0.0
        %v7400 = vmul.f32 %v7361, 0.0
        %v7401 = vmul.f32 %v7363, 0.0
        %v7402 = vmul.f32 %v7365, 0.0
        %v7403 = vmul.f32 %v7367, 0.0
        %v7404 = vmul.f32 %v7369, 0.0
        %v7405 = vmul.f32 %v7371, 0.0
        %v7406 = vmul.f32 %v7373, 0.0
        %v7407 = vmul.f32 %v7375, 0.0
        %7424 = vrot.lane.b32.xlu0 %v7376, 64
        %v7425 = vpop.permute.xlu0 %7424
        %7426 = vrot.lane.b32.xlu0 %v7377, 64
        %v7427 = vpop.permute.xlu0 %7426
        %7428 = vrot.lane.b32.xlu0 %v7378, 64
        %v7429 = vpop.permute.xlu0 %7428
        %7430 = vrot.lane.b32.xlu0 %v7379, 64
        %v7431 = vpop.permute.xlu0 %7430
        %7432 = vrot.lane.b32.xlu0 %v7380, 64
        %v7433 = vpop.permute.xlu0 %7432
        %7434 = vrot.lane.b32.xlu0 %v7381, 64
        %v7435 = vpop.permute.xlu0 %7434
        %7436 = vrot.lane.b32.xlu0 %v7382, 64
        %v7437 = vpop.permute.xlu0 %7436
        %7438 = vrot.lane.b32.xlu0 %v7383, 64
        %v7439 = vpop.permute.xlu0 %7438
        %7440 = vrot.lane.b32.xlu0 %v7384, 64
        %v7441 = vpop.permute.xlu0 %7440
        %7442 = vrot.lane.b32.xlu0 %v7385, 64
        %v7443 = vpop.permute.xlu0 %7442
        %7444 = vrot.lane.b32.xlu0 %v7386, 64
        %v7445 = vpop.permute.xlu0 %7444
        %7446 = vrot.lane.b32.xlu0 %v7387, 64
        %v7447 = vpop.permute.xlu0 %7446
        %7448 = vrot.lane.b32.xlu0 %v7388, 64
        %v7449 = vpop.permute.xlu0 %7448
        %7450 = vrot.lane.b32.xlu0 %v7389, 64
        %v7451 = vpop.permute.xlu0 %7450
        %7452 = vrot.lane.b32.xlu0 %v7390, 64
        %v7453 = vpop.permute.xlu0 %7452
        %7454 = vrot.lane.b32.xlu0 %v7391, 64
        %v7455 = vpop.permute.xlu0 %7454
        %v7472 = vmul.f32 %v7345, %v7425
        %v7473 = vmul.f32 %v7347, %v7427
        %v7474 = vmul.f32 %v7349, %v7429
        %v7475 = vmul.f32 %v7351, %v7431
        %v7476 = vmul.f32 %v7353, %v7433
        %v7477 = vmul.f32 %v7355, %v7435
        %v7478 = vmul.f32 %v7357, %v7437
        %v7479 = vmul.f32 %v7359, %v7439
        %v7480 = vmul.f32 %v7361, %v7441
        %v7481 = vmul.f32 %v7363, %v7443
        %v7482 = vmul.f32 %v7365, %v7445
        %v7483 = vmul.f32 %v7367, %v7447
        %v7484 = vmul.f32 %v7369, %v7449
        %v7485 = vmul.f32 %v7371, %v7451
        %v7486 = vmul.f32 %v7373, %v7453
        %v7487 = vmul.f32 %v7375, %v7455
        %7504 = vrot.lane.b32.xlu0 %v7472, 32
        %v7505 = vpop.permute.xlu0 %7504
        %7506 = vrot.lane.b32.xlu0 %v7473, 32
        %v7507 = vpop.permute.xlu0 %7506
        %7508 = vrot.lane.b32.xlu0 %v7474, 32
        %v7509 = vpop.permute.xlu0 %7508
        %7510 = vrot.lane.b32.xlu0 %v7475, 32
        %v7511 = vpop.permute.xlu0 %7510
        %7512 = vrot.lane.b32.xlu0 %v7476, 32
        %v7513 = vpop.permute.xlu0 %7512
        %7514 = vrot.lane.b32.xlu0 %v7477, 32
        %v7515 = vpop.permute.xlu0 %7514
        %7516 = vrot.lane.b32.xlu0 %v7478, 32
        %v7517 = vpop.permute.xlu0 %7516
        %7518 = vrot.lane.b32.xlu0 %v7479, 32
        %v7519 = vpop.permute.xlu0 %7518
        %7520 = vrot.lane.b32.xlu0 %v7480, 32
        %v7521 = vpop.permute.xlu0 %7520
        %7522 = vrot.lane.b32.xlu0 %v7481, 32
        %v7523 = vpop.permute.xlu0 %7522
        %7524 = vrot.lane.b32.xlu0 %v7482, 32
        %v7525 = vpop.permute.xlu0 %7524
        %7526 = vrot.lane.b32.xlu0 %v7483, 32
        %v7527 = vpop.permute.xlu0 %7526
        %7528 = vrot.lane.b32.xlu0 %v7484, 32
        %v7529 = vpop.permute.xlu0 %7528
        %7530 = vrot.lane.b32.xlu0 %v7485, 32
        %v7531 = vpop.permute.xlu0 %7530
        %7532 = vrot.lane.b32.xlu0 %v7486, 32
        %v7533 = vpop.permute.xlu0 %7532
        %7534 = vrot.lane.b32.xlu0 %v7487, 32
        %v7535 = vpop.permute.xlu0 %7534
        %v7552 = vadd.f32 %v7392, %v7505
        %v7553 = vadd.f32 %v7393, %v7507
        %v7554 = vadd.f32 %v7394, %v7509
        %v7555 = vadd.f32 %v7395, %v7511
        %v7556 = vadd.f32 %v7396, %v7513
        %v7557 = vadd.f32 %v7397, %v7515
        %v7558 = vadd.f32 %v7398, %v7517
        %v7559 = vadd.f32 %v7399, %v7519
        %v7560 = vadd.f32 %v7400, %v7521
        %v7561 = vadd.f32 %v7401, %v7523
        %v7562 = vadd.f32 %v7402, %v7525
        %v7563 = vadd.f32 %v7403, %v7527
        %v7564 = vadd.f32 %v7404, %v7529
        %v7565 = vadd.f32 %v7405, %v7531
        %v7566 = vadd.f32 %v7406, %v7533
        %v7567 = vadd.f32 %v7407, %v7535
        %v7568 = vtanh.pop %v7552
        %v7569 = vtanh.pop %v7553
        %v7570 = vtanh.pop %v7554
        %v7571 = vtanh.pop %v7555
        %v7572 = vtanh.pop %v7556
        %v7573 = vtanh.pop %v7557
        %v7574 = vtanh.pop %v7558
        %v7575 = vtanh.pop %v7559
        %v7576 = vtanh.pop %v7560
        %v7577 = vtanh.pop %v7561
        %v7578 = vtanh.pop %v7562
        %v7579 = vtanh.pop %v7563
        %v7580 = vtanh.pop %v7564
        %v7581 = vtanh.pop %v7565
        %v7582 = vtanh.pop %v7566
        %v7583 = vtanh.pop %v7567
        %7600 = vrot.lane.b32.xlu0 %v7568, 64
        %v7601 = vpop.permute.xlu0 %7600
        %7602 = vrot.lane.b32.xlu0 %v7569, 64
        %v7603 = vpop.permute.xlu0 %7602
        %7604 = vrot.lane.b32.xlu0 %v7570, 64
        %v7605 = vpop.permute.xlu0 %7604
        %7606 = vrot.lane.b32.xlu0 %v7571, 64
        %v7607 = vpop.permute.xlu0 %7606
        %7608 = vrot.lane.b32.xlu0 %v7572, 64
        %v7609 = vpop.permute.xlu0 %7608
        %7610 = vrot.lane.b32.xlu0 %v7573, 64
        %v7611 = vpop.permute.xlu0 %7610
        %7612 = vrot.lane.b32.xlu0 %v7574, 64
        %v7613 = vpop.permute.xlu0 %7612
        %7614 = vrot.lane.b32.xlu0 %v7575, 64
        %v7615 = vpop.permute.xlu0 %7614
        %7616 = vrot.lane.b32.xlu0 %v7576, 64
        %v7617 = vpop.permute.xlu0 %7616
        %7618 = vrot.lane.b32.xlu0 %v7577, 64
        %v7619 = vpop.permute.xlu0 %7618
        %7620 = vrot.lane.b32.xlu0 %v7578, 64
        %v7621 = vpop.permute.xlu0 %7620
        %7622 = vrot.lane.b32.xlu0 %v7579, 64
        %v7623 = vpop.permute.xlu0 %7622
        %7624 = vrot.lane.b32.xlu0 %v7580, 64
        %v7625 = vpop.permute.xlu0 %7624
        %7626 = vrot.lane.b32.xlu0 %v7581, 64
        %v7627 = vpop.permute.xlu0 %7626
        %7628 = vrot.lane.b32.xlu0 %v7582, 64
        %v7629 = vpop.permute.xlu0 %7628
        %7630 = vrot.lane.b32.xlu0 %v7583, 64
        %v7631 = vpop.permute.xlu0 %7630
        %v7648 = vmul.f32 %v7345, %v7601
        %v7649 = vmul.f32 %v7347, %v7603
        %v7650 = vmul.f32 %v7349, %v7605
        %v7651 = vmul.f32 %v7351, %v7607
        %v7652 = vmul.f32 %v7353, %v7609
        %v7653 = vmul.f32 %v7355, %v7611
        %v7654 = vmul.f32 %v7357, %v7613
        %v7655 = vmul.f32 %v7359, %v7615
        %v7656 = vmul.f32 %v7361, %v7617
        %v7657 = vmul.f32 %v7363, %v7619
        %v7658 = vmul.f32 %v7365, %v7621
        %v7659 = vmul.f32 %v7367, %v7623
        %v7660 = vmul.f32 %v7369, %v7625
        %v7661 = vmul.f32 %v7371, %v7627
        %v7662 = vmul.f32 %v7373, %v7629
        %v7663 = vmul.f32 %v7375, %v7631
        %7680 = vrot.lane.b32.xlu0 %v7648, 32
        %v7681 = vpop.permute.xlu0 %7680
        %7682 = vrot.lane.b32.xlu0 %v7649, 32
        %v7683 = vpop.permute.xlu0 %7682
        %7684 = vrot.lane.b32.xlu0 %v7650, 32
        %v7685 = vpop.permute.xlu0 %7684
        %7686 = vrot.lane.b32.xlu0 %v7651, 32
        %v7687 = vpop.permute.xlu0 %7686
        %7688 = vrot.lane.b32.xlu0 %v7652, 32
        %v7689 = vpop.permute.xlu0 %7688
        %7690 = vrot.lane.b32.xlu0 %v7653, 32
        %v7691 = vpop.permute.xlu0 %7690
        %7692 = vrot.lane.b32.xlu0 %v7654, 32
        %v7693 = vpop.permute.xlu0 %7692
        %7694 = vrot.lane.b32.xlu0 %v7655, 32
        %v7695 = vpop.permute.xlu0 %7694
        %7696 = vrot.lane.b32.xlu0 %v7656, 32
        %v7697 = vpop.permute.xlu0 %7696
        %7698 = vrot.lane.b32.xlu0 %v7657, 32
        %v7699 = vpop.permute.xlu0 %7698
        %7700 = vrot.lane.b32.xlu0 %v7658, 32
        %v7701 = vpop.permute.xlu0 %7700
        %7702 = vrot.lane.b32.xlu0 %v7659, 32
        %v7703 = vpop.permute.xlu0 %7702
        %7704 = vrot.lane.b32.xlu0 %v7660, 32
        %v7705 = vpop.permute.xlu0 %7704
        %7706 = vrot.lane.b32.xlu0 %v7661, 32
        %v7707 = vpop.permute.xlu0 %7706
        %7708 = vrot.lane.b32.xlu0 %v7662, 32
        %v7709 = vpop.permute.xlu0 %7708
        %7710 = vrot.lane.b32.xlu0 %v7663, 32
        %v7711 = vpop.permute.xlu0 %7710
        %v7712 = vsel %vm7115, %v7681, 0
        %v7714 = vsel %vm7115, %v7683, 0
        %v7716 = vsel %vm7115, %v7685, 0
        %v7718 = vsel %vm7115, %v7687, 0
        %v7720 = vsel %vm7115, %v7689, 0
        %v7722 = vsel %vm7115, %v7691, 0
        %v7724 = vsel %vm7115, %v7693, 0
        %v7726 = vsel %vm7115, %v7695, 0
        %v7728 = vsel %vm7115, %v7697, 0
        %v7730 = vsel %vm7115, %v7699, 0
        %v7732 = vsel %vm7115, %v7701, 0
        %v7734 = vsel %vm7115, %v7703, 0
        %v7736 = vsel %vm7115, %v7705, 0
        %v7738 = vsel %vm7115, %v7707, 0
        %v7740 = vsel %vm7115, %v7709, 0
        %v7742 = vsel %vm7115, %v7711, 0
        %7744 = vmatprep.subr.mxu0 0.0
        %7745 = vmatpush1.msra.mxu0 0.0
        %7746 = vmatprep.subr.mxu0 0.0
        %7747 = vmatpush1.msra.mxu0 0.0
        %7748 = vmatprep.subr.mxu0 0.0
        %7749 = vmatpush1.msra.mxu0 0.0
        %7750 = vmatprep.subr.mxu0 0.0
        %7751 = vmatpush1.msra.mxu0 0.0
        %7752 = vmatprep.subr.mxu0 0.0
        %7753 = vmatpush1.msra.mxu0 0.0
        %7754 = vmatprep.subr.mxu0 0.0
        %7755 = vmatpush1.msra.mxu0 0.0
        %7756 = vmatprep.subr.mxu0 0.0
        %7757 = vmatpush1.msra.mxu0 0.0
        %7758 = vmatprep.subr.mxu0 0.0
        %7759 = vmatpush1.msra.mxu0 0.0
        %7760 = vmatprep.subr.mxu0 0.0
        %7761 = vmatpush1.msra.mxu0 0.0
        %7762 = vmatprep.subr.mxu0 0.0
        %7763 = vmatpush1.msra.mxu0 0.0
        %7764 = vmatprep.subr.mxu0 0.0
        %7765 = vmatpush1.msra.mxu0 0.0
        %7766 = vmatprep.subr.mxu0 0.0
        %7767 = vmatpush1.msra.mxu0 0.0
        %7768 = vmatprep.subr.mxu0 0.0
        %7769 = vmatpush1.msra.mxu0 %v7114
        %7770 = vmatprep.subr.mxu0 0.0
        %7771 = vmatpush1.msra.mxu0 %v7113
        %7772 = vmatprep.subr.mxu0 0.0
        %7773 = vmatpush1.msra.mxu0 %v7112
        %7774 = vmatprep.subr.mxu0 0.0
        %7775 = vmatpush1.msra.mxu0 %v7111
        %7776 = vmatprep.subr.mxu0 0.0
        %7777 = vmatpush2.msra.mxu0 0.0
        %7778 = vmatprep.subr.mxu0 0.0
        %7779 = vmatpush2.msra.mxu0 0.0
        %7780 = vmatprep.subr.mxu0 0.0
        %7781 = vmatpush2.msra.mxu0 0.0
        %7782 = vmatprep.subr.mxu0 0.0
        %7783 = vmatpush2.msra.mxu0 0.0
        %7784 = vmatprep.subr.mxu0 0.0
        %7785 = vmatpush2.msra.mxu0 0.0
        %7786 = vmatprep.subr.mxu0 0.0
        %7787 = vmatpush2.msra.mxu0 0.0
        %7788 = vmatprep.subr.mxu0 0.0
        %7789 = vmatpush2.msra.mxu0 0.0
        %7790 = vmatprep.subr.mxu0 0.0
        %7791 = vmatpush2.msra.mxu0 0.0
        %7792 = vmatprep.subr.mxu0 0.0
        %7793 = vmatpush2.msra.mxu0 0.0
        %7794 = vmatprep.subr.mxu0 0.0
        %7795 = vmatpush2.msra.mxu0 0.0
        %7796 = vmatprep.subr.mxu0 0.0
        %7797 = vmatpush2.msra.mxu0 0.0
        %7798 = vmatprep.subr.mxu0 0.0
        %7799 = vmatpush2.msra.mxu0 0.0
        %7800 = vmatprep.subr.mxu0 0.0
        %7801 = vmatpush2.msra.mxu0 0.0
        %7802 = vmatprep.subr.mxu0 0.0
        %7803 = vmatpush2.msra.mxu0 0.0
        %7804 = vmatprep.subr.mxu0 0.0
        %7805 = vmatpush2.msra.mxu0 0.0
        %7806 = vmatprep.subr.mxu0 0.0
        %7807 = vmatpush2.msra.mxu0 0.0
        %7808 = vmatprep.mubr.f32.mxu0 0.0
        %7809 = vmatmul.mubr.f32.gmra.mxu0 %v7712
        %v7810 = vpop.f32.mrf.mxu0
        %v7811 = vadd.f32 0.0, %v7810
        %v7812 = vpop.f32.mrf.mxu0
        %7813 = vmatprep.mubr.f32.mxu0 0.0
        %7814 = vmatmul.mubr.f32.gmra.mxu0 %v7714
        %v7815 = vpop.f32.mrf.mxu0
        %v7816 = vadd.f32 0.0, %v7815
        %v7817 = vpop.f32.mrf.mxu0
        %7818 = vmatprep.mubr.f32.mxu0 0.0
        %7819 = vmatmul.mubr.f32.gmra.mxu0 %v7716
        %v7820 = vpop.f32.mrf.mxu0
        %v7821 = vadd.f32 0.0, %v7820
        %v7822 = vpop.f32.mrf.mxu0
        %7823 = vmatprep.mubr.f32.mxu0 0.0
        %7824 = vmatmul.mubr.f32.gmra.mxu0 %v7718
        %v7825 = vpop.f32.mrf.mxu0
        %v7826 = vadd.f32 0.0, %v7825
        %v7827 = vpop.f32.mrf.mxu0
        %7828 = vmatprep.mubr.f32.mxu0 0.0
        %7829 = vmatmul.mubr.f32.gmra.mxu0 %v7720
        %v7830 = vpop.f32.mrf.mxu0
        %v7831 = vadd.f32 0.0, %v7830
        %v7832 = vpop.f32.mrf.mxu0
        %7833 = vmatprep.mubr.f32.mxu0 0.0
        %7834 = vmatmul.mubr.f32.gmra.mxu0 %v7722
        %v7835 = vpop.f32.mrf.mxu0
        %v7836 = vadd.f32 0.0, %v7835
        %v7837 = vpop.f32.mrf.mxu0
        %7838 = vmatprep.mubr.f32.mxu0 0.0
        %7839 = vmatmul.mubr.f32.gmra.mxu0 %v7724
        %v7840 = vpop.f32.mrf.mxu0
        %v7841 = vadd.f32 0.0, %v7840
        %v7842 = vpop.f32.mrf.mxu0
        %7843 = vmatprep.mubr.f32.mxu0 0.0
        %7844 = vmatmul.mubr.f32.gmra.mxu0 %v7726
        %v7845 = vpop.f32.mrf.mxu0
        %v7846 = vadd.f32 0.0, %v7845
        %v7847 = vpop.f32.mrf.mxu0
        %7848 = vmatprep.mubr.f32.mxu0 0.0
        %7849 = vmatmul.mubr.f32.gmra.mxu0 %v7728
        %v7850 = vpop.f32.mrf.mxu0
        %v7851 = vadd.f32 0.0, %v7850
        %v7852 = vpop.f32.mrf.mxu0
        %7853 = vmatprep.mubr.f32.mxu0 0.0
        %7854 = vmatmul.mubr.f32.gmra.mxu0 %v7730
        %v7855 = vpop.f32.mrf.mxu0
        %v7856 = vadd.f32 0.0, %v7855
        %v7857 = vpop.f32.mrf.mxu0
        %7858 = vmatprep.mubr.f32.mxu0 0.0
        %7859 = vmatmul.mubr.f32.gmra.mxu0 %v7732
        %v7860 = vpop.f32.mrf.mxu0
        %v7861 = vadd.f32 0.0, %v7860
        %v7862 = vpop.f32.mrf.mxu0
        %7863 = vmatprep.mubr.f32.mxu0 0.0
        %7864 = vmatmul.mubr.f32.gmra.mxu0 %v7734
        %v7865 = vpop.f32.mrf.mxu0
        %v7866 = vadd.f32 0.0, %v7865
        %v7867 = vpop.f32.mrf.mxu0
        %7868 = vmatprep.mubr.f32.mxu0 0.0
        %7869 = vmatmul.mubr.f32.gmra.mxu0 %v7736
        %v7870 = vpop.f32.mrf.mxu0
        %v7871 = vadd.f32 0.0, %v7870
        %v7872 = vpop.f32.mrf.mxu0
        %7873 = vmatprep.mubr.f32.mxu0 0.0
        %7874 = vmatmul.mubr.f32.gmra.mxu0 %v7738
        %v7875 = vpop.f32.mrf.mxu0
        %v7876 = vadd.f32 0.0, %v7875
        %v7877 = vpop.f32.mrf.mxu0
        %7878 = vmatprep.mubr.f32.mxu0 0.0
        %7879 = vmatmul.mubr.f32.gmra.mxu0 %v7740
        %v7880 = vpop.f32.mrf.mxu0
        %v7881 = vadd.f32 0.0, %v7880
        %v7882 = vpop.f32.mrf.mxu0
        %7883 = vmatprep.mubr.f32.mxu0 0.0
        %7884 = vmatmul.mubr.f32.gmra.mxu0 %v7742
        %v7885 = vpop.f32.mrf.mxu0
        %v7886 = vadd.f32 0.0, %v7885
        %v7887 = vpop.f32.mrf.mxu0
        %7888 = vdwg.mxu0
        %v7889 = vadd.f32 %v6793, %v7811
        %v7890 = vadd.f32 %v6798, %v7816
        %v7891 = vadd.f32 %v6803, %v7821
        %v7892 = vadd.f32 %v6808, %v7826
        %v7893 = vadd.f32 %v6813, %v7831
        %v7894 = vadd.f32 %v6818, %v7836
        %v7895 = vadd.f32 %v6823, %v7841
        %v7896 = vadd.f32 %v6828, %v7846
        %v7897 = vadd.f32 %v6833, %v7851
        %v7898 = vadd.f32 %v6838, %v7856
        %v7899 = vadd.f32 %v6843, %v7861
        %v7900 = vadd.f32 %v6848, %v7866
        %v7901 = vadd.f32 %v6853, %v7871
        %v7902 = vadd.f32 %v6858, %v7876
        %v7903 = vadd.f32 %v6863, %v7881
        %v7904 = vadd.f32 %v6868, %v7886
        %v7905 = vxor.u32 %v7889, 2147483648
        %v7906 = vxor.u32 %v7890, 2147483648
        %v7907 = vxor.u32 %v7891, 2147483648
        %v7908 = vxor.u32 %v7892, 2147483648
        %v7909 = vxor.u32 %v7893, 2147483648
        %v7910 = vxor.u32 %v7894, 2147483648
        %v7911 = vxor.u32 %v7895, 2147483648
        %v7912 = vxor.u32 %v7896, 2147483648
        %v7913 = vxor.u32 %v7897, 2147483648
        %v7914 = vxor.u32 %v7898, 2147483648
        %v7915 = vxor.u32 %v7899, 2147483648
        %v7916 = vxor.u32 %v7900, 2147483648
        %v7917 = vxor.u32 %v7901, 2147483648
        %v7918 = vxor.u32 %v7902, 2147483648
        %v7919 = vxor.u32 %v7903, 2147483648
        %v7920 = vxor.u32 %v7904, 2147483648
        %v7921 = vmul.f32 %v7905, 1.442695
        %v7922 = vpow.pop %v7921
        %v7923 = vmul.f32 %v7906, 1.442695
        %v7924 = vpow.pop %v7923
        %v7925 = vmul.f32 %v7907, 1.442695
        %v7926 = vpow.pop %v7925
        %v7927 = vmul.f32 %v7908, 1.442695
        %v7928 = vpow.pop %v7927
        %v7929 = vmul.f32 %v7909, 1.442695
        %v7930 = vpow.pop %v7929
        %v7931 = vmul.f32 %v7910, 1.442695
        %v7932 = vpow.pop %v7931
        %v7933 = vmul.f32 %v7911, 1.442695
        %v7934 = vpow.pop %v7933
        %v7935 = vmul.f32 %v7912, 1.442695
        %v7936 = vpow.pop %v7935
        %v7937 = vmul.f32 %v7913, 1.442695
        %v7938 = vpow.pop %v7937
        %v7939 = vmul.f32 %v7914, 1.442695
        %v7940 = vpow.pop %v7939
        %v7941 = vmul.f32 %v7915, 1.442695
        %v7942 = vpow.pop %v7941
        %v7943 = vmul.f32 %v7916, 1.442695
        %v7944 = vpow.pop %v7943
        %v7945 = vmul.f32 %v7917, 1.442695
        %v7946 = vpow.pop %v7945
        %v7947 = vmul.f32 %v7918, 1.442695
        %v7948 = vpow.pop %v7947
        %v7949 = vmul.f32 %v7919, 1.442695
        %v7950 = vpow.pop %v7949
        %v7951 = vmul.f32 %v7920, 1.442695
        %v7952 = vpow.pop %v7951
        %v7953 = vadd.f32 %v7922, 1.0
        %v7954 = vadd.f32 %v7924, 1.0
        %v7955 = vadd.f32 %v7926, 1.0
        %v7956 = vadd.f32 %v7928, 1.0
        %v7957 = vadd.f32 %v7930, 1.0
        %v7958 = vadd.f32 %v7932, 1.0
        %v7959 = vadd.f32 %v7934, 1.0
        %v7960 = vadd.f32 %v7936, 1.0
        %v7961 = vadd.f32 %v7938, 1.0
        %v7962 = vadd.f32 %v7940, 1.0
        %v7963 = vadd.f32 %v7942, 1.0
        %v7964 = vadd.f32 %v7944, 1.0
        %v7965 = vadd.f32 %v7946, 1.0
        %v7966 = vadd.f32 %v7948, 1.0
        %v7967 = vadd.f32 %v7950, 1.0
        %v7968 = vadd.f32 %v7952, 1.0
        %v7969 = vrcp.pop %v7953
        %v7970 = vmul.f32 1.0, %v7969
        %v7971 = vrcp.pop %v7954
        %v7972 = vmul.f32 1.0, %v7971
        %v7973 = vrcp.pop %v7955
        %v7974 = vmul.f32 1.0, %v7973
        %v7975 = vrcp.pop %v7956
        %v7976 = vmul.f32 1.0, %v7975
        %v7977 = vrcp.pop %v7957
        %v7978 = vmul.f32 1.0, %v7977
        %v7979 = vrcp.pop %v7958
        %v7980 = vmul.f32 1.0, %v7979
        %v7981 = vrcp.pop %v7959
        %v7982 = vmul.f32 1.0, %v7981
        %v7983 = vrcp.pop %v7960
        %v7984 = vmul.f32 1.0, %v7983
        %v7985 = vrcp.pop %v7961
        %v7986 = vmul.f32 1.0, %v7985
        %v7987 = vrcp.pop %v7962
        %v7988 = vmul.f32 1.0, %v7987
        %v7989 = vrcp.pop %v7963
        %v7990 = vmul.f32 1.0, %v7989
        %v7991 = vrcp.pop %v7964
        %v7992 = vmul.f32 1.0, %v7991
        %v7993 = vrcp.pop %v7965
        %v7994 = vmul.f32 1.0, %v7993
        %v7995 = vrcp.pop %v7966
        %v7996 = vmul.f32 1.0, %v7995
        %v7997 = vrcp.pop %v7967
        %v7998 = vmul.f32 1.0, %v7997
        %v7999 = vrcp.pop %v7968
        %v8000 = vmul.f32 1.0, %v7999
        %v8001 = vtanh.pop %v7889
        %v8002 = vtanh.pop %v7890
        %v8003 = vtanh.pop %v7891
        %v8004 = vtanh.pop %v7892
        %v8005 = vtanh.pop %v7893
        %v8006 = vtanh.pop %v7894
        %v8007 = vtanh.pop %v7895
        %v8008 = vtanh.pop %v7896
        %v8009 = vtanh.pop %v7897
        %v8010 = vtanh.pop %v7898
        %v8011 = vtanh.pop %v7899
        %v8012 = vtanh.pop %v7900
        %v8013 = vtanh.pop %v7901
        %v8014 = vtanh.pop %v7902
        %v8015 = vtanh.pop %v7903
        %v8016 = vtanh.pop %v7904
        %v8017 = vmul.f32 %v7970, %v7552
        %v8018 = vmul.f32 %v7972, %v7553
        %v8019 = vmul.f32 %v7974, %v7554
        %v8020 = vmul.f32 %v7976, %v7555
        %v8021 = vmul.f32 %v7978, %v7556
        %v8022 = vmul.f32 %v7980, %v7557
        %v8023 = vmul.f32 %v7982, %v7558
        %v8024 = vmul.f32 %v7984, %v7559
        %v8025 = vmul.f32 %v7986, %v7560
        %v8026 = vmul.f32 %v7988, %v7561
        %v8027 = vmul.f32 %v7990, %v7562
        %v8028 = vmul.f32 %v7992, %v7563
        %v8029 = vmul.f32 %v7994, %v7564
        %v8030 = vmul.f32 %v7996, %v7565
        %v8031 = vmul.f32 %v7998, %v7566
        %v8032 = vmul.f32 %v8000, %v7567
        %8049 = vrot.lane.b32.xlu0 %v8001, 64
        %v8050 = vpop.permute.xlu0 %8049
        %8051 = vrot.lane.b32.xlu0 %v8002, 64
        %v8052 = vpop.permute.xlu0 %8051
        %8053 = vrot.lane.b32.xlu0 %v8003, 64
        %v8054 = vpop.permute.xlu0 %8053
        %8055 = vrot.lane.b32.xlu0 %v8004, 64
        %v8056 = vpop.permute.xlu0 %8055
        %8057 = vrot.lane.b32.xlu0 %v8005, 64
        %v8058 = vpop.permute.xlu0 %8057
        %8059 = vrot.lane.b32.xlu0 %v8006, 64
        %v8060 = vpop.permute.xlu0 %8059
        %8061 = vrot.lane.b32.xlu0 %v8007, 64
        %v8062 = vpop.permute.xlu0 %8061
        %8063 = vrot.lane.b32.xlu0 %v8008, 64
        %v8064 = vpop.permute.xlu0 %8063
        %8065 = vrot.lane.b32.xlu0 %v8009, 64
        %v8066 = vpop.permute.xlu0 %8065
        %8067 = vrot.lane.b32.xlu0 %v8010, 64
        %v8068 = vpop.permute.xlu0 %8067
        %8069 = vrot.lane.b32.xlu0 %v8011, 64
        %v8070 = vpop.permute.xlu0 %8069
        %8071 = vrot.lane.b32.xlu0 %v8012, 64
        %v8072 = vpop.permute.xlu0 %8071
        %8073 = vrot.lane.b32.xlu0 %v8013, 64
        %v8074 = vpop.permute.xlu0 %8073
        %8075 = vrot.lane.b32.xlu0 %v8014, 64
        %v8076 = vpop.permute.xlu0 %8075
        %8077 = vrot.lane.b32.xlu0 %v8015, 64
        %v8078 = vpop.permute.xlu0 %8077
        %8079 = vrot.lane.b32.xlu0 %v8016, 64
        %v8080 = vpop.permute.xlu0 %8079
        %v8097 = vmul.f32 %v7970, %v8050
        %v8098 = vmul.f32 %v7972, %v8052
        %v8099 = vmul.f32 %v7974, %v8054
        %v8100 = vmul.f32 %v7976, %v8056
        %v8101 = vmul.f32 %v7978, %v8058
        %v8102 = vmul.f32 %v7980, %v8060
        %v8103 = vmul.f32 %v7982, %v8062
        %v8104 = vmul.f32 %v7984, %v8064
        %v8105 = vmul.f32 %v7986, %v8066
        %v8106 = vmul.f32 %v7988, %v8068
        %v8107 = vmul.f32 %v7990, %v8070
        %v8108 = vmul.f32 %v7992, %v8072
        %v8109 = vmul.f32 %v7994, %v8074
        %v8110 = vmul.f32 %v7996, %v8076
        %v8111 = vmul.f32 %v7998, %v8078
        %v8112 = vmul.f32 %v8000, %v8080
        %8129 = vrot.lane.b32.xlu0 %v8097, 32
        %v8130 = vpop.permute.xlu0 %8129
        %8131 = vrot.lane.b32.xlu0 %v8098, 32
        %v8132 = vpop.permute.xlu0 %8131
        %8133 = vrot.lane.b32.xlu0 %v8099, 32
        %v8134 = vpop.permute.xlu0 %8133
        %8135 = vrot.lane.b32.xlu0 %v8100, 32
        %v8136 = vpop.permute.xlu0 %8135
        %8137 = vrot.lane.b32.xlu0 %v8101, 32
        %v8138 = vpop.permute.xlu0 %8137
        %8139 = vrot.lane.b32.xlu0 %v8102, 32
        %v8140 = vpop.permute.xlu0 %8139
        %8141 = vrot.lane.b32.xlu0 %v8103, 32
        %v8142 = vpop.permute.xlu0 %8141
        %8143 = vrot.lane.b32.xlu0 %v8104, 32
        %v8144 = vpop.permute.xlu0 %8143
        %8145 = vrot.lane.b32.xlu0 %v8105, 32
        %v8146 = vpop.permute.xlu0 %8145
        %8147 = vrot.lane.b32.xlu0 %v8106, 32
        %v8148 = vpop.permute.xlu0 %8147
        %8149 = vrot.lane.b32.xlu0 %v8107, 32
        %v8150 = vpop.permute.xlu0 %8149
        %8151 = vrot.lane.b32.xlu0 %v8108, 32
        %v8152 = vpop.permute.xlu0 %8151
        %8153 = vrot.lane.b32.xlu0 %v8109, 32
        %v8154 = vpop.permute.xlu0 %8153
        %8155 = vrot.lane.b32.xlu0 %v8110, 32
        %v8156 = vpop.permute.xlu0 %8155
        %8157 = vrot.lane.b32.xlu0 %v8111, 32
        %v8158 = vpop.permute.xlu0 %8157
        %8159 = vrot.lane.b32.xlu0 %v8112, 32
        %v8160 = vpop.permute.xlu0 %8159
        %v8177 = vadd.f32 %v8017, %v8130
        %v8178 = vadd.f32 %v8018, %v8132
        %v8179 = vadd.f32 %v8019, %v8134
        %v8180 = vadd.f32 %v8020, %v8136
        %v8181 = vadd.f32 %v8021, %v8138
        %v8182 = vadd.f32 %v8022, %v8140
        %v8183 = vadd.f32 %v8023, %v8142
        %v8184 = vadd.f32 %v8024, %v8144
        %v8185 = vadd.f32 %v8025, %v8146
        %v8186 = vadd.f32 %v8026, %v8148
        %v8187 = vadd.f32 %v8027, %v8150
        %v8188 = vadd.f32 %v8028, %v8152
        %v8189 = vadd.f32 %v8029, %v8154
        %v8190 = vadd.f32 %v8030, %v8156
        %v8191 = vadd.f32 %v8031, %v8158
        %v8192 = vadd.f32 %v8032, %v8160
        %v8193 = vtanh.pop %v8177
        %v8194 = vtanh.pop %v8178
        %v8195 = vtanh.pop %v8179
        %v8196 = vtanh.pop %v8180
        %v8197 = vtanh.pop %v8181
        %v8198 = vtanh.pop %v8182
        %v8199 = vtanh.pop %v8183
        %v8200 = vtanh.pop %v8184
        %v8201 = vtanh.pop %v8185
        %v8202 = vtanh.pop %v8186
        %v8203 = vtanh.pop %v8187
        %v8204 = vtanh.pop %v8188
        %v8205 = vtanh.pop %v8189
        %v8206 = vtanh.pop %v8190
        %v8207 = vtanh.pop %v8191
        %v8208 = vtanh.pop %v8192
        %8225 = vrot.lane.b32.xlu0 %v8193, 64
        %v8226 = vpop.permute.xlu0 %8225
        %8227 = vrot.lane.b32.xlu0 %v8194, 64
        %v8228 = vpop.permute.xlu0 %8227
        %8229 = vrot.lane.b32.xlu0 %v8195, 64
        %v8230 = vpop.permute.xlu0 %8229
        %8231 = vrot.lane.b32.xlu0 %v8196, 64
        %v8232 = vpop.permute.xlu0 %8231
        %8233 = vrot.lane.b32.xlu0 %v8197, 64
        %v8234 = vpop.permute.xlu0 %8233
        %8235 = vrot.lane.b32.xlu0 %v8198, 64
        %v8236 = vpop.permute.xlu0 %8235
        %8237 = vrot.lane.b32.xlu0 %v8199, 64
        %v8238 = vpop.permute.xlu0 %8237
        %8239 = vrot.lane.b32.xlu0 %v8200, 64
        %v8240 = vpop.permute.xlu0 %8239
        %8241 = vrot.lane.b32.xlu0 %v8201, 64
        %v8242 = vpop.permute.xlu0 %8241
        %8243 = vrot.lane.b32.xlu0 %v8202, 64
        %v8244 = vpop.permute.xlu0 %8243
        %8245 = vrot.lane.b32.xlu0 %v8203, 64
        %v8246 = vpop.permute.xlu0 %8245
        %8247 = vrot.lane.b32.xlu0 %v8204, 64
        %v8248 = vpop.permute.xlu0 %8247
        %8249 = vrot.lane.b32.xlu0 %v8205, 64
        %v8250 = vpop.permute.xlu0 %8249
        %8251 = vrot.lane.b32.xlu0 %v8206, 64
        %v8252 = vpop.permute.xlu0 %8251
        %8253 = vrot.lane.b32.xlu0 %v8207, 64
        %v8254 = vpop.permute.xlu0 %8253
        %8255 = vrot.lane.b32.xlu0 %v8208, 64
        %v8256 = vpop.permute.xlu0 %8255
        %v8273 = vmul.f32 %v7970, %v8226
        %v8274 = vmul.f32 %v7972, %v8228
        %v8275 = vmul.f32 %v7974, %v8230
        %v8276 = vmul.f32 %v7976, %v8232
        %v8277 = vmul.f32 %v7978, %v8234
        %v8278 = vmul.f32 %v7980, %v8236
        %v8279 = vmul.f32 %v7982, %v8238
        %v8280 = vmul.f32 %v7984, %v8240
        %v8281 = vmul.f32 %v7986, %v8242
        %v8282 = vmul.f32 %v7988, %v8244
        %v8283 = vmul.f32 %v7990, %v8246
        %v8284 = vmul.f32 %v7992, %v8248
        %v8285 = vmul.f32 %v7994, %v8250
        %v8286 = vmul.f32 %v7996, %v8252
        %v8287 = vmul.f32 %v7998, %v8254
        %v8288 = vmul.f32 %v8000, %v8256
        %8305 = vrot.lane.b32.xlu0 %v8273, 32
        %v8306 = vpop.permute.xlu0 %8305
        %8307 = vrot.lane.b32.xlu0 %v8274, 32
        %v8308 = vpop.permute.xlu0 %8307
        %8309 = vrot.lane.b32.xlu0 %v8275, 32
        %v8310 = vpop.permute.xlu0 %8309
        %8311 = vrot.lane.b32.xlu0 %v8276, 32
        %v8312 = vpop.permute.xlu0 %8311
        %8313 = vrot.lane.b32.xlu0 %v8277, 32
        %v8314 = vpop.permute.xlu0 %8313
        %8315 = vrot.lane.b32.xlu0 %v8278, 32
        %v8316 = vpop.permute.xlu0 %8315
        %8317 = vrot.lane.b32.xlu0 %v8279, 32
        %v8318 = vpop.permute.xlu0 %8317
        %8319 = vrot.lane.b32.xlu0 %v8280, 32
        %v8320 = vpop.permute.xlu0 %8319
        %8321 = vrot.lane.b32.xlu0 %v8281, 32
        %v8322 = vpop.permute.xlu0 %8321
        %8323 = vrot.lane.b32.xlu0 %v8282, 32
        %v8324 = vpop.permute.xlu0 %8323
        %8325 = vrot.lane.b32.xlu0 %v8283, 32
        %v8326 = vpop.permute.xlu0 %8325
        %8327 = vrot.lane.b32.xlu0 %v8284, 32
        %v8328 = vpop.permute.xlu0 %8327
        %8329 = vrot.lane.b32.xlu0 %v8285, 32
        %v8330 = vpop.permute.xlu0 %8329
        %8331 = vrot.lane.b32.xlu0 %v8286, 32
        %v8332 = vpop.permute.xlu0 %8331
        %8333 = vrot.lane.b32.xlu0 %v8287, 32
        %v8334 = vpop.permute.xlu0 %8333
        %8335 = vrot.lane.b32.xlu0 %v8288, 32
        %v8336 = vpop.permute.xlu0 %8335
        %v8337 = vsel %vm7115, %v8306, 0
        %v8339 = vsel %vm7115, %v8308, 0
        %v8341 = vsel %vm7115, %v8310, 0
        %v8343 = vsel %vm7115, %v8312, 0
        %v8345 = vsel %vm7115, %v8314, 0
        %v8347 = vsel %vm7115, %v8316, 0
        %v8349 = vsel %vm7115, %v8318, 0
        %v8351 = vsel %vm7115, %v8320, 0
        %v8353 = vsel %vm7115, %v8322, 0
        %v8355 = vsel %vm7115, %v8324, 0
        %v8357 = vsel %vm7115, %v8326, 0
        %v8359 = vsel %vm7115, %v8328, 0
        %v8361 = vsel %vm7115, %v8330, 0
        %v8363 = vsel %vm7115, %v8332, 0
        %v8365 = vsel %vm7115, %v8334, 0
        %v8367 = vsel %vm7115, %v8336, 0
        %8369 = vmatprep.subr.mxu0 0.0
        %8370 = vmatpush1.msra.mxu0 0.0
        %8371 = vmatprep.subr.mxu0 0.0
        %8372 = vmatpush1.msra.mxu0 0.0
        %8373 = vmatprep.subr.mxu0 0.0
        %8374 = vmatpush1.msra.mxu0 0.0
        %8375 = vmatprep.subr.mxu0 0.0
        %8376 = vmatpush1.msra.mxu0 0.0
        %8377 = vmatprep.subr.mxu0 0.0
        %8378 = vmatpush1.msra.mxu0 0.0
        %8379 = vmatprep.subr.mxu0 0.0
        %8380 = vmatpush1.msra.mxu0 0.0
        %8381 = vmatprep.subr.mxu0 0.0
        %8382 = vmatpush1.msra.mxu0 0.0
        %8383 = vmatprep.subr.mxu0 0.0
        %8384 = vmatpush1.msra.mxu0 0.0
        %8385 = vmatprep.subr.mxu0 0.0
        %8386 = vmatpush1.msra.mxu0 0.0
        %8387 = vmatprep.subr.mxu0 0.0
        %8388 = vmatpush1.msra.mxu0 0.0
        %8389 = vmatprep.subr.mxu0 0.0
        %8390 = vmatpush1.msra.mxu0 0.0
        %8391 = vmatprep.subr.mxu0 0.0
        %8392 = vmatpush1.msra.mxu0 0.0
        %8393 = vmatprep.subr.mxu0 0.0
        %8394 = vmatpush1.msra.mxu0 %v7114
        %8395 = vmatprep.subr.mxu0 0.0
        %8396 = vmatpush1.msra.mxu0 %v7113
        %8397 = vmatprep.subr.mxu0 0.0
        %8398 = vmatpush1.msra.mxu0 %v7112
        %8399 = vmatprep.subr.mxu0 0.0
        %8400 = vmatpush1.msra.mxu0 %v7111
        %8401 = vmatprep.subr.mxu0 0.0
        %8402 = vmatpush2.msra.mxu0 0.0
        %8403 = vmatprep.subr.mxu0 0.0
        %8404 = vmatpush2.msra.mxu0 0.0
        %8405 = vmatprep.subr.mxu0 0.0
        %8406 = vmatpush2.msra.mxu0 0.0
        %8407 = vmatprep.subr.mxu0 0.0
        %8408 = vmatpush2.msra.mxu0 0.0
        %8409 = vmatprep.subr.mxu0 0.0
        %8410 = vmatpush2.msra.mxu0 0.0
        %8411 = vmatprep.subr.mxu0 0.0
        %8412 = vmatpush2.msra.mxu0 0.0
        %8413 = vmatprep.subr.mxu0 0.0
        %8414 = vmatpush2.msra.mxu0 0.0
        %8415 = vmatprep.subr.mxu0 0.0
        %8416 = vmatpush2.msra.mxu0 0.0
        %8417 = vmatprep.subr.mxu0 0.0
        %8418 = vmatpush2.msra.mxu0 0.0
        %8419 = vmatprep.subr.mxu0 0.0
        %8420 = vmatpush2.msra.mxu0 0.0
        %8421 = vmatprep.subr.mxu0 0.0
        %8422 = vmatpush2.msra.mxu0 0.0
        %8423 = vmatprep.subr.mxu0 0.0
        %8424 = vmatpush2.msra.mxu0 0.0
        %8425 = vmatprep.subr.mxu0 0.0
        %8426 = vmatpush2.msra.mxu0 0.0
        %8427 = vmatprep.subr.mxu0 0.0
        %8428 = vmatpush2.msra.mxu0 0.0
        %8429 = vmatprep.subr.mxu0 0.0
        %8430 = vmatpush2.msra.mxu0 0.0
        %8431 = vmatprep.subr.mxu0 0.0
        %8432 = vmatpush2.msra.mxu0 0.0
        %8433 = vmatprep.mubr.f32.mxu0 0.0
        %8434 = vmatmul.mubr.f32.gmra.mxu0 %v8337
        %v8435 = vpop.f32.mrf.mxu0
        %v8436 = vadd.f32 0.0, %v8435
        %v8437 = vpop.f32.mrf.mxu0
        %8438 = vmatprep.mubr.f32.mxu0 0.0
        %8439 = vmatmul.mubr.f32.gmra.mxu0 %v8339
        %v8440 = vpop.f32.mrf.mxu0
        %v8441 = vadd.f32 0.0, %v8440
        %v8442 = vpop.f32.mrf.mxu0
        %8443 = vmatprep.mubr.f32.mxu0 0.0
        %8444 = vmatmul.mubr.f32.gmra.mxu0 %v8341
        %v8445 = vpop.f32.mrf.mxu0
        %v8446 = vadd.f32 0.0, %v8445
        %v8447 = vpop.f32.mrf.mxu0
        %8448 = vmatprep.mubr.f32.mxu0 0.0
        %8449 = vmatmul.mubr.f32.gmra.mxu0 %v8343
        %v8450 = vpop.f32.mrf.mxu0
        %v8451 = vadd.f32 0.0, %v8450
        %v8452 = vpop.f32.mrf.mxu0
        %8453 = vmatprep.mubr.f32.mxu0 0.0
        %8454 = vmatmul.mubr.f32.gmra.mxu0 %v8345
        %v8455 = vpop.f32.mrf.mxu0
        %v8456 = vadd.f32 0.0, %v8455
        %v8457 = vpop.f32.mrf.mxu0
        %8458 = vmatprep.mubr.f32.mxu0 0.0
        %8459 = vmatmul.mubr.f32.gmra.mxu0 %v8347
        %v8460 = vpop.f32.mrf.mxu0
        %v8461 = vadd.f32 0.0, %v8460
        %v8462 = vpop.f32.mrf.mxu0
        %8463 = vmatprep.mubr.f32.mxu0 0.0
        %8464 = vmatmul.mubr.f32.gmra.mxu0 %v8349
        %v8465 = vpop.f32.mrf.mxu0
        %v8466 = vadd.f32 0.0, %v8465
        %v8467 = vpop.f32.mrf.mxu0
        %8468 = vmatprep.mubr.f32.mxu0 0.0
        %8469 = vmatmul.mubr.f32.gmra.mxu0 %v8351
        %v8470 = vpop.f32.mrf.mxu0
        %v8471 = vadd.f32 0.0, %v8470
        %v8472 = vpop.f32.mrf.mxu0
        %8473 = vmatprep.mubr.f32.mxu0 0.0
        %8474 = vmatmul.mubr.f32.gmra.mxu0 %v8353
        %v8475 = vpop.f32.mrf.mxu0
        %v8476 = vadd.f32 0.0, %v8475
        %v8477 = vpop.f32.mrf.mxu0
        %8478 = vmatprep.mubr.f32.mxu0 0.0
        %8479 = vmatmul.mubr.f32.gmra.mxu0 %v8355
        %v8480 = vpop.f32.mrf.mxu0
        %v8481 = vadd.f32 0.0, %v8480
        %v8482 = vpop.f32.mrf.mxu0
        %8483 = vmatprep.mubr.f32.mxu0 0.0
        %8484 = vmatmul.mubr.f32.gmra.mxu0 %v8357
        %v8485 = vpop.f32.mrf.mxu0
        %v8486 = vadd.f32 0.0, %v8485
        %v8487 = vpop.f32.mrf.mxu0
        %8488 = vmatprep.mubr.f32.mxu0 0.0
        %8489 = vmatmul.mubr.f32.gmra.mxu0 %v8359
        %v8490 = vpop.f32.mrf.mxu0
        %v8491 = vadd.f32 0.0, %v8490
        %v8492 = vpop.f32.mrf.mxu0
        %8493 = vmatprep.mubr.f32.mxu0 0.0
        %8494 = vmatmul.mubr.f32.gmra.mxu0 %v8361
        %v8495 = vpop.f32.mrf.mxu0
        %v8496 = vadd.f32 0.0, %v8495
        %v8497 = vpop.f32.mrf.mxu0
        %8498 = vmatprep.mubr.f32.mxu0 0.0
        %8499 = vmatmul.mubr.f32.gmra.mxu0 %v8363
        %v8500 = vpop.f32.mrf.mxu0
        %v8501 = vadd.f32 0.0, %v8500
        %v8502 = vpop.f32.mrf.mxu0
        %8503 = vmatprep.mubr.f32.mxu0 0.0
        %8504 = vmatmul.mubr.f32.gmra.mxu0 %v8365
        %v8505 = vpop.f32.mrf.mxu0
        %v8506 = vadd.f32 0.0, %v8505
        %v8507 = vpop.f32.mrf.mxu0
        %8508 = vmatprep.mubr.f32.mxu0 0.0
        %8509 = vmatmul.mubr.f32.gmra.mxu0 %v8367
        %v8510 = vpop.f32.mrf.mxu0
        %v8511 = vadd.f32 0.0, %v8510
        %v8512 = vpop.f32.mrf.mxu0
        %8513 = vdwg.mxu0
        %v8514 = vadd.f32 %v6873, %v8436
        %v8515 = vadd.f32 %v6878, %v8441
        %v8516 = vadd.f32 %v6883, %v8446
        %v8517 = vadd.f32 %v6888, %v8451
        %v8518 = vadd.f32 %v6893, %v8456
        %v8519 = vadd.f32 %v6898, %v8461
        %v8520 = vadd.f32 %v6903, %v8466
        %v8521 = vadd.f32 %v6908, %v8471
        %v8522 = vadd.f32 %v6913, %v8476
        %v8523 = vadd.f32 %v6918, %v8481
        %v8524 = vadd.f32 %v6923, %v8486
        %v8525 = vadd.f32 %v6928, %v8491
        %v8526 = vadd.f32 %v6933, %v8496
        %v8527 = vadd.f32 %v6938, %v8501
        %v8528 = vadd.f32 %v6943, %v8506
        %v8529 = vadd.f32 %v6948, %v8511
        %v8530 = vxor.u32 %v8514, 2147483648
        %v8531 = vxor.u32 %v8515, 2147483648
        %v8532 = vxor.u32 %v8516, 2147483648
        %v8533 = vxor.u32 %v8517, 2147483648
        %v8534 = vxor.u32 %v8518, 2147483648
        %v8535 = vxor.u32 %v8519, 2147483648
        %v8536 = vxor.u32 %v8520, 2147483648
        %v8537 = vxor.u32 %v8521, 2147483648
        %v8538 = vxor.u32 %v8522, 2147483648
        %v8539 = vxor.u32 %v8523, 2147483648
        %v8540 = vxor.u32 %v8524, 2147483648
        %v8541 = vxor.u32 %v8525, 2147483648
        %v8542 = vxor.u32 %v8526, 2147483648
        %v8543 = vxor.u32 %v8527, 2147483648
        %v8544 = vxor.u32 %v8528, 2147483648
        %v8545 = vxor.u32 %v8529, 2147483648
        %v8546 = vmul.f32 %v8530, 1.442695
        %v8547 = vpow.pop %v8546
        %v8548 = vmul.f32 %v8531, 1.442695
        %v8549 = vpow.pop %v8548
        %v8550 = vmul.f32 %v8532, 1.442695
        %v8551 = vpow.pop %v8550
        %v8552 = vmul.f32 %v8533, 1.442695
        %v8553 = vpow.pop %v8552
        %v8554 = vmul.f32 %v8534, 1.442695
        %v8555 = vpow.pop %v8554
        %v8556 = vmul.f32 %v8535, 1.442695
        %v8557 = vpow.pop %v8556
        %v8558 = vmul.f32 %v8536, 1.442695
        %v8559 = vpow.pop %v8558
        %v8560 = vmul.f32 %v8537, 1.442695
        %v8561 = vpow.pop %v8560
        %v8562 = vmul.f32 %v8538, 1.442695
        %v8563 = vpow.pop %v8562
        %v8564 = vmul.f32 %v8539, 1.442695
        %v8565 = vpow.pop %v8564
        %v8566 = vmul.f32 %v8540, 1.442695
        %v8567 = vpow.pop %v8566
        %v8568 = vmul.f32 %v8541, 1.442695
        %v8569 = vpow.pop %v8568
        %v8570 = vmul.f32 %v8542, 1.442695
        %v8571 = vpow.pop %v8570
        %v8572 = vmul.f32 %v8543, 1.442695
        %v8573 = vpow.pop %v8572
        %v8574 = vmul.f32 %v8544, 1.442695
        %v8575 = vpow.pop %v8574
        %v8576 = vmul.f32 %v8545, 1.442695
        %v8577 = vpow.pop %v8576
        %v8578 = vadd.f32 %v8547, 1.0
        %v8579 = vadd.f32 %v8549, 1.0
        %v8580 = vadd.f32 %v8551, 1.0
        %v8581 = vadd.f32 %v8553, 1.0
        %v8582 = vadd.f32 %v8555, 1.0
        %v8583 = vadd.f32 %v8557, 1.0
        %v8584 = vadd.f32 %v8559, 1.0
        %v8585 = vadd.f32 %v8561, 1.0
        %v8586 = vadd.f32 %v8563, 1.0
        %v8587 = vadd.f32 %v8565, 1.0
        %v8588 = vadd.f32 %v8567, 1.0
        %v8589 = vadd.f32 %v8569, 1.0
        %v8590 = vadd.f32 %v8571, 1.0
        %v8591 = vadd.f32 %v8573, 1.0
        %v8592 = vadd.f32 %v8575, 1.0
        %v8593 = vadd.f32 %v8577, 1.0
        %v8594 = vrcp.pop %v8578
        %v8595 = vmul.f32 1.0, %v8594
        %v8596 = vrcp.pop %v8579
        %v8597 = vmul.f32 1.0, %v8596
        %v8598 = vrcp.pop %v8580
        %v8599 = vmul.f32 1.0, %v8598
        %v8600 = vrcp.pop %v8581
        %v8601 = vmul.f32 1.0, %v8600
        %v8602 = vrcp.pop %v8582
        %v8603 = vmul.f32 1.0, %v8602
        %v8604 = vrcp.pop %v8583
        %v8605 = vmul.f32 1.0, %v8604
        %v8606 = vrcp.pop %v8584
        %v8607 = vmul.f32 1.0, %v8606
        %v8608 = vrcp.pop %v8585
        %v8609 = vmul.f32 1.0, %v8608
        %v8610 = vrcp.pop %v8586
        %v8611 = vmul.f32 1.0, %v8610
        %v8612 = vrcp.pop %v8587
        %v8613 = vmul.f32 1.0, %v8612
        %v8614 = vrcp.pop %v8588
        %v8615 = vmul.f32 1.0, %v8614
        %v8616 = vrcp.pop %v8589
        %v8617 = vmul.f32 1.0, %v8616
        %v8618 = vrcp.pop %v8590
        %v8619 = vmul.f32 1.0, %v8618
        %v8620 = vrcp.pop %v8591
        %v8621 = vmul.f32 1.0, %v8620
        %v8622 = vrcp.pop %v8592
        %v8623 = vmul.f32 1.0, %v8622
        %v8624 = vrcp.pop %v8593
        %v8625 = vmul.f32 1.0, %v8624
        %v8626 = vtanh.pop %v8514
        %v8627 = vtanh.pop %v8515
        %v8628 = vtanh.pop %v8516
        %v8629 = vtanh.pop %v8517
        %v8630 = vtanh.pop %v8518
        %v8631 = vtanh.pop %v8519
        %v8632 = vtanh.pop %v8520
        %v8633 = vtanh.pop %v8521
        %v8634 = vtanh.pop %v8522
        %v8635 = vtanh.pop %v8523
        %v8636 = vtanh.pop %v8524
        %v8637 = vtanh.pop %v8525
        %v8638 = vtanh.pop %v8526
        %v8639 = vtanh.pop %v8527
        %v8640 = vtanh.pop %v8528
        %v8641 = vtanh.pop %v8529
        %v8642 = vmul.f32 %v8595, %v8177
        %v8643 = vmul.f32 %v8597, %v8178
        %v8644 = vmul.f32 %v8599, %v8179
        %v8645 = vmul.f32 %v8601, %v8180
        %v8646 = vmul.f32 %v8603, %v8181
        %v8647 = vmul.f32 %v8605, %v8182
        %v8648 = vmul.f32 %v8607, %v8183
        %v8649 = vmul.f32 %v8609, %v8184
        %v8650 = vmul.f32 %v8611, %v8185
        %v8651 = vmul.f32 %v8613, %v8186
        %v8652 = vmul.f32 %v8615, %v8187
        %v8653 = vmul.f32 %v8617, %v8188
        %v8654 = vmul.f32 %v8619, %v8189
        %v8655 = vmul.f32 %v8621, %v8190
        %v8656 = vmul.f32 %v8623, %v8191
        %v8657 = vmul.f32 %v8625, %v8192
        %8674 = vrot.lane.b32.xlu0 %v8626, 64
        %v8675 = vpop.permute.xlu0 %8674
        %8676 = vrot.lane.b32.xlu0 %v8627, 64
        %v8677 = vpop.permute.xlu0 %8676
        %8678 = vrot.lane.b32.xlu0 %v8628, 64
        %v8679 = vpop.permute.xlu0 %8678
        %8680 = vrot.lane.b32.xlu0 %v8629, 64
        %v8681 = vpop.permute.xlu0 %8680
        %8682 = vrot.lane.b32.xlu0 %v8630, 64
        %v8683 = vpop.permute.xlu0 %8682
        %8684 = vrot.lane.b32.xlu0 %v8631, 64
        %v8685 = vpop.permute.xlu0 %8684
        %8686 = vrot.lane.b32.xlu0 %v8632, 64
        %v8687 = vpop.permute.xlu0 %8686
        %8688 = vrot.lane.b32.xlu0 %v8633, 64
        %v8689 = vpop.permute.xlu0 %8688
        %8690 = vrot.lane.b32.xlu0 %v8634, 64
        %v8691 = vpop.permute.xlu0 %8690
        %8692 = vrot.lane.b32.xlu0 %v8635, 64
        %v8693 = vpop.permute.xlu0 %8692
        %8694 = vrot.lane.b32.xlu0 %v8636, 64
        %v8695 = vpop.permute.xlu0 %8694
        %8696 = vrot.lane.b32.xlu0 %v8637, 64
        %v8697 = vpop.permute.xlu0 %8696
        %8698 = vrot.lane.b32.xlu0 %v8638, 64
        %v8699 = vpop.permute.xlu0 %8698
        %8700 = vrot.lane.b32.xlu0 %v8639, 64
        %v8701 = vpop.permute.xlu0 %8700
        %8702 = vrot.lane.b32.xlu0 %v8640, 64
        %v8703 = vpop.permute.xlu0 %8702
        %8704 = vrot.lane.b32.xlu0 %v8641, 64
        %v8705 = vpop.permute.xlu0 %8704
        %v8722 = vmul.f32 %v8595, %v8675
        %v8723 = vmul.f32 %v8597, %v8677
        %v8724 = vmul.f32 %v8599, %v8679
        %v8725 = vmul.f32 %v8601, %v8681
        %v8726 = vmul.f32 %v8603, %v8683
        %v8727 = vmul.f32 %v8605, %v8685
        %v8728 = vmul.f32 %v8607, %v8687
        %v8729 = vmul.f32 %v8609, %v8689
        %v8730 = vmul.f32 %v8611, %v8691
        %v8731 = vmul.f32 %v8613, %v8693
        %v8732 = vmul.f32 %v8615, %v8695
        %v8733 = vmul.f32 %v8617, %v8697
        %v8734 = vmul.f32 %v8619, %v8699
        %v8735 = vmul.f32 %v8621, %v8701
        %v8736 = vmul.f32 %v8623, %v8703
        %v8737 = vmul.f32 %v8625, %v8705
        %8754 = vrot.lane.b32.xlu0 %v8722, 32
        %v8755 = vpop.permute.xlu0 %8754
        %8756 = vrot.lane.b32.xlu0 %v8723, 32
        %v8757 = vpop.permute.xlu0 %8756
        %8758 = vrot.lane.b32.xlu0 %v8724, 32
        %v8759 = vpop.permute.xlu0 %8758
        %8760 = vrot.lane.b32.xlu0 %v8725, 32
        %v8761 = vpop.permute.xlu0 %8760
        %8762 = vrot.lane.b32.xlu0 %v8726, 32
        %v8763 = vpop.permute.xlu0 %8762
        %8764 = vrot.lane.b32.xlu0 %v8727, 32
        %v8765 = vpop.permute.xlu0 %8764
        %8766 = vrot.lane.b32.xlu0 %v8728, 32
        %v8767 = vpop.permute.xlu0 %8766
        %8768 = vrot.lane.b32.xlu0 %v8729, 32
        %v8769 = vpop.permute.xlu0 %8768
        %8770 = vrot.lane.b32.xlu0 %v8730, 32
        %v8771 = vpop.permute.xlu0 %8770
        %8772 = vrot.lane.b32.xlu0 %v8731, 32
        %v8773 = vpop.permute.xlu0 %8772
        %8774 = vrot.lane.b32.xlu0 %v8732, 32
        %v8775 = vpop.permute.xlu0 %8774
        %8776 = vrot.lane.b32.xlu0 %v8733, 32
        %v8777 = vpop.permute.xlu0 %8776
        %8778 = vrot.lane.b32.xlu0 %v8734, 32
        %v8779 = vpop.permute.xlu0 %8778
        %8780 = vrot.lane.b32.xlu0 %v8735, 32
        %v8781 = vpop.permute.xlu0 %8780
        %8782 = vrot.lane.b32.xlu0 %v8736, 32
        %v8783 = vpop.permute.xlu0 %8782
        %8784 = vrot.lane.b32.xlu0 %v8737, 32
        %v8785 = vpop.permute.xlu0 %8784
        %v8802 = vadd.f32 %v8642, %v8755
        %v8803 = vadd.f32 %v8643, %v8757
        %v8804 = vadd.f32 %v8644, %v8759
        %v8805 = vadd.f32 %v8645, %v8761
        %v8806 = vadd.f32 %v8646, %v8763
        %v8807 = vadd.f32 %v8647, %v8765
        %v8808 = vadd.f32 %v8648, %v8767
        %v8809 = vadd.f32 %v8649, %v8769
        %v8810 = vadd.f32 %v8650, %v8771
        %v8811 = vadd.f32 %v8651, %v8773
        %v8812 = vadd.f32 %v8652, %v8775
        %v8813 = vadd.f32 %v8653, %v8777
        %v8814 = vadd.f32 %v8654, %v8779
        %v8815 = vadd.f32 %v8655, %v8781
        %v8816 = vadd.f32 %v8656, %v8783
        %v8817 = vadd.f32 %v8657, %v8785
        %v8818 = vtanh.pop %v8802
        %v8819 = vtanh.pop %v8803
        %v8820 = vtanh.pop %v8804
        %v8821 = vtanh.pop %v8805
        %v8822 = vtanh.pop %v8806
        %v8823 = vtanh.pop %v8807
        %v8824 = vtanh.pop %v8808
        %v8825 = vtanh.pop %v8809
        %v8826 = vtanh.pop %v8810
        %v8827 = vtanh.pop %v8811
        %v8828 = vtanh.pop %v8812
        %v8829 = vtanh.pop %v8813
        %v8830 = vtanh.pop %v8814
        %v8831 = vtanh.pop %v8815
        %v8832 = vtanh.pop %v8816
        %v8833 = vtanh.pop %v8817
        %8850 = vrot.lane.b32.xlu0 %v8818, 64
        %v8851 = vpop.permute.xlu0 %8850
        %8852 = vrot.lane.b32.xlu0 %v8819, 64
        %v8853 = vpop.permute.xlu0 %8852
        %8854 = vrot.lane.b32.xlu0 %v8820, 64
        %v8855 = vpop.permute.xlu0 %8854
        %8856 = vrot.lane.b32.xlu0 %v8821, 64
        %v8857 = vpop.permute.xlu0 %8856
        %8858 = vrot.lane.b32.xlu0 %v8822, 64
        %v8859 = vpop.permute.xlu0 %8858
        %8860 = vrot.lane.b32.xlu0 %v8823, 64
        %v8861 = vpop.permute.xlu0 %8860
        %8862 = vrot.lane.b32.xlu0 %v8824, 64
        %v8863 = vpop.permute.xlu0 %8862
        %8864 = vrot.lane.b32.xlu0 %v8825, 64
        %v8865 = vpop.permute.xlu0 %8864
        %8866 = vrot.lane.b32.xlu0 %v8826, 64
        %v8867 = vpop.permute.xlu0 %8866
        %8868 = vrot.lane.b32.xlu0 %v8827, 64
        %v8869 = vpop.permute.xlu0 %8868
        %8870 = vrot.lane.b32.xlu0 %v8828, 64
        %v8871 = vpop.permute.xlu0 %8870
        %8872 = vrot.lane.b32.xlu0 %v8829, 64
        %v8873 = vpop.permute.xlu0 %8872
        %8874 = vrot.lane.b32.xlu0 %v8830, 64
        %v8875 = vpop.permute.xlu0 %8874
        %8876 = vrot.lane.b32.xlu0 %v8831, 64
        %v8877 = vpop.permute.xlu0 %8876
        %8878 = vrot.lane.b32.xlu0 %v8832, 64
        %v8879 = vpop.permute.xlu0 %8878
        %8880 = vrot.lane.b32.xlu0 %v8833, 64
        %v8881 = vpop.permute.xlu0 %8880
        %v8898 = vmul.f32 %v8595, %v8851
        %v8899 = vmul.f32 %v8597, %v8853
        %v8900 = vmul.f32 %v8599, %v8855
        %v8901 = vmul.f32 %v8601, %v8857
        %v8902 = vmul.f32 %v8603, %v8859
        %v8903 = vmul.f32 %v8605, %v8861
        %v8904 = vmul.f32 %v8607, %v8863
        %v8905 = vmul.f32 %v8609, %v8865
        %v8906 = vmul.f32 %v8611, %v8867
        %v8907 = vmul.f32 %v8613, %v8869
        %v8908 = vmul.f32 %v8615, %v8871
        %v8909 = vmul.f32 %v8617, %v8873
        %v8910 = vmul.f32 %v8619, %v8875
        %v8911 = vmul.f32 %v8621, %v8877
        %v8912 = vmul.f32 %v8623, %v8879
        %v8913 = vmul.f32 %v8625, %v8881
        %8930 = vrot.lane.b32.xlu0 %v8898, 32
        %v8931 = vpop.permute.xlu0 %8930
        %8932 = vrot.lane.b32.xlu0 %v8899, 32
        %v8933 = vpop.permute.xlu0 %8932
        %8934 = vrot.lane.b32.xlu0 %v8900, 32
        %v8935 = vpop.permute.xlu0 %8934
        %8936 = vrot.lane.b32.xlu0 %v8901, 32
        %v8937 = vpop.permute.xlu0 %8936
        %8938 = vrot.lane.b32.xlu0 %v8902, 32
        %v8939 = vpop.permute.xlu0 %8938
        %8940 = vrot.lane.b32.xlu0 %v8903, 32
        %v8941 = vpop.permute.xlu0 %8940
        %8942 = vrot.lane.b32.xlu0 %v8904, 32
        %v8943 = vpop.permute.xlu0 %8942
        %8944 = vrot.lane.b32.xlu0 %v8905, 32
        %v8945 = vpop.permute.xlu0 %8944
        %8946 = vrot.lane.b32.xlu0 %v8906, 32
        %v8947 = vpop.permute.xlu0 %8946
        %8948 = vrot.lane.b32.xlu0 %v8907, 32
        %v8949 = vpop.permute.xlu0 %8948
        %8950 = vrot.lane.b32.xlu0 %v8908, 32
        %v8951 = vpop.permute.xlu0 %8950
        %8952 = vrot.lane.b32.xlu0 %v8909, 32
        %v8953 = vpop.permute.xlu0 %8952
        %8954 = vrot.lane.b32.xlu0 %v8910, 32
        %v8955 = vpop.permute.xlu0 %8954
        %8956 = vrot.lane.b32.xlu0 %v8911, 32
        %v8957 = vpop.permute.xlu0 %8956
        %8958 = vrot.lane.b32.xlu0 %v8912, 32
        %v8959 = vpop.permute.xlu0 %8958
        %8960 = vrot.lane.b32.xlu0 %v8913, 32
        %v8961 = vpop.permute.xlu0 %8960
        %v8962 = vsel %vm7115, %v8931, 0
        %v8964 = vsel %vm7115, %v8933, 0
        %v8966 = vsel %vm7115, %v8935, 0
        %v8968 = vsel %vm7115, %v8937, 0
        %v8970 = vsel %vm7115, %v8939, 0
        %v8972 = vsel %vm7115, %v8941, 0
        %v8974 = vsel %vm7115, %v8943, 0
        %v8976 = vsel %vm7115, %v8945, 0
        %v8978 = vsel %vm7115, %v8947, 0
        %v8980 = vsel %vm7115, %v8949, 0
        %v8982 = vsel %vm7115, %v8951, 0
        %v8984 = vsel %vm7115, %v8953, 0
        %v8986 = vsel %vm7115, %v8955, 0
        %v8988 = vsel %vm7115, %v8957, 0
        %v8990 = vsel %vm7115, %v8959, 0
        %v8992 = vsel %vm7115, %v8961, 0
        %8994 = vmatprep.subr.mxu0 0.0
        %8995 = vmatpush1.msra.mxu0 0.0
        %8996 = vmatprep.subr.mxu0 0.0
        %8997 = vmatpush1.msra.mxu0 0.0
        %8998 = vmatprep.subr.mxu0 0.0
        %8999 = vmatpush1.msra.mxu0 0.0
        %9000 = vmatprep.subr.mxu0 0.0
        %9001 = vmatpush1.msra.mxu0 0.0
        %9002 = vmatprep.subr.mxu0 0.0
        %9003 = vmatpush1.msra.mxu0 0.0
        %9004 = vmatprep.subr.mxu0 0.0
        %9005 = vmatpush1.msra.mxu0 0.0
        %9006 = vmatprep.subr.mxu0 0.0
        %9007 = vmatpush1.msra.mxu0 0.0
        %9008 = vmatprep.subr.mxu0 0.0
        %9009 = vmatpush1.msra.mxu0 0.0
        %9010 = vmatprep.subr.mxu0 0.0
        %9011 = vmatpush1.msra.mxu0 0.0
        %9012 = vmatprep.subr.mxu0 0.0
        %9013 = vmatpush1.msra.mxu0 0.0
        %9014 = vmatprep.subr.mxu0 0.0
        %9015 = vmatpush1.msra.mxu0 0.0
        %9016 = vmatprep.subr.mxu0 0.0
        %9017 = vmatpush1.msra.mxu0 0.0
        %9018 = vmatprep.subr.mxu0 0.0
        %9019 = vmatpush1.msra.mxu0 %v7114
        %9020 = vmatprep.subr.mxu0 0.0
        %9021 = vmatpush1.msra.mxu0 %v7113
        %9022 = vmatprep.subr.mxu0 0.0
        %9023 = vmatpush1.msra.mxu0 %v7112
        %9024 = vmatprep.subr.mxu0 0.0
        %9025 = vmatpush1.msra.mxu0 %v7111
        %9026 = vmatprep.subr.mxu0 0.0
        %9027 = vmatpush2.msra.mxu0 0.0
        %9028 = vmatprep.subr.mxu0 0.0
        %9029 = vmatpush2.msra.mxu0 0.0
        %9030 = vmatprep.subr.mxu0 0.0
        %9031 = vmatpush2.msra.mxu0 0.0
        %9032 = vmatprep.subr.mxu0 0.0
        %9033 = vmatpush2.msra.mxu0 0.0
        %9034 = vmatprep.subr.mxu0 0.0
        %9035 = vmatpush2.msra.mxu0 0.0
        %9036 = vmatprep.subr.mxu0 0.0
        %9037 = vmatpush2.msra.mxu0 0.0
        %9038 = vmatprep.subr.mxu0 0.0
        %9039 = vmatpush2.msra.mxu0 0.0
        %9040 = vmatprep.subr.mxu0 0.0
        %9041 = vmatpush2.msra.mxu0 0.0
        %9042 = vmatprep.subr.mxu0 0.0
        %9043 = vmatpush2.msra.mxu0 0.0
        %9044 = vmatprep.subr.mxu0 0.0
        %9045 = vmatpush2.msra.mxu0 0.0
        %9046 = vmatprep.subr.mxu0 0.0
        %9047 = vmatpush2.msra.mxu0 0.0
        %9048 = vmatprep.subr.mxu0 0.0
        %9049 = vmatpush2.msra.mxu0 0.0
        %9050 = vmatprep.subr.mxu0 0.0
        %9051 = vmatpush2.msra.mxu0 0.0
        %9052 = vmatprep.subr.mxu0 0.0
        %9053 = vmatpush2.msra.mxu0 0.0
        %9054 = vmatprep.subr.mxu0 0.0
        %9055 = vmatpush2.msra.mxu0 0.0
        %9056 = vmatprep.subr.mxu0 0.0
        %9057 = vmatpush2.msra.mxu0 0.0
        %9058 = vmatprep.mubr.f32.mxu0 0.0
        %9059 = vmatmul.mubr.f32.gmra.mxu0 %v8962
        %v9060 = vpop.f32.mrf.mxu0
        %v9061 = vadd.f32 0.0, %v9060
        %v9062 = vpop.f32.mrf.mxu0
        %9063 = vmatprep.mubr.f32.mxu0 0.0
        %9064 = vmatmul.mubr.f32.gmra.mxu0 %v8964
        %v9065 = vpop.f32.mrf.mxu0
        %v9066 = vadd.f32 0.0, %v9065
        %v9067 = vpop.f32.mrf.mxu0
        %9068 = vmatprep.mubr.f32.mxu0 0.0
        %9069 = vmatmul.mubr.f32.gmra.mxu0 %v8966
        %v9070 = vpop.f32.mrf.mxu0
        %v9071 = vadd.f32 0.0, %v9070
        %v9072 = vpop.f32.mrf.mxu0
        %9073 = vmatprep.mubr.f32.mxu0 0.0
        %9074 = vmatmul.mubr.f32.gmra.mxu0 %v8968
        %v9075 = vpop.f32.mrf.mxu0
        %v9076 = vadd.f32 0.0, %v9075
        %v9077 = vpop.f32.mrf.mxu0
        %9078 = vmatprep.mubr.f32.mxu0 0.0
        %9079 = vmatmul.mubr.f32.gmra.mxu0 %v8970
        %v9080 = vpop.f32.mrf.mxu0
        %v9081 = vadd.f32 0.0, %v9080
        %v9082 = vpop.f32.mrf.mxu0
        %9083 = vmatprep.mubr.f32.mxu0 0.0
        %9084 = vmatmul.mubr.f32.gmra.mxu0 %v8972
        %v9085 = vpop.f32.mrf.mxu0
        %v9086 = vadd.f32 0.0, %v9085
        %v9087 = vpop.f32.mrf.mxu0
        %9088 = vmatprep.mubr.f32.mxu0 0.0
        %9089 = vmatmul.mubr.f32.gmra.mxu0 %v8974
        %v9090 = vpop.f32.mrf.mxu0
        %v9091 = vadd.f32 0.0, %v9090
        %v9092 = vpop.f32.mrf.mxu0
        %9093 = vmatprep.mubr.f32.mxu0 0.0
        %9094 = vmatmul.mubr.f32.gmra.mxu0 %v8976
        %v9095 = vpop.f32.mrf.mxu0
        %v9096 = vadd.f32 0.0, %v9095
        %v9097 = vpop.f32.mrf.mxu0
        %9098 = vmatprep.mubr.f32.mxu0 0.0
        %9099 = vmatmul.mubr.f32.gmra.mxu0 %v8978
        %v9100 = vpop.f32.mrf.mxu0
        %v9101 = vadd.f32 0.0, %v9100
        %v9102 = vpop.f32.mrf.mxu0
        %9103 = vmatprep.mubr.f32.mxu0 0.0
        %9104 = vmatmul.mubr.f32.gmra.mxu0 %v8980
        %v9105 = vpop.f32.mrf.mxu0
        %v9106 = vadd.f32 0.0, %v9105
        %v9107 = vpop.f32.mrf.mxu0
        %9108 = vmatprep.mubr.f32.mxu0 0.0
        %9109 = vmatmul.mubr.f32.gmra.mxu0 %v8982
        %v9110 = vpop.f32.mrf.mxu0
        %v9111 = vadd.f32 0.0, %v9110
        %v9112 = vpop.f32.mrf.mxu0
        %9113 = vmatprep.mubr.f32.mxu0 0.0
        %9114 = vmatmul.mubr.f32.gmra.mxu0 %v8984
        %v9115 = vpop.f32.mrf.mxu0
        %v9116 = vadd.f32 0.0, %v9115
        %v9117 = vpop.f32.mrf.mxu0
        %9118 = vmatprep.mubr.f32.mxu0 0.0
        %9119 = vmatmul.mubr.f32.gmra.mxu0 %v8986
        %v9120 = vpop.f32.mrf.mxu0
        %v9121 = vadd.f32 0.0, %v9120
        %v9122 = vpop.f32.mrf.mxu0
        %9123 = vmatprep.mubr.f32.mxu0 0.0
        %9124 = vmatmul.mubr.f32.gmra.mxu0 %v8988
        %v9125 = vpop.f32.mrf.mxu0
        %v9126 = vadd.f32 0.0, %v9125
        %v9127 = vpop.f32.mrf.mxu0
        %9128 = vmatprep.mubr.f32.mxu0 0.0
        %9129 = vmatmul.mubr.f32.gmra.mxu0 %v8990
        %v9130 = vpop.f32.mrf.mxu0
        %v9131 = vadd.f32 0.0, %v9130
        %v9132 = vpop.f32.mrf.mxu0
        %9133 = vmatprep.mubr.f32.mxu0 0.0
        %9134 = vmatmul.mubr.f32.gmra.mxu0 %v8992
        %v9135 = vpop.f32.mrf.mxu0
        %v9136 = vadd.f32 0.0, %v9135
        %v9137 = vpop.f32.mrf.mxu0
        %9138 = vdwg.mxu0
        %v9139 = vadd.f32 %v6953, %v9061
        %v9140 = vadd.f32 %v6958, %v9066
        %v9141 = vadd.f32 %v6963, %v9071
        %v9142 = vadd.f32 %v6968, %v9076
        %v9143 = vadd.f32 %v6973, %v9081
        %v9144 = vadd.f32 %v6978, %v9086
        %v9145 = vadd.f32 %v6983, %v9091
        %v9146 = vadd.f32 %v6988, %v9096
        %v9147 = vadd.f32 %v6993, %v9101
        %v9148 = vadd.f32 %v6998, %v9106
        %v9149 = vadd.f32 %v7003, %v9111
        %v9150 = vadd.f32 %v7008, %v9116
        %v9151 = vadd.f32 %v7013, %v9121
        %v9152 = vadd.f32 %v7018, %v9126
        %v9153 = vadd.f32 %v7023, %v9131
        %v9154 = vadd.f32 %v7028, %v9136
        %v9155 = vxor.u32 %v9139, 2147483648
        %v9156 = vxor.u32 %v9140, 2147483648
        %v9157 = vxor.u32 %v9141, 2147483648
        %v9158 = vxor.u32 %v9142, 2147483648
        %v9159 = vxor.u32 %v9143, 2147483648
        %v9160 = vxor.u32 %v9144, 2147483648
        %v9161 = vxor.u32 %v9145, 2147483648
        %v9162 = vxor.u32 %v9146, 2147483648
        %v9163 = vxor.u32 %v9147, 2147483648
        %v9164 = vxor.u32 %v9148, 2147483648
        %v9165 = vxor.u32 %v9149, 2147483648
        %v9166 = vxor.u32 %v9150, 2147483648
        %v9167 = vxor.u32 %v9151, 2147483648
        %v9168 = vxor.u32 %v9152, 2147483648
        %v9169 = vxor.u32 %v9153, 2147483648
        %v9170 = vxor.u32 %v9154, 2147483648
        %v9171 = vmul.f32 %v9155, 1.442695
        %v9172 = vpow.pop %v9171
        %v9173 = vmul.f32 %v9156, 1.442695
        %v9174 = vpow.pop %v9173
        %v9175 = vmul.f32 %v9157, 1.442695
        %v9176 = vpow.pop %v9175
        %v9177 = vmul.f32 %v9158, 1.442695
        %v9178 = vpow.pop %v9177
        %v9179 = vmul.f32 %v9159, 1.442695
        %v9180 = vpow.pop %v9179
        %v9181 = vmul.f32 %v9160, 1.442695
        %v9182 = vpow.pop %v9181
        %v9183 = vmul.f32 %v9161, 1.442695
        %v9184 = vpow.pop %v9183
        %v9185 = vmul.f32 %v9162, 1.442695
        %v9186 = vpow.pop %v9185
        %v9187 = vmul.f32 %v9163, 1.442695
        %v9188 = vpow.pop %v9187
        %v9189 = vmul.f32 %v9164, 1.442695
        %v9190 = vpow.pop %v9189
        %v9191 = vmul.f32 %v9165, 1.442695
        %v9192 = vpow.pop %v9191
        %v9193 = vmul.f32 %v9166, 1.442695
        %v9194 = vpow.pop %v9193
        %v9195 = vmul.f32 %v9167, 1.442695
        %v9196 = vpow.pop %v9195
        %v9197 = vmul.f32 %v9168, 1.442695
        %v9198 = vpow.pop %v9197
        %v9199 = vmul.f32 %v9169, 1.442695
        %v9200 = vpow.pop %v9199
        %v9201 = vmul.f32 %v9170, 1.442695
        %v9202 = vpow.pop %v9201
        %v9203 = vadd.f32 %v9172, 1.0
        %v9204 = vadd.f32 %v9174, 1.0
        %v9205 = vadd.f32 %v9176, 1.0
        %v9206 = vadd.f32 %v9178, 1.0
        %v9207 = vadd.f32 %v9180, 1.0
        %v9208 = vadd.f32 %v9182, 1.0
        %v9209 = vadd.f32 %v9184, 1.0
        %v9210 = vadd.f32 %v9186, 1.0
        %v9211 = vadd.f32 %v9188, 1.0
        %v9212 = vadd.f32 %v9190, 1.0
        %v9213 = vadd.f32 %v9192, 1.0
        %v9214 = vadd.f32 %v9194, 1.0
        %v9215 = vadd.f32 %v9196, 1.0
        %v9216 = vadd.f32 %v9198, 1.0
        %v9217 = vadd.f32 %v9200, 1.0
        %v9218 = vadd.f32 %v9202, 1.0
        %v9219 = vrcp.pop %v9203
        %v9220 = vmul.f32 1.0, %v9219
        %v9221 = vrcp.pop %v9204
        %v9222 = vmul.f32 1.0, %v9221
        %v9223 = vrcp.pop %v9205
        %v9224 = vmul.f32 1.0, %v9223
        %v9225 = vrcp.pop %v9206
        %v9226 = vmul.f32 1.0, %v9225
        %v9227 = vrcp.pop %v9207
        %v9228 = vmul.f32 1.0, %v9227
        %v9229 = vrcp.pop %v9208
        %v9230 = vmul.f32 1.0, %v9229
        %v9231 = vrcp.pop %v9209
        %v9232 = vmul.f32 1.0, %v9231
        %v9233 = vrcp.pop %v9210
        %v9234 = vmul.f32 1.0, %v9233
        %v9235 = vrcp.pop %v9211
        %v9236 = vmul.f32 1.0, %v9235
        %v9237 = vrcp.pop %v9212
        %v9238 = vmul.f32 1.0, %v9237
        %v9239 = vrcp.pop %v9213
        %v9240 = vmul.f32 1.0, %v9239
        %v9241 = vrcp.pop %v9214
        %v9242 = vmul.f32 1.0, %v9241
        %v9243 = vrcp.pop %v9215
        %v9244 = vmul.f32 1.0, %v9243
        %v9245 = vrcp.pop %v9216
        %v9246 = vmul.f32 1.0, %v9245
        %v9247 = vrcp.pop %v9217
        %v9248 = vmul.f32 1.0, %v9247
        %v9249 = vrcp.pop %v9218
        %v9250 = vmul.f32 1.0, %v9249
        %v9251 = vtanh.pop %v9139
        %v9252 = vtanh.pop %v9140
        %v9253 = vtanh.pop %v9141
        %v9254 = vtanh.pop %v9142
        %v9255 = vtanh.pop %v9143
        %v9256 = vtanh.pop %v9144
        %v9257 = vtanh.pop %v9145
        %v9258 = vtanh.pop %v9146
        %v9259 = vtanh.pop %v9147
        %v9260 = vtanh.pop %v9148
        %v9261 = vtanh.pop %v9149
        %v9262 = vtanh.pop %v9150
        %v9263 = vtanh.pop %v9151
        %v9264 = vtanh.pop %v9152
        %v9265 = vtanh.pop %v9153
        %v9266 = vtanh.pop %v9154
        %v9267 = vmul.f32 %v9220, %v8802
        %v9268 = vmul.f32 %v9222, %v8803
        %v9269 = vmul.f32 %v9224, %v8804
        %v9270 = vmul.f32 %v9226, %v8805
        %v9271 = vmul.f32 %v9228, %v8806
        %v9272 = vmul.f32 %v9230, %v8807
        %v9273 = vmul.f32 %v9232, %v8808
        %v9274 = vmul.f32 %v9234, %v8809
        %v9275 = vmul.f32 %v9236, %v8810
        %v9276 = vmul.f32 %v9238, %v8811
        %v9277 = vmul.f32 %v9240, %v8812
        %v9278 = vmul.f32 %v9242, %v8813
        %v9279 = vmul.f32 %v9244, %v8814
        %v9280 = vmul.f32 %v9246, %v8815
        %v9281 = vmul.f32 %v9248, %v8816
        %v9282 = vmul.f32 %v9250, %v8817
        %9299 = vrot.lane.b32.xlu0 %v9251, 64
        %v9300 = vpop.permute.xlu0 %9299
        %9301 = vrot.lane.b32.xlu0 %v9252, 64
        %v9302 = vpop.permute.xlu0 %9301
        %9303 = vrot.lane.b32.xlu0 %v9253, 64
        %v9304 = vpop.permute.xlu0 %9303
        %9305 = vrot.lane.b32.xlu0 %v9254, 64
        %v9306 = vpop.permute.xlu0 %9305
        %9307 = vrot.lane.b32.xlu0 %v9255, 64
        %v9308 = vpop.permute.xlu0 %9307
        %9309 = vrot.lane.b32.xlu0 %v9256, 64
        %v9310 = vpop.permute.xlu0 %9309
        %9311 = vrot.lane.b32.xlu0 %v9257, 64
        %v9312 = vpop.permute.xlu0 %9311
        %9313 = vrot.lane.b32.xlu0 %v9258, 64
        %v9314 = vpop.permute.xlu0 %9313
        %9315 = vrot.lane.b32.xlu0 %v9259, 64
        %v9316 = vpop.permute.xlu0 %9315
        %9317 = vrot.lane.b32.xlu0 %v9260, 64
        %v9318 = vpop.permute.xlu0 %9317
        %9319 = vrot.lane.b32.xlu0 %v9261, 64
        %v9320 = vpop.permute.xlu0 %9319
        %9321 = vrot.lane.b32.xlu0 %v9262, 64
        %v9322 = vpop.permute.xlu0 %9321
        %9323 = vrot.lane.b32.xlu0 %v9263, 64
        %v9324 = vpop.permute.xlu0 %9323
        %9325 = vrot.lane.b32.xlu0 %v9264, 64
        %v9326 = vpop.permute.xlu0 %9325
        %9327 = vrot.lane.b32.xlu0 %v9265, 64
        %v9328 = vpop.permute.xlu0 %9327
        %9329 = vrot.lane.b32.xlu0 %v9266, 64
        %v9330 = vpop.permute.xlu0 %9329
        %v9347 = vmul.f32 %v9220, %v9300
        %v9348 = vmul.f32 %v9222, %v9302
        %v9349 = vmul.f32 %v9224, %v9304
        %v9350 = vmul.f32 %v9226, %v9306
        %v9351 = vmul.f32 %v9228, %v9308
        %v9352 = vmul.f32 %v9230, %v9310
        %v9353 = vmul.f32 %v9232, %v9312
        %v9354 = vmul.f32 %v9234, %v9314
        %v9355 = vmul.f32 %v9236, %v9316
        %v9356 = vmul.f32 %v9238, %v9318
        %v9357 = vmul.f32 %v9240, %v9320
        %v9358 = vmul.f32 %v9242, %v9322
        %v9359 = vmul.f32 %v9244, %v9324
        %v9360 = vmul.f32 %v9246, %v9326
        %v9361 = vmul.f32 %v9248, %v9328
        %v9362 = vmul.f32 %v9250, %v9330
        %9379 = vrot.lane.b32.xlu0 %v9347, 32
        %v9380 = vpop.permute.xlu0 %9379
        %9381 = vrot.lane.b32.xlu0 %v9348, 32
        %v9382 = vpop.permute.xlu0 %9381
        %9383 = vrot.lane.b32.xlu0 %v9349, 32
        %v9384 = vpop.permute.xlu0 %9383
        %9385 = vrot.lane.b32.xlu0 %v9350, 32
        %v9386 = vpop.permute.xlu0 %9385
        %9387 = vrot.lane.b32.xlu0 %v9351, 32
        %v9388 = vpop.permute.xlu0 %9387
        %9389 = vrot.lane.b32.xlu0 %v9352, 32
        %v9390 = vpop.permute.xlu0 %9389
        %9391 = vrot.lane.b32.xlu0 %v9353, 32
        %v9392 = vpop.permute.xlu0 %9391
        %9393 = vrot.lane.b32.xlu0 %v9354, 32
        %v9394 = vpop.permute.xlu0 %9393
        %9395 = vrot.lane.b32.xlu0 %v9355, 32
        %v9396 = vpop.permute.xlu0 %9395
        %9397 = vrot.lane.b32.xlu0 %v9356, 32
        %v9398 = vpop.permute.xlu0 %9397
        %9399 = vrot.lane.b32.xlu0 %v9357, 32
        %v9400 = vpop.permute.xlu0 %9399
        %9401 = vrot.lane.b32.xlu0 %v9358, 32
        %v9402 = vpop.permute.xlu0 %9401
        %9403 = vrot.lane.b32.xlu0 %v9359, 32
        %v9404 = vpop.permute.xlu0 %9403
        %9405 = vrot.lane.b32.xlu0 %v9360, 32
        %v9406 = vpop.permute.xlu0 %9405
        %9407 = vrot.lane.b32.xlu0 %v9361, 32
        %v9408 = vpop.permute.xlu0 %9407
        %9409 = vrot.lane.b32.xlu0 %v9362, 32
        %v9410 = vpop.permute.xlu0 %9409
        %v9427 = vadd.f32 %v9267, %v9380
        %v9428 = vadd.f32 %v9268, %v9382
        %v9429 = vadd.f32 %v9269, %v9384
        %v9430 = vadd.f32 %v9270, %v9386
        %v9431 = vadd.f32 %v9271, %v9388
        %v9432 = vadd.f32 %v9272, %v9390
        %v9433 = vadd.f32 %v9273, %v9392
        %v9434 = vadd.f32 %v9274, %v9394
        %v9435 = vadd.f32 %v9275, %v9396
        %v9436 = vadd.f32 %v9276, %v9398
        %v9437 = vadd.f32 %v9277, %v9400
        %v9438 = vadd.f32 %v9278, %v9402
        %v9439 = vadd.f32 %v9279, %v9404
        %v9440 = vadd.f32 %v9280, %v9406
        %v9441 = vadd.f32 %v9281, %v9408
        %v9442 = vadd.f32 %v9282, %v9410
        %v9443 = vtanh.pop %v9427
        %v9444 = vtanh.pop %v9428
        %v9445 = vtanh.pop %v9429
        %v9446 = vtanh.pop %v9430
        %v9447 = vtanh.pop %v9431
        %v9448 = vtanh.pop %v9432
        %v9449 = vtanh.pop %v9433
        %v9450 = vtanh.pop %v9434
        %v9451 = vtanh.pop %v9435
        %v9452 = vtanh.pop %v9436
        %v9453 = vtanh.pop %v9437
        %v9454 = vtanh.pop %v9438
        %v9455 = vtanh.pop %v9439
        %v9456 = vtanh.pop %v9440
        %v9457 = vtanh.pop %v9441
        %v9458 = vtanh.pop %v9442
        %9475 = vrot.lane.b32.xlu0 %v9443, 64
        %v9476 = vpop.permute.xlu0 %9475
        %9477 = vrot.lane.b32.xlu0 %v9444, 64
        %v9478 = vpop.permute.xlu0 %9477
        %9479 = vrot.lane.b32.xlu0 %v9445, 64
        %v9480 = vpop.permute.xlu0 %9479
        %9481 = vrot.lane.b32.xlu0 %v9446, 64
        %v9482 = vpop.permute.xlu0 %9481
        %9483 = vrot.lane.b32.xlu0 %v9447, 64
        %v9484 = vpop.permute.xlu0 %9483
        %9485 = vrot.lane.b32.xlu0 %v9448, 64
        %v9486 = vpop.permute.xlu0 %9485
        %9487 = vrot.lane.b32.xlu0 %v9449, 64
        %v9488 = vpop.permute.xlu0 %9487
        %9489 = vrot.lane.b32.xlu0 %v9450, 64
        %v9490 = vpop.permute.xlu0 %9489
        %9491 = vrot.lane.b32.xlu0 %v9451, 64
        %v9492 = vpop.permute.xlu0 %9491
        %9493 = vrot.lane.b32.xlu0 %v9452, 64
        %v9494 = vpop.permute.xlu0 %9493
        %9495 = vrot.lane.b32.xlu0 %v9453, 64
        %v9496 = vpop.permute.xlu0 %9495
        %9497 = vrot.lane.b32.xlu0 %v9454, 64
        %v9498 = vpop.permute.xlu0 %9497
        %9499 = vrot.lane.b32.xlu0 %v9455, 64
        %v9500 = vpop.permute.xlu0 %9499
        %9501 = vrot.lane.b32.xlu0 %v9456, 64
        %v9502 = vpop.permute.xlu0 %9501
        %9503 = vrot.lane.b32.xlu0 %v9457, 64
        %v9504 = vpop.permute.xlu0 %9503
        %9505 = vrot.lane.b32.xlu0 %v9458, 64
        %v9506 = vpop.permute.xlu0 %9505
        %v9523 = vmul.f32 %v9220, %v9476
        %v9524 = vmul.f32 %v9222, %v9478
        %v9525 = vmul.f32 %v9224, %v9480
        %v9526 = vmul.f32 %v9226, %v9482
        %v9527 = vmul.f32 %v9228, %v9484
        %v9528 = vmul.f32 %v9230, %v9486
        %v9529 = vmul.f32 %v9232, %v9488
        %v9530 = vmul.f32 %v9234, %v9490
        %v9531 = vmul.f32 %v9236, %v9492
        %v9532 = vmul.f32 %v9238, %v9494
        %v9533 = vmul.f32 %v9240, %v9496
        %v9534 = vmul.f32 %v9242, %v9498
        %v9535 = vmul.f32 %v9244, %v9500
        %v9536 = vmul.f32 %v9246, %v9502
        %v9537 = vmul.f32 %v9248, %v9504
        %v9538 = vmul.f32 %v9250, %v9506
        %9555 = vrot.lane.b32.xlu0 %v9523, 32
        %v9556 = vpop.permute.xlu0 %9555
        %9557 = vrot.lane.b32.xlu0 %v9524, 32
        %v9558 = vpop.permute.xlu0 %9557
        %9559 = vrot.lane.b32.xlu0 %v9525, 32
        %v9560 = vpop.permute.xlu0 %9559
        %9561 = vrot.lane.b32.xlu0 %v9526, 32
        %v9562 = vpop.permute.xlu0 %9561
        %9563 = vrot.lane.b32.xlu0 %v9527, 32
        %v9564 = vpop.permute.xlu0 %9563
        %9565 = vrot.lane.b32.xlu0 %v9528, 32
        %v9566 = vpop.permute.xlu0 %9565
        %9567 = vrot.lane.b32.xlu0 %v9529, 32
        %v9568 = vpop.permute.xlu0 %9567
        %9569 = vrot.lane.b32.xlu0 %v9530, 32
        %v9570 = vpop.permute.xlu0 %9569
        %9571 = vrot.lane.b32.xlu0 %v9531, 32
        %v9572 = vpop.permute.xlu0 %9571
        %9573 = vrot.lane.b32.xlu0 %v9532, 32
        %v9574 = vpop.permute.xlu0 %9573
        %9575 = vrot.lane.b32.xlu0 %v9533, 32
        %v9576 = vpop.permute.xlu0 %9575
        %9577 = vrot.lane.b32.xlu0 %v9534, 32
        %v9578 = vpop.permute.xlu0 %9577
        %9579 = vrot.lane.b32.xlu0 %v9535, 32
        %v9580 = vpop.permute.xlu0 %9579
        %9581 = vrot.lane.b32.xlu0 %v9536, 32
        %v9582 = vpop.permute.xlu0 %9581
        %9583 = vrot.lane.b32.xlu0 %v9537, 32
        %v9584 = vpop.permute.xlu0 %9583
        %9585 = vrot.lane.b32.xlu0 %v9538, 32
        %v9586 = vpop.permute.xlu0 %9585
        %v9587 = vsel %vm7115, %v9556, 0
        %v9589 = vsel %vm7115, %v9558, 0
        %v9591 = vsel %vm7115, %v9560, 0
        %v9593 = vsel %vm7115, %v9562, 0
        %v9595 = vsel %vm7115, %v9564, 0
        %v9597 = vsel %vm7115, %v9566, 0
        %v9599 = vsel %vm7115, %v9568, 0
        %v9601 = vsel %vm7115, %v9570, 0
        %v9603 = vsel %vm7115, %v9572, 0
        %v9605 = vsel %vm7115, %v9574, 0
        %v9607 = vsel %vm7115, %v9576, 0
        %v9609 = vsel %vm7115, %v9578, 0
        %v9611 = vsel %vm7115, %v9580, 0
        %v9613 = vsel %vm7115, %v9582, 0
        %v9615 = vsel %vm7115, %v9584, 0
        %v9617 = vsel %vm7115, %v9586, 0
        %9619 = vmatprep.subr.mxu0 0.0
        %9620 = vmatpush1.msra.mxu0 0.0
        %9621 = vmatprep.subr.mxu0 0.0
        %9622 = vmatpush1.msra.mxu0 0.0
        %9623 = vmatprep.subr.mxu0 0.0
        %9624 = vmatpush1.msra.mxu0 0.0
        %9625 = vmatprep.subr.mxu0 0.0
        %9626 = vmatpush1.msra.mxu0 0.0
        %9627 = vmatprep.subr.mxu0 0.0
        %9628 = vmatpush1.msra.mxu0 0.0
        %9629 = vmatprep.subr.mxu0 0.0
        %9630 = vmatpush1.msra.mxu0 0.0
        %9631 = vmatprep.subr.mxu0 0.0
        %9632 = vmatpush1.msra.mxu0 0.0
        %9633 = vmatprep.subr.mxu0 0.0
        %9634 = vmatpush1.msra.mxu0 0.0
        %9635 = vmatprep.subr.mxu0 0.0
        %9636 = vmatpush1.msra.mxu0 0.0
        %9637 = vmatprep.subr.mxu0 0.0
        %9638 = vmatpush1.msra.mxu0 0.0
        %9639 = vmatprep.subr.mxu0 0.0
        %9640 = vmatpush1.msra.mxu0 0.0
        %9641 = vmatprep.subr.mxu0 0.0
        %9642 = vmatpush1.msra.mxu0 0.0
        %9643 = vmatprep.subr.mxu0 0.0
        %9644 = vmatpush1.msra.mxu0 %v7114
        %9645 = vmatprep.subr.mxu0 0.0
        %9646 = vmatpush1.msra.mxu0 %v7113
        %9647 = vmatprep.subr.mxu0 0.0
        %9648 = vmatpush1.msra.mxu0 %v7112
        %9649 = vmatprep.subr.mxu0 0.0
        %9650 = vmatpush1.msra.mxu0 %v7111
        %9651 = vmatprep.subr.mxu0 0.0
        %9652 = vmatpush2.msra.mxu0 0.0
        %9653 = vmatprep.subr.mxu0 0.0
        %9654 = vmatpush2.msra.mxu0 0.0
        %9655 = vmatprep.subr.mxu0 0.0
        %9656 = vmatpush2.msra.mxu0 0.0
        %9657 = vmatprep.subr.mxu0 0.0
        %9658 = vmatpush2.msra.mxu0 0.0
        %9659 = vmatprep.subr.mxu0 0.0
        %9660 = vmatpush2.msra.mxu0 0.0
        %9661 = vmatprep.subr.mxu0 0.0
        %9662 = vmatpush2.msra.mxu0 0.0
        %9663 = vmatprep.subr.mxu0 0.0
        %9664 = vmatpush2.msra.mxu0 0.0
        %9665 = vmatprep.subr.mxu0 0.0
        %9666 = vmatpush2.msra.mxu0 0.0
        %9667 = vmatprep.subr.mxu0 0.0
        %9668 = vmatpush2.msra.mxu0 0.0
        %9669 = vmatprep.subr.mxu0 0.0
        %9670 = vmatpush2.msra.mxu0 0.0
        %9671 = vmatprep.subr.mxu0 0.0
        %9672 = vmatpush2.msra.mxu0 0.0
        %9673 = vmatprep.subr.mxu0 0.0
        %9674 = vmatpush2.msra.mxu0 0.0
        %9675 = vmatprep.subr.mxu0 0.0
        %9676 = vmatpush2.msra.mxu0 0.0
        %9677 = vmatprep.subr.mxu0 0.0
        %9678 = vmatpush2.msra.mxu0 0.0
        %9679 = vmatprep.subr.mxu0 0.0
        %9680 = vmatpush2.msra.mxu0 0.0
        %9681 = vmatprep.subr.mxu0 0.0
        %9682 = vmatpush2.msra.mxu0 0.0
        %9683 = vmatprep.mubr.f32.mxu0 0.0
        %9684 = vmatmul.mubr.f32.gmra.mxu0 %v9587
        %v9685 = vpop.f32.mrf.mxu0
        %v9686 = vadd.f32 0.0, %v9685
        %v9687 = vpop.f32.mrf.mxu0
        %9688 = vmatprep.mubr.f32.mxu0 0.0
        %9689 = vmatmul.mubr.f32.gmra.mxu0 %v9589
        %v9690 = vpop.f32.mrf.mxu0
        %v9691 = vadd.f32 0.0, %v9690
        %v9692 = vpop.f32.mrf.mxu0
        %9693 = vmatprep.mubr.f32.mxu0 0.0
        %9694 = vmatmul.mubr.f32.gmra.mxu0 %v9591
        %v9695 = vpop.f32.mrf.mxu0
        %v9696 = vadd.f32 0.0, %v9695
        %v9697 = vpop.f32.mrf.mxu0
        %9698 = vmatprep.mubr.f32.mxu0 0.0
        %9699 = vmatmul.mubr.f32.gmra.mxu0 %v9593
        %v9700 = vpop.f32.mrf.mxu0
        %v9701 = vadd.f32 0.0, %v9700
        %v9702 = vpop.f32.mrf.mxu0
        %9703 = vmatprep.mubr.f32.mxu0 0.0
        %9704 = vmatmul.mubr.f32.gmra.mxu0 %v9595
        %v9705 = vpop.f32.mrf.mxu0
        %v9706 = vadd.f32 0.0, %v9705
        %v9707 = vpop.f32.mrf.mxu0
        %9708 = vmatprep.mubr.f32.mxu0 0.0
        %9709 = vmatmul.mubr.f32.gmra.mxu0 %v9597
        %v9710 = vpop.f32.mrf.mxu0
        %v9711 = vadd.f32 0.0, %v9710
        %v9712 = vpop.f32.mrf.mxu0
        %9713 = vmatprep.mubr.f32.mxu0 0.0
        %9714 = vmatmul.mubr.f32.gmra.mxu0 %v9599
        %v9715 = vpop.f32.mrf.mxu0
        %v9716 = vadd.f32 0.0, %v9715
        %v9717 = vpop.f32.mrf.mxu0
        %9718 = vmatprep.mubr.f32.mxu0 0.0
        %9719 = vmatmul.mubr.f32.gmra.mxu0 %v9601
        %v9720 = vpop.f32.mrf.mxu0
        %v9721 = vadd.f32 0.0, %v9720
        %v9722 = vpop.f32.mrf.mxu0
        %9723 = vmatprep.mubr.f32.mxu0 0.0
        %9724 = vmatmul.mubr.f32.gmra.mxu0 %v9603
        %v9725 = vpop.f32.mrf.mxu0
        %v9726 = vadd.f32 0.0, %v9725
        %v9727 = vpop.f32.mrf.mxu0
        %9728 = vmatprep.mubr.f32.mxu0 0.0
        %9729 = vmatmul.mubr.f32.gmra.mxu0 %v9605
        %v9730 = vpop.f32.mrf.mxu0
        %v9731 = vadd.f32 0.0, %v9730
        %v9732 = vpop.f32.mrf.mxu0
        %9733 = vmatprep.mubr.f32.mxu0 0.0
        %9734 = vmatmul.mubr.f32.gmra.mxu0 %v9607
        %v9735 = vpop.f32.mrf.mxu0
        %v9736 = vadd.f32 0.0, %v9735
        %v9737 = vpop.f32.mrf.mxu0
        %9738 = vmatprep.mubr.f32.mxu0 0.0
        %9739 = vmatmul.mubr.f32.gmra.mxu0 %v9609
        %v9740 = vpop.f32.mrf.mxu0
        %v9741 = vadd.f32 0.0, %v9740
        %v9742 = vpop.f32.mrf.mxu0
        %9743 = vmatprep.mubr.f32.mxu0 0.0
        %9744 = vmatmul.mubr.f32.gmra.mxu0 %v9611
        %v9745 = vpop.f32.mrf.mxu0
        %v9746 = vadd.f32 0.0, %v9745
        %v9747 = vpop.f32.mrf.mxu0
        %9748 = vmatprep.mubr.f32.mxu0 0.0
        %9749 = vmatmul.mubr.f32.gmra.mxu0 %v9613
        %v9750 = vpop.f32.mrf.mxu0
        %v9751 = vadd.f32 0.0, %v9750
        %v9752 = vpop.f32.mrf.mxu0
        %9753 = vmatprep.mubr.f32.mxu0 0.0
        %9754 = vmatmul.mubr.f32.gmra.mxu0 %v9615
        %v9755 = vpop.f32.mrf.mxu0
        %v9756 = vadd.f32 0.0, %v9755
        %v9757 = vpop.f32.mrf.mxu0
        %9758 = vmatprep.mubr.f32.mxu0 0.0
        %9759 = vmatmul.mubr.f32.gmra.mxu0 %v9617
        %v9760 = vpop.f32.mrf.mxu0
        %v9761 = vadd.f32 0.0, %v9760
        %v9762 = vpop.f32.mrf.mxu0
        %9763 = vdwg.mxu0
        %v9764 = vadd.f32 %v7033, %v9686
        %v9765 = vadd.f32 %v7038, %v9691
        %v9766 = vadd.f32 %v7043, %v9696
        %v9767 = vadd.f32 %v7048, %v9701
        %v9768 = vadd.f32 %v7053, %v9706
        %v9769 = vadd.f32 %v7058, %v9711
        %v9770 = vadd.f32 %v7063, %v9716
        %v9771 = vadd.f32 %v7068, %v9721
        %v9772 = vadd.f32 %v7073, %v9726
        %v9773 = vadd.f32 %v7078, %v9731
        %v9774 = vadd.f32 %v7083, %v9736
        %v9775 = vadd.f32 %v7088, %v9741
        %v9776 = vadd.f32 %v7093, %v9746
        %v9777 = vadd.f32 %v7098, %v9751
        %v9778 = vadd.f32 %v7103, %v9756
        %v9779 = vadd.f32 %v7108, %v9761
        %v9780 = vxor.u32 %v9764, 2147483648
        %v9781 = vxor.u32 %v9765, 2147483648
        %v9782 = vxor.u32 %v9766, 2147483648
        %v9783 = vxor.u32 %v9767, 2147483648
        %v9784 = vxor.u32 %v9768, 2147483648
        %v9785 = vxor.u32 %v9769, 2147483648
        %v9786 = vxor.u32 %v9770, 2147483648
        %v9787 = vxor.u32 %v9771, 2147483648
        %v9788 = vxor.u32 %v9772, 2147483648
        %v9789 = vxor.u32 %v9773, 2147483648
        %v9790 = vxor.u32 %v9774, 2147483648
        %v9791 = vxor.u32 %v9775, 2147483648
        %v9792 = vxor.u32 %v9776, 2147483648
        %v9793 = vxor.u32 %v9777, 2147483648
        %v9794 = vxor.u32 %v9778, 2147483648
        %v9795 = vxor.u32 %v9779, 2147483648
        %v9796 = vmul.f32 %v9780, 1.442695
        %v9797 = vpow.pop %v9796
        %v9798 = vmul.f32 %v9781, 1.442695
        %v9799 = vpow.pop %v9798
        %v9800 = vmul.f32 %v9782, 1.442695
        %v9801 = vpow.pop %v9800
        %v9802 = vmul.f32 %v9783, 1.442695
        %v9803 = vpow.pop %v9802
        %v9804 = vmul.f32 %v9784, 1.442695
        %v9805 = vpow.pop %v9804
        %v9806 = vmul.f32 %v9785, 1.442695
        %v9807 = vpow.pop %v9806
        %v9808 = vmul.f32 %v9786, 1.442695
        %v9809 = vpow.pop %v9808
        %v9810 = vmul.f32 %v9787, 1.442695
        %v9811 = vpow.pop %v9810
        %v9812 = vmul.f32 %v9788, 1.442695
        %v9813 = vpow.pop %v9812
        %v9814 = vmul.f32 %v9789, 1.442695
        %v9815 = vpow.pop %v9814
        %v9816 = vmul.f32 %v9790, 1.442695
        %v9817 = vpow.pop %v9816
        %v9818 = vmul.f32 %v9791, 1.442695
        %v9819 = vpow.pop %v9818
        %v9820 = vmul.f32 %v9792, 1.442695
        %v9821 = vpow.pop %v9820
        %v9822 = vmul.f32 %v9793, 1.442695
        %v9823 = vpow.pop %v9822
        %v9824 = vmul.f32 %v9794, 1.442695
        %v9825 = vpow.pop %v9824
        %v9826 = vmul.f32 %v9795, 1.442695
        %v9827 = vpow.pop %v9826
        %v9828 = vadd.f32 %v9797, 1.0
        %v9829 = vadd.f32 %v9799, 1.0
        %v9830 = vadd.f32 %v9801, 1.0
        %v9831 = vadd.f32 %v9803, 1.0
        %v9832 = vadd.f32 %v9805, 1.0
        %v9833 = vadd.f32 %v9807, 1.0
        %v9834 = vadd.f32 %v9809, 1.0
        %v9835 = vadd.f32 %v9811, 1.0
        %v9836 = vadd.f32 %v9813, 1.0
        %v9837 = vadd.f32 %v9815, 1.0
        %v9838 = vadd.f32 %v9817, 1.0
        %v9839 = vadd.f32 %v9819, 1.0
        %v9840 = vadd.f32 %v9821, 1.0
        %v9841 = vadd.f32 %v9823, 1.0
        %v9842 = vadd.f32 %v9825, 1.0
        %v9843 = vadd.f32 %v9827, 1.0
        %v9844 = vrcp.pop %v9828
        %v9845 = vmul.f32 1.0, %v9844
        %v9846 = vrcp.pop %v9829
        %v9847 = vmul.f32 1.0, %v9846
        %v9848 = vrcp.pop %v9830
        %v9849 = vmul.f32 1.0, %v9848
        %v9850 = vrcp.pop %v9831
        %v9851 = vmul.f32 1.0, %v9850
        %v9852 = vrcp.pop %v9832
        %v9853 = vmul.f32 1.0, %v9852
        %v9854 = vrcp.pop %v9833
        %v9855 = vmul.f32 1.0, %v9854
        %v9856 = vrcp.pop %v9834
        %v9857 = vmul.f32 1.0, %v9856
        %v9858 = vrcp.pop %v9835
        %v9859 = vmul.f32 1.0, %v9858
        %v9860 = vrcp.pop %v9836
        %v9861 = vmul.f32 1.0, %v9860
        %v9862 = vrcp.pop %v9837
        %v9863 = vmul.f32 1.0, %v9862
        %v9864 = vrcp.pop %v9838
        %v9865 = vmul.f32 1.0, %v9864
        %v9866 = vrcp.pop %v9839
        %v9867 = vmul.f32 1.0, %v9866
        %v9868 = vrcp.pop %v9840
        %v9869 = vmul.f32 1.0, %v9868
        %v9870 = vrcp.pop %v9841
        %v9871 = vmul.f32 1.0, %v9870
        %v9872 = vrcp.pop %v9842
        %v9873 = vmul.f32 1.0, %v9872
        %v9874 = vrcp.pop %v9843
        %v9875 = vmul.f32 1.0, %v9874
        %v9876 = vtanh.pop %v9764
        %v9877 = vtanh.pop %v9765
        %v9878 = vtanh.pop %v9766
        %v9879 = vtanh.pop %v9767
        %v9880 = vtanh.pop %v9768
        %v9881 = vtanh.pop %v9769
        %v9882 = vtanh.pop %v9770
        %v9883 = vtanh.pop %v9771
        %v9884 = vtanh.pop %v9772
        %v9885 = vtanh.pop %v9773
        %v9886 = vtanh.pop %v9774
        %v9887 = vtanh.pop %v9775
        %v9888 = vtanh.pop %v9776
        %v9889 = vtanh.pop %v9777
        %v9890 = vtanh.pop %v9778
        %v9891 = vtanh.pop %v9779
        %v9892 = vmul.f32 %v9845, %v9427
        %v9893 = vmul.f32 %v9847, %v9428
        %v9894 = vmul.f32 %v9849, %v9429
        %v9895 = vmul.f32 %v9851, %v9430
        %v9896 = vmul.f32 %v9853, %v9431
        %v9897 = vmul.f32 %v9855, %v9432
        %v9898 = vmul.f32 %v9857, %v9433
        %v9899 = vmul.f32 %v9859, %v9434
        %v9900 = vmul.f32 %v9861, %v9435
        %v9901 = vmul.f32 %v9863, %v9436
        %v9902 = vmul.f32 %v9865, %v9437
        %v9903 = vmul.f32 %v9867, %v9438
        %v9904 = vmul.f32 %v9869, %v9439
        %v9905 = vmul.f32 %v9871, %v9440
        %v9906 = vmul.f32 %v9873, %v9441
        %v9907 = vmul.f32 %v9875, %v9442
        %9924 = vrot.lane.b32.xlu0 %v9876, 64
        %v9925 = vpop.permute.xlu0 %9924
        %9926 = vrot.lane.b32.xlu0 %v9877, 64
        %v9927 = vpop.permute.xlu0 %9926
        %9928 = vrot.lane.b32.xlu0 %v9878, 64
        %v9929 = vpop.permute.xlu0 %9928
        %9930 = vrot.lane.b32.xlu0 %v9879, 64
        %v9931 = vpop.permute.xlu0 %9930
        %9932 = vrot.lane.b32.xlu0 %v9880, 64
        %v9933 = vpop.permute.xlu0 %9932
        %9934 = vrot.lane.b32.xlu0 %v9881, 64
        %v9935 = vpop.permute.xlu0 %9934
        %9936 = vrot.lane.b32.xlu0 %v9882, 64
        %v9937 = vpop.permute.xlu0 %9936
        %9938 = vrot.lane.b32.xlu0 %v9883, 64
        %v9939 = vpop.permute.xlu0 %9938
        %9940 = vrot.lane.b32.xlu0 %v9884, 64
        %v9941 = vpop.permute.xlu0 %9940
        %9942 = vrot.lane.b32.xlu0 %v9885, 64
        %v9943 = vpop.permute.xlu0 %9942
        %9944 = vrot.lane.b32.xlu0 %v9886, 64
        %v9945 = vpop.permute.xlu0 %9944
        %9946 = vrot.lane.b32.xlu0 %v9887, 64
        %v9947 = vpop.permute.xlu0 %9946
        %9948 = vrot.lane.b32.xlu0 %v9888, 64
        %v9949 = vpop.permute.xlu0 %9948
        %9950 = vrot.lane.b32.xlu0 %v9889, 64
        %v9951 = vpop.permute.xlu0 %9950
        %9952 = vrot.lane.b32.xlu0 %v9890, 64
        %v9953 = vpop.permute.xlu0 %9952
        %9954 = vrot.lane.b32.xlu0 %v9891, 64
        %v9955 = vpop.permute.xlu0 %9954
        %v9972 = vmul.f32 %v9845, %v9925
        %v9973 = vmul.f32 %v9847, %v9927
        %v9974 = vmul.f32 %v9849, %v9929
        %v9975 = vmul.f32 %v9851, %v9931
        %v9976 = vmul.f32 %v9853, %v9933
        %v9977 = vmul.f32 %v9855, %v9935
        %v9978 = vmul.f32 %v9857, %v9937
        %v9979 = vmul.f32 %v9859, %v9939
        %v9980 = vmul.f32 %v9861, %v9941
        %v9981 = vmul.f32 %v9863, %v9943
        %v9982 = vmul.f32 %v9865, %v9945
        %v9983 = vmul.f32 %v9867, %v9947
        %v9984 = vmul.f32 %v9869, %v9949
        %v9985 = vmul.f32 %v9871, %v9951
        %v9986 = vmul.f32 %v9873, %v9953
        %v9987 = vmul.f32 %v9875, %v9955
        %10004 = vrot.lane.b32.xlu0 %v9972, 32
        %v10005 = vpop.permute.xlu0 %10004
        %10006 = vrot.lane.b32.xlu0 %v9973, 32
        %v10007 = vpop.permute.xlu0 %10006
        %10008 = vrot.lane.b32.xlu0 %v9974, 32
        %v10009 = vpop.permute.xlu0 %10008
        %10010 = vrot.lane.b32.xlu0 %v9975, 32
        %v10011 = vpop.permute.xlu0 %10010
        %10012 = vrot.lane.b32.xlu0 %v9976, 32
        %v10013 = vpop.permute.xlu0 %10012
        %10014 = vrot.lane.b32.xlu0 %v9977, 32
        %v10015 = vpop.permute.xlu0 %10014
        %10016 = vrot.lane.b32.xlu0 %v9978, 32
        %v10017 = vpop.permute.xlu0 %10016
        %10018 = vrot.lane.b32.xlu0 %v9979, 32
        %v10019 = vpop.permute.xlu0 %10018
        %10020 = vrot.lane.b32.xlu0 %v9980, 32
        %v10021 = vpop.permute.xlu0 %10020
        %10022 = vrot.lane.b32.xlu0 %v9981, 32
        %v10023 = vpop.permute.xlu0 %10022
        %10024 = vrot.lane.b32.xlu0 %v9982, 32
        %v10025 = vpop.permute.xlu0 %10024
        %10026 = vrot.lane.b32.xlu0 %v9983, 32
        %v10027 = vpop.permute.xlu0 %10026
        %10028 = vrot.lane.b32.xlu0 %v9984, 32
        %v10029 = vpop.permute.xlu0 %10028
        %10030 = vrot.lane.b32.xlu0 %v9985, 32
        %v10031 = vpop.permute.xlu0 %10030
        %10032 = vrot.lane.b32.xlu0 %v9986, 32
        %v10033 = vpop.permute.xlu0 %10032
        %10034 = vrot.lane.b32.xlu0 %v9987, 32
        %v10035 = vpop.permute.xlu0 %10034
        %v10052 = vadd.f32 %v9892, %v10005
        %v10053 = vadd.f32 %v9893, %v10007
        %v10054 = vadd.f32 %v9894, %v10009
        %v10055 = vadd.f32 %v9895, %v10011
        %v10056 = vadd.f32 %v9896, %v10013
        %v10057 = vadd.f32 %v9897, %v10015
        %v10058 = vadd.f32 %v9898, %v10017
        %v10059 = vadd.f32 %v9899, %v10019
        %v10060 = vadd.f32 %v9900, %v10021
        %v10061 = vadd.f32 %v9901, %v10023
        %v10062 = vadd.f32 %v9902, %v10025
        %v10063 = vadd.f32 %v9903, %v10027
        %v10064 = vadd.f32 %v9904, %v10029
        %v10065 = vadd.f32 %v9905, %v10031
        %v10066 = vadd.f32 %v9906, %v10033
        %v10067 = vadd.f32 %v9907, %v10035
        %v10068 = vtanh.pop %v10052
        %v10069 = vtanh.pop %v10053
        %v10070 = vtanh.pop %v10054
        %v10071 = vtanh.pop %v10055
        %v10072 = vtanh.pop %v10056
        %v10073 = vtanh.pop %v10057
        %v10074 = vtanh.pop %v10058
        %v10075 = vtanh.pop %v10059
        %v10076 = vtanh.pop %v10060
        %v10077 = vtanh.pop %v10061
        %v10078 = vtanh.pop %v10062
        %v10079 = vtanh.pop %v10063
        %v10080 = vtanh.pop %v10064
        %v10081 = vtanh.pop %v10065
        %v10082 = vtanh.pop %v10066
        %v10083 = vtanh.pop %v10067
        %10100 = vrot.lane.b32.xlu0 %v10068, 64
        %v10101 = vpop.permute.xlu0 %10100
        %10102 = vrot.lane.b32.xlu0 %v10069, 64
        %v10103 = vpop.permute.xlu0 %10102
        %10104 = vrot.lane.b32.xlu0 %v10070, 64
        %v10105 = vpop.permute.xlu0 %10104
        %10106 = vrot.lane.b32.xlu0 %v10071, 64
        %v10107 = vpop.permute.xlu0 %10106
        %10108 = vrot.lane.b32.xlu0 %v10072, 64
        %v10109 = vpop.permute.xlu0 %10108
        %10110 = vrot.lane.b32.xlu0 %v10073, 64
        %v10111 = vpop.permute.xlu0 %10110
        %10112 = vrot.lane.b32.xlu0 %v10074, 64
        %v10113 = vpop.permute.xlu0 %10112
        %10114 = vrot.lane.b32.xlu0 %v10075, 64
        %v10115 = vpop.permute.xlu0 %10114
        %10116 = vrot.lane.b32.xlu0 %v10076, 64
        %v10117 = vpop.permute.xlu0 %10116
        %10118 = vrot.lane.b32.xlu0 %v10077, 64
        %v10119 = vpop.permute.xlu0 %10118
        %10120 = vrot.lane.b32.xlu0 %v10078, 64
        %v10121 = vpop.permute.xlu0 %10120
        %10122 = vrot.lane.b32.xlu0 %v10079, 64
        %v10123 = vpop.permute.xlu0 %10122
        %10124 = vrot.lane.b32.xlu0 %v10080, 64
        %v10125 = vpop.permute.xlu0 %10124
        %10126 = vrot.lane.b32.xlu0 %v10081, 64
        %v10127 = vpop.permute.xlu0 %10126
        %10128 = vrot.lane.b32.xlu0 %v10082, 64
        %v10129 = vpop.permute.xlu0 %10128
        %10130 = vrot.lane.b32.xlu0 %v10083, 64
        %v10131 = vpop.permute.xlu0 %10130
        %v10148 = vmul.f32 %v9845, %v10101
        %v10149 = vmul.f32 %v9847, %v10103
        %v10150 = vmul.f32 %v9849, %v10105
        %v10151 = vmul.f32 %v9851, %v10107
        %v10152 = vmul.f32 %v9853, %v10109
        %v10153 = vmul.f32 %v9855, %v10111
        %v10154 = vmul.f32 %v9857, %v10113
        %v10155 = vmul.f32 %v9859, %v10115
        %v10156 = vmul.f32 %v9861, %v10117
        %v10157 = vmul.f32 %v9863, %v10119
        %v10158 = vmul.f32 %v9865, %v10121
        %v10159 = vmul.f32 %v9867, %v10123
        %v10160 = vmul.f32 %v9869, %v10125
        %v10161 = vmul.f32 %v9871, %v10127
        %v10162 = vmul.f32 %v9873, %v10129
        %v10163 = vmul.f32 %v9875, %v10131
        %10180 = vrot.lane.b32.xlu0 %v8273, 64
        %v10181 = vpop.permute.xlu0 %10180
        %10182 = vrot.lane.b32.xlu0 %v8274, 64
        %v10183 = vpop.permute.xlu0 %10182
        %10184 = vrot.lane.b32.xlu0 %v8275, 64
        %v10185 = vpop.permute.xlu0 %10184
        %10186 = vrot.lane.b32.xlu0 %v8276, 64
        %v10187 = vpop.permute.xlu0 %10186
        %10188 = vrot.lane.b32.xlu0 %v8277, 64
        %v10189 = vpop.permute.xlu0 %10188
        %10190 = vrot.lane.b32.xlu0 %v8278, 64
        %v10191 = vpop.permute.xlu0 %10190
        %10192 = vrot.lane.b32.xlu0 %v8279, 64
        %v10193 = vpop.permute.xlu0 %10192
        %10194 = vrot.lane.b32.xlu0 %v8280, 64
        %v10195 = vpop.permute.xlu0 %10194
        %10196 = vrot.lane.b32.xlu0 %v8281, 64
        %v10197 = vpop.permute.xlu0 %10196
        %10198 = vrot.lane.b32.xlu0 %v8282, 64
        %v10199 = vpop.permute.xlu0 %10198
        %10200 = vrot.lane.b32.xlu0 %v8283, 64
        %v10201 = vpop.permute.xlu0 %10200
        %10202 = vrot.lane.b32.xlu0 %v8284, 64
        %v10203 = vpop.permute.xlu0 %10202
        %10204 = vrot.lane.b32.xlu0 %v8285, 64
        %v10205 = vpop.permute.xlu0 %10204
        %10206 = vrot.lane.b32.xlu0 %v8286, 64
        %v10207 = vpop.permute.xlu0 %10206
        %10208 = vrot.lane.b32.xlu0 %v8287, 64
        %v10209 = vpop.permute.xlu0 %10208
        %10210 = vrot.lane.b32.xlu0 %v8288, 64
        %v10211 = vpop.permute.xlu0 %10210
        %10228 = vrot.lane.b32.xlu0 %v8898, 96
        %v10229 = vpop.permute.xlu0 %10228
        %10230 = vrot.lane.b32.xlu0 %v8899, 96
        %v10231 = vpop.permute.xlu0 %10230
        %10232 = vrot.lane.b32.xlu0 %v8900, 96
        %v10233 = vpop.permute.xlu0 %10232
        %10234 = vrot.lane.b32.xlu0 %v8901, 96
        %v10235 = vpop.permute.xlu0 %10234
        %10236 = vrot.lane.b32.xlu0 %v8902, 96
        %v10237 = vpop.permute.xlu0 %10236
        %10238 = vrot.lane.b32.xlu0 %v8903, 96
        %v10239 = vpop.permute.xlu0 %10238
        %10240 = vrot.lane.b32.xlu0 %v8904, 96
        %v10241 = vpop.permute.xlu0 %10240
        %10242 = vrot.lane.b32.xlu0 %v8905, 96
        %v10243 = vpop.permute.xlu0 %10242
        %10244 = vrot.lane.b32.xlu0 %v8906, 96
        %v10245 = vpop.permute.xlu0 %10244
        %10246 = vrot.lane.b32.xlu0 %v8907, 96
        %v10247 = vpop.permute.xlu0 %10246
        %10248 = vrot.lane.b32.xlu0 %v8908, 96
        %v10249 = vpop.permute.xlu0 %10248
        %10250 = vrot.lane.b32.xlu0 %v8909, 96
        %v10251 = vpop.permute.xlu0 %10250
        %10252 = vrot.lane.b32.xlu0 %v8910, 96
        %v10253 = vpop.permute.xlu0 %10252
        %10254 = vrot.lane.b32.xlu0 %v8911, 96
        %v10255 = vpop.permute.xlu0 %10254
        %10256 = vrot.lane.b32.xlu0 %v8912, 96
        %v10257 = vpop.permute.xlu0 %10256
        %10258 = vrot.lane.b32.xlu0 %v8913, 96
        %v10259 = vpop.permute.xlu0 %10258
        %10292 = vrot.lane.b32.xlu0 %v10148, 32
        %v10293 = vpop.permute.xlu0 %10292
        %10294 = vrot.lane.b32.xlu0 %v10149, 32
        %v10295 = vpop.permute.xlu0 %10294
        %10296 = vrot.lane.b32.xlu0 %v10150, 32
        %v10297 = vpop.permute.xlu0 %10296
        %10298 = vrot.lane.b32.xlu0 %v10151, 32
        %v10299 = vpop.permute.xlu0 %10298
        %10300 = vrot.lane.b32.xlu0 %v10152, 32
        %v10301 = vpop.permute.xlu0 %10300
        %10302 = vrot.lane.b32.xlu0 %v10153, 32
        %v10303 = vpop.permute.xlu0 %10302
        %10304 = vrot.lane.b32.xlu0 %v10154, 32
        %v10305 = vpop.permute.xlu0 %10304
        %10306 = vrot.lane.b32.xlu0 %v10155, 32
        %v10307 = vpop.permute.xlu0 %10306
        %10308 = vrot.lane.b32.xlu0 %v10156, 32
        %v10309 = vpop.permute.xlu0 %10308
        %10310 = vrot.lane.b32.xlu0 %v10157, 32
        %v10311 = vpop.permute.xlu0 %10310
        %10312 = vrot.lane.b32.xlu0 %v10158, 32
        %v10313 = vpop.permute.xlu0 %10312
        %10314 = vrot.lane.b32.xlu0 %v10159, 32
        %v10315 = vpop.permute.xlu0 %10314
        %10316 = vrot.lane.b32.xlu0 %v10160, 32
        %v10317 = vpop.permute.xlu0 %10316
        %10318 = vrot.lane.b32.xlu0 %v10161, 32
        %v10319 = vpop.permute.xlu0 %10318
        %10320 = vrot.lane.b32.xlu0 %v10162, 32
        %v10321 = vpop.permute.xlu0 %10320
        %10322 = vrot.lane.b32.xlu0 %v10163, 32
        %v10323 = vpop.permute.xlu0 %10322
        %v10324 = vsel %vm7115, %v7681, %v10181
        %v10325 = vsel %vm7115, %v7683, %v10183
        %v10326 = vsel %vm7115, %v7685, %v10185
        %v10327 = vsel %vm7115, %v7687, %v10187
        %v10328 = vsel %vm7115, %v7689, %v10189
        %v10329 = vsel %vm7115, %v7691, %v10191
        %v10330 = vsel %vm7115, %v7693, %v10193
        %v10331 = vsel %vm7115, %v7695, %v10195
        %v10332 = vsel %vm7115, %v7697, %v10197
        %v10333 = vsel %vm7115, %v7699, %v10199
        %v10334 = vsel %vm7115, %v7701, %v10201
        %v10335 = vsel %vm7115, %v7703, %v10203
        %v10336 = vsel %vm7115, %v7705, %v10205
        %v10337 = vsel %vm7115, %v7707, %v10207
        %v10338 = vsel %vm7115, %v7709, %v10209
        %v10339 = vsel %vm7115, %v7711, %v10211
        %v10340 = vsel %vm785, %v10324, %v10229
        %v10341 = vsel %vm785, %v10325, %v10231
        %v10342 = vsel %vm785, %v10326, %v10233
        %v10343 = vsel %vm785, %v10327, %v10235
        %v10344 = vsel %vm785, %v10328, %v10237
        %v10345 = vsel %vm785, %v10329, %v10239
        %v10346 = vsel %vm785, %v10330, %v10241
        %v10347 = vsel %vm785, %v10331, %v10243
        %v10348 = vsel %vm785, %v10332, %v10245
        %v10349 = vsel %vm785, %v10333, %v10247
        %v10350 = vsel %vm785, %v10334, %v10249
        %v10351 = vsel %vm785, %v10335, %v10251
        %v10352 = vsel %vm785, %v10336, %v10253
        %v10353 = vsel %vm785, %v10337, %v10255
        %v10354 = vsel %vm785, %v10338, %v10257
        %v10355 = vsel %vm785, %v10339, %v10259
        %vm10356 = vcmask 785408
        %v10357 = vsel %vm10356, %v10340, %v9523
        %v10358 = vsel %vm10356, %v10341, %v9524
        %v10359 = vsel %vm10356, %v10342, %v9525
        %v10360 = vsel %vm10356, %v10343, %v9526
        %v10361 = vsel %vm10356, %v10344, %v9527
        %v10362 = vsel %vm10356, %v10345, %v9528
        %v10363 = vsel %vm10356, %v10346, %v9529
        %v10364 = vsel %vm10356, %v10347, %v9530
        %v10365 = vsel %vm10356, %v10348, %v9531
        %v10366 = vsel %vm10356, %v10349, %v9532
        %v10367 = vsel %vm10356, %v10350, %v9533
        %v10368 = vsel %vm10356, %v10351, %v9534
        %v10369 = vsel %vm10356, %v10352, %v9535
        %v10370 = vsel %vm10356, %v10353, %v9536
        %v10371 = vsel %vm10356, %v10354, %v9537
        %v10372 = vsel %vm10356, %v10355, %v9538
        %v10373 = vld [vmem:[%s1 + $0x68] sm:$0xff]
        %v10374 = vld [vmem:[%s1 + $0x70] sm:$0xff]
        %v10375 = vld [vmem:[%s1 + $0x78] sm:$0xff]
        %v10376 = vld [vmem:[%s1 + $0x80] sm:$0xff]
        %v10377 = vld [vmem:[%s1 + $0x88] sm:$0xff]
        %v10378 = vld [vmem:[%s1 + $0x90] sm:$0xff]
        %v10379 = vld [vmem:[%s1 + $0x98] sm:$0xff]
        %v10380 = vld [vmem:[%s1 + $0xa0] sm:$0xff]
        %v10381 = vld [vmem:[%s1 + $0xa8] sm:$0xff]
        %v10382 = vld [vmem:[%s1 + $0xb0] sm:$0xff]
        %v10383 = vld [vmem:[%s1 + $0xb8] sm:$0xff]
        %v10384 = vld [vmem:[%s1 + $0xc0] sm:$0xff]
        %v10385 = vld [vmem:[%s1 + $0xc8] sm:$0xff]
        %v10386 = vld [vmem:[%s1 + $0xd0] sm:$0xff]
        %v10387 = vld [vmem:[%s1 + $0xd8] sm:$0xff]
        %v10388 = vld [vmem:[%s1 + $0xe0] sm:$0xff]
        %v10389 = vld [vmem:[%s1 + $0xe8] sm:$0xff]
        %v10390 = vld [vmem:[%s1 + $0xf0] sm:$0xff]
        %v10391 = vld [vmem:[%s1 + $0xf8] sm:$0xff]
        %v10392 = vld [vmem:[%s1 + $0x100] sm:$0xff]
        %v10393 = vld [vmem:[%s1 + $0x108] sm:$0x1]
        %v10394 = vlaneseq
        %v10395 = vshrl.u32 %v10394, 7
        %v10396 = vsub.s32 0, %v10395
        %v10397 = vrot.slane %v10393, %v10396
        %v10398 = vsel %vm7115, %v10293, 0
        %v10400 = vsel %vm7115, %v10295, 0
        %v10402 = vsel %vm7115, %v10297, 0
        %v10404 = vsel %vm7115, %v10299, 0
        %v10406 = vsel %vm7115, %v10301, 0
        %v10408 = vsel %vm7115, %v10303, 0
        %v10410 = vsel %vm7115, %v10305, 0
        %v10412 = vsel %vm7115, %v10307, 0
        %v10414 = vsel %vm7115, %v10309, 0
        %v10416 = vsel %vm7115, %v10311, 0
        %v10418 = vsel %vm7115, %v10313, 0
        %v10420 = vsel %vm7115, %v10315, 0
        %v10422 = vsel %vm7115, %v10317, 0
        %v10424 = vsel %vm7115, %v10319, 0
        %v10426 = vsel %vm7115, %v10321, 0
        %v10428 = vsel %vm7115, %v10323, 0
        %10430 = vmatprep.subr.mxu0 0.0
        %10431 = vmatpush1.msra.mxu0 %v10388
        %10432 = vmatprep.subr.mxu0 0.0
        %10433 = vmatpush1.msra.mxu0 %v10387
        %10434 = vmatprep.subr.mxu0 0.0
        %10435 = vmatpush1.msra.mxu0 %v10386
        %10436 = vmatprep.subr.mxu0 0.0
        %10437 = vmatpush1.msra.mxu0 %v10385
        %10438 = vmatprep.subr.mxu0 0.0
        %10439 = vmatpush1.msra.mxu0 %v10384
        %10440 = vmatprep.subr.mxu0 0.0
        %10441 = vmatpush1.msra.mxu0 %v10383
        %10442 = vmatprep.subr.mxu0 0.0
        %10443 = vmatpush1.msra.mxu0 %v10382
        %10444 = vmatprep.subr.mxu0 0.0
        %10445 = vmatpush1.msra.mxu0 %v10381
        %10446 = vmatprep.subr.mxu0 0.0
        %10447 = vmatpush1.msra.mxu0 %v10380
        %10448 = vmatprep.subr.mxu0 0.0
        %10449 = vmatpush1.msra.mxu0 %v10379
        %10450 = vmatprep.subr.mxu0 0.0
        %10451 = vmatpush1.msra.mxu0 %v10378
        %10452 = vmatprep.subr.mxu0 0.0
        %10453 = vmatpush1.msra.mxu0 %v10377
        %10454 = vmatprep.subr.mxu0 0.0
        %10455 = vmatpush1.msra.mxu0 %v10376
        %10456 = vmatprep.subr.mxu0 0.0
        %10457 = vmatpush1.msra.mxu0 %v10375
        %10458 = vmatprep.subr.mxu0 0.0
        %10459 = vmatpush1.msra.mxu0 %v10374
        %10460 = vmatprep.subr.mxu0 0.0
        %10461 = vmatpush1.msra.mxu0 %v10373
        %10462 = vmatprep.subr.mxu0 0.0
        %10463 = vmatpush2.msra.mxu0 0.0
        %10464 = vmatprep.subr.mxu0 0.0
        %10465 = vmatpush2.msra.mxu0 0.0
        %10466 = vmatprep.subr.mxu0 0.0
        %10467 = vmatpush2.msra.mxu0 0.0
        %10468 = vmatprep.subr.mxu0 0.0
        %10469 = vmatpush2.msra.mxu0 0.0
        %10470 = vmatprep.subr.mxu0 0.0
        %10471 = vmatpush2.msra.mxu0 0.0
        %10472 = vmatprep.subr.mxu0 0.0
        %10473 = vmatpush2.msra.mxu0 0.0
        %10474 = vmatprep.subr.mxu0 0.0
        %10475 = vmatpush2.msra.mxu0 0.0
        %10476 = vmatprep.subr.mxu0 0.0
        %10477 = vmatpush2.msra.mxu0 0.0
        %10478 = vmatprep.subr.mxu0 0.0
        %10479 = vmatpush2.msra.mxu0 0.0
        %10480 = vmatprep.subr.mxu0 0.0
        %10481 = vmatpush2.msra.mxu0 0.0
        %10482 = vmatprep.subr.mxu0 0.0
        %10483 = vmatpush2.msra.mxu0 0.0
        %10484 = vmatprep.subr.mxu0 0.0
        %10485 = vmatpush2.msra.mxu0 0.0
        %10486 = vmatprep.subr.mxu0 0.0
        %10487 = vmatpush2.msra.mxu0 %v10392
        %10488 = vmatprep.subr.mxu0 0.0
        %10489 = vmatpush2.msra.mxu0 %v10391
        %10490 = vmatprep.subr.mxu0 0.0
        %10491 = vmatpush2.msra.mxu0 %v10390
        %10492 = vmatprep.subr.mxu0 0.0
        %10493 = vmatpush2.msra.mxu0 %v10389
        %10494 = vmatprep.mubr.f32.mxu0 %v10398
        %10495 = vmatmul.mubr.f32.gmra.mxu0 %v10357
        %v10496 = vpop.f32.mrf.mxu0
        %v10497 = vadd.f32 %v10397, %v10496
        %v10498 = vpop.f32.mrf.mxu0
        %10499 = vmatprep.mubr.f32.mxu0 %v10400
        %10500 = vmatmul.mubr.f32.gmra.mxu0 %v10358
        %v10501 = vpop.f32.mrf.mxu0
        %v10502 = vadd.f32 %v10397, %v10501
        %v10503 = vpop.f32.mrf.mxu0
        %10504 = vmatprep.mubr.f32.mxu0 %v10402
        %10505 = vmatmul.mubr.f32.gmra.mxu0 %v10359
        %v10506 = vpop.f32.mrf.mxu0
        %v10507 = vadd.f32 %v10397, %v10506
        %v10508 = vpop.f32.mrf.mxu0
        %10509 = vmatprep.mubr.f32.mxu0 %v10404
        %10510 = vmatmul.mubr.f32.gmra.mxu0 %v10360
        %v10511 = vpop.f32.mrf.mxu0
        %v10512 = vadd.f32 %v10397, %v10511
        %v10513 = vpop.f32.mrf.mxu0
        %10514 = vmatprep.mubr.f32.mxu0 %v10406
        %10515 = vmatmul.mubr.f32.gmra.mxu0 %v10361
        %v10516 = vpop.f32.mrf.mxu0
        %v10517 = vadd.f32 %v10397, %v10516
        %v10518 = vpop.f32.mrf.mxu0
        %10519 = vmatprep.mubr.f32.mxu0 %v10408
        %10520 = vmatmul.mubr.f32.gmra.mxu0 %v10362
        %v10521 = vpop.f32.mrf.mxu0
        %v10522 = vadd.f32 %v10397, %v10521
        %v10523 = vpop.f32.mrf.mxu0
        %10524 = vmatprep.mubr.f32.mxu0 %v10410
        %10525 = vmatmul.mubr.f32.gmra.mxu0 %v10363
        %v10526 = vpop.f32.mrf.mxu0
        %v10527 = vadd.f32 %v10397, %v10526
        %v10528 = vpop.f32.mrf.mxu0
        %10529 = vmatprep.mubr.f32.mxu0 %v10412
        %10530 = vmatmul.mubr.f32.gmra.mxu0 %v10364
        %v10531 = vpop.f32.mrf.mxu0
        %v10532 = vadd.f32 %v10397, %v10531
        %v10533 = vpop.f32.mrf.mxu0
        %10534 = vmatprep.mubr.f32.mxu0 %v10414
        %10535 = vmatmul.mubr.f32.gmra.mxu0 %v10365
        %v10536 = vpop.f32.mrf.mxu0
        %v10537 = vadd.f32 %v10397, %v10536
        %v10538 = vpop.f32.mrf.mxu0
        %10539 = vmatprep.mubr.f32.mxu0 %v10416
        %10540 = vmatmul.mubr.f32.gmra.mxu0 %v10366
        %v10541 = vpop.f32.mrf.mxu0
        %v10542 = vadd.f32 %v10397, %v10541
        %v10543 = vpop.f32.mrf.mxu0
        %10544 = vmatprep.mubr.f32.mxu0 %v10418
        %10545 = vmatmul.mubr.f32.gmra.mxu0 %v10367
        %v10546 = vpop.f32.mrf.mxu0
        %v10547 = vadd.f32 %v10397, %v10546
        %v10548 = vpop.f32.mrf.mxu0
        %10549 = vmatprep.mubr.f32.mxu0 %v10420
        %10550 = vmatmul.mubr.f32.gmra.mxu0 %v10368
        %v10551 = vpop.f32.mrf.mxu0
        %v10552 = vadd.f32 %v10397, %v10551
        %v10553 = vpop.f32.mrf.mxu0
        %10554 = vmatprep.mubr.f32.mxu0 %v10422
        %10555 = vmatmul.mubr.f32.gmra.mxu0 %v10369
        %v10556 = vpop.f32.mrf.mxu0
        %v10557 = vadd.f32 %v10397, %v10556
        %v10558 = vpop.f32.mrf.mxu0
        %10559 = vmatprep.mubr.f32.mxu0 %v10424
        %10560 = vmatmul.mubr.f32.gmra.mxu0 %v10370
        %v10561 = vpop.f32.mrf.mxu0
        %v10562 = vadd.f32 %v10397, %v10561
        %v10563 = vpop.f32.mrf.mxu0
        %10564 = vmatprep.mubr.f32.mxu0 %v10426
        %10565 = vmatmul.mubr.f32.gmra.mxu0 %v10371
        %v10566 = vpop.f32.mrf.mxu0
        %v10567 = vadd.f32 %v10397, %v10566
        %v10568 = vpop.f32.mrf.mxu0
        %10569 = vmatprep.mubr.f32.mxu0 %v10428
        %10570 = vmatmul.mubr.f32.gmra.mxu0 %v10372
        %v10571 = vpop.f32.mrf.mxu0
        %v10572 = vadd.f32 %v10397, %v10571
        %v10573 = vpop.f32.mrf.mxu0
        %10574 = vdwg.mxu0
        %v10575 = vmax.f32 %v10497, 0.0
        %v10576 = vmax.f32 %v10502, 0.0
        %v10577 = vmax.f32 %v10507, 0.0
        %v10578 = vmax.f32 %v10512, 0.0
        %v10579 = vmax.f32 %v10517, 0.0
        %v10580 = vmax.f32 %v10522, 0.0
        %v10581 = vmax.f32 %v10527, 0.0
        %v10582 = vmax.f32 %v10532, 0.0
        %v10583 = vmax.f32 %v10537, 0.0
        %v10584 = vmax.f32 %v10542, 0.0
        %v10585 = vmax.f32 %v10547, 0.0
        %v10586 = vmax.f32 %v10552, 0.0
        %v10587 = vmax.f32 %v10557, 0.0
        %v10588 = vmax.f32 %v10562, 0.0
        %v10589 = vmax.f32 %v10567, 0.0
        %v10590 = vmax.f32 %v10572, 0.0
        %v10591 = vld [vmem:[%s1 + $0x110] sm:$0xff]
        %v10592 = vld [vmem:[%s1 + $0x118] sm:$0xff]
        %v10593 = vld [vmem:[%s1 + $0x120] sm:$0xff]
        %v10594 = vld [vmem:[%s1 + $0x128] sm:$0xff]
        %v10595 = vld [vmem:[%s1 + $0x130] sm:$0x1]
        %v10596 = vlaneseq
        %v10597 = vshrl.u32 %v10596, 7
        %v10598 = vsub.s32 0, %v10597
        %v10599 = vrot.slane %v10595, %v10598
        %v10601 = vsel %vm7115, %v10575, 0
        %v10604 = vsel %vm7115, %v10576, 0
        %v10607 = vsel %vm7115, %v10577, 0
        %v10610 = vsel %vm7115, %v10578, 0
        %v10613 = vsel %vm7115, %v10579, 0
        %v10616 = vsel %vm7115, %v10580, 0
        %v10619 = vsel %vm7115, %v10581, 0
        %v10622 = vsel %vm7115, %v10582, 0
        %v10625 = vsel %vm7115, %v10583, 0
        %v10628 = vsel %vm7115, %v10584, 0
        %v10631 = vsel %vm7115, %v10585, 0
        %v10634 = vsel %vm7115, %v10586, 0
        %v10637 = vsel %vm7115, %v10587, 0
        %v10640 = vsel %vm7115, %v10588, 0
        %v10643 = vsel %vm7115, %v10589, 0
        %v10646 = vsel %vm7115, %v10590, 0
        %10648 = vmatprep.subr.mxu0 0.0
        %10649 = vmatpush1.msra.mxu0 0.0
        %10650 = vmatprep.subr.mxu0 0.0
        %10651 = vmatpush1.msra.mxu0 0.0
        %10652 = vmatprep.subr.mxu0 0.0
        %10653 = vmatpush1.msra.mxu0 0.0
        %10654 = vmatprep.subr.mxu0 0.0
        %10655 = vmatpush1.msra.mxu0 0.0
        %10656 = vmatprep.subr.mxu0 0.0
        %10657 = vmatpush1.msra.mxu0 0.0
        %10658 = vmatprep.subr.mxu0 0.0
        %10659 = vmatpush1.msra.mxu0 0.0
        %10660 = vmatprep.subr.mxu0 0.0
        %10661 = vmatpush1.msra.mxu0 0.0
        %10662 = vmatprep.subr.mxu0 0.0
        %10663 = vmatpush1.msra.mxu0 0.0
        %10664 = vmatprep.subr.mxu0 0.0
        %10665 = vmatpush1.msra.mxu0 0.0
        %10666 = vmatprep.subr.mxu0 0.0
        %10667 = vmatpush1.msra.mxu0 0.0
        %10668 = vmatprep.subr.mxu0 0.0
        %10669 = vmatpush1.msra.mxu0 0.0
        %10670 = vmatprep.subr.mxu0 0.0
        %10671 = vmatpush1.msra.mxu0 0.0
        %10672 = vmatprep.subr.mxu0 0.0
        %10673 = vmatpush1.msra.mxu0 %v10594
        %10674 = vmatprep.subr.mxu0 0.0
        %10675 = vmatpush1.msra.mxu0 %v10593
        %10676 = vmatprep.subr.mxu0 0.0
        %10677 = vmatpush1.msra.mxu0 %v10592
        %10678 = vmatprep.subr.mxu0 0.0
        %10679 = vmatpush1.msra.mxu0 %v10591
        %10680 = vmatprep.subr.mxu0 0.0
        %10681 = vmatpush2.msra.mxu0 0.0
        %10682 = vmatprep.subr.mxu0 0.0
        %10683 = vmatpush2.msra.mxu0 0.0
        %10684 = vmatprep.subr.mxu0 0.0
        %10685 = vmatpush2.msra.mxu0 0.0
        %10686 = vmatprep.subr.mxu0 0.0
        %10687 = vmatpush2.msra.mxu0 0.0
        %10688 = vmatprep.subr.mxu0 0.0
        %10689 = vmatpush2.msra.mxu0 0.0
        %10690 = vmatprep.subr.mxu0 0.0
        %10691 = vmatpush2.msra.mxu0 0.0
        %10692 = vmatprep.subr.mxu0 0.0
        %10693 = vmatpush2.msra.mxu0 0.0
        %10694 = vmatprep.subr.mxu0 0.0
        %10695 = vmatpush2.msra.mxu0 0.0
        %10696 = vmatprep.subr.mxu0 0.0
        %10697 = vmatpush2.msra.mxu0 0.0
        %10698 = vmatprep.subr.mxu0 0.0
        %10699 = vmatpush2.msra.mxu0 0.0
        %10700 = vmatprep.subr.mxu0 0.0
        %10701 = vmatpush2.msra.mxu0 0.0
        %10702 = vmatprep.subr.mxu0 0.0
        %10703 = vmatpush2.msra.mxu0 0.0
        %10704 = vmatprep.subr.mxu0 0.0
        %10705 = vmatpush2.msra.mxu0 0.0
        %10706 = vmatprep.subr.mxu0 0.0
        %10707 = vmatpush2.msra.mxu0 0.0
        %10708 = vmatprep.subr.mxu0 0.0
        %10709 = vmatpush2.msra.mxu0 0.0
        %10710 = vmatprep.subr.mxu0 0.0
        %10711 = vmatpush2.msra.mxu0 0.0
        %10712 = vmatprep.mubr.f32.mxu0 0.0
        %10713 = vmatmul.mubr.f32.gmra.mxu0 %v10601
        %v10714 = vpop.f32.mrf.mxu0
        %v10715 = vadd.f32 %v10599, %v10714
        %v10716 = vpop.f32.mrf.mxu0
        %10717 = vmatprep.mubr.f32.mxu0 0.0
        %10718 = vmatmul.mubr.f32.gmra.mxu0 %v10604
        %v10719 = vpop.f32.mrf.mxu0
        %v10720 = vadd.f32 %v10599, %v10719
        %v10721 = vpop.f32.mrf.mxu0
        %10722 = vmatprep.mubr.f32.mxu0 0.0
        %10723 = vmatmul.mubr.f32.gmra.mxu0 %v10607
        %v10724 = vpop.f32.mrf.mxu0
        %v10725 = vadd.f32 %v10599, %v10724
        %v10726 = vpop.f32.mrf.mxu0
        %10727 = vmatprep.mubr.f32.mxu0 0.0
        %10728 = vmatmul.mubr.f32.gmra.mxu0 %v10610
        %v10729 = vpop.f32.mrf.mxu0
        %v10730 = vadd.f32 %v10599, %v10729
        %v10731 = vpop.f32.mrf.mxu0
        %10732 = vmatprep.mubr.f32.mxu0 0.0
        %10733 = vmatmul.mubr.f32.gmra.mxu0 %v10613
        %v10734 = vpop.f32.mrf.mxu0
        %v10735 = vadd.f32 %v10599, %v10734
        %v10736 = vpop.f32.mrf.mxu0
        %10737 = vmatprep.mubr.f32.mxu0 0.0
        %10738 = vmatmul.mubr.f32.gmra.mxu0 %v10616
        %v10739 = vpop.f32.mrf.mxu0
        %v10740 = vadd.f32 %v10599, %v10739
        %v10741 = vpop.f32.mrf.mxu0
        %10742 = vmatprep.mubr.f32.mxu0 0.0
        %10743 = vmatmul.mubr.f32.gmra.mxu0 %v10619
        %v10744 = vpop.f32.mrf.mxu0
        %v10745 = vadd.f32 %v10599, %v10744
        %v10746 = vpop.f32.mrf.mxu0
        %10747 = vmatprep.mubr.f32.mxu0 0.0
        %10748 = vmatmul.mubr.f32.gmra.mxu0 %v10622
        %v10749 = vpop.f32.mrf.mxu0
        %v10750 = vadd.f32 %v10599, %v10749
        %v10751 = vpop.f32.mrf.mxu0
        %10752 = vmatprep.mubr.f32.mxu0 0.0
        %10753 = vmatmul.mubr.f32.gmra.mxu0 %v10625
        %v10754 = vpop.f32.mrf.mxu0
        %v10755 = vadd.f32 %v10599, %v10754
        %v10756 = vpop.f32.mrf.mxu0
        %10757 = vmatprep.mubr.f32.mxu0 0.0
        %10758 = vmatmul.mubr.f32.gmra.mxu0 %v10628
        %v10759 = vpop.f32.mrf.mxu0
        %v10760 = vadd.f32 %v10599, %v10759
        %v10761 = vpop.f32.mrf.mxu0
        %10762 = vmatprep.mubr.f32.mxu0 0.0
        %10763 = vmatmul.mubr.f32.gmra.mxu0 %v10631
        %v10764 = vpop.f32.mrf.mxu0
        %v10765 = vadd.f32 %v10599, %v10764
        %v10766 = vpop.f32.mrf.mxu0
        %10767 = vmatprep.mubr.f32.mxu0 0.0
        %10768 = vmatmul.mubr.f32.gmra.mxu0 %v10634
        %v10769 = vpop.f32.mrf.mxu0
        %v10770 = vadd.f32 %v10599, %v10769
        %v10771 = vpop.f32.mrf.mxu0
        %10772 = vmatprep.mubr.f32.mxu0 0.0
        %10773 = vmatmul.mubr.f32.gmra.mxu0 %v10637
        %v10774 = vpop.f32.mrf.mxu0
        %v10775 = vadd.f32 %v10599, %v10774
        %v10776 = vpop.f32.mrf.mxu0
        %10777 = vmatprep.mubr.f32.mxu0 0.0
        %10778 = vmatmul.mubr.f32.gmra.mxu0 %v10640
        %v10779 = vpop.f32.mrf.mxu0
        %v10780 = vadd.f32 %v10599, %v10779
        %v10781 = vpop.f32.mrf.mxu0
        %10782 = vmatprep.mubr.f32.mxu0 0.0
        %10783 = vmatmul.mubr.f32.gmra.mxu0 %v10643
        %v10784 = vpop.f32.mrf.mxu0
        %v10785 = vadd.f32 %v10599, %v10784
        %v10786 = vpop.f32.mrf.mxu0
        %10787 = vmatprep.mubr.f32.mxu0 0.0
        %10788 = vmatmul.mubr.f32.gmra.mxu0 %v10646
        %v10789 = vpop.f32.mrf.mxu0
        %v10790 = vadd.f32 %v10599, %v10789
        %v10791 = vpop.f32.mrf.mxu0
        %10792 = vdwg.mxu0
        %v10793 = vld [vmem:[%s1 + $0x138] sm:$0xff]
        %v10794 = vld [vmem:[%s1 + $0x140] sm:$0x3]
        %v10795 = vld [vmem:[%s1 + $0x148] sm:$0xff]
        %v10796 = vld [vmem:[%s1 + $0x150] sm:$0x3]
        %v10797 = vld [vmem:[%s1 + $0x158] sm:$0x1]
        %v10798 = vmax.f32 %v10715, 0.0
        %v10799 = vmax.f32 %v10720, 0.0
        %v10800 = vmax.f32 %v10725, 0.0
        %v10801 = vmax.f32 %v10730, 0.0
        %v10802 = vmax.f32 %v10735, 0.0
        %v10803 = vmax.f32 %v10740, 0.0
        %v10804 = vmax.f32 %v10745, 0.0
        %v10805 = vmax.f32 %v10750, 0.0
        %v10806 = vmax.f32 %v10755, 0.0
        %v10807 = vmax.f32 %v10760, 0.0
        %v10808 = vmax.f32 %v10765, 0.0
        %v10809 = vmax.f32 %v10770, 0.0
        %v10810 = vmax.f32 %v10775, 0.0
        %v10811 = vmax.f32 %v10780, 0.0
        %v10812 = vmax.f32 %v10785, 0.0
        %v10813 = vmax.f32 %v10790, 0.0
        %vm10814 = vcmask 80896
        %v10816 = vsel %vm10814, %v10806, 0
        %v10819 = vsel %vm10814, %v10807, 0
        %v10822 = vsel %vm10814, %v10808, 0
        %v10825 = vsel %vm10814, %v10809, 0
        %v10828 = vsel %vm10814, %v10810, 0
        %v10831 = vsel %vm10814, %v10811, 0
        %v10834 = vsel %vm10814, %v10812, 0
        %v10837 = vsel %vm10814, %v10813, 0
        %vm10839 = vcmask 1041408
        %v10841 = vsel %vm10839, %v10796, 0
        %10843 = vmatprep.subr.mxu0 0.0
        %10844 = vmatpush1.msra.mxu0 0.0
        %10845 = vmatprep.subr.mxu0 0.0
        %10846 = vmatpush1.msra.mxu0 0.0
        %10847 = vmatprep.subr.mxu0 0.0
        %10848 = vmatpush1.msra.mxu0 0.0
        %10849 = vmatprep.subr.mxu0 0.0
        %10850 = vmatpush1.msra.mxu0 0.0
        %10851 = vmatprep.subr.mxu0 0.0
        %10852 = vmatpush1.msra.mxu0 0.0
        %10853 = vmatprep.subr.mxu0 0.0
        %10854 = vmatpush1.msra.mxu0 0.0
        %10855 = vmatprep.subr.mxu0 0.0
        %10856 = vmatpush1.msra.mxu0 0.0
        %10857 = vmatprep.subr.mxu0 0.0
        %10858 = vmatpush1.msra.mxu0 0.0
        %10859 = vmatprep.subr.mxu0 0.0
        %10860 = vmatpush1.msra.mxu0 0.0
        %10861 = vmatprep.subr.mxu0 0.0
        %10862 = vmatpush1.msra.mxu0 0.0
        %10863 = vmatprep.subr.mxu0 0.0
        %10864 = vmatpush1.msra.mxu0 0.0
        %10865 = vmatprep.subr.mxu0 0.0
        %10866 = vmatpush1.msra.mxu0 0.0
        %10867 = vmatprep.subr.mxu0 0.0
        %10868 = vmatpush1.msra.mxu0 0.0
        %10869 = vmatprep.subr.mxu0 0.0
        %10870 = vmatpush1.msra.mxu0 0.0
        %10871 = vmatprep.subr.mxu0 0.0
        %10872 = vmatpush1.msra.mxu0 %v10841
        %10873 = vmatprep.subr.mxu0 0.0
        %10874 = vmatpush1.msra.mxu0 %v10795
        %10875 = vmatprep.subr.mxu0 0.0
        %10876 = vmatpush2.msra.mxu0 0.0
        %10877 = vmatprep.subr.mxu0 0.0
        %10878 = vmatpush2.msra.mxu0 0.0
        %10879 = vmatprep.subr.mxu0 0.0
        %10880 = vmatpush2.msra.mxu0 0.0
        %10881 = vmatprep.subr.mxu0 0.0
        %10882 = vmatpush2.msra.mxu0 0.0
        %10883 = vmatprep.subr.mxu0 0.0
        %10884 = vmatpush2.msra.mxu0 0.0
        %10885 = vmatprep.subr.mxu0 0.0
        %10886 = vmatpush2.msra.mxu0 0.0
        %10887 = vmatprep.subr.mxu0 0.0
        %10888 = vmatpush2.msra.mxu0 0.0
        %10889 = vmatprep.subr.mxu0 0.0
        %10890 = vmatpush2.msra.mxu0 0.0
        %10891 = vmatprep.subr.mxu0 0.0
        %10892 = vmatpush2.msra.mxu0 0.0
        %10893 = vmatprep.subr.mxu0 0.0
        %10894 = vmatpush2.msra.mxu0 0.0
        %10895 = vmatprep.subr.mxu0 0.0
        %10896 = vmatpush2.msra.mxu0 0.0
        %10897 = vmatprep.subr.mxu0 0.0
        %10898 = vmatpush2.msra.mxu0 0.0
        %10899 = vmatprep.subr.mxu0 0.0
        %10900 = vmatpush2.msra.mxu0 0.0
        %10901 = vmatprep.subr.mxu0 0.0
        %10902 = vmatpush2.msra.mxu0 0.0
        %10903 = vmatprep.subr.mxu0 0.0
        %10904 = vmatpush2.msra.mxu0 0.0
        %10905 = vmatprep.subr.mxu0 0.0
        %10906 = vmatpush2.msra.mxu0 0.0
        %10907 = vmatprep.mubr.f32.mxu0 0.0
        %10908 = vmatmul.mubr.f32.gmra.mxu0 %v10816
        %v10909 = vpop.f32.mrf.mxu0
        %v10910 = vadd.f32 0.0, %v10909
        %v10911 = vpop.f32.mrf.mxu0
        %10912 = vmatprep.mubr.f32.mxu0 0.0
        %10913 = vmatmul.mubr.f32.gmra.mxu0 %v10819
        %v10914 = vpop.f32.mrf.mxu0
        %v10915 = vadd.f32 0.0, %v10914
        %v10916 = vpop.f32.mrf.mxu0
        %10917 = vmatprep.mubr.f32.mxu0 0.0
        %10918 = vmatmul.mubr.f32.gmra.mxu0 %v10822
        %v10919 = vpop.f32.mrf.mxu0
        %v10920 = vadd.f32 0.0, %v10919
        %v10921 = vpop.f32.mrf.mxu0
        %10922 = vmatprep.mubr.f32.mxu0 0.0
        %10923 = vmatmul.mubr.f32.gmra.mxu0 %v10825
        %v10924 = vpop.f32.mrf.mxu0
        %v10925 = vadd.f32 0.0, %v10924
        %v10926 = vpop.f32.mrf.mxu0
        %10927 = vmatprep.mubr.f32.mxu0 0.0
        %10928 = vmatmul.mubr.f32.gmra.mxu0 %v10828
        %v10929 = vpop.f32.mrf.mxu0
        %v10930 = vadd.f32 0.0, %v10929
        %v10931 = vpop.f32.mrf.mxu0
        %10932 = vmatprep.mubr.f32.mxu0 0.0
        %10933 = vmatmul.mubr.f32.gmra.mxu0 %v10831
        %v10934 = vpop.f32.mrf.mxu0
        %v10935 = vadd.f32 0.0, %v10934
        %v10936 = vpop.f32.mrf.mxu0
        %10937 = vmatprep.mubr.f32.mxu0 0.0
        %10938 = vmatmul.mubr.f32.gmra.mxu0 %v10834
        %v10939 = vpop.f32.mrf.mxu0
        %v10940 = vadd.f32 0.0, %v10939
        %v10941 = vpop.f32.mrf.mxu0
        %10942 = vmatprep.mubr.f32.mxu0 0.0
        %10943 = vmatmul.mubr.f32.gmra.mxu0 %v10837
        %v10944 = vpop.f32.mrf.mxu0
        %v10945 = vadd.f32 0.0, %v10944
        %v10946 = vpop.f32.mrf.mxu0
        %10947 = vdwg.mxu0
        %v10949 = vsel %vm10814, %v10798, 0
        %v10952 = vsel %vm10814, %v10799, 0
        %v10955 = vsel %vm10814, %v10800, 0
        %v10958 = vsel %vm10814, %v10801, 0
        %v10961 = vsel %vm10814, %v10802, 0
        %v10964 = vsel %vm10814, %v10803, 0
        %v10967 = vsel %vm10814, %v10804, 0
        %v10970 = vsel %vm10814, %v10805, 0
        %v10973 = vsel %vm10839, %v10794, 0
        %10975 = vmatprep.subr.mxu0 0.0
        %10976 = vmatpush1.msra.mxu0 0.0
        %10977 = vmatprep.subr.mxu0 0.0
        %10978 = vmatpush1.msra.mxu0 0.0
        %10979 = vmatprep.subr.mxu0 0.0
        %10980 = vmatpush1.msra.mxu0 0.0
        %10981 = vmatprep.subr.mxu0 0.0
        %10982 = vmatpush1.msra.mxu0 0.0
        %10983 = vmatprep.subr.mxu0 0.0
        %10984 = vmatpush1.msra.mxu0 0.0
        %10985 = vmatprep.subr.mxu0 0.0
        %10986 = vmatpush1.msra.mxu0 0.0
        %10987 = vmatprep.subr.mxu0 0.0
        %10988 = vmatpush1.msra.mxu0 0.0
        %10989 = vmatprep.subr.mxu0 0.0
        %10990 = vmatpush1.msra.mxu0 0.0
        %10991 = vmatprep.subr.mxu0 0.0
        %10992 = vmatpush1.msra.mxu0 0.0
        %10993 = vmatprep.subr.mxu0 0.0
        %10994 = vmatpush1.msra.mxu0 0.0
        %10995 = vmatprep.subr.mxu0 0.0
        %10996 = vmatpush1.msra.mxu0 0.0
        %10997 = vmatprep.subr.mxu0 0.0
        %10998 = vmatpush1.msra.mxu0 0.0
        %10999 = vmatprep.subr.mxu0 0.0
        %11000 = vmatpush1.msra.mxu0 0.0
        %11001 = vmatprep.subr.mxu0 0.0
        %11002 = vmatpush1.msra.mxu0 0.0
        %11003 = vmatprep.subr.mxu0 0.0
        %11004 = vmatpush1.msra.mxu0 %v10973
        %11005 = vmatprep.subr.mxu0 0.0
        %11006 = vmatpush1.msra.mxu0 %v10793
        %11007 = vmatprep.subr.mxu0 0.0
        %11008 = vmatpush2.msra.mxu0 0.0
        %11009 = vmatprep.subr.mxu0 0.0
        %11010 = vmatpush2.msra.mxu0 0.0
        %11011 = vmatprep.subr.mxu0 0.0
        %11012 = vmatpush2.msra.mxu0 0.0
        %11013 = vmatprep.subr.mxu0 0.0
        %11014 = vmatpush2.msra.mxu0 0.0
        %11015 = vmatprep.subr.mxu0 0.0
        %11016 = vmatpush2.msra.mxu0 0.0
        %11017 = vmatprep.subr.mxu0 0.0
        %11018 = vmatpush2.msra.mxu0 0.0
        %11019 = vmatprep.subr.mxu0 0.0
        %11020 = vmatpush2.msra.mxu0 0.0
        %11021 = vmatprep.subr.mxu0 0.0
        %11022 = vmatpush2.msra.mxu0 0.0
        %11023 = vmatprep.subr.mxu0 0.0
        %11024 = vmatpush2.msra.mxu0 0.0
        %11025 = vmatprep.subr.mxu0 0.0
        %11026 = vmatpush2.msra.mxu0 0.0
        %11027 = vmatprep.subr.mxu0 0.0
        %11028 = vmatpush2.msra.mxu0 0.0
        %11029 = vmatprep.subr.mxu0 0.0
        %11030 = vmatpush2.msra.mxu0 0.0
        %11031 = vmatprep.subr.mxu0 0.0
        %11032 = vmatpush2.msra.mxu0 0.0
        %11033 = vmatprep.subr.mxu0 0.0
        %11034 = vmatpush2.msra.mxu0 0.0
        %11035 = vmatprep.subr.mxu0 0.0
        %11036 = vmatpush2.msra.mxu0 0.0
        %11037 = vmatprep.subr.mxu0 0.0
        %11038 = vmatpush2.msra.mxu0 0.0
        %11039 = vmatprep.mubr.f32.mxu0 0.0
        %11040 = vmatmul.mubr.f32.gmra.mxu0 %v10949
        %v11041 = vpop.f32.mrf.mxu0
        %v11042 = vadd.f32 %v10910, %v11041
        %v11043 = vpop.f32.mrf.mxu0
        %11044 = vmatprep.mubr.f32.mxu0 0.0
        %11045 = vmatmul.mubr.f32.gmra.mxu0 %v10952
        %v11046 = vpop.f32.mrf.mxu0
        %v11047 = vadd.f32 %v10915, %v11046
        %v11048 = vpop.f32.mrf.mxu0
        %11049 = vmatprep.mubr.f32.mxu0 0.0
        %11050 = vmatmul.mubr.f32.gmra.mxu0 %v10955
        %v11051 = vpop.f32.mrf.mxu0
        %v11052 = vadd.f32 %v10920, %v11051
        %v11053 = vpop.f32.mrf.mxu0
        %11054 = vmatprep.mubr.f32.mxu0 0.0
        %11055 = vmatmul.mubr.f32.gmra.mxu0 %v10958
        %v11056 = vpop.f32.mrf.mxu0
        %v11057 = vadd.f32 %v10925, %v11056
        %v11058 = vpop.f32.mrf.mxu0
        %11059 = vmatprep.mubr.f32.mxu0 0.0
        %11060 = vmatmul.mubr.f32.gmra.mxu0 %v10961
        %v11061 = vpop.f32.mrf.mxu0
        %v11062 = vadd.f32 %v10930, %v11061
        %v11063 = vpop.f32.mrf.mxu0
        %11064 = vmatprep.mubr.f32.mxu0 0.0
        %11065 = vmatmul.mubr.f32.gmra.mxu0 %v10964
        %v11066 = vpop.f32.mrf.mxu0
        %v11067 = vadd.f32 %v10935, %v11066
        %v11068 = vpop.f32.mrf.mxu0
        %11069 = vmatprep.mubr.f32.mxu0 0.0
        %11070 = vmatmul.mubr.f32.gmra.mxu0 %v10967
        %v11071 = vpop.f32.mrf.mxu0
        %v11072 = vadd.f32 %v10940, %v11071
        %v11073 = vpop.f32.mrf.mxu0
        %11074 = vmatprep.mubr.f32.mxu0 0.0
        %11075 = vmatmul.mubr.f32.gmra.mxu0 %v10970
        %v11076 = vpop.f32.mrf.mxu0
        %v11077 = vadd.f32 %v10945, %v11076
        %v11078 = vpop.f32.mrf.mxu0
        %11079 = vdwg.mxu0
        %v11080 = vlaneseq
        %v11081 = vshrl.u32 %v11080, 7
        %v11082 = vsub.s32 0, %v11081
        %v11083 = vrot.slane %v10797, %v11082
        %v11084 = vadd.f32 %v11042, %v11083
        %v11085 = vadd.f32 %v11047, %v11083
        %v11086 = vadd.f32 %v11052, %v11083
        %v11087 = vadd.f32 %v11057, %v11083
        %v11088 = vadd.f32 %v11062, %v11083
        %v11089 = vadd.f32 %v11067, %v11083
        %v11090 = vadd.f32 %v11072, %v11083
        %v11091 = vadd.f32 %v11077, %v11083
        %11100 = vrot.lane.b32.xlu0 %v11084, 127
        %v11101 = vpop.permute.xlu0 %11100
        %11102 = vrot.lane.b32.xlu0 %v11085, 127
        %v11103 = vpop.permute.xlu0 %11102
        %11104 = vrot.lane.b32.xlu0 %v11086, 127
        %v11105 = vpop.permute.xlu0 %11104
        %11106 = vrot.lane.b32.xlu0 %v11087, 127
        %v11107 = vpop.permute.xlu0 %11106
        %11108 = vrot.lane.b32.xlu0 %v11088, 127
        %v11109 = vpop.permute.xlu0 %11108
        %11110 = vrot.lane.b32.xlu0 %v11089, 127
        %v11111 = vpop.permute.xlu0 %11110
        %11112 = vrot.lane.b32.xlu0 %v11090, 127
        %v11113 = vpop.permute.xlu0 %11112
        %11114 = vrot.lane.b32.xlu0 %v11091, 127
        %v11115 = vpop.permute.xlu0 %11114
        %vm11124 = vcmp.gt.f32.partialorder %v11084, %v11101
        %vm11125 = vcmp.gt.f32.partialorder %v11085, %v11103
        %vm11126 = vcmp.gt.f32.partialorder %v11086, %v11105
        %vm11127 = vcmp.gt.f32.partialorder %v11087, %v11107
        %vm11128 = vcmp.gt.f32.partialorder %v11088, %v11109
        %vm11129 = vcmp.gt.f32.partialorder %v11089, %v11111
        %vm11130 = vcmp.gt.f32.partialorder %v11090, %v11113
        %vm11131 = vcmp.gt.f32.partialorder %v11091, %v11115
        %v11132 = vsel %vm11124, 1, 0
        %v11133 = vsel %vm11125, 1, 0
        %v11134 = vsel %vm11126, 1, 0
        %v11135 = vsel %vm11127, 1, 0
        %v11136 = vsel %vm11128, 1, 0
        %v11137 = vsel %vm11129, 1, 0
        %v11138 = vsel %vm11130, 1, 0
        %v11139 = vsel %vm11131, 1, 0
        %11140 = vset.pattern.permute.xlu0 0
        %11141 = vperm.xlu0 %11140, %v11132
        %v11142 = vpop.permute.xlu0 %11141
        %11143 = vset.pattern.permute.xlu0 0
        %11144 = vperm.xlu0 %11143, %v11133
        %v11145 = vpop.permute.xlu0 %11144
        %11146 = vset.pattern.permute.xlu0 0
        %11147 = vperm.xlu0 %11146, %v11134
        %v11148 = vpop.permute.xlu0 %11147
        %11149 = vset.pattern.permute.xlu0 0
        %11150 = vperm.xlu0 %11149, %v11135
        %v11151 = vpop.permute.xlu0 %11150
        %11152 = vset.pattern.permute.xlu0 0
        %11153 = vperm.xlu0 %11152, %v11136
        %v11154 = vpop.permute.xlu0 %11153
        %11155 = vset.pattern.permute.xlu0 0
        %11156 = vperm.xlu0 %11155, %v11137
        %v11157 = vpop.permute.xlu0 %11156
        %11158 = vset.pattern.permute.xlu0 0
        %11159 = vperm.xlu0 %11158, %v11138
        %v11160 = vpop.permute.xlu0 %11159
        %11161 = vset.pattern.permute.xlu0 0
        %11162 = vperm.xlu0 %11161, %v11139
        %v11163 = vpop.permute.xlu0 %11162
        %vm11164 = vcmp.eq.s32.totalorder %v11142, 1
        %vm11165 = vcmp.eq.s32.totalorder %v11145, 1
        %vm11166 = vcmp.eq.s32.totalorder %v11148, 1
        %vm11167 = vcmp.eq.s32.totalorder %v11151, 1
        %vm11168 = vcmp.eq.s32.totalorder %v11154, 1
        %vm11169 = vcmp.eq.s32.totalorder %v11157, 1
        %vm11170 = vcmp.eq.s32.totalorder %v11160, 1
        %vm11171 = vcmp.eq.s32.totalorder %v11163, 1
        %v11172 = vsel %vm11164, %v10715, %v10755
        %v11173 = vsel %vm11165, %v10720, %v10760
        %v11174 = vsel %vm11166, %v10725, %v10765
        %v11175 = vsel %vm11167, %v10730, %v10770
        %v11176 = vsel %vm11168, %v10735, %v10775
        %v11177 = vsel %vm11169, %v10740, %v10780
        %v11178 = vsel %vm11170, %v10745, %v10785
        %v11179 = vsel %vm11171, %v10750, %v10790
        %11188 = vrot.lane.b32.xlu0 %v11172, 2
        %v11189 = vpop.permute.xlu0 %11188
        %11190 = vrot.lane.b32.xlu0 %v11173, 2
        %v11191 = vpop.permute.xlu0 %11190
        %11192 = vrot.lane.b32.xlu0 %v11174, 2
        %v11193 = vpop.permute.xlu0 %11192
        %11194 = vrot.lane.b32.xlu0 %v11175, 2
        %v11195 = vpop.permute.xlu0 %11194
        %11196 = vrot.lane.b32.xlu0 %v11176, 2
        %v11197 = vpop.permute.xlu0 %11196
        %11198 = vrot.lane.b32.xlu0 %v11177, 2
        %v11199 = vpop.permute.xlu0 %11198
        %11200 = vrot.lane.b32.xlu0 %v11178, 2
        %v11201 = vpop.permute.xlu0 %11200
        %11202 = vrot.lane.b32.xlu0 %v11179, 2
        %v11203 = vpop.permute.xlu0 %11202
        %vm11212 = vcmask 15360
        %v11213 = vsel %vm11212, %v11084, %v11189
        %v11214 = vsel %vm11212, %v11085, %v11191
        %v11215 = vsel %vm11212, %v11086, %v11193
        %v11216 = vsel %vm11212, %v11087, %v11195
        %v11217 = vsel %vm11212, %v11088, %v11197
        %v11218 = vsel %vm11212, %v11089, %v11199
        %v11219 = vsel %vm11212, %v11090, %v11201
        %v11220 = vsel %vm11212, %v11091, %v11203
        %vm11221 = vcmask 97280
        %v11222 = vsel %vm11221, %v11213, 0.0
        %v11223 = vsel %vm11221, %v11214, 0.0
        %v11224 = vsel %vm11221, %v11215, 0.0
        %v11225 = vsel %vm11221, %v11216, 0.0
        %v11226 = vsel %vm11221, %v11217, 0.0
        %v11227 = vsel %vm11221, %v11218, 0.0
        %v11228 = vsel %vm11221, %v11219, 0.0
        %v11229 = vsel %vm11221, %v11220, 0.0
        %11230 = vst [vmem:[%s137] sm:$0xff] %v11222
        %11231 = vst [vmem:[%s137 + $0x8] sm:$0xff] %v11223
        %11232 = vst [vmem:[%s137 + $0x10] sm:$0xff] %v11224
        %11233 = vst [vmem:[%s137 + $0x18] sm:$0xff] %v11225
        %11234 = vst [vmem:[%s137 + $0x20] sm:$0xff] %v11226
        %11235 = vst [vmem:[%s137 + $0x28] sm:$0xff] %v11227
        %11236 = vst [vmem:[%s137 + $0x30] sm:$0xff] %v11228
        %11237 = vst [vmem:[%s137 + $0x38] sm:$0xff] %v11229
        %s11238 = sand.u32 %s71, 1
        %s11239 = scalar_lea.sflag [#allocation3], %s11238
        %s11240 = sand.u32 %s71, 1
        %s11241 = smul.addr %s11240, 64
        %s11242 = scalar_lea.vmem [#allocation2], %s11241
        // Predicated region
        $region29: #{tpu_custom_call.1} parent=27 // pred_check
          %p11243 = pneg %p81
        $region30: #{tpu_custom_call.1} parent=27 // pred_check_branch
          %11245 = sbr.rel (%p11243) target = $region32
        $region31: #{tpu_custom_call.1} parent=27 // pred_region
          %s11246 = smul.u32 8, %s16
          %s11248 = ssub.s32 1024, 1024
          %11249 = vsyncadd %s11239, %s11248
          %s11250 = smul.addr %s11246, 128
          %s11251 = scalar_lea.hbm %s2, %s11250
          %s11252 = sshll.u32 %s11242, 4
          %s11253 = int_to_ptr.vmem [resolvable:$true] %s11252
          %11258 = dma.vmem_to_hbm [thread:$0]  %s11253, 1024, %s11251, %s11239, 128, 128, 8
        $region32: #{tpu_custom_call.1} parent=27 // pred_fallthru
          _
      $region28: #{tpu_custom_call.1} parent=5 // pred_fallthru
        _
      %p11259 = scmp.le.s32.totalorder 2, %s11
      // Predicated region
      $region33: #{tpu_custom_call.1} parent=5 // pred_check
        %p11260 = pneg %p11259
      $region34: #{tpu_custom_call.1} parent=5 // pred_check_branch
        %11262 = sbr.rel (%p11260) target = $region36
      $region35: #{tpu_custom_call.1} parent=5 // pred_region
        %s11263 = ssub.s32 %s11, 2
        // Predicated region
        $region37: #{tpu_custom_call.1} parent=35 // pred_check
          %p11264 = pneg %p87
        $region38: #{tpu_custom_call.1} parent=35 // pred_check_branch
          %11266 = sbr.rel (%p11264) target = $region40
        $region39: #{tpu_custom_call.1} parent=35 // pred_region
          %s11267 = sand.u32 %s72, 1
          %s11268 = scalar_lea.sflag [#allocation3], %s11267
          %s11269 = sand.u32 %s72, 1
          %s11270 = smul.addr %s11269, 64
          %s11271 = scalar_lea.vmem [#allocation2], %s11270
          %11272 = dma.done %s11268, 1024
        $region40: #{tpu_custom_call.1} parent=35 // pred_fallthru
          _
      $region36: #{tpu_custom_call.1} parent=5 // pred_fallthru
        _
    $region6: #{tpu_custom_call.1} parent=1 // loop_footer
      %s15 = sadd.s32 1, %s11
    $region7: #{tpu_custom_call.1} parent=1 // loop_footer_branch
      %10 = sbr.rel target = $region3
    $region8: #{tpu_custom_call.1} parent=1 // loop_exit
      _
    %11273 = vsyncpa [#allocation3], 1
    %s11274 = scalar_lea.sflag [#allocation3], 1
    %11275 = vsyncpa %s11274, 1

</llo_original>
